<compile_context>
chip_gen: v6e
topology: v6e:2x2x1
jax: 0.10.0
libtpu: 0.0.40
codegen_flags: <defaults>
</compile_context>

<pallas_src>
import jax
import jax.numpy as jnp
from jax.experimental import pallas as pl
from jax.experimental.pallas import tpu as pltpu


def _sigmoid(x):
    # sigmoid(x) == 0.5 * (tanh(x/2) + 1): single EUP op, no VALU divide chain.
    return 0.5 * jnp.tanh(0.5 * x) + 0.5


def _gru_block_kernel(x_ref, wc_ref, whh_ref, b_ref, o_ref, gi_s):
    """One (B*H)-tile of sequences per grid step.

    x_ref:   (W, Cin, TB)    raw input, sequence-major, B*H tile on lanes
    wc_ref:  (6*Hd, Cin)     fused (W_ih @ W_conv) weights, [forward ; backward]
    whh_ref: (6*Hd, Hd)      hidden-to-hidden weights, [forward ; backward]
    b_ref:   (8*Hd, 1)       [b_fwd(3Hd) ; b_bwd(3Hd) ; b_hn_fwd(Hd) ; b_hn_bwd(Hd)]
    o_ref:   (W, Cout, TB)   output; channels = [forward Hd | backward Hd]
    gi_s:    (W, 6*Hd, TB)   VMEM scratch: hoisted gate pre-activations, both directions
    """
    W = x_ref.shape[0]
    TB = x_ref.shape[2]
    Hd = whh_ref.shape[1]
    H3 = 3 * Hd

    # ---- Phase 1: hoisted fused input projection (off the serial chain). ----
    # All 2*W projections are independent -> MXU pipelines them back to back.
    b_gates = b_ref[0:2 * H3, :]                                  # (6Hd, 1)
    for t in range(W):
        gi_s[t] = (jnp.dot(wc_ref[...], x_ref[t],
                           preferred_element_type=jnp.float32) + b_gates)

    # ---- Phase 2: interleaved bidirectional recurrence. ----
    whh_f = whh_ref[0:H3, :]
    whh_b = whh_ref[H3:2 * H3, :]
    bhn_f = b_ref[2 * H3:2 * H3 + Hd, :]
    bhn_b = b_ref[2 * H3 + Hd:2 * H3 + 2 * Hd, :]

    def step(gi, h, whh, bhn):
        gh = jnp.dot(whh, h, preferred_element_type=jnp.float32)  # (3Hd, TB)
        r = _sigmoid(gi[0:Hd] + gh[0:Hd])
        z = _sigmoid(gi[Hd:2 * Hd] + gh[Hd:2 * Hd])
        n = jnp.tanh(gi[2 * Hd:H3] + r * (gh[2 * Hd:H3] + bhn))
        return (1.0 - z) * n + z * h

    # W is small and static for this module (text-SR row width); the Python loop
    # unrolls into static indices.  For much larger W switch to a partially
    # unrolled lax.fori_loop to bound vreg live ranges.
    h_f = jnp.zeros((Hd, TB), jnp.float32)
    h_b = jnp.zeros((Hd, TB), jnp.float32)
    for k in range(W):
        s = W - 1 - k
        # Two independent chains per iteration: fwd @ t=k, bwd @ t=s.
        h_f = step(gi_s[k, 0:H3, :], h_f, whh_f, bhn_f)
        h_b = step(gi_s[s, H3:2 * H3, :], h_b, whh_b, bhn_b)
        # Direct half-channel writes (Hd is sublane-aligned for typical Cout).
        o_ref[k, 0:Hd, :] = h_f.astype(o_ref.dtype)
        o_ref[s, Hd:2 * Hd, :] = h_b.astype(o_ref.dtype)


def gru_block_forward(x_nchw, conv_w, conv_b, gru):
    """Equivalent of GruBlock.forward.

    x_nchw: (B, Cin, H, W) float32
    conv_w: (Cout, Cin, 1, 1) float32 ; conv_b: (Cout,) float32
    gru: dict of per-direction PyTorch GRU params (Hd = Cout // 2):
        w_ih_{f,b}: (3*Hd, Cout), w_hh_{f,b}: (3*Hd, Hd),
        b_ih_{f,b}, b_hh_{f,b}: (3*Hd,)
    returns: (B, Cout, H, W) float32
    """
    B, Cin, H, Wd = x_nchw.shape
    Cout = conv_w.shape[0]
    Hd = Cout // 2
    wc = conv_w[:, :, 0, 0].astype(jnp.float32)                   # (Cout, Cin)

    def fuse(w_ih, b_ih, b_hh):
        # Fold the 1x1 conv into the GRU input projection:
        #   W_ih @ (Wc x + bc) + b_ih == (W_ih @ Wc) x + (W_ih @ bc + b_ih)
        wcomb = w_ih @ wc                                         # (3Hd, Cin)
        bcomb = w_ih @ conv_b + b_ih                              # (3Hd,)
        # hh bias of r,z adds linearly -> fold it in; hh bias of n stays
        # separate (it lives inside r * (W_hn h + b_hn)).
        bcomb = bcomb.at[:2 * Hd].add(b_hh[:2 * Hd])
        return wcomb, bcomb, b_hh[2 * Hd:]

    wcf, bf, bhnf = fuse(gru['w_ih_f'], gru['b_ih_f'], gru['b_hh_f'])
    wcb, bb, bhnb = fuse(gru['w_ih_b'], gru['b_ih_b'], gru['b_hh_b'])

    # Packed operands: 3 arrays instead of 9 (fewer DMA descriptors / padded blocks).
    wc_all = jnp.concatenate([wcf, wcb], axis=0).astype(jnp.float32)           # (6Hd, Cin)
    whh_all = jnp.concatenate([gru['w_hh_f'], gru['w_hh_b']],
                              axis=0).astype(jnp.float32)                      # (6Hd, Hd)
    b_all = jnp.concatenate([bf, bb, bhnf, bhnb],
                            axis=0).astype(jnp.float32).reshape(8 * Hd, 1)     # (8Hd, 1)

    # (B, Cin, H, W) -> (W, Cin, B*H): sequence on the leading axis, the B*H
    # "batch of rows" on the lane axis.
    BH = B * H
    BHp = ((BH + 127) // 128) * 128
    # TB: largest of {512,384,256} that divides BHp while leaving >= 2 grid tiles
    # (so both v7x TensorCores get work); otherwise 128.
    TB = 128
    if BHp >= 256:
        for cand in (512, 384, 256):
            if 2 * cand <= BHp and BHp % cand == 0:
                TB = cand
                break

    x_seq = jnp.transpose(x_nchw, (3, 1, 0, 2)).reshape(Wd, Cin, BH)
    if BHp != BH:
        x_seq = jnp.pad(x_seq, ((0, 0), (0, 0), (0, BHp - BH)))

    out = pl.pallas_call(
        _gru_block_kernel,
        out_shape=jax.ShapeDtypeStruct((Wd, Cout, BHp), jnp.float32),
        grid_spec=pltpu.PrefetchScalarGridSpec(
            num_scalar_prefetch=0,
            grid=(BHp // TB,),
            in_specs=[
                pl.BlockSpec((Wd, Cin, TB), lambda n: (0, 0, n)),
                pl.BlockSpec((6 * Hd, Cin), lambda n: (0, 0)),
                pl.BlockSpec((6 * Hd, Hd), lambda n: (0, 0)),
                pl.BlockSpec((8 * Hd, 1), lambda n: (0, 0)),
            ],
            out_specs=pl.BlockSpec((Wd, Cout, TB), lambda n: (0, 0, n)),
            scratch_shapes=[pltpu.VMEM((Wd, 6 * Hd, TB), jnp.float32)],
        ),
        compiler_params=pltpu.CompilerParams(
            dimension_semantics=("parallel",),
        ),
    )(x_seq, wc_all, whh_all, b_all)

    # (W, Cout, B*H) -> (B, Cout, H, W).  When GruBlocks are stacked, keeping the
    # (W, C, B*H) kernel layout between blocks avoids these extra HBM passes.
    out = out[:, :, :BH].reshape(Wd, Cout, B, H)
    return jnp.transpose(out, (2, 1, 3, 0))


# ----------------------------- reference (pure JAX) -----------------------------

def _gru_direction_ref(seq, w_ih, w_hh, b_ih, b_hh, Hd):
    # seq: (N, T, C) -> (N, T, Hd), PyTorch GRU semantics, h0 = 0
    def step(h, x_t):
        gi = x_t @ w_ih.T + b_ih
        gh = h @ w_hh.T + b_hh
        r = jax.nn.sigmoid(gi[:, :Hd] + gh[:, :Hd])
        z = jax.nn.sigmoid(gi[:, Hd:2 * Hd] + gh[:, Hd:2 * Hd])
        n = jnp.tanh(gi[:, 2 * Hd:] + r * gh[:, 2 * Hd:])
        h_new = (1.0 - z) * n + z * h
        return h_new, h_new

    N = seq.shape[0]
    h0 = jnp.zeros((N, Hd), jnp.float32)
    _, hs = jax.lax.scan(step, h0, jnp.transpose(seq, (1, 0, 2)))
    return jnp.transpose(hs, (1, 0, 2))


def _reference_forward(x, conv_w, conv_b, gru):
    B, Cin, H, Wd = x.shape
    Cout = conv_w.shape[0]
    Hd = Cout // 2
    wc = conv_w[:, :, 0, 0]
    y = jnp.einsum('oc,bchw->bohw', wc, x) + conv_b[None, :, None, None]
    y = jnp.transpose(y, (0, 2, 3, 1)).reshape(B * H, Wd, Cout)
    out_f = _gru_direction_ref(y, gru['w_ih_f'], gru['w_hh_f'],
                               gru['b_ih_f'], gru['b_hh_f'], Hd)
    out_b = _gru_direction_ref(y[:, ::-1, :], gru['w_ih_b'], gru['w_hh_b'],
                               gru['b_ih_b'], gru['b_hh_b'], Hd)[:, ::-1, :]
    out = jnp.concatenate([out_f, out_b], axis=-1)
    out = out.reshape(B, H, Wd, Cout)
    return jnp.transpose(out, (0, 3, 1, 2))


if __name__ == "__main__":
    # Small deterministic setup: batch=2, in_channels=4, spatial 16x16, out_channels=32.
    B, Cin, H, Wd = 2, 4, 16, 16
    Cout = 32
    Hd = Cout // 2

    key = jax.random.PRNGKey(0)
    ks = jax.random.split(key, 11)
    x = jax.random.normal(ks[0], (B, Cin, H, Wd), dtype=jnp.float32)

    cb = 1.0 / (Cin ** 0.5)
    conv_w = jax.random.uniform(ks[1], (Cout, Cin, 1, 1), jnp.float32, -cb, cb)
    conv_b = jax.random.uniform(ks[2], (Cout,), jnp.float32, -cb, cb)

    gb = 1.0 / (Hd ** 0.5)
    gru = {
        'w_ih_f': jax.random.uniform(ks[3], (3 * Hd, Cout), jnp.float32, -gb, gb),
        'w_hh_f': jax.random.uniform(ks[4], (3 * Hd, Hd), jnp.float32, -gb, gb),
        'b_ih_f': jax.random.uniform(ks[5], (3 * Hd,), jnp.float32, -gb, gb),
        'b_hh_f': jax.random.uniform(ks[6], (3 * Hd,), jnp.float32, -gb, gb),
        'w_ih_b': jax.random.uniform(ks[7], (3 * Hd, Cout), jnp.float32, -gb, gb),
        'w_hh_b': jax.random.uniform(ks[8], (3 * Hd, Hd), jnp.float32, -gb, gb),
        'b_ih_b': jax.random.uniform(ks[9], (3 * Hd,), jnp.float32, -gb, gb),
        'b_hh_b': jax.random.uniform(ks[10], (3 * Hd,), jnp.float32, -gb, gb),
    }

    fwd = jax.jit(gru_block_forward)
    out = jax.block_until_ready(fwd(x, conv_w, conv_b, gru))

    ref = jax.block_until_ready(jax.jit(_reference_forward)(x, conv_w, conv_b, gru))
    assert out.shape == (B, Cout, H, Wd), out.shape
    max_err = float(jnp.max(jnp.abs(out - ref)))
    assert max_err < 2e-4, max_err
    print("KERNEL_OK")
</pallas_src>

<mosaic_0001>
module attributes {stable_mosaic.version = 11 : i64} {
  func.func @_gru_block_kernel(%arg0: i32, %arg1: memref<16x4x128xf32, #tpu.memory_space<vmem>>, %arg2: memref<96x4xf32, #tpu.memory_space<vmem>>, %arg3: memref<96x16xf32, #tpu.memory_space<vmem>>, %arg4: memref<128x1xf32, #tpu.memory_space<vmem>>, %arg5: memref<16x32x128xf32, #tpu.memory_space<vmem>>, %arg6: memref<16x96x128xf32, #tpu.memory_space<vmem>>) attributes {dimension_semantics = [#tpu.dimension_semantics<parallel>], iteration_bounds = array<i64: 1>, scalar_prefetch = 0 : i64, scratch_operands = 1 : i64, tpu.core_type = #tpu.core_type<tc>, window_params = [{transform_indices = @transform_0, window_bounds = array<i64: 16, 4, 128>}, {pipeline_mode = #tpu.pipeline_mode<synchronous>, transform_indices = @transform_1, window_bounds = array<i64: 96, 4>}, {pipeline_mode = #tpu.pipeline_mode<synchronous>, transform_indices = @transform_2, window_bounds = array<i64: 96, 16>}, {pipeline_mode = #tpu.pipeline_mode<synchronous>, transform_indices = @transform_3, window_bounds = array<i64: 128, 1>}, {transform_indices = @transform_4, window_bounds = array<i64: 16, 32, 128>}]} {
    %c0 = arith.constant 0 : index
    %c0_0 = arith.constant 0 : index
    %0 = vector.load %arg4[%c0, %c0_0] : memref<128x1xf32, #tpu.memory_space<vmem>>, vector<96x1xf32>
    %c0_1 = arith.constant 0 : index
    %c0_2 = arith.constant 0 : index
    %1 = vector.load %arg2[%c0_1, %c0_2] : memref<96x4xf32, #tpu.memory_space<vmem>>, vector<96x4xf32>
    %c0_3 = arith.constant 0 : index
    %c0_4 = arith.constant 0 : index
    %c0_5 = arith.constant 0 : index
    %2 = vector.load %arg1[%c0_3, %c0_4, %c0_5] : memref<16x4x128xf32, #tpu.memory_space<vmem>>, vector<1x4x128xf32>
    %3 = vector.shape_cast %2 : vector<1x4x128xf32> to vector<4x128xf32>
    %cst = arith.constant dense<0.000000e+00> : vector<96x128xf32>
    %4 = tpu.matmul %1, %3, %cst {dimension_numbers = #tpu.dot_dimension_numbers<[1], [0], [0], [1], [0, 0, 1, 1], [], []>} : vector<96x4xf32>, vector<4x128xf32>, vector<96x128xf32> -> vector<96x128xf32>
    %5 = vector.broadcast %0 : vector<96x1xf32> to vector<96x128xf32>
    %6 = arith.addf %4, %5 : vector<96x128xf32>
    %c0_6 = arith.constant 0 : index
    %c0_7 = arith.constant 0 : index
    %c0_8 = arith.constant 0 : index
    %7 = vector.load %arg6[%c0_6, %c0_7, %c0_8] : memref<16x96x128xf32, #tpu.memory_space<vmem>>, vector<1x96x128xf32>
    %8 = vector.shape_cast %7 : vector<1x96x128xf32> to vector<96x128xf32>
    %9 = vector.shape_cast %6 : vector<96x128xf32> to vector<1x96x128xf32>
    tpu.vector_store %arg6[%c0_6, %c0_7, %c0_8], %9 {strides = array<i32>} : memref<16x96x128xf32, #tpu.memory_space<vmem>>, vector<1x96x128xf32>,
    %c0_9 = arith.constant 0 : index
    %c0_10 = arith.constant 0 : index
    %10 = vector.load %arg2[%c0_9, %c0_10] : memref<96x4xf32, #tpu.memory_space<vmem>>, vector<96x4xf32>
    %c1 = arith.constant 1 : index
    %c0_11 = arith.constant 0 : index
    %c0_12 = arith.constant 0 : index
    %11 = vector.load %arg1[%c1, %c0_11, %c0_12] : memref<16x4x128xf32, #tpu.memory_space<vmem>>, vector<1x4x128xf32>
    %12 = vector.shape_cast %11 : vector<1x4x128xf32> to vector<4x128xf32>
    %cst_13 = arith.constant dense<0.000000e+00> : vector<96x128xf32>
    %13 = tpu.matmul %10, %12, %cst_13 {dimension_numbers = #tpu.dot_dimension_numbers<[1], [0], [0], [1], [0, 0, 1, 1], [], []>} : vector<96x4xf32>, vector<4x128xf32>, vector<96x128xf32> -> vector<96x128xf32>
    %14 = vector.broadcast %0 : vector<96x1xf32> to vector<96x128xf32>
    %15 = arith.addf %13, %14 : vector<96x128xf32>
    %c1_14 = arith.constant 1 : index
    %c0_15 = arith.constant 0 : index
    %c0_16 = arith.constant 0 : index
    %16 = vector.load %arg6[%c1_14, %c0_15, %c0_16] : memref<16x96x128xf32, #tpu.memory_space<vmem>>, vector<1x96x128xf32>
    %17 = vector.shape_cast %16 : vector<1x96x128xf32> to vector<96x128xf32>
    %18 = vector.shape_cast %15 : vector<96x128xf32> to vector<1x96x128xf32>
    tpu.vector_store %arg6[%c1_14, %c0_15, %c0_16], %18 {strides = array<i32>} : memref<16x96x128xf32, #tpu.memory_space<vmem>>, vector<1x96x128xf32>,
    %c0_17 = arith.constant 0 : index
    %c0_18 = arith.constant 0 : index
    %19 = vector.load %arg2[%c0_17, %c0_18] : memref<96x4xf32, #tpu.memory_space<vmem>>, vector<96x4xf32>
    %c2 = arith.constant 2 : index
    %c0_19 = arith.constant 0 : index
    %c0_20 = arith.constant 0 : index
    %20 = vector.load %arg1[%c2, %c0_19, %c0_20] : memref<16x4x128xf32, #tpu.memory_space<vmem>>, vector<1x4x128xf32>
    %21 = vector.shape_cast %20 : vector<1x4x128xf32> to vector<4x128xf32>
    %cst_21 = arith.constant dense<0.000000e+00> : vector<96x128xf32>
    %22 = tpu.matmul %19, %21, %cst_21 {dimension_numbers = #tpu.dot_dimension_numbers<[1], [0], [0], [1], [0, 0, 1, 1], [], []>} : vector<96x4xf32>, vector<4x128xf32>, vector<96x128xf32> -> vector<96x128xf32>
    %23 = vector.broadcast %0 : vector<96x1xf32> to vector<96x128xf32>
    %24 = arith.addf %22, %23 : vector<96x128xf32>
    %c2_22 = arith.constant 2 : index
    %c0_23 = arith.constant 0 : index
    %c0_24 = arith.constant 0 : index
    %25 = vector.load %arg6[%c2_22, %c0_23, %c0_24] : memref<16x96x128xf32, #tpu.memory_space<vmem>>, vector<1x96x128xf32>
    %26 = vector.shape_cast %25 : vector<1x96x128xf32> to vector<96x128xf32>
    %27 = vector.shape_cast %24 : vector<96x128xf32> to vector<1x96x128xf32>
    tpu.vector_store %arg6[%c2_22, %c0_23, %c0_24], %27 {strides = array<i32>} : memref<16x96x128xf32, #tpu.memory_space<vmem>>, vector<1x96x128xf32>,
    %c0_25 = arith.constant 0 : index
    %c0_26 = arith.constant 0 : index
    %28 = vector.load %arg2[%c0_25, %c0_26] : memref<96x4xf32, #tpu.memory_space<vmem>>, vector<96x4xf32>
    %c3 = arith.constant 3 : index
    %c0_27 = arith.constant 0 : index
    %c0_28 = arith.constant 0 : index
    %29 = vector.load %arg1[%c3, %c0_27, %c0_28] : memref<16x4x128xf32, #tpu.memory_space<vmem>>, vector<1x4x128xf32>
    %30 = vector.shape_cast %29 : vector<1x4x128xf32> to vector<4x128xf32>
    %cst_29 = arith.constant dense<0.000000e+00> : vector<96x128xf32>
    %31 = tpu.matmul %28, %30, %cst_29 {dimension_numbers = #tpu.dot_dimension_numbers<[1], [0], [0], [1], [0, 0, 1, 1], [], []>} : vector<96x4xf32>, vector<4x128xf32>, vector<96x128xf32> -> vector<96x128xf32>
    %32 = vector.broadcast %0 : vector<96x1xf32> to vector<96x128xf32>
    %33 = arith.addf %31, %32 : vector<96x128xf32>
    %c3_30 = arith.constant 3 : index
    %c0_31 = arith.constant 0 : index
    %c0_32 = arith.constant 0 : index
    %34 = vector.load %arg6[%c3_30, %c0_31, %c0_32] : memref<16x96x128xf32, #tpu.memory_space<vmem>>, vector<1x96x128xf32>
    %35 = vector.shape_cast %34 : vector<1x96x128xf32> to vector<96x128xf32>
    %36 = vector.shape_cast %33 : vector<96x128xf32> to vector<1x96x128xf32>
    tpu.vector_store %arg6[%c3_30, %c0_31, %c0_32], %36 {strides = array<i32>} : memref<16x96x128xf32, #tpu.memory_space<vmem>>, vector<1x96x128xf32>,
    %c0_33 = arith.constant 0 : index
    %c0_34 = arith.constant 0 : index
    %37 = vector.load %arg2[%c0_33, %c0_34] : memref<96x4xf32, #tpu.memory_space<vmem>>, vector<96x4xf32>
    %c4 = arith.constant 4 : index
    %c0_35 = arith.constant 0 : index
    %c0_36 = arith.constant 0 : index
    %38 = vector.load %arg1[%c4, %c0_35, %c0_36] : memref<16x4x128xf32, #tpu.memory_space<vmem>>, vector<1x4x128xf32>
    %39 = vector.shape_cast %38 : vector<1x4x128xf32> to vector<4x128xf32>
    %cst_37 = arith.constant dense<0.000000e+00> : vector<96x128xf32>
    %40 = tpu.matmul %37, %39, %cst_37 {dimension_numbers = #tpu.dot_dimension_numbers<[1], [0], [0], [1], [0, 0, 1, 1], [], []>} : vector<96x4xf32>, vector<4x128xf32>, vector<96x128xf32> -> vector<96x128xf32>
    %41 = vector.broadcast %0 : vector<96x1xf32> to vector<96x128xf32>
    %42 = arith.addf %40, %41 : vector<96x128xf32>
    %c4_38 = arith.constant 4 : index
    %c0_39 = arith.constant 0 : index
    %c0_40 = arith.constant 0 : index
    %43 = vector.load %arg6[%c4_38, %c0_39, %c0_40] : memref<16x96x128xf32, #tpu.memory_space<vmem>>, vector<1x96x128xf32>
    %44 = vector.shape_cast %43 : vector<1x96x128xf32> to vector<96x128xf32>
    %45 = vector.shape_cast %42 : vector<96x128xf32> to vector<1x96x128xf32>
    tpu.vector_store %arg6[%c4_38, %c0_39, %c0_40], %45 {strides = array<i32>} : memref<16x96x128xf32, #tpu.memory_space<vmem>>, vector<1x96x128xf32>,
    %c0_41 = arith.constant 0 : index
    %c0_42 = arith.constant 0 : index
    %46 = vector.load %arg2[%c0_41, %c0_42] : memref<96x4xf32, #tpu.memory_space<vmem>>, vector<96x4xf32>
    %c5 = arith.constant 5 : index
    %c0_43 = arith.constant 0 : index
    %c0_44 = arith.constant 0 : index
    %47 = vector.load %arg1[%c5, %c0_43, %c0_44] : memref<16x4x128xf32, #tpu.memory_space<vmem>>, vector<1x4x128xf32>
    %48 = vector.shape_cast %47 : vector<1x4x128xf32> to vector<4x128xf32>
    %cst_45 = arith.constant dense<0.000000e+00> : vector<96x128xf32>
    %49 = tpu.matmul %46, %48, %cst_45 {dimension_numbers = #tpu.dot_dimension_numbers<[1], [0], [0], [1], [0, 0, 1, 1], [], []>} : vector<96x4xf32>, vector<4x128xf32>, vector<96x128xf32> -> vector<96x128xf32>
    %50 = vector.broadcast %0 : vector<96x1xf32> to vector<96x128xf32>
    %51 = arith.addf %49, %50 : vector<96x128xf32>
    %c5_46 = arith.constant 5 : index
    %c0_47 = arith.constant 0 : index
    %c0_48 = arith.constant 0 : index
    %52 = vector.load %arg6[%c5_46, %c0_47, %c0_48] : memref<16x96x128xf32, #tpu.memory_space<vmem>>, vector<1x96x128xf32>
    %53 = vector.shape_cast %52 : vector<1x96x128xf32> to vector<96x128xf32>
    %54 = vector.shape_cast %51 : vector<96x128xf32> to vector<1x96x128xf32>
    tpu.vector_store %arg6[%c5_46, %c0_47, %c0_48], %54 {strides = array<i32>} : memref<16x96x128xf32, #tpu.memory_space<vmem>>, vector<1x96x128xf32>,
    %c0_49 = arith.constant 0 : index
    %c0_50 = arith.constant 0 : index
    %55 = vector.load %arg2[%c0_49, %c0_50] : memref<96x4xf32, #tpu.memory_space<vmem>>, vector<96x4xf32>
    %c6 = arith.constant 6 : index
    %c0_51 = arith.constant 0 : index
    %c0_52 = arith.constant 0 : index
    %56 = vector.load %arg1[%c6, %c0_51, %c0_52] : memref<16x4x128xf32, #tpu.memory_space<vmem>>, vector<1x4x128xf32>
    %57 = vector.shape_cast %56 : vector<1x4x128xf32> to vector<4x128xf32>
    %cst_53 = arith.constant dense<0.000000e+00> : vector<96x128xf32>
    %58 = tpu.matmul %55, %57, %cst_53 {dimension_numbers = #tpu.dot_dimension_numbers<[1], [0], [0], [1], [0, 0, 1, 1], [], []>} : vector<96x4xf32>, vector<4x128xf32>, vector<96x128xf32> -> vector<96x128xf32>
    %59 = vector.broadcast %0 : vector<96x1xf32> to vector<96x128xf32>
    %60 = arith.addf %58, %59 : vector<96x128xf32>
    %c6_54 = arith.constant 6 : index
    %c0_55 = arith.constant 0 : index
    %c0_56 = arith.constant 0 : index
    %61 = vector.load %arg6[%c6_54, %c0_55, %c0_56] : memref<16x96x128xf32, #tpu.memory_space<vmem>>, vector<1x96x128xf32>
    %62 = vector.shape_cast %61 : vector<1x96x128xf32> to vector<96x128xf32>
    %63 = vector.shape_cast %60 : vector<96x128xf32> to vector<1x96x128xf32>
    tpu.vector_store %arg6[%c6_54, %c0_55, %c0_56], %63 {strides = array<i32>} : memref<16x96x128xf32, #tpu.memory_space<vmem>>, vector<1x96x128xf32>,
    %c0_57 = arith.constant 0 : index
    %c0_58 = arith.constant 0 : index
    %64 = vector.load %arg2[%c0_57, %c0_58] : memref<96x4xf32, #tpu.memory_space<vmem>>, vector<96x4xf32>
    %c7 = arith.constant 7 : index
    %c0_59 = arith.constant 0 : index
    %c0_60 = arith.constant 0 : index
    %65 = vector.load %arg1[%c7, %c0_59, %c0_60] : memref<16x4x128xf32, #tpu.memory_space<vmem>>, vector<1x4x128xf32>
    %66 = vector.shape_cast %65 : vector<1x4x128xf32> to vector<4x128xf32>
    %cst_61 = arith.constant dense<0.000000e+00> : vector<96x128xf32>
    %67 = tpu.matmul %64, %66, %cst_61 {dimension_numbers = #tpu.dot_dimension_numbers<[1], [0], [0], [1], [0, 0, 1, 1], [], []>} : vector<96x4xf32>, vector<4x128xf32>, vector<96x128xf32> -> vector<96x128xf32>
    %68 = vector.broadcast %0 : vector<96x1xf32> to vector<96x128xf32>
    %69 = arith.addf %67, %68 : vector<96x128xf32>
    %c7_62 = arith.constant 7 : index
    %c0_63 = arith.constant 0 : index
    %c0_64 = arith.constant 0 : index
    %70 = vector.load %arg6[%c7_62, %c0_63, %c0_64] : memref<16x96x128xf32, #tpu.memory_space<vmem>>, vector<1x96x128xf32>
    %71 = vector.shape_cast %70 : vector<1x96x128xf32> to vector<96x128xf32>
    %72 = vector.shape_cast %69 : vector<96x128xf32> to vector<1x96x128xf32>
    tpu.vector_store %arg6[%c7_62, %c0_63, %c0_64], %72 {strides = array<i32>} : memref<16x96x128xf32, #tpu.memory_space<vmem>>, vector<1x96x128xf32>,
    %c0_65 = arith.constant 0 : index
    %c0_66 = arith.constant 0 : index
    %73 = vector.load %arg2[%c0_65, %c0_66] : memref<96x4xf32, #tpu.memory_space<vmem>>, vector<96x4xf32>
    %c8 = arith.constant 8 : index
    %c0_67 = arith.constant 0 : index
    %c0_68 = arith.constant 0 : index
    %74 = vector.load %arg1[%c8, %c0_67, %c0_68] : memref<16x4x128xf32, #tpu.memory_space<vmem>>, vector<1x4x128xf32>
    %75 = vector.shape_cast %74 : vector<1x4x128xf32> to vector<4x128xf32>
    %cst_69 = arith.constant dense<0.000000e+00> : vector<96x128xf32>
    %76 = tpu.matmul %73, %75, %cst_69 {dimension_numbers = #tpu.dot_dimension_numbers<[1], [0], [0], [1], [0, 0, 1, 1], [], []>} : vector<96x4xf32>, vector<4x128xf32>, vector<96x128xf32> -> vector<96x128xf32>
    %77 = vector.broadcast %0 : vector<96x1xf32> to vector<96x128xf32>
    %78 = arith.addf %76, %77 : vector<96x128xf32>
    %c8_70 = arith.constant 8 : index
    %c0_71 = arith.constant 0 : index
    %c0_72 = arith.constant 0 : index
    %79 = vector.load %arg6[%c8_70, %c0_71, %c0_72] : memref<16x96x128xf32, #tpu.memory_space<vmem>>, vector<1x96x128xf32>
    %80 = vector.shape_cast %79 : vector<1x96x128xf32> to vector<96x128xf32>
    %81 = vector.shape_cast %78 : vector<96x128xf32> to vector<1x96x128xf32>
    tpu.vector_store %arg6[%c8_70, %c0_71, %c0_72], %81 {strides = array<i32>} : memref<16x96x128xf32, #tpu.memory_space<vmem>>, vector<1x96x128xf32>,
    %c0_73 = arith.constant 0 : index
    %c0_74 = arith.constant 0 : index
    %82 = vector.load %arg2[%c0_73, %c0_74] : memref<96x4xf32, #tpu.memory_space<vmem>>, vector<96x4xf32>
    %c9 = arith.constant 9 : index
    %c0_75 = arith.constant 0 : index
    %c0_76 = arith.constant 0 : index
    %83 = vector.load %arg1[%c9, %c0_75, %c0_76] : memref<16x4x128xf32, #tpu.memory_space<vmem>>, vector<1x4x128xf32>
    %84 = vector.shape_cast %83 : vector<1x4x128xf32> to vector<4x128xf32>
    %cst_77 = arith.constant dense<0.000000e+00> : vector<96x128xf32>
    %85 = tpu.matmul %82, %84, %cst_77 {dimension_numbers = #tpu.dot_dimension_numbers<[1], [0], [0], [1], [0, 0, 1, 1], [], []>} : vector<96x4xf32>, vector<4x128xf32>, vector<96x128xf32> -> vector<96x128xf32>
    %86 = vector.broadcast %0 : vector<96x1xf32> to vector<96x128xf32>
    %87 = arith.addf %85, %86 : vector<96x128xf32>
    %c9_78 = arith.constant 9 : index
    %c0_79 = arith.constant 0 : index
    %c0_80 = arith.constant 0 : index
    %88 = vector.load %arg6[%c9_78, %c0_79, %c0_80] : memref<16x96x128xf32, #tpu.memory_space<vmem>>, vector<1x96x128xf32>
    %89 = vector.shape_cast %88 : vector<1x96x128xf32> to vector<96x128xf32>
    %90 = vector.shape_cast %87 : vector<96x128xf32> to vector<1x96x128xf32>
    tpu.vector_store %arg6[%c9_78, %c0_79, %c0_80], %90 {strides = array<i32>} : memref<16x96x128xf32, #tpu.memory_space<vmem>>, vector<1x96x128xf32>,
    %c0_81 = arith.constant 0 : index
    %c0_82 = arith.constant 0 : index
    %91 = vector.load %arg2[%c0_81, %c0_82] : memref<96x4xf32, #tpu.memory_space<vmem>>, vector<96x4xf32>
    %c10 = arith.constant 10 : index
    %c0_83 = arith.constant 0 : index
    %c0_84 = arith.constant 0 : index
    %92 = vector.load %arg1[%c10, %c0_83, %c0_84] : memref<16x4x128xf32, #tpu.memory_space<vmem>>, vector<1x4x128xf32>
    %93 = vector.shape_cast %92 : vector<1x4x128xf32> to vector<4x128xf32>
    %cst_85 = arith.constant dense<0.000000e+00> : vector<96x128xf32>
    %94 = tpu.matmul %91, %93, %cst_85 {dimension_numbers = #tpu.dot_dimension_numbers<[1], [0], [0], [1], [0, 0, 1, 1], [], []>} : vector<96x4xf32>, vector<4x128xf32>, vector<96x128xf32> -> vector<96x128xf32>
    %95 = vector.broadcast %0 : vector<96x1xf32> to vector<96x128xf32>
    %96 = arith.addf %94, %95 : vector<96x128xf32>
    %c10_86 = arith.constant 10 : index
    %c0_87 = arith.constant 0 : index
    %c0_88 = arith.constant 0 : index
    %97 = vector.load %arg6[%c10_86, %c0_87, %c0_88] : memref<16x96x128xf32, #tpu.memory_space<vmem>>, vector<1x96x128xf32>
    %98 = vector.shape_cast %97 : vector<1x96x128xf32> to vector<96x128xf32>
    %99 = vector.shape_cast %96 : vector<96x128xf32> to vector<1x96x128xf32>
    tpu.vector_store %arg6[%c10_86, %c0_87, %c0_88], %99 {strides = array<i32>} : memref<16x96x128xf32, #tpu.memory_space<vmem>>, vector<1x96x128xf32>,
    %c0_89 = arith.constant 0 : index
    %c0_90 = arith.constant 0 : index
    %100 = vector.load %arg2[%c0_89, %c0_90] : memref<96x4xf32, #tpu.memory_space<vmem>>, vector<96x4xf32>
    %c11 = arith.constant 11 : index
    %c0_91 = arith.constant 0 : index
    %c0_92 = arith.constant 0 : index
    %101 = vector.load %arg1[%c11, %c0_91, %c0_92] : memref<16x4x128xf32, #tpu.memory_space<vmem>>, vector<1x4x128xf32>
    %102 = vector.shape_cast %101 : vector<1x4x128xf32> to vector<4x128xf32>
    %cst_93 = arith.constant dense<0.000000e+00> : vector<96x128xf32>
    %103 = tpu.matmul %100, %102, %cst_93 {dimension_numbers = #tpu.dot_dimension_numbers<[1], [0], [0], [1], [0, 0, 1, 1], [], []>} : vector<96x4xf32>, vector<4x128xf32>, vector<96x128xf32> -> vector<96x128xf32>
    %104 = vector.broadcast %0 : vector<96x1xf32> to vector<96x128xf32>
    %105 = arith.addf %103, %104 : vector<96x128xf32>
    %c11_94 = arith.constant 11 : index
    %c0_95 = arith.constant 0 : index
    %c0_96 = arith.constant 0 : index
    %106 = vector.load %arg6[%c11_94, %c0_95, %c0_96] : memref<16x96x128xf32, #tpu.memory_space<vmem>>, vector<1x96x128xf32>
    %107 = vector.shape_cast %106 : vector<1x96x128xf32> to vector<96x128xf32>
    %108 = vector.shape_cast %105 : vector<96x128xf32> to vector<1x96x128xf32>
    tpu.vector_store %arg6[%c11_94, %c0_95, %c0_96], %108 {strides = array<i32>} : memref<16x96x128xf32, #tpu.memory_space<vmem>>, vector<1x96x128xf32>,
    %c0_97 = arith.constant 0 : index
    %c0_98 = arith.constant 0 : index
    %109 = vector.load %arg2[%c0_97, %c0_98] : memref<96x4xf32, #tpu.memory_space<vmem>>, vector<96x4xf32>
    %c12 = arith.constant 12 : index
    %c0_99 = arith.constant 0 : index
    %c0_100 = arith.constant 0 : index
    %110 = vector.load %arg1[%c12, %c0_99, %c0_100] : memref<16x4x128xf32, #tpu.memory_space<vmem>>, vector<1x4x128xf32>
    %111 = vector.shape_cast %110 : vector<1x4x128xf32> to vector<4x128xf32>
    %cst_101 = arith.constant dense<0.000000e+00> : vector<96x128xf32>
    %112 = tpu.matmul %109, %111, %cst_101 {dimension_numbers = #tpu.dot_dimension_numbers<[1], [0], [0], [1], [0, 0, 1, 1], [], []>} : vector<96x4xf32>, vector<4x128xf32>, vector<96x128xf32> -> vector<96x128xf32>
    %113 = vector.broadcast %0 : vector<96x1xf32> to vector<96x128xf32>
    %114 = arith.addf %112, %113 : vector<96x128xf32>
    %c12_102 = arith.constant 12 : index
    %c0_103 = arith.constant 0 : index
    %c0_104 = arith.constant 0 : index
    %115 = vector.load %arg6[%c12_102, %c0_103, %c0_104] : memref<16x96x128xf32, #tpu.memory_space<vmem>>, vector<1x96x128xf32>
    %116 = vector.shape_cast %115 : vector<1x96x128xf32> to vector<96x128xf32>
    %117 = vector.shape_cast %114 : vector<96x128xf32> to vector<1x96x128xf32>
    tpu.vector_store %arg6[%c12_102, %c0_103, %c0_104], %117 {strides = array<i32>} : memref<16x96x128xf32, #tpu.memory_space<vmem>>, vector<1x96x128xf32>,
    %c0_105 = arith.constant 0 : index
    %c0_106 = arith.constant 0 : index
    %118 = vector.load %arg2[%c0_105, %c0_106] : memref<96x4xf32, #tpu.memory_space<vmem>>, vector<96x4xf32>
    %c13 = arith.constant 13 : index
    %c0_107 = arith.constant 0 : index
    %c0_108 = arith.constant 0 : index
    %119 = vector.load %arg1[%c13, %c0_107, %c0_108] : memref<16x4x128xf32, #tpu.memory_space<vmem>>, vector<1x4x128xf32>
    %120 = vector.shape_cast %119 : vector<1x4x128xf32> to vector<4x128xf32>
    %cst_109 = arith.constant dense<0.000000e+00> : vector<96x128xf32>
    %121 = tpu.matmul %118, %120, %cst_109 {dimension_numbers = #tpu.dot_dimension_numbers<[1], [0], [0], [1], [0, 0, 1, 1], [], []>} : vector<96x4xf32>, vector<4x128xf32>, vector<96x128xf32> -> vector<96x128xf32>
    %122 = vector.broadcast %0 : vector<96x1xf32> to vector<96x128xf32>
    %123 = arith.addf %121, %122 : vector<96x128xf32>
    %c13_110 = arith.constant 13 : index
    %c0_111 = arith.constant 0 : index
    %c0_112 = arith.constant 0 : index
    %124 = vector.load %arg6[%c13_110, %c0_111, %c0_112] : memref<16x96x128xf32, #tpu.memory_space<vmem>>, vector<1x96x128xf32>
    %125 = vector.shape_cast %124 : vector<1x96x128xf32> to vector<96x128xf32>
    %126 = vector.shape_cast %123 : vector<96x128xf32> to vector<1x96x128xf32>
    tpu.vector_store %arg6[%c13_110, %c0_111, %c0_112], %126 {strides = array<i32>} : memref<16x96x128xf32, #tpu.memory_space<vmem>>, vector<1x96x128xf32>,
    %c0_113 = arith.constant 0 : index
    %c0_114 = arith.constant 0 : index
    %127 = vector.load %arg2[%c0_113, %c0_114] : memref<96x4xf32, #tpu.memory_space<vmem>>, vector<96x4xf32>
    %c14 = arith.constant 14 : index
    %c0_115 = arith.constant 0 : index
    %c0_116 = arith.constant 0 : index
    %128 = vector.load %arg1[%c14, %c0_115, %c0_116] : memref<16x4x128xf32, #tpu.memory_space<vmem>>, vector<1x4x128xf32>
    %129 = vector.shape_cast %128 : vector<1x4x128xf32> to vector<4x128xf32>
    %cst_117 = arith.constant dense<0.000000e+00> : vector<96x128xf32>
    %130 = tpu.matmul %127, %129, %cst_117 {dimension_numbers = #tpu.dot_dimension_numbers<[1], [0], [0], [1], [0, 0, 1, 1], [], []>} : vector<96x4xf32>, vector<4x128xf32>, vector<96x128xf32> -> vector<96x128xf32>
    %131 = vector.broadcast %0 : vector<96x1xf32> to vector<96x128xf32>
    %132 = arith.addf %130, %131 : vector<96x128xf32>
    %c14_118 = arith.constant 14 : index
    %c0_119 = arith.constant 0 : index
    %c0_120 = arith.constant 0 : index
    %133 = vector.load %arg6[%c14_118, %c0_119, %c0_120] : memref<16x96x128xf32, #tpu.memory_space<vmem>>, vector<1x96x128xf32>
    %134 = vector.shape_cast %133 : vector<1x96x128xf32> to vector<96x128xf32>
    %135 = vector.shape_cast %132 : vector<96x128xf32> to vector<1x96x128xf32>
    tpu.vector_store %arg6[%c14_118, %c0_119, %c0_120], %135 {strides = array<i32>} : memref<16x96x128xf32, #tpu.memory_space<vmem>>, vector<1x96x128xf32>,
    %c0_121 = arith.constant 0 : index
    %c0_122 = arith.constant 0 : index
    %136 = vector.load %arg2[%c0_121, %c0_122] : memref<96x4xf32, #tpu.memory_space<vmem>>, vector<96x4xf32>
    %c15 = arith.constant 15 : index
    %c0_123 = arith.constant 0 : index
    %c0_124 = arith.constant 0 : index
    %137 = vector.load %arg1[%c15, %c0_123, %c0_124] : memref<16x4x128xf32, #tpu.memory_space<vmem>>, vector<1x4x128xf32>
    %138 = vector.shape_cast %137 : vector<1x4x128xf32> to vector<4x128xf32>
    %cst_125 = arith.constant dense<0.000000e+00> : vector<96x128xf32>
    %139 = tpu.matmul %136, %138, %cst_125 {dimension_numbers = #tpu.dot_dimension_numbers<[1], [0], [0], [1], [0, 0, 1, 1], [], []>} : vector<96x4xf32>, vector<4x128xf32>, vector<96x128xf32> -> vector<96x128xf32>
    %140 = vector.broadcast %0 : vector<96x1xf32> to vector<96x128xf32>
    %141 = arith.addf %139, %140 : vector<96x128xf32>
    %c15_126 = arith.constant 15 : index
    %c0_127 = arith.constant 0 : index
    %c0_128 = arith.constant 0 : index
    %142 = vector.load %arg6[%c15_126, %c0_127, %c0_128] : memref<16x96x128xf32, #tpu.memory_space<vmem>>, vector<1x96x128xf32>
    %143 = vector.shape_cast %142 : vector<1x96x128xf32> to vector<96x128xf32>
    %144 = vector.shape_cast %141 : vector<96x128xf32> to vector<1x96x128xf32>
    tpu.vector_store %arg6[%c15_126, %c0_127, %c0_128], %144 {strides = array<i32>} : memref<16x96x128xf32, #tpu.memory_space<vmem>>, vector<1x96x128xf32>,
    %c0_129 = arith.constant 0 : index
    %c0_130 = arith.constant 0 : index
    %145 = vector.load %arg3[%c0_129, %c0_130] : memref<96x16xf32, #tpu.memory_space<vmem>>, vector<48x16xf32>
    %c48 = arith.constant 48 : index
    %c0_131 = arith.constant 0 : index
    %146 = vector.load %arg3[%c48, %c0_131] : memref<96x16xf32, #tpu.memory_space<vmem>>, vector<48x16xf32>
    %c96 = arith.constant 96 : index
    %c0_132 = arith.constant 0 : index
    %147 = vector.load %arg4[%c96, %c0_132] : memref<128x1xf32, #tpu.memory_space<vmem>>, vector<16x1xf32>
    %c112 = arith.constant 112 : index
    %c0_133 = arith.constant 0 : index
    %148 = vector.load %arg4[%c112, %c0_133] : memref<128x1xf32, #tpu.memory_space<vmem>>, vector<16x1xf32>
    %cst_134 = arith.constant 0.000000e+00 : f32
    %149 = vector.broadcast %cst_134 : f32 to vector<16x128xf32>
    %cst_135 = arith.constant 0.000000e+00 : f32
    %150 = vector.broadcast %cst_135 : f32 to vector<16x128xf32>
    %c0_136 = arith.constant 0 : index
    %c0_137 = arith.constant 0 : index
    %c0_138 = arith.constant 0 : index
    %151 = vector.load %arg6[%c0_136, %c0_137, %c0_138] : memref<16x96x128xf32, #tpu.memory_space<vmem>>, vector<1x48x128xf32>
    %152 = vector.shape_cast %151 : vector<1x48x128xf32> to vector<48x128xf32>
    %cst_139 = arith.constant dense<0.000000e+00> : vector<48x128xf32>
    %153 = tpu.matmul %145, %149, %cst_139 {dimension_numbers = #tpu.dot_dimension_numbers<[1], [0], [0], [1], [0, 0, 1, 1], [], []>} : vector<48x16xf32>, vector<16x128xf32>, vector<48x128xf32> -> vector<48x128xf32>
    %154 = vector.extract_strided_slice %152 {offsets = [0, 0], sizes = [16, 128], strides = [1, 1]} : vector<48x128xf32> to vector<16x128xf32>
    %155 = vector.extract_strided_slice %153 {offsets = [0, 0], sizes = [16, 128], strides = [1, 1]} : vector<48x128xf32> to vector<16x128xf32>
    %156 = arith.addf %154, %155 : vector<16x128xf32>
    %cst_140 = arith.constant 5.000000e-01 : f32
    %157 = vector.broadcast %cst_140 : f32 to vector<16x128xf32>
    %158 = arith.mulf %157, %156 : vector<16x128xf32>
    %159 = math.tanh %158 : vector<16x128xf32>
    %cst_141 = arith.constant 5.000000e-01 : f32
    %160 = vector.broadcast %cst_141 : f32 to vector<16x128xf32>
    %161 = arith.mulf %160, %159 : vector<16x128xf32>
    %cst_142 = arith.constant 5.000000e-01 : f32
    %162 = vector.broadcast %cst_142 : f32 to vector<16x128xf32>
    %163 = arith.addf %161, %162 : vector<16x128xf32>
    %164 = vector.extract_strided_slice %152 {offsets = [16, 0], sizes = [16, 128], strides = [1, 1]} : vector<48x128xf32> to vector<16x128xf32>
    %165 = vector.extract_strided_slice %153 {offsets = [16, 0], sizes = [16, 128], strides = [1, 1]} : vector<48x128xf32> to vector<16x128xf32>
    %166 = arith.addf %164, %165 : vector<16x128xf32>
    %cst_143 = arith.constant 5.000000e-01 : f32
    %167 = vector.broadcast %cst_143 : f32 to vector<16x128xf32>
    %168 = arith.mulf %167, %166 : vector<16x128xf32>
    %169 = math.tanh %168 : vector<16x128xf32>
    %cst_144 = arith.constant 5.000000e-01 : f32
    %170 = vector.broadcast %cst_144 : f32 to vector<16x128xf32>
    %171 = arith.mulf %170, %169 : vector<16x128xf32>
    %cst_145 = arith.constant 5.000000e-01 : f32
    %172 = vector.broadcast %cst_145 : f32 to vector<16x128xf32>
    %173 = arith.addf %171, %172 : vector<16x128xf32>
    %174 = vector.extract_strided_slice %152 {offsets = [32, 0], sizes = [16, 128], strides = [1, 1]} : vector<48x128xf32> to vector<16x128xf32>
    %175 = vector.extract_strided_slice %153 {offsets = [32, 0], sizes = [16, 128], strides = [1, 1]} : vector<48x128xf32> to vector<16x128xf32>
    %176 = vector.broadcast %147 : vector<16x1xf32> to vector<16x128xf32>
    %177 = arith.addf %175, %176 : vector<16x128xf32>
    %178 = arith.mulf %163, %177 : vector<16x128xf32>
    %179 = arith.addf %174, %178 : vector<16x128xf32>
    %180 = math.tanh %179 : vector<16x128xf32>
    %cst_146 = arith.constant 1.000000e+00 : f32
    %181 = vector.broadcast %cst_146 : f32 to vector<16x128xf32>
    %182 = arith.subf %181, %173 : vector<16x128xf32>
    %183 = arith.mulf %182, %180 : vector<16x128xf32>
    %184 = arith.mulf %173, %149 : vector<16x128xf32>
    %185 = arith.addf %183, %184 : vector<16x128xf32>
    %c15_147 = arith.constant 15 : index
    %c48_148 = arith.constant 48 : index
    %c0_149 = arith.constant 0 : index
    %186 = vector.load %arg6[%c15_147, %c48_148, %c0_149] : memref<16x96x128xf32, #tpu.memory_space<vmem>>, vector<1x48x128xf32>
    %187 = vector.shape_cast %186 : vector<1x48x128xf32> to vector<48x128xf32>
    %cst_150 = arith.constant dense<0.000000e+00> : vector<48x128xf32>
    %188 = tpu.matmul %146, %150, %cst_150 {dimension_numbers = #tpu.dot_dimension_numbers<[1], [0], [0], [1], [0, 0, 1, 1], [], []>} : vector<48x16xf32>, vector<16x128xf32>, vector<48x128xf32> -> vector<48x128xf32>
    %189 = vector.extract_strided_slice %187 {offsets = [0, 0], sizes = [16, 128], strides = [1, 1]} : vector<48x128xf32> to vector<16x128xf32>
    %190 = vector.extract_strided_slice %188 {offsets = [0, 0], sizes = [16, 128], strides = [1, 1]} : vector<48x128xf32> to vector<16x128xf32>
    %191 = arith.addf %189, %190 : vector<16x128xf32>
    %cst_151 = arith.constant 5.000000e-01 : f32
    %192 = vector.broadcast %cst_151 : f32 to vector<16x128xf32>
    %193 = arith.mulf %192, %191 : vector<16x128xf32>
    %194 = math.tanh %193 : vector<16x128xf32>
    %cst_152 = arith.constant 5.000000e-01 : f32
    %195 = vector.broadcast %cst_152 : f32 to vector<16x128xf32>
    %196 = arith.mulf %195, %194 : vector<16x128xf32>
    %cst_153 = arith.constant 5.000000e-01 : f32
    %197 = vector.broadcast %cst_153 : f32 to vector<16x128xf32>
    %198 = arith.addf %196, %197 : vector<16x128xf32>
    %199 = vector.extract_strided_slice %187 {offsets = [16, 0], sizes = [16, 128], strides = [1, 1]} : vector<48x128xf32> to vector<16x128xf32>
    %200 = vector.extract_strided_slice %188 {offsets = [16, 0], sizes = [16, 128], strides = [1, 1]} : vector<48x128xf32> to vector<16x128xf32>
    %201 = arith.addf %199, %200 : vector<16x128xf32>
    %cst_154 = arith.constant 5.000000e-01 : f32
    %202 = vector.broadcast %cst_154 : f32 to vector<16x128xf32>
    %203 = arith.mulf %202, %201 : vector<16x128xf32>
    %204 = math.tanh %203 : vector<16x128xf32>
    %cst_155 = arith.constant 5.000000e-01 : f32
    %205 = vector.broadcast %cst_155 : f32 to vector<16x128xf32>
    %206 = arith.mulf %205, %204 : vector<16x128xf32>
    %cst_156 = arith.constant 5.000000e-01 : f32
    %207 = vector.broadcast %cst_156 : f32 to vector<16x128xf32>
    %208 = arith.addf %206, %207 : vector<16x128xf32>
    %209 = vector.extract_strided_slice %187 {offsets = [32, 0], sizes = [16, 128], strides = [1, 1]} : vector<48x128xf32> to vector<16x128xf32>
    %210 = vector.extract_strided_slice %188 {offsets = [32, 0], sizes = [16, 128], strides = [1, 1]} : vector<48x128xf32> to vector<16x128xf32>
    %211 = vector.broadcast %148 : vector<16x1xf32> to vector<16x128xf32>
    %212 = arith.addf %210, %211 : vector<16x128xf32>
    %213 = arith.mulf %198, %212 : vector<16x128xf32>
    %214 = arith.addf %209, %213 : vector<16x128xf32>
    %215 = math.tanh %214 : vector<16x128xf32>
    %cst_157 = arith.constant 1.000000e+00 : f32
    %216 = vector.broadcast %cst_157 : f32 to vector<16x128xf32>
    %217 = arith.subf %216, %208 : vector<16x128xf32>
    %218 = arith.mulf %217, %215 : vector<16x128xf32>
    %219 = arith.mulf %208, %150 : vector<16x128xf32>
    %220 = arith.addf %218, %219 : vector<16x128xf32>
    %c0_158 = arith.constant 0 : index
    %c0_159 = arith.constant 0 : index
    %c0_160 = arith.constant 0 : index
    %221 = vector.load %arg5[%c0_158, %c0_159, %c0_160] : memref<16x32x128xf32, #tpu.memory_space<vmem>>, vector<1x16x128xf32>
    %222 = vector.shape_cast %221 : vector<1x16x128xf32> to vector<16x128xf32>
    %223 = vector.shape_cast %185 : vector<16x128xf32> to vector<1x16x128xf32>
    tpu.vector_store %arg5[%c0_158, %c0_159, %c0_160], %223 {strides = array<i32>} : memref<16x32x128xf32, #tpu.memory_space<vmem>>, vector<1x16x128xf32>,
    %c15_161 = arith.constant 15 : index
    %c16 = arith.constant 16 : index
    %c0_162 = arith.constant 0 : index
    %224 = vector.load %arg5[%c15_161, %c16, %c0_162] : memref<16x32x128xf32, #tpu.memory_space<vmem>>, vector<1x16x128xf32>
    %225 = vector.shape_cast %224 : vector<1x16x128xf32> to vector<16x128xf32>
    %226 = vector.shape_cast %220 : vector<16x128xf32> to vector<1x16x128xf32>
    tpu.vector_store %arg5[%c15_161, %c16, %c0_162], %226 {strides = array<i32>} : memref<16x32x128xf32, #tpu.memory_space<vmem>>, vector<1x16x128xf32>,
    %c1_163 = arith.constant 1 : index
    %c0_164 = arith.constant 0 : index
    %c0_165 = arith.constant 0 : index
    %227 = vector.load %arg6[%c1_163, %c0_164, %c0_165] : memref<16x96x128xf32, #tpu.memory_space<vmem>>, vector<1x48x128xf32>
    %228 = vector.shape_cast %227 : vector<1x48x128xf32> to vector<48x128xf32>
    %cst_166 = arith.constant dense<0.000000e+00> : vector<48x128xf32>
    %229 = tpu.matmul %145, %185, %cst_166 {dimension_numbers = #tpu.dot_dimension_numbers<[1], [0], [0], [1], [0, 0, 1, 1], [], []>} : vector<48x16xf32>, vector<16x128xf32>, vector<48x128xf32> -> vector<48x128xf32>
    %230 = vector.extract_strided_slice %228 {offsets = [0, 0], sizes = [16, 128], strides = [1, 1]} : vector<48x128xf32> to vector<16x128xf32>
    %231 = vector.extract_strided_slice %229 {offsets = [0, 0], sizes = [16, 128], strides = [1, 1]} : vector<48x128xf32> to vector<16x128xf32>
    %232 = arith.addf %230, %231 : vector<16x128xf32>
    %cst_167 = arith.constant 5.000000e-01 : f32
    %233 = vector.broadcast %cst_167 : f32 to vector<16x128xf32>
    %234 = arith.mulf %233, %232 : vector<16x128xf32>
    %235 = math.tanh %234 : vector<16x128xf32>
    %cst_168 = arith.constant 5.000000e-01 : f32
    %236 = vector.broadcast %cst_168 : f32 to vector<16x128xf32>
    %237 = arith.mulf %236, %235 : vector<16x128xf32>
    %cst_169 = arith.constant 5.000000e-01 : f32
    %238 = vector.broadcast %cst_169 : f32 to vector<16x128xf32>
    %239 = arith.addf %237, %238 : vector<16x128xf32>
    %240 = vector.extract_strided_slice %228 {offsets = [16, 0], sizes = [16, 128], strides = [1, 1]} : vector<48x128xf32> to vector<16x128xf32>
    %241 = vector.extract_strided_slice %229 {offsets = [16, 0], sizes = [16, 128], strides = [1, 1]} : vector<48x128xf32> to vector<16x128xf32>
    %242 = arith.addf %240, %241 : vector<16x128xf32>
    %cst_170 = arith.constant 5.000000e-01 : f32
    %243 = vector.broadcast %cst_170 : f32 to vector<16x128xf32>
    %244 = arith.mulf %243, %242 : vector<16x128xf32>
    %245 = math.tanh %244 : vector<16x128xf32>
    %cst_171 = arith.constant 5.000000e-01 : f32
    %246 = vector.broadcast %cst_171 : f32 to vector<16x128xf32>
    %247 = arith.mulf %246, %245 : vector<16x128xf32>
    %cst_172 = arith.constant 5.000000e-01 : f32
    %248 = vector.broadcast %cst_172 : f32 to vector<16x128xf32>
    %249 = arith.addf %247, %248 : vector<16x128xf32>
    %250 = vector.extract_strided_slice %228 {offsets = [32, 0], sizes = [16, 128], strides = [1, 1]} : vector<48x128xf32> to vector<16x128xf32>
    %251 = vector.extract_strided_slice %229 {offsets = [32, 0], sizes = [16, 128], strides = [1, 1]} : vector<48x128xf32> to vector<16x128xf32>
    %252 = vector.broadcast %147 : vector<16x1xf32> to vector<16x128xf32>
    %253 = arith.addf %251, %252 : vector<16x128xf32>
    %254 = arith.mulf %239, %253 : vector<16x128xf32>
    %255 = arith.addf %250, %254 : vector<16x128xf32>
    %256 = math.tanh %255 : vector<16x128xf32>
    %cst_173 = arith.constant 1.000000e+00 : f32
    %257 = vector.broadcast %cst_173 : f32 to vector<16x128xf32>
    %258 = arith.subf %257, %249 : vector<16x128xf32>
    %259 = arith.mulf %258, %256 : vector<16x128xf32>
    %260 = arith.mulf %249, %185 : vector<16x128xf32>
    %261 = arith.addf %259, %260 : vector<16x128xf32>
    %c14_174 = arith.constant 14 : index
    %c48_175 = arith.constant 48 : index
    %c0_176 = arith.constant 0 : index
    %262 = vector.load %arg6[%c14_174, %c48_175, %c0_176] : memref<16x96x128xf32, #tpu.memory_space<vmem>>, vector<1x48x128xf32>
    %263 = vector.shape_cast %262 : vector<1x48x128xf32> to vector<48x128xf32>
    %cst_177 = arith.constant dense<0.000000e+00> : vector<48x128xf32>
    %264 = tpu.matmul %146, %220, %cst_177 {dimension_numbers = #tpu.dot_dimension_numbers<[1], [0], [0], [1], [0, 0, 1, 1], [], []>} : vector<48x16xf32>, vector<16x128xf32>, vector<48x128xf32> -> vector<48x128xf32>
    %265 = vector.extract_strided_slice %263 {offsets = [0, 0], sizes = [16, 128], strides = [1, 1]} : vector<48x128xf32> to vector<16x128xf32>
    %266 = vector.extract_strided_slice %264 {offsets = [0, 0], sizes = [16, 128], strides = [1, 1]} : vector<48x128xf32> to vector<16x128xf32>
    %267 = arith.addf %265, %266 : vector<16x128xf32>
    %cst_178 = arith.constant 5.000000e-01 : f32
    %268 = vector.broadcast %cst_178 : f32 to vector<16x128xf32>
    %269 = arith.mulf %268, %267 : vector<16x128xf32>
    %270 = math.tanh %269 : vector<16x128xf32>
    %cst_179 = arith.constant 5.000000e-01 : f32
    %271 = vector.broadcast %cst_179 : f32 to vector<16x128xf32>
    %272 = arith.mulf %271, %270 : vector<16x128xf32>
    %cst_180 = arith.constant 5.000000e-01 : f32
    %273 = vector.broadcast %cst_180 : f32 to vector<16x128xf32>
    %274 = arith.addf %272, %273 : vector<16x128xf32>
    %275 = vector.extract_strided_slice %263 {offsets = [16, 0], sizes = [16, 128], strides = [1, 1]} : vector<48x128xf32> to vector<16x128xf32>
    %276 = vector.extract_strided_slice %264 {offsets = [16, 0], sizes = [16, 128], strides = [1, 1]} : vector<48x128xf32> to vector<16x128xf32>
    %277 = arith.addf %275, %276 : vector<16x128xf32>
    %cst_181 = arith.constant 5.000000e-01 : f32
    %278 = vector.broadcast %cst_181 : f32 to vector<16x128xf32>
    %279 = arith.mulf %278, %277 : vector<16x128xf32>
    %280 = math.tanh %279 : vector<16x128xf32>
    %cst_182 = arith.constant 5.000000e-01 : f32
    %281 = vector.broadcast %cst_182 : f32 to vector<16x128xf32>
    %282 = arith.mulf %281, %280 : vector<16x128xf32>
    %cst_183 = arith.constant 5.000000e-01 : f32
    %283 = vector.broadcast %cst_183 : f32 to vector<16x128xf32>
    %284 = arith.addf %282, %283 : vector<16x128xf32>
    %285 = vector.extract_strided_slice %263 {offsets = [32, 0], sizes = [16, 128], strides = [1, 1]} : vector<48x128xf32> to vector<16x128xf32>
    %286 = vector.extract_strided_slice %264 {offsets = [32, 0], sizes = [16, 128], strides = [1, 1]} : vector<48x128xf32> to vector<16x128xf32>
    %287 = vector.broadcast %148 : vector<16x1xf32> to vector<16x128xf32>
    %288 = arith.addf %286, %287 : vector<16x128xf32>
    %289 = arith.mulf %274, %288 : vector<16x128xf32>
    %290 = arith.addf %285, %289 : vector<16x128xf32>
    %291 = math.tanh %290 : vector<16x128xf32>
    %cst_184 = arith.constant 1.000000e+00 : f32
    %292 = vector.broadcast %cst_184 : f32 to vector<16x128xf32>
    %293 = arith.subf %292, %284 : vector<16x128xf32>
    %294 = arith.mulf %293, %291 : vector<16x128xf32>
    %295 = arith.mulf %284, %220 : vector<16x128xf32>
    %296 = arith.addf %294, %295 : vector<16x128xf32>
    %c1_185 = arith.constant 1 : index
    %c0_186 = arith.constant 0 : index
    %c0_187 = arith.constant 0 : index
    %297 = vector.load %arg5[%c1_185, %c0_186, %c0_187] : memref<16x32x128xf32, #tpu.memory_space<vmem>>, vector<1x16x128xf32>
    %298 = vector.shape_cast %297 : vector<1x16x128xf32> to vector<16x128xf32>
    %299 = vector.shape_cast %261 : vector<16x128xf32> to vector<1x16x128xf32>
    tpu.vector_store %arg5[%c1_185, %c0_186, %c0_187], %299 {strides = array<i32>} : memref<16x32x128xf32, #tpu.memory_space<vmem>>, vector<1x16x128xf32>,
    %c14_188 = arith.constant 14 : index
    %c16_189 = arith.constant 16 : index
    %c0_190 = arith.constant 0 : index
    %300 = vector.load %arg5[%c14_188, %c16_189, %c0_190] : memref<16x32x128xf32, #tpu.memory_space<vmem>>, vector<1x16x128xf32>
    %301 = vector.shape_cast %300 : vector<1x16x128xf32> to vector<16x128xf32>
    %302 = vector.shape_cast %296 : vector<16x128xf32> to vector<1x16x128xf32>
    tpu.vector_store %arg5[%c14_188, %c16_189, %c0_190], %302 {strides = array<i32>} : memref<16x32x128xf32, #tpu.memory_space<vmem>>, vector<1x16x128xf32>,
    %c2_191 = arith.constant 2 : index
    %c0_192 = arith.constant 0 : index
    %c0_193 = arith.constant 0 : index
    %303 = vector.load %arg6[%c2_191, %c0_192, %c0_193] : memref<16x96x128xf32, #tpu.memory_space<vmem>>, vector<1x48x128xf32>
    %304 = vector.shape_cast %303 : vector<1x48x128xf32> to vector<48x128xf32>
    %cst_194 = arith.constant dense<0.000000e+00> : vector<48x128xf32>
    %305 = tpu.matmul %145, %261, %cst_194 {dimension_numbers = #tpu.dot_dimension_numbers<[1], [0], [0], [1], [0, 0, 1, 1], [], []>} : vector<48x16xf32>, vector<16x128xf32>, vector<48x128xf32> -> vector<48x128xf32>
    %306 = vector.extract_strided_slice %304 {offsets = [0, 0], sizes = [16, 128], strides = [1, 1]} : vector<48x128xf32> to vector<16x128xf32>
    %307 = vector.extract_strided_slice %305 {offsets = [0, 0], sizes = [16, 128], strides = [1, 1]} : vector<48x128xf32> to vector<16x128xf32>
    %308 = arith.addf %306, %307 : vector<16x128xf32>
    %cst_195 = arith.constant 5.000000e-01 : f32
    %309 = vector.broadcast %cst_195 : f32 to vector<16x128xf32>
    %310 = arith.mulf %309, %308 : vector<16x128xf32>
    %311 = math.tanh %310 : vector<16x128xf32>
    %cst_196 = arith.constant 5.000000e-01 : f32
    %312 = vector.broadcast %cst_196 : f32 to vector<16x128xf32>
    %313 = arith.mulf %312, %311 : vector<16x128xf32>
    %cst_197 = arith.constant 5.000000e-01 : f32
    %314 = vector.broadcast %cst_197 : f32 to vector<16x128xf32>
    %315 = arith.addf %313, %314 : vector<16x128xf32>
    %316 = vector.extract_strided_slice %304 {offsets = [16, 0], sizes = [16, 128], strides = [1, 1]} : vector<48x128xf32> to vector<16x128xf32>
    %317 = vector.extract_strided_slice %305 {offsets = [16, 0], sizes = [16, 128], strides = [1, 1]} : vector<48x128xf32> to vector<16x128xf32>
    %318 = arith.addf %316, %317 : vector<16x128xf32>
    %cst_198 = arith.constant 5.000000e-01 : f32
    %319 = vector.broadcast %cst_198 : f32 to vector<16x128xf32>
    %320 = arith.mulf %319, %318 : vector<16x128xf32>
    %321 = math.tanh %320 : vector<16x128xf32>
    %cst_199 = arith.constant 5.000000e-01 : f32
    %322 = vector.broadcast %cst_199 : f32 to vector<16x128xf32>
    %323 = arith.mulf %322, %321 : vector<16x128xf32>
    %cst_200 = arith.constant 5.000000e-01 : f32
    %324 = vector.broadcast %cst_200 : f32 to vector<16x128xf32>
    %325 = arith.addf %323, %324 : vector<16x128xf32>
    %326 = vector.extract_strided_slice %304 {offsets = [32, 0], sizes = [16, 128], strides = [1, 1]} : vector<48x128xf32> to vector<16x128xf32>
    %327 = vector.extract_strided_slice %305 {offsets = [32, 0], sizes = [16, 128], strides = [1, 1]} : vector<48x128xf32> to vector<16x128xf32>
    %328 = vector.broadcast %147 : vector<16x1xf32> to vector<16x128xf32>
    %329 = arith.addf %327, %328 : vector<16x128xf32>
    %330 = arith.mulf %315, %329 : vector<16x128xf32>
    %331 = arith.addf %326, %330 : vector<16x128xf32>
    %332 = math.tanh %331 : vector<16x128xf32>
    %cst_201 = arith.constant 1.000000e+00 : f32
    %333 = vector.broadcast %cst_201 : f32 to vector<16x128xf32>
    %334 = arith.subf %333, %325 : vector<16x128xf32>
    %335 = arith.mulf %334, %332 : vector<16x128xf32>
    %336 = arith.mulf %325, %261 : vector<16x128xf32>
    %337 = arith.addf %335, %336 : vector<16x128xf32>
    %c13_202 = arith.constant 13 : index
    %c48_203 = arith.constant 48 : index
    %c0_204 = arith.constant 0 : index
    %338 = vector.load %arg6[%c13_202, %c48_203, %c0_204] : memref<16x96x128xf32, #tpu.memory_space<vmem>>, vector<1x48x128xf32>
    %339 = vector.shape_cast %338 : vector<1x48x128xf32> to vector<48x128xf32>
    %cst_205 = arith.constant dense<0.000000e+00> : vector<48x128xf32>
    %340 = tpu.matmul %146, %296, %cst_205 {dimension_numbers = #tpu.dot_dimension_numbers<[1], [0], [0], [1], [0, 0, 1, 1], [], []>} : vector<48x16xf32>, vector<16x128xf32>, vector<48x128xf32> -> vector<48x128xf32>
    %341 = vector.extract_strided_slice %339 {offsets = [0, 0], sizes = [16, 128], strides = [1, 1]} : vector<48x128xf32> to vector<16x128xf32>
    %342 = vector.extract_strided_slice %340 {offsets = [0, 0], sizes = [16, 128], strides = [1, 1]} : vector<48x128xf32> to vector<16x128xf32>
    %343 = arith.addf %341, %342 : vector<16x128xf32>
    %cst_206 = arith.constant 5.000000e-01 : f32
    %344 = vector.broadcast %cst_206 : f32 to vector<16x128xf32>
    %345 = arith.mulf %344, %343 : vector<16x128xf32>
    %346 = math.tanh %345 : vector<16x128xf32>
    %cst_207 = arith.constant 5.000000e-01 : f32
    %347 = vector.broadcast %cst_207 : f32 to vector<16x128xf32>
    %348 = arith.mulf %347, %346 : vector<16x128xf32>
    %cst_208 = arith.constant 5.000000e-01 : f32
    %349 = vector.broadcast %cst_208 : f32 to vector<16x128xf32>
    %350 = arith.addf %348, %349 : vector<16x128xf32>
    %351 = vector.extract_strided_slice %339 {offsets = [16, 0], sizes = [16, 128], strides = [1, 1]} : vector<48x128xf32> to vector<16x128xf32>
    %352 = vector.extract_strided_slice %340 {offsets = [16, 0], sizes = [16, 128], strides = [1, 1]} : vector<48x128xf32> to vector<16x128xf32>
    %353 = arith.addf %351, %352 : vector<16x128xf32>
    %cst_209 = arith.constant 5.000000e-01 : f32
    %354 = vector.broadcast %cst_209 : f32 to vector<16x128xf32>
    %355 = arith.mulf %354, %353 : vector<16x128xf32>
    %356 = math.tanh %355 : vector<16x128xf32>
    %cst_210 = arith.constant 5.000000e-01 : f32
    %357 = vector.broadcast %cst_210 : f32 to vector<16x128xf32>
    %358 = arith.mulf %357, %356 : vector<16x128xf32>
    %cst_211 = arith.constant 5.000000e-01 : f32
    %359 = vector.broadcast %cst_211 : f32 to vector<16x128xf32>
    %360 = arith.addf %358, %359 : vector<16x128xf32>
    %361 = vector.extract_strided_slice %339 {offsets = [32, 0], sizes = [16, 128], strides = [1, 1]} : vector<48x128xf32> to vector<16x128xf32>
    %362 = vector.extract_strided_slice %340 {offsets = [32, 0], sizes = [16, 128], strides = [1, 1]} : vector<48x128xf32> to vector<16x128xf32>
    %363 = vector.broadcast %148 : vector<16x1xf32> to vector<16x128xf32>
    %364 = arith.addf %362, %363 : vector<16x128xf32>
    %365 = arith.mulf %350, %364 : vector<16x128xf32>
    %366 = arith.addf %361, %365 : vector<16x128xf32>
    %367 = math.tanh %366 : vector<16x128xf32>
    %cst_212 = arith.constant 1.000000e+00 : f32
    %368 = vector.broadcast %cst_212 : f32 to vector<16x128xf32>
    %369 = arith.subf %368, %360 : vector<16x128xf32>
    %370 = arith.mulf %369, %367 : vector<16x128xf32>
    %371 = arith.mulf %360, %296 : vector<16x128xf32>
    %372 = arith.addf %370, %371 : vector<16x128xf32>
    %c2_213 = arith.constant 2 : index
    %c0_214 = arith.constant 0 : index
    %c0_215 = arith.constant 0 : index
    %373 = vector.load %arg5[%c2_213, %c0_214, %c0_215] : memref<16x32x128xf32, #tpu.memory_space<vmem>>, vector<1x16x128xf32>
    %374 = vector.shape_cast %373 : vector<1x16x128xf32> to vector<16x128xf32>
    %375 = vector.shape_cast %337 : vector<16x128xf32> to vector<1x16x128xf32>
    tpu.vector_store %arg5[%c2_213, %c0_214, %c0_215], %375 {strides = array<i32>} : memref<16x32x128xf32, #tpu.memory_space<vmem>>, vector<1x16x128xf32>,
    %c13_216 = arith.constant 13 : index
    %c16_217 = arith.constant 16 : index
    %c0_218 = arith.constant 0 : index
    %376 = vector.load %arg5[%c13_216, %c16_217, %c0_218] : memref<16x32x128xf32, #tpu.memory_space<vmem>>, vector<1x16x128xf32>
    %377 = vector.shape_cast %376 : vector<1x16x128xf32> to vector<16x128xf32>
    %378 = vector.shape_cast %372 : vector<16x128xf32> to vector<1x16x128xf32>
    tpu.vector_store %arg5[%c13_216, %c16_217, %c0_218], %378 {strides = array<i32>} : memref<16x32x128xf32, #tpu.memory_space<vmem>>, vector<1x16x128xf32>,
    %c3_219 = arith.constant 3 : index
    %c0_220 = arith.constant 0 : index
    %c0_221 = arith.constant 0 : index
    %379 = vector.load %arg6[%c3_219, %c0_220, %c0_221] : memref<16x96x128xf32, #tpu.memory_space<vmem>>, vector<1x48x128xf32>
    %380 = vector.shape_cast %379 : vector<1x48x128xf32> to vector<48x128xf32>
    %cst_222 = arith.constant dense<0.000000e+00> : vector<48x128xf32>
    %381 = tpu.matmul %145, %337, %cst_222 {dimension_numbers = #tpu.dot_dimension_numbers<[1], [0], [0], [1], [0, 0, 1, 1], [], []>} : vector<48x16xf32>, vector<16x128xf32>, vector<48x128xf32> -> vector<48x128xf32>
    %382 = vector.extract_strided_slice %380 {offsets = [0, 0], sizes = [16, 128], strides = [1, 1]} : vector<48x128xf32> to vector<16x128xf32>
    %383 = vector.extract_strided_slice %381 {offsets = [0, 0], sizes = [16, 128], strides = [1, 1]} : vector<48x128xf32> to vector<16x128xf32>
    %384 = arith.addf %382, %383 : vector<16x128xf32>
    %cst_223 = arith.constant 5.000000e-01 : f32
    %385 = vector.broadcast %cst_223 : f32 to vector<16x128xf32>
    %386 = arith.mulf %385, %384 : vector<16x128xf32>
    %387 = math.tanh %386 : vector<16x128xf32>
    %cst_224 = arith.constant 5.000000e-01 : f32
    %388 = vector.broadcast %cst_224 : f32 to vector<16x128xf32>
    %389 = arith.mulf %388, %387 : vector<16x128xf32>
    %cst_225 = arith.constant 5.000000e-01 : f32
    %390 = vector.broadcast %cst_225 : f32 to vector<16x128xf32>
    %391 = arith.addf %389, %390 : vector<16x128xf32>
    %392 = vector.extract_strided_slice %380 {offsets = [16, 0], sizes = [16, 128], strides = [1, 1]} : vector<48x128xf32> to vector<16x128xf32>
    %393 = vector.extract_strided_slice %381 {offsets = [16, 0], sizes = [16, 128], strides = [1, 1]} : vector<48x128xf32> to vector<16x128xf32>
    %394 = arith.addf %392, %393 : vector<16x128xf32>
    %cst_226 = arith.constant 5.000000e-01 : f32
    %395 = vector.broadcast %cst_226 : f32 to vector<16x128xf32>
    %396 = arith.mulf %395, %394 : vector<16x128xf32>
    %397 = math.tanh %396 : vector<16x128xf32>
    %cst_227 = arith.constant 5.000000e-01 : f32
    %398 = vector.broadcast %cst_227 : f32 to vector<16x128xf32>
    %399 = arith.mulf %398, %397 : vector<16x128xf32>
    %cst_228 = arith.constant 5.000000e-01 : f32
    %400 = vector.broadcast %cst_228 : f32 to vector<16x128xf32>
    %401 = arith.addf %399, %400 : vector<16x128xf32>
    %402 = vector.extract_strided_slice %380 {offsets = [32, 0], sizes = [16, 128], strides = [1, 1]} : vector<48x128xf32> to vector<16x128xf32>
    %403 = vector.extract_strided_slice %381 {offsets = [32, 0], sizes = [16, 128], strides = [1, 1]} : vector<48x128xf32> to vector<16x128xf32>
    %404 = vector.broadcast %147 : vector<16x1xf32> to vector<16x128xf32>
    %405 = arith.addf %403, %404 : vector<16x128xf32>
    %406 = arith.mulf %391, %405 : vector<16x128xf32>
    %407 = arith.addf %402, %406 : vector<16x128xf32>
    %408 = math.tanh %407 : vector<16x128xf32>
    %cst_229 = arith.constant 1.000000e+00 : f32
    %409 = vector.broadcast %cst_229 : f32 to vector<16x128xf32>
    %410 = arith.subf %409, %401 : vector<16x128xf32>
    %411 = arith.mulf %410, %408 : vector<16x128xf32>
    %412 = arith.mulf %401, %337 : vector<16x128xf32>
    %413 = arith.addf %411, %412 : vector<16x128xf32>
    %c12_230 = arith.constant 12 : index
    %c48_231 = arith.constant 48 : index
    %c0_232 = arith.constant 0 : index
    %414 = vector.load %arg6[%c12_230, %c48_231, %c0_232] : memref<16x96x128xf32, #tpu.memory_space<vmem>>, vector<1x48x128xf32>
    %415 = vector.shape_cast %414 : vector<1x48x128xf32> to vector<48x128xf32>
    %cst_233 = arith.constant dense<0.000000e+00> : vector<48x128xf32>
    %416 = tpu.matmul %146, %372, %cst_233 {dimension_numbers = #tpu.dot_dimension_numbers<[1], [0], [0], [1], [0, 0, 1, 1], [], []>} : vector<48x16xf32>, vector<16x128xf32>, vector<48x128xf32> -> vector<48x128xf32>
    %417 = vector.extract_strided_slice %415 {offsets = [0, 0], sizes = [16, 128], strides = [1, 1]} : vector<48x128xf32> to vector<16x128xf32>
    %418 = vector.extract_strided_slice %416 {offsets = [0, 0], sizes = [16, 128], strides = [1, 1]} : vector<48x128xf32> to vector<16x128xf32>
    %419 = arith.addf %417, %418 : vector<16x128xf32>
    %cst_234 = arith.constant 5.000000e-01 : f32
    %420 = vector.broadcast %cst_234 : f32 to vector<16x128xf32>
    %421 = arith.mulf %420, %419 : vector<16x128xf32>
    %422 = math.tanh %421 : vector<16x128xf32>
    %cst_235 = arith.constant 5.000000e-01 : f32
    %423 = vector.broadcast %cst_235 : f32 to vector<16x128xf32>
    %424 = arith.mulf %423, %422 : vector<16x128xf32>
    %cst_236 = arith.constant 5.000000e-01 : f32
    %425 = vector.broadcast %cst_236 : f32 to vector<16x128xf32>
    %426 = arith.addf %424, %425 : vector<16x128xf32>
    %427 = vector.extract_strided_slice %415 {offsets = [16, 0], sizes = [16, 128], strides = [1, 1]} : vector<48x128xf32> to vector<16x128xf32>
    %428 = vector.extract_strided_slice %416 {offsets = [16, 0], sizes = [16, 128], strides = [1, 1]} : vector<48x128xf32> to vector<16x128xf32>
    %429 = arith.addf %427, %428 : vector<16x128xf32>
    %cst_237 = arith.constant 5.000000e-01 : f32
    %430 = vector.broadcast %cst_237 : f32 to vector<16x128xf32>
    %431 = arith.mulf %430, %429 : vector<16x128xf32>
    %432 = math.tanh %431 : vector<16x128xf32>
    %cst_238 = arith.constant 5.000000e-01 : f32
    %433 = vector.broadcast %cst_238 : f32 to vector<16x128xf32>
    %434 = arith.mulf %433, %432 : vector<16x128xf32>
    %cst_239 = arith.constant 5.000000e-01 : f32
    %435 = vector.broadcast %cst_239 : f32 to vector<16x128xf32>
    %436 = arith.addf %434, %435 : vector<16x128xf32>
    %437 = vector.extract_strided_slice %415 {offsets = [32, 0], sizes = [16, 128], strides = [1, 1]} : vector<48x128xf32> to vector<16x128xf32>
    %438 = vector.extract_strided_slice %416 {offsets = [32, 0], sizes = [16, 128], strides = [1, 1]} : vector<48x128xf32> to vector<16x128xf32>
    %439 = vector.broadcast %148 : vector<16x1xf32> to vector<16x128xf32>
    %440 = arith.addf %438, %439 : vector<16x128xf32>
    %441 = arith.mulf %426, %440 : vector<16x128xf32>
    %442 = arith.addf %437, %441 : vector<16x128xf32>
    %443 = math.tanh %442 : vector<16x128xf32>
    %cst_240 = arith.constant 1.000000e+00 : f32
    %444 = vector.broadcast %cst_240 : f32 to vector<16x128xf32>
    %445 = arith.subf %444, %436 : vector<16x128xf32>
    %446 = arith.mulf %445, %443 : vector<16x128xf32>
    %447 = arith.mulf %436, %372 : vector<16x128xf32>
    %448 = arith.addf %446, %447 : vector<16x128xf32>
    %c3_241 = arith.constant 3 : index
    %c0_242 = arith.constant 0 : index
    %c0_243 = arith.constant 0 : index
    %449 = vector.load %arg5[%c3_241, %c0_242, %c0_243] : memref<16x32x128xf32, #tpu.memory_space<vmem>>, vector<1x16x128xf32>
    %450 = vector.shape_cast %449 : vector<1x16x128xf32> to vector<16x128xf32>
    %451 = vector.shape_cast %413 : vector<16x128xf32> to vector<1x16x128xf32>
    tpu.vector_store %arg5[%c3_241, %c0_242, %c0_243], %451 {strides = array<i32>} : memref<16x32x128xf32, #tpu.memory_space<vmem>>, vector<1x16x128xf32>,
    %c12_244 = arith.constant 12 : index
    %c16_245 = arith.constant 16 : index
    %c0_246 = arith.constant 0 : index
    %452 = vector.load %arg5[%c12_244, %c16_245, %c0_246] : memref<16x32x128xf32, #tpu.memory_space<vmem>>, vector<1x16x128xf32>
    %453 = vector.shape_cast %452 : vector<1x16x128xf32> to vector<16x128xf32>
    %454 = vector.shape_cast %448 : vector<16x128xf32> to vector<1x16x128xf32>
    tpu.vector_store %arg5[%c12_244, %c16_245, %c0_246], %454 {strides = array<i32>} : memref<16x32x128xf32, #tpu.memory_space<vmem>>, vector<1x16x128xf32>,
    %c4_247 = arith.constant 4 : index
    %c0_248 = arith.constant 0 : index
    %c0_249 = arith.constant 0 : index
    %455 = vector.load %arg6[%c4_247, %c0_248, %c0_249] : memref<16x96x128xf32, #tpu.memory_space<vmem>>, vector<1x48x128xf32>
    %456 = vector.shape_cast %455 : vector<1x48x128xf32> to vector<48x128xf32>
    %cst_250 = arith.constant dense<0.000000e+00> : vector<48x128xf32>
    %457 = tpu.matmul %145, %413, %cst_250 {dimension_numbers = #tpu.dot_dimension_numbers<[1], [0], [0], [1], [0, 0, 1, 1], [], []>} : vector<48x16xf32>, vector<16x128xf32>, vector<48x128xf32> -> vector<48x128xf32>
    %458 = vector.extract_strided_slice %456 {offsets = [0, 0], sizes = [16, 128], strides = [1, 1]} : vector<48x128xf32> to vector<16x128xf32>
    %459 = vector.extract_strided_slice %457 {offsets = [0, 0], sizes = [16, 128], strides = [1, 1]} : vector<48x128xf32> to vector<16x128xf32>
    %460 = arith.addf %458, %459 : vector<16x128xf32>
    %cst_251 = arith.constant 5.000000e-01 : f32
    %461 = vector.broadcast %cst_251 : f32 to vector<16x128xf32>
    %462 = arith.mulf %461, %460 : vector<16x128xf32>
    %463 = math.tanh %462 : vector<16x128xf32>
    %cst_252 = arith.constant 5.000000e-01 : f32
    %464 = vector.broadcast %cst_252 : f32 to vector<16x128xf32>
    %465 = arith.mulf %464, %463 : vector<16x128xf32>
    %cst_253 = arith.constant 5.000000e-01 : f32
    %466 = vector.broadcast %cst_253 : f32 to vector<16x128xf32>
    %467 = arith.addf %465, %466 : vector<16x128xf32>
    %468 = vector.extract_strided_slice %456 {offsets = [16, 0], sizes = [16, 128], strides = [1, 1]} : vector<48x128xf32> to vector<16x128xf32>
    %469 = vector.extract_strided_slice %457 {offsets = [16, 0], sizes = [16, 128], strides = [1, 1]} : vector<48x128xf32> to vector<16x128xf32>
    %470 = arith.addf %468, %469 : vector<16x128xf32>
    %cst_254 = arith.constant 5.000000e-01 : f32
    %471 = vector.broadcast %cst_254 : f32 to vector<16x128xf32>
    %472 = arith.mulf %471, %470 : vector<16x128xf32>
    %473 = math.tanh %472 : vector<16x128xf32>
    %cst_255 = arith.constant 5.000000e-01 : f32
    %474 = vector.broadcast %cst_255 : f32 to vector<16x128xf32>
    %475 = arith.mulf %474, %473 : vector<16x128xf32>
    %cst_256 = arith.constant 5.000000e-01 : f32
    %476 = vector.broadcast %cst_256 : f32 to vector<16x128xf32>
    %477 = arith.addf %475, %476 : vector<16x128xf32>
    %478 = vector.extract_strided_slice %456 {offsets = [32, 0], sizes = [16, 128], strides = [1, 1]} : vector<48x128xf32> to vector<16x128xf32>
    %479 = vector.extract_strided_slice %457 {offsets = [32, 0], sizes = [16, 128], strides = [1, 1]} : vector<48x128xf32> to vector<16x128xf32>
    %480 = vector.broadcast %147 : vector<16x1xf32> to vector<16x128xf32>
    %481 = arith.addf %479, %480 : vector<16x128xf32>
    %482 = arith.mulf %467, %481 : vector<16x128xf32>
    %483 = arith.addf %478, %482 : vector<16x128xf32>
    %484 = math.tanh %483 : vector<16x128xf32>
    %cst_257 = arith.constant 1.000000e+00 : f32
    %485 = vector.broadcast %cst_257 : f32 to vector<16x128xf32>
    %486 = arith.subf %485, %477 : vector<16x128xf32>
    %487 = arith.mulf %486, %484 : vector<16x128xf32>
    %488 = arith.mulf %477, %413 : vector<16x128xf32>
    %489 = arith.addf %487, %488 : vector<16x128xf32>
    %c11_258 = arith.constant 11 : index
    %c48_259 = arith.constant 48 : index
    %c0_260 = arith.constant 0 : index
    %490 = vector.load %arg6[%c11_258, %c48_259, %c0_260] : memref<16x96x128xf32, #tpu.memory_space<vmem>>, vector<1x48x128xf32>
    %491 = vector.shape_cast %490 : vector<1x48x128xf32> to vector<48x128xf32>
    %cst_261 = arith.constant dense<0.000000e+00> : vector<48x128xf32>
    %492 = tpu.matmul %146, %448, %cst_261 {dimension_numbers = #tpu.dot_dimension_numbers<[1], [0], [0], [1], [0, 0, 1, 1], [], []>} : vector<48x16xf32>, vector<16x128xf32>, vector<48x128xf32> -> vector<48x128xf32>
    %493 = vector.extract_strided_slice %491 {offsets = [0, 0], sizes = [16, 128], strides = [1, 1]} : vector<48x128xf32> to vector<16x128xf32>
    %494 = vector.extract_strided_slice %492 {offsets = [0, 0], sizes = [16, 128], strides = [1, 1]} : vector<48x128xf32> to vector<16x128xf32>
    %495 = arith.addf %493, %494 : vector<16x128xf32>
    %cst_262 = arith.constant 5.000000e-01 : f32
    %496 = vector.broadcast %cst_262 : f32 to vector<16x128xf32>
    %497 = arith.mulf %496, %495 : vector<16x128xf32>
    %498 = math.tanh %497 : vector<16x128xf32>
    %cst_263 = arith.constant 5.000000e-01 : f32
    %499 = vector.broadcast %cst_263 : f32 to vector<16x128xf32>
    %500 = arith.mulf %499, %498 : vector<16x128xf32>
    %cst_264 = arith.constant 5.000000e-01 : f32
    %501 = vector.broadcast %cst_264 : f32 to vector<16x128xf32>
    %502 = arith.addf %500, %501 : vector<16x128xf32>
    %503 = vector.extract_strided_slice %491 {offsets = [16, 0], sizes = [16, 128], strides = [1, 1]} : vector<48x128xf32> to vector<16x128xf32>
    %504 = vector.extract_strided_slice %492 {offsets = [16, 0], sizes = [16, 128], strides = [1, 1]} : vector<48x128xf32> to vector<16x128xf32>
    %505 = arith.addf %503, %504 : vector<16x128xf32>
    %cst_265 = arith.constant 5.000000e-01 : f32
    %506 = vector.broadcast %cst_265 : f32 to vector<16x128xf32>
    %507 = arith.mulf %506, %505 : vector<16x128xf32>
    %508 = math.tanh %507 : vector<16x128xf32>
    %cst_266 = arith.constant 5.000000e-01 : f32
    %509 = vector.broadcast %cst_266 : f32 to vector<16x128xf32>
    %510 = arith.mulf %509, %508 : vector<16x128xf32>
    %cst_267 = arith.constant 5.000000e-01 : f32
    %511 = vector.broadcast %cst_267 : f32 to vector<16x128xf32>
    %512 = arith.addf %510, %511 : vector<16x128xf32>
    %513 = vector.extract_strided_slice %491 {offsets = [32, 0], sizes = [16, 128], strides = [1, 1]} : vector<48x128xf32> to vector<16x128xf32>
    %514 = vector.extract_strided_slice %492 {offsets = [32, 0], sizes = [16, 128], strides = [1, 1]} : vector<48x128xf32> to vector<16x128xf32>
    %515 = vector.broadcast %148 : vector<16x1xf32> to vector<16x128xf32>
    %516 = arith.addf %514, %515 : vector<16x128xf32>
    %517 = arith.mulf %502, %516 : vector<16x128xf32>
    %518 = arith.addf %513, %517 : vector<16x128xf32>
    %519 = math.tanh %518 : vector<16x128xf32>
    %cst_268 = arith.constant 1.000000e+00 : f32
    %520 = vector.broadcast %cst_268 : f32 to vector<16x128xf32>
    %521 = arith.subf %520, %512 : vector<16x128xf32>
    %522 = arith.mulf %521, %519 : vector<16x128xf32>
    %523 = arith.mulf %512, %448 : vector<16x128xf32>
    %524 = arith.addf %522, %523 : vector<16x128xf32>
    %c4_269 = arith.constant 4 : index
    %c0_270 = arith.constant 0 : index
    %c0_271 = arith.constant 0 : index
    %525 = vector.load %arg5[%c4_269, %c0_270, %c0_271] : memref<16x32x128xf32, #tpu.memory_space<vmem>>, vector<1x16x128xf32>
    %526 = vector.shape_cast %525 : vector<1x16x128xf32> to vector<16x128xf32>
    %527 = vector.shape_cast %489 : vector<16x128xf32> to vector<1x16x128xf32>
    tpu.vector_store %arg5[%c4_269, %c0_270, %c0_271], %527 {strides = array<i32>} : memref<16x32x128xf32, #tpu.memory_space<vmem>>, vector<1x16x128xf32>,
    %c11_272 = arith.constant 11 : index
    %c16_273 = arith.constant 16 : index
    %c0_274 = arith.constant 0 : index
    %528 = vector.load %arg5[%c11_272, %c16_273, %c0_274] : memref<16x32x128xf32, #tpu.memory_space<vmem>>, vector<1x16x128xf32>
    %529 = vector.shape_cast %528 : vector<1x16x128xf32> to vector<16x128xf32>
    %530 = vector.shape_cast %524 : vector<16x128xf32> to vector<1x16x128xf32>
    tpu.vector_store %arg5[%c11_272, %c16_273, %c0_274], %530 {strides = array<i32>} : memref<16x32x128xf32, #tpu.memory_space<vmem>>, vector<1x16x128xf32>,
    %c5_275 = arith.constant 5 : index
    %c0_276 = arith.constant 0 : index
    %c0_277 = arith.constant 0 : index
    %531 = vector.load %arg6[%c5_275, %c0_276, %c0_277] : memref<16x96x128xf32, #tpu.memory_space<vmem>>, vector<1x48x128xf32>
    %532 = vector.shape_cast %531 : vector<1x48x128xf32> to vector<48x128xf32>
    %cst_278 = arith.constant dense<0.000000e+00> : vector<48x128xf32>
    %533 = tpu.matmul %145, %489, %cst_278 {dimension_numbers = #tpu.dot_dimension_numbers<[1], [0], [0], [1], [0, 0, 1, 1], [], []>} : vector<48x16xf32>, vector<16x128xf32>, vector<48x128xf32> -> vector<48x128xf32>
    %534 = vector.extract_strided_slice %532 {offsets = [0, 0], sizes = [16, 128], strides = [1, 1]} : vector<48x128xf32> to vector<16x128xf32>
    %535 = vector.extract_strided_slice %533 {offsets = [0, 0], sizes = [16, 128], strides = [1, 1]} : vector<48x128xf32> to vector<16x128xf32>
    %536 = arith.addf %534, %535 : vector<16x128xf32>
    %cst_279 = arith.constant 5.000000e-01 : f32
    %537 = vector.broadcast %cst_279 : f32 to vector<16x128xf32>
    %538 = arith.mulf %537, %536 : vector<16x128xf32>
    %539 = math.tanh %538 : vector<16x128xf32>
    %cst_280 = arith.constant 5.000000e-01 : f32
    %540 = vector.broadcast %cst_280 : f32 to vector<16x128xf32>
    %541 = arith.mulf %540, %539 : vector<16x128xf32>
    %cst_281 = arith.constant 5.000000e-01 : f32
    %542 = vector.broadcast %cst_281 : f32 to vector<16x128xf32>
    %543 = arith.addf %541, %542 : vector<16x128xf32>
    %544 = vector.extract_strided_slice %532 {offsets = [16, 0], sizes = [16, 128], strides = [1, 1]} : vector<48x128xf32> to vector<16x128xf32>
    %545 = vector.extract_strided_slice %533 {offsets = [16, 0], sizes = [16, 128], strides = [1, 1]} : vector<48x128xf32> to vector<16x128xf32>
    %546 = arith.addf %544, %545 : vector<16x128xf32>
    %cst_282 = arith.constant 5.000000e-01 : f32
    %547 = vector.broadcast %cst_282 : f32 to vector<16x128xf32>
    %548 = arith.mulf %547, %546 : vector<16x128xf32>
    %549 = math.tanh %548 : vector<16x128xf32>
    %cst_283 = arith.constant 5.000000e-01 : f32
    %550 = vector.broadcast %cst_283 : f32 to vector<16x128xf32>
    %551 = arith.mulf %550, %549 : vector<16x128xf32>
    %cst_284 = arith.constant 5.000000e-01 : f32
    %552 = vector.broadcast %cst_284 : f32 to vector<16x128xf32>
    %553 = arith.addf %551, %552 : vector<16x128xf32>
    %554 = vector.extract_strided_slice %532 {offsets = [32, 0], sizes = [16, 128], strides = [1, 1]} : vector<48x128xf32> to vector<16x128xf32>
    %555 = vector.extract_strided_slice %533 {offsets = [32, 0], sizes = [16, 128], strides = [1, 1]} : vector<48x128xf32> to vector<16x128xf32>
    %556 = vector.broadcast %147 : vector<16x1xf32> to vector<16x128xf32>
    %557 = arith.addf %555, %556 : vector<16x128xf32>
    %558 = arith.mulf %543, %557 : vector<16x128xf32>
    %559 = arith.addf %554, %558 : vector<16x128xf32>
    %560 = math.tanh %559 : vector<16x128xf32>
    %cst_285 = arith.constant 1.000000e+00 : f32
    %561 = vector.broadcast %cst_285 : f32 to vector<16x128xf32>
    %562 = arith.subf %561, %553 : vector<16x128xf32>
    %563 = arith.mulf %562, %560 : vector<16x128xf32>
    %564 = arith.mulf %553, %489 : vector<16x128xf32>
    %565 = arith.addf %563, %564 : vector<16x128xf32>
    %c10_286 = arith.constant 10 : index
    %c48_287 = arith.constant 48 : index
    %c0_288 = arith.constant 0 : index
    %566 = vector.load %arg6[%c10_286, %c48_287, %c0_288] : memref<16x96x128xf32, #tpu.memory_space<vmem>>, vector<1x48x128xf32>
    %567 = vector.shape_cast %566 : vector<1x48x128xf32> to vector<48x128xf32>
    %cst_289 = arith.constant dense<0.000000e+00> : vector<48x128xf32>
    %568 = tpu.matmul %146, %524, %cst_289 {dimension_numbers = #tpu.dot_dimension_numbers<[1], [0], [0], [1], [0, 0, 1, 1], [], []>} : vector<48x16xf32>, vector<16x128xf32>, vector<48x128xf32> -> vector<48x128xf32>
    %569 = vector.extract_strided_slice %567 {offsets = [0, 0], sizes = [16, 128], strides = [1, 1]} : vector<48x128xf32> to vector<16x128xf32>
    %570 = vector.extract_strided_slice %568 {offsets = [0, 0], sizes = [16, 128], strides = [1, 1]} : vector<48x128xf32> to vector<16x128xf32>
    %571 = arith.addf %569, %570 : vector<16x128xf32>
    %cst_290 = arith.constant 5.000000e-01 : f32
    %572 = vector.broadcast %cst_290 : f32 to vector<16x128xf32>
    %573 = arith.mulf %572, %571 : vector<16x128xf32>
    %574 = math.tanh %573 : vector<16x128xf32>
    %cst_291 = arith.constant 5.000000e-01 : f32
    %575 = vector.broadcast %cst_291 : f32 to vector<16x128xf32>
    %576 = arith.mulf %575, %574 : vector<16x128xf32>
    %cst_292 = arith.constant 5.000000e-01 : f32
    %577 = vector.broadcast %cst_292 : f32 to vector<16x128xf32>
    %578 = arith.addf %576, %577 : vector<16x128xf32>
    %579 = vector.extract_strided_slice %567 {offsets = [16, 0], sizes = [16, 128], strides = [1, 1]} : vector<48x128xf32> to vector<16x128xf32>
    %580 = vector.extract_strided_slice %568 {offsets = [16, 0], sizes = [16, 128], strides = [1, 1]} : vector<48x128xf32> to vector<16x128xf32>
    %581 = arith.addf %579, %580 : vector<16x128xf32>
    %cst_293 = arith.constant 5.000000e-01 : f32
    %582 = vector.broadcast %cst_293 : f32 to vector<16x128xf32>
    %583 = arith.mulf %582, %581 : vector<16x128xf32>
    %584 = math.tanh %583 : vector<16x128xf32>
    %cst_294 = arith.constant 5.000000e-01 : f32
    %585 = vector.broadcast %cst_294 : f32 to vector<16x128xf32>
    %586 = arith.mulf %585, %584 : vector<16x128xf32>
    %cst_295 = arith.constant 5.000000e-01 : f32
    %587 = vector.broadcast %cst_295 : f32 to vector<16x128xf32>
    %588 = arith.addf %586, %587 : vector<16x128xf32>
    %589 = vector.extract_strided_slice %567 {offsets = [32, 0], sizes = [16, 128], strides = [1, 1]} : vector<48x128xf32> to vector<16x128xf32>
    %590 = vector.extract_strided_slice %568 {offsets = [32, 0], sizes = [16, 128], strides = [1, 1]} : vector<48x128xf32> to vector<16x128xf32>
    %591 = vector.broadcast %148 : vector<16x1xf32> to vector<16x128xf32>
    %592 = arith.addf %590, %591 : vector<16x128xf32>
    %593 = arith.mulf %578, %592 : vector<16x128xf32>
    %594 = arith.addf %589, %593 : vector<16x128xf32>
    %595 = math.tanh %594 : vector<16x128xf32>
    %cst_296 = arith.constant 1.000000e+00 : f32
    %596 = vector.broadcast %cst_296 : f32 to vector<16x128xf32>
    %597 = arith.subf %596, %588 : vector<16x128xf32>
    %598 = arith.mulf %597, %595 : vector<16x128xf32>
    %599 = arith.mulf %588, %524 : vector<16x128xf32>
    %600 = arith.addf %598, %599 : vector<16x128xf32>
    %c5_297 = arith.constant 5 : index
    %c0_298 = arith.constant 0 : index
    %c0_299 = arith.constant 0 : index
    %601 = vector.load %arg5[%c5_297, %c0_298, %c0_299] : memref<16x32x128xf32, #tpu.memory_space<vmem>>, vector<1x16x128xf32>
    %602 = vector.shape_cast %601 : vector<1x16x128xf32> to vector<16x128xf32>
    %603 = vector.shape_cast %565 : vector<16x128xf32> to vector<1x16x128xf32>
    tpu.vector_store %arg5[%c5_297, %c0_298, %c0_299], %603 {strides = array<i32>} : memref<16x32x128xf32, #tpu.memory_space<vmem>>, vector<1x16x128xf32>,
    %c10_300 = arith.constant 10 : index
    %c16_301 = arith.constant 16 : index
    %c0_302 = arith.constant 0 : index
    %604 = vector.load %arg5[%c10_300, %c16_301, %c0_302] : memref<16x32x128xf32, #tpu.memory_space<vmem>>, vector<1x16x128xf32>
    %605 = vector.shape_cast %604 : vector<1x16x128xf32> to vector<16x128xf32>
    %606 = vector.shape_cast %600 : vector<16x128xf32> to vector<1x16x128xf32>
    tpu.vector_store %arg5[%c10_300, %c16_301, %c0_302], %606 {strides = array<i32>} : memref<16x32x128xf32, #tpu.memory_space<vmem>>, vector<1x16x128xf32>,
    %c6_303 = arith.constant 6 : index
    %c0_304 = arith.constant 0 : index
    %c0_305 = arith.constant 0 : index
    %607 = vector.load %arg6[%c6_303, %c0_304, %c0_305] : memref<16x96x128xf32, #tpu.memory_space<vmem>>, vector<1x48x128xf32>
    %608 = vector.shape_cast %607 : vector<1x48x128xf32> to vector<48x128xf32>
    %cst_306 = arith.constant dense<0.000000e+00> : vector<48x128xf32>
    %609 = tpu.matmul %145, %565, %cst_306 {dimension_numbers = #tpu.dot_dimension_numbers<[1], [0], [0], [1], [0, 0, 1, 1], [], []>} : vector<48x16xf32>, vector<16x128xf32>, vector<48x128xf32> -> vector<48x128xf32>
    %610 = vector.extract_strided_slice %608 {offsets = [0, 0], sizes = [16, 128], strides = [1, 1]} : vector<48x128xf32> to vector<16x128xf32>
    %611 = vector.extract_strided_slice %609 {offsets = [0, 0], sizes = [16, 128], strides = [1, 1]} : vector<48x128xf32> to vector<16x128xf32>
    %612 = arith.addf %610, %611 : vector<16x128xf32>
    %cst_307 = arith.constant 5.000000e-01 : f32
    %613 = vector.broadcast %cst_307 : f32 to vector<16x128xf32>
    %614 = arith.mulf %613, %612 : vector<16x128xf32>
    %615 = math.tanh %614 : vector<16x128xf32>
    %cst_308 = arith.constant 5.000000e-01 : f32
    %616 = vector.broadcast %cst_308 : f32 to vector<16x128xf32>
    %617 = arith.mulf %616, %615 : vector<16x128xf32>
    %cst_309 = arith.constant 5.000000e-01 : f32
    %618 = vector.broadcast %cst_309 : f32 to vector<16x128xf32>
    %619 = arith.addf %617, %618 : vector<16x128xf32>
    %620 = vector.extract_strided_slice %608 {offsets = [16, 0], sizes = [16, 128], strides = [1, 1]} : vector<48x128xf32> to vector<16x128xf32>
    %621 = vector.extract_strided_slice %609 {offsets = [16, 0], sizes = [16, 128], strides = [1, 1]} : vector<48x128xf32> to vector<16x128xf32>
    %622 = arith.addf %620, %621 : vector<16x128xf32>
    %cst_310 = arith.constant 5.000000e-01 : f32
    %623 = vector.broadcast %cst_310 : f32 to vector<16x128xf32>
    %624 = arith.mulf %623, %622 : vector<16x128xf32>
    %625 = math.tanh %624 : vector<16x128xf32>
    %cst_311 = arith.constant 5.000000e-01 : f32
    %626 = vector.broadcast %cst_311 : f32 to vector<16x128xf32>
    %627 = arith.mulf %626, %625 : vector<16x128xf32>
    %cst_312 = arith.constant 5.000000e-01 : f32
    %628 = vector.broadcast %cst_312 : f32 to vector<16x128xf32>
    %629 = arith.addf %627, %628 : vector<16x128xf32>
    %630 = vector.extract_strided_slice %608 {offsets = [32, 0], sizes = [16, 128], strides = [1, 1]} : vector<48x128xf32> to vector<16x128xf32>
    %631 = vector.extract_strided_slice %609 {offsets = [32, 0], sizes = [16, 128], strides = [1, 1]} : vector<48x128xf32> to vector<16x128xf32>
    %632 = vector.broadcast %147 : vector<16x1xf32> to vector<16x128xf32>
    %633 = arith.addf %631, %632 : vector<16x128xf32>
    %634 = arith.mulf %619, %633 : vector<16x128xf32>
    %635 = arith.addf %630, %634 : vector<16x128xf32>
    %636 = math.tanh %635 : vector<16x128xf32>
    %cst_313 = arith.constant 1.000000e+00 : f32
    %637 = vector.broadcast %cst_313 : f32 to vector<16x128xf32>
    %638 = arith.subf %637, %629 : vector<16x128xf32>
    %639 = arith.mulf %638, %636 : vector<16x128xf32>
    %640 = arith.mulf %629, %565 : vector<16x128xf32>
    %641 = arith.addf %639, %640 : vector<16x128xf32>
    %c9_314 = arith.constant 9 : index
    %c48_315 = arith.constant 48 : index
    %c0_316 = arith.constant 0 : index
    %642 = vector.load %arg6[%c9_314, %c48_315, %c0_316] : memref<16x96x128xf32, #tpu.memory_space<vmem>>, vector<1x48x128xf32>
    %643 = vector.shape_cast %642 : vector<1x48x128xf32> to vector<48x128xf32>
    %cst_317 = arith.constant dense<0.000000e+00> : vector<48x128xf32>
    %644 = tpu.matmul %146, %600, %cst_317 {dimension_numbers = #tpu.dot_dimension_numbers<[1], [0], [0], [1], [0, 0, 1, 1], [], []>} : vector<48x16xf32>, vector<16x128xf32>, vector<48x128xf32> -> vector<48x128xf32>
    %645 = vector.extract_strided_slice %643 {offsets = [0, 0], sizes = [16, 128], strides = [1, 1]} : vector<48x128xf32> to vector<16x128xf32>
    %646 = vector.extract_strided_slice %644 {offsets = [0, 0], sizes = [16, 128], strides = [1, 1]} : vector<48x128xf32> to vector<16x128xf32>
    %647 = arith.addf %645, %646 : vector<16x128xf32>
    %cst_318 = arith.constant 5.000000e-01 : f32
    %648 = vector.broadcast %cst_318 : f32 to vector<16x128xf32>
    %649 = arith.mulf %648, %647 : vector<16x128xf32>
    %650 = math.tanh %649 : vector<16x128xf32>
    %cst_319 = arith.constant 5.000000e-01 : f32
    %651 = vector.broadcast %cst_319 : f32 to vector<16x128xf32>
    %652 = arith.mulf %651, %650 : vector<16x128xf32>
    %cst_320 = arith.constant 5.000000e-01 : f32
    %653 = vector.broadcast %cst_320 : f32 to vector<16x128xf32>
    %654 = arith.addf %652, %653 : vector<16x128xf32>
    %655 = vector.extract_strided_slice %643 {offsets = [16, 0], sizes = [16, 128], strides = [1, 1]} : vector<48x128xf32> to vector<16x128xf32>
    %656 = vector.extract_strided_slice %644 {offsets = [16, 0], sizes = [16, 128], strides = [1, 1]} : vector<48x128xf32> to vector<16x128xf32>
    %657 = arith.addf %655, %656 : vector<16x128xf32>
    %cst_321 = arith.constant 5.000000e-01 : f32
    %658 = vector.broadcast %cst_321 : f32 to vector<16x128xf32>
    %659 = arith.mulf %658, %657 : vector<16x128xf32>
    %660 = math.tanh %659 : vector<16x128xf32>
    %cst_322 = arith.constant 5.000000e-01 : f32
    %661 = vector.broadcast %cst_322 : f32 to vector<16x128xf32>
    %662 = arith.mulf %661, %660 : vector<16x128xf32>
    %cst_323 = arith.constant 5.000000e-01 : f32
    %663 = vector.broadcast %cst_323 : f32 to vector<16x128xf32>
    %664 = arith.addf %662, %663 : vector<16x128xf32>
    %665 = vector.extract_strided_slice %643 {offsets = [32, 0], sizes = [16, 128], strides = [1, 1]} : vector<48x128xf32> to vector<16x128xf32>
    %666 = vector.extract_strided_slice %644 {offsets = [32, 0], sizes = [16, 128], strides = [1, 1]} : vector<48x128xf32> to vector<16x128xf32>
    %667 = vector.broadcast %148 : vector<16x1xf32> to vector<16x128xf32>
    %668 = arith.addf %666, %667 : vector<16x128xf32>
    %669 = arith.mulf %654, %668 : vector<16x128xf32>
    %670 = arith.addf %665, %669 : vector<16x128xf32>
    %671 = math.tanh %670 : vector<16x128xf32>
    %cst_324 = arith.constant 1.000000e+00 : f32
    %672 = vector.broadcast %cst_324 : f32 to vector<16x128xf32>
    %673 = arith.subf %672, %664 : vector<16x128xf32>
    %674 = arith.mulf %673, %671 : vector<16x128xf32>
    %675 = arith.mulf %664, %600 : vector<16x128xf32>
    %676 = arith.addf %674, %675 : vector<16x128xf32>
    %c6_325 = arith.constant 6 : index
    %c0_326 = arith.constant 0 : index
    %c0_327 = arith.constant 0 : index
    %677 = vector.load %arg5[%c6_325, %c0_326, %c0_327] : memref<16x32x128xf32, #tpu.memory_space<vmem>>, vector<1x16x128xf32>
    %678 = vector.shape_cast %677 : vector<1x16x128xf32> to vector<16x128xf32>
    %679 = vector.shape_cast %641 : vector<16x128xf32> to vector<1x16x128xf32>
    tpu.vector_store %arg5[%c6_325, %c0_326, %c0_327], %679 {strides = array<i32>} : memref<16x32x128xf32, #tpu.memory_space<vmem>>, vector<1x16x128xf32>,
    %c9_328 = arith.constant 9 : index
    %c16_329 = arith.constant 16 : index
    %c0_330 = arith.constant 0 : index
    %680 = vector.load %arg5[%c9_328, %c16_329, %c0_330] : memref<16x32x128xf32, #tpu.memory_space<vmem>>, vector<1x16x128xf32>
    %681 = vector.shape_cast %680 : vector<1x16x128xf32> to vector<16x128xf32>
    %682 = vector.shape_cast %676 : vector<16x128xf32> to vector<1x16x128xf32>
    tpu.vector_store %arg5[%c9_328, %c16_329, %c0_330], %682 {strides = array<i32>} : memref<16x32x128xf32, #tpu.memory_space<vmem>>, vector<1x16x128xf32>,
    %c7_331 = arith.constant 7 : index
    %c0_332 = arith.constant 0 : index
    %c0_333 = arith.constant 0 : index
    %683 = vector.load %arg6[%c7_331, %c0_332, %c0_333] : memref<16x96x128xf32, #tpu.memory_space<vmem>>, vector<1x48x128xf32>
    %684 = vector.shape_cast %683 : vector<1x48x128xf32> to vector<48x128xf32>
    %cst_334 = arith.constant dense<0.000000e+00> : vector<48x128xf32>
    %685 = tpu.matmul %145, %641, %cst_334 {dimension_numbers = #tpu.dot_dimension_numbers<[1], [0], [0], [1], [0, 0, 1, 1], [], []>} : vector<48x16xf32>, vector<16x128xf32>, vector<48x128xf32> -> vector<48x128xf32>
    %686 = vector.extract_strided_slice %684 {offsets = [0, 0], sizes = [16, 128], strides = [1, 1]} : vector<48x128xf32> to vector<16x128xf32>
    %687 = vector.extract_strided_slice %685 {offsets = [0, 0], sizes = [16, 128], strides = [1, 1]} : vector<48x128xf32> to vector<16x128xf32>
    %688 = arith.addf %686, %687 : vector<16x128xf32>
    %cst_335 = arith.constant 5.000000e-01 : f32
    %689 = vector.broadcast %cst_335 : f32 to vector<16x128xf32>
    %690 = arith.mulf %689, %688 : vector<16x128xf32>
    %691 = math.tanh %690 : vector<16x128xf32>
    %cst_336 = arith.constant 5.000000e-01 : f32
    %692 = vector.broadcast %cst_336 : f32 to vector<16x128xf32>
    %693 = arith.mulf %692, %691 : vector<16x128xf32>
    %cst_337 = arith.constant 5.000000e-01 : f32
    %694 = vector.broadcast %cst_337 : f32 to vector<16x128xf32>
    %695 = arith.addf %693, %694 : vector<16x128xf32>
    %696 = vector.extract_strided_slice %684 {offsets = [16, 0], sizes = [16, 128], strides = [1, 1]} : vector<48x128xf32> to vector<16x128xf32>
    %697 = vector.extract_strided_slice %685 {offsets = [16, 0], sizes = [16, 128], strides = [1, 1]} : vector<48x128xf32> to vector<16x128xf32>
    %698 = arith.addf %696, %697 : vector<16x128xf32>
    %cst_338 = arith.constant 5.000000e-01 : f32
    %699 = vector.broadcast %cst_338 : f32 to vector<16x128xf32>
    %700 = arith.mulf %699, %698 : vector<16x128xf32>
    %701 = math.tanh %700 : vector<16x128xf32>
    %cst_339 = arith.constant 5.000000e-01 : f32
    %702 = vector.broadcast %cst_339 : f32 to vector<16x128xf32>
    %703 = arith.mulf %702, %701 : vector<16x128xf32>
    %cst_340 = arith.constant 5.000000e-01 : f32
    %704 = vector.broadcast %cst_340 : f32 to vector<16x128xf32>
    %705 = arith.addf %703, %704 : vector<16x128xf32>
    %706 = vector.extract_strided_slice %684 {offsets = [32, 0], sizes = [16, 128], strides = [1, 1]} : vector<48x128xf32> to vector<16x128xf32>
    %707 = vector.extract_strided_slice %685 {offsets = [32, 0], sizes = [16, 128], strides = [1, 1]} : vector<48x128xf32> to vector<16x128xf32>
    %708 = vector.broadcast %147 : vector<16x1xf32> to vector<16x128xf32>
    %709 = arith.addf %707, %708 : vector<16x128xf32>
    %710 = arith.mulf %695, %709 : vector<16x128xf32>
    %711 = arith.addf %706, %710 : vector<16x128xf32>
    %712 = math.tanh %711 : vector<16x128xf32>
    %cst_341 = arith.constant 1.000000e+00 : f32
    %713 = vector.broadcast %cst_341 : f32 to vector<16x128xf32>
    %714 = arith.subf %713, %705 : vector<16x128xf32>
    %715 = arith.mulf %714, %712 : vector<16x128xf32>
    %716 = arith.mulf %705, %641 : vector<16x128xf32>
    %717 = arith.addf %715, %716 : vector<16x128xf32>
    %c8_342 = arith.constant 8 : index
    %c48_343 = arith.constant 48 : index
    %c0_344 = arith.constant 0 : index
    %718 = vector.load %arg6[%c8_342, %c48_343, %c0_344] : memref<16x96x128xf32, #tpu.memory_space<vmem>>, vector<1x48x128xf32>
    %719 = vector.shape_cast %718 : vector<1x48x128xf32> to vector<48x128xf32>
    %cst_345 = arith.constant dense<0.000000e+00> : vector<48x128xf32>
    %720 = tpu.matmul %146, %676, %cst_345 {dimension_numbers = #tpu.dot_dimension_numbers<[1], [0], [0], [1], [0, 0, 1, 1], [], []>} : vector<48x16xf32>, vector<16x128xf32>, vector<48x128xf32> -> vector<48x128xf32>
    %721 = vector.extract_strided_slice %719 {offsets = [0, 0], sizes = [16, 128], strides = [1, 1]} : vector<48x128xf32> to vector<16x128xf32>
    %722 = vector.extract_strided_slice %720 {offsets = [0, 0], sizes = [16, 128], strides = [1, 1]} : vector<48x128xf32> to vector<16x128xf32>
    %723 = arith.addf %721, %722 : vector<16x128xf32>
    %cst_346 = arith.constant 5.000000e-01 : f32
    %724 = vector.broadcast %cst_346 : f32 to vector<16x128xf32>
    %725 = arith.mulf %724, %723 : vector<16x128xf32>
    %726 = math.tanh %725 : vector<16x128xf32>
    %cst_347 = arith.constant 5.000000e-01 : f32
    %727 = vector.broadcast %cst_347 : f32 to vector<16x128xf32>
    %728 = arith.mulf %727, %726 : vector<16x128xf32>
    %cst_348 = arith.constant 5.000000e-01 : f32
    %729 = vector.broadcast %cst_348 : f32 to vector<16x128xf32>
    %730 = arith.addf %728, %729 : vector<16x128xf32>
    %731 = vector.extract_strided_slice %719 {offsets = [16, 0], sizes = [16, 128], strides = [1, 1]} : vector<48x128xf32> to vector<16x128xf32>
    %732 = vector.extract_strided_slice %720 {offsets = [16, 0], sizes = [16, 128], strides = [1, 1]} : vector<48x128xf32> to vector<16x128xf32>
    %733 = arith.addf %731, %732 : vector<16x128xf32>
    %cst_349 = arith.constant 5.000000e-01 : f32
    %734 = vector.broadcast %cst_349 : f32 to vector<16x128xf32>
    %735 = arith.mulf %734, %733 : vector<16x128xf32>
    %736 = math.tanh %735 : vector<16x128xf32>
    %cst_350 = arith.constant 5.000000e-01 : f32
    %737 = vector.broadcast %cst_350 : f32 to vector<16x128xf32>
    %738 = arith.mulf %737, %736 : vector<16x128xf32>
    %cst_351 = arith.constant 5.000000e-01 : f32
    %739 = vector.broadcast %cst_351 : f32 to vector<16x128xf32>
    %740 = arith.addf %738, %739 : vector<16x128xf32>
    %741 = vector.extract_strided_slice %719 {offsets = [32, 0], sizes = [16, 128], strides = [1, 1]} : vector<48x128xf32> to vector<16x128xf32>
    %742 = vector.extract_strided_slice %720 {offsets = [32, 0], sizes = [16, 128], strides = [1, 1]} : vector<48x128xf32> to vector<16x128xf32>
    %743 = vector.broadcast %148 : vector<16x1xf32> to vector<16x128xf32>
    %744 = arith.addf %742, %743 : vector<16x128xf32>
    %745 = arith.mulf %730, %744 : vector<16x128xf32>
    %746 = arith.addf %741, %745 : vector<16x128xf32>
    %747 = math.tanh %746 : vector<16x128xf32>
    %cst_352 = arith.constant 1.000000e+00 : f32
    %748 = vector.broadcast %cst_352 : f32 to vector<16x128xf32>
    %749 = arith.subf %748, %740 : vector<16x128xf32>
    %750 = arith.mulf %749, %747 : vector<16x128xf32>
    %751 = arith.mulf %740, %676 : vector<16x128xf32>
    %752 = arith.addf %750, %751 : vector<16x128xf32>
    %c7_353 = arith.constant 7 : index
    %c0_354 = arith.constant 0 : index
    %c0_355 = arith.constant 0 : index
    %753 = vector.load %arg5[%c7_353, %c0_354, %c0_355] : memref<16x32x128xf32, #tpu.memory_space<vmem>>, vector<1x16x128xf32>
    %754 = vector.shape_cast %753 : vector<1x16x128xf32> to vector<16x128xf32>
    %755 = vector.shape_cast %717 : vector<16x128xf32> to vector<1x16x128xf32>
    tpu.vector_store %arg5[%c7_353, %c0_354, %c0_355], %755 {strides = array<i32>} : memref<16x32x128xf32, #tpu.memory_space<vmem>>, vector<1x16x128xf32>,
    %c8_356 = arith.constant 8 : index
    %c16_357 = arith.constant 16 : index
    %c0_358 = arith.constant 0 : index
    %756 = vector.load %arg5[%c8_356, %c16_357, %c0_358] : memref<16x32x128xf32, #tpu.memory_space<vmem>>, vector<1x16x128xf32>
    %757 = vector.shape_cast %756 : vector<1x16x128xf32> to vector<16x128xf32>
    %758 = vector.shape_cast %752 : vector<16x128xf32> to vector<1x16x128xf32>
    tpu.vector_store %arg5[%c8_356, %c16_357, %c0_358], %758 {strides = array<i32>} : memref<16x32x128xf32, #tpu.memory_space<vmem>>, vector<1x16x128xf32>,
    %c8_359 = arith.constant 8 : index
    %c0_360 = arith.constant 0 : index
    %c0_361 = arith.constant 0 : index
    %759 = vector.load %arg6[%c8_359, %c0_360, %c0_361] : memref<16x96x128xf32, #tpu.memory_space<vmem>>, vector<1x48x128xf32>
    %760 = vector.shape_cast %759 : vector<1x48x128xf32> to vector<48x128xf32>
    %cst_362 = arith.constant dense<0.000000e+00> : vector<48x128xf32>
    %761 = tpu.matmul %145, %717, %cst_362 {dimension_numbers = #tpu.dot_dimension_numbers<[1], [0], [0], [1], [0, 0, 1, 1], [], []>} : vector<48x16xf32>, vector<16x128xf32>, vector<48x128xf32> -> vector<48x128xf32>
    %762 = vector.extract_strided_slice %760 {offsets = [0, 0], sizes = [16, 128], strides = [1, 1]} : vector<48x128xf32> to vector<16x128xf32>
    %763 = vector.extract_strided_slice %761 {offsets = [0, 0], sizes = [16, 128], strides = [1, 1]} : vector<48x128xf32> to vector<16x128xf32>
    %764 = arith.addf %762, %763 : vector<16x128xf32>
    %cst_363 = arith.constant 5.000000e-01 : f32
    %765 = vector.broadcast %cst_363 : f32 to vector<16x128xf32>
    %766 = arith.mulf %765, %764 : vector<16x128xf32>
    %767 = math.tanh %766 : vector<16x128xf32>
    %cst_364 = arith.constant 5.000000e-01 : f32
    %768 = vector.broadcast %cst_364 : f32 to vector<16x128xf32>
    %769 = arith.mulf %768, %767 : vector<16x128xf32>
    %cst_365 = arith.constant 5.000000e-01 : f32
    %770 = vector.broadcast %cst_365 : f32 to vector<16x128xf32>
    %771 = arith.addf %769, %770 : vector<16x128xf32>
    %772 = vector.extract_strided_slice %760 {offsets = [16, 0], sizes = [16, 128], strides = [1, 1]} : vector<48x128xf32> to vector<16x128xf32>
    %773 = vector.extract_strided_slice %761 {offsets = [16, 0], sizes = [16, 128], strides = [1, 1]} : vector<48x128xf32> to vector<16x128xf32>
    %774 = arith.addf %772, %773 : vector<16x128xf32>
    %cst_366 = arith.constant 5.000000e-01 : f32
    %775 = vector.broadcast %cst_366 : f32 to vector<16x128xf32>
    %776 = arith.mulf %775, %774 : vector<16x128xf32>
    %777 = math.tanh %776 : vector<16x128xf32>
    %cst_367 = arith.constant 5.000000e-01 : f32
    %778 = vector.broadcast %cst_367 : f32 to vector<16x128xf32>
    %779 = arith.mulf %778, %777 : vector<16x128xf32>
    %cst_368 = arith.constant 5.000000e-01 : f32
    %780 = vector.broadcast %cst_368 : f32 to vector<16x128xf32>
    %781 = arith.addf %779, %780 : vector<16x128xf32>
    %782 = vector.extract_strided_slice %760 {offsets = [32, 0], sizes = [16, 128], strides = [1, 1]} : vector<48x128xf32> to vector<16x128xf32>
    %783 = vector.extract_strided_slice %761 {offsets = [32, 0], sizes = [16, 128], strides = [1, 1]} : vector<48x128xf32> to vector<16x128xf32>
    %784 = vector.broadcast %147 : vector<16x1xf32> to vector<16x128xf32>
    %785 = arith.addf %783, %784 : vector<16x128xf32>
    %786 = arith.mulf %771, %785 : vector<16x128xf32>
    %787 = arith.addf %782, %786 : vector<16x128xf32>
    %788 = math.tanh %787 : vector<16x128xf32>
    %cst_369 = arith.constant 1.000000e+00 : f32
    %789 = vector.broadcast %cst_369 : f32 to vector<16x128xf32>
    %790 = arith.subf %789, %781 : vector<16x128xf32>
    %791 = arith.mulf %790, %788 : vector<16x128xf32>
    %792 = arith.mulf %781, %717 : vector<16x128xf32>
    %793 = arith.addf %791, %792 : vector<16x128xf32>
    %c7_370 = arith.constant 7 : index
    %c48_371 = arith.constant 48 : index
    %c0_372 = arith.constant 0 : index
    %794 = vector.load %arg6[%c7_370, %c48_371, %c0_372] : memref<16x96x128xf32, #tpu.memory_space<vmem>>, vector<1x48x128xf32>
    %795 = vector.shape_cast %794 : vector<1x48x128xf32> to vector<48x128xf32>
    %cst_373 = arith.constant dense<0.000000e+00> : vector<48x128xf32>
    %796 = tpu.matmul %146, %752, %cst_373 {dimension_numbers = #tpu.dot_dimension_numbers<[1], [0], [0], [1], [0, 0, 1, 1], [], []>} : vector<48x16xf32>, vector<16x128xf32>, vector<48x128xf32> -> vector<48x128xf32>
    %797 = vector.extract_strided_slice %795 {offsets = [0, 0], sizes = [16, 128], strides = [1, 1]} : vector<48x128xf32> to vector<16x128xf32>
    %798 = vector.extract_strided_slice %796 {offsets = [0, 0], sizes = [16, 128], strides = [1, 1]} : vector<48x128xf32> to vector<16x128xf32>
    %799 = arith.addf %797, %798 : vector<16x128xf32>
    %cst_374 = arith.constant 5.000000e-01 : f32
    %800 = vector.broadcast %cst_374 : f32 to vector<16x128xf32>
    %801 = arith.mulf %800, %799 : vector<16x128xf32>
    %802 = math.tanh %801 : vector<16x128xf32>
    %cst_375 = arith.constant 5.000000e-01 : f32
    %803 = vector.broadcast %cst_375 : f32 to vector<16x128xf32>
    %804 = arith.mulf %803, %802 : vector<16x128xf32>
    %cst_376 = arith.constant 5.000000e-01 : f32
    %805 = vector.broadcast %cst_376 : f32 to vector<16x128xf32>
    %806 = arith.addf %804, %805 : vector<16x128xf32>
    %807 = vector.extract_strided_slice %795 {offsets = [16, 0], sizes = [16, 128], strides = [1, 1]} : vector<48x128xf32> to vector<16x128xf32>
    %808 = vector.extract_strided_slice %796 {offsets = [16, 0], sizes = [16, 128], strides = [1, 1]} : vector<48x128xf32> to vector<16x128xf32>
    %809 = arith.addf %807, %808 : vector<16x128xf32>
    %cst_377 = arith.constant 5.000000e-01 : f32
    %810 = vector.broadcast %cst_377 : f32 to vector<16x128xf32>
    %811 = arith.mulf %810, %809 : vector<16x128xf32>
    %812 = math.tanh %811 : vector<16x128xf32>
    %cst_378 = arith.constant 5.000000e-01 : f32
    %813 = vector.broadcast %cst_378 : f32 to vector<16x128xf32>
    %814 = arith.mulf %813, %812 : vector<16x128xf32>
    %cst_379 = arith.constant 5.000000e-01 : f32
    %815 = vector.broadcast %cst_379 : f32 to vector<16x128xf32>
    %816 = arith.addf %814, %815 : vector<16x128xf32>
    %817 = vector.extract_strided_slice %795 {offsets = [32, 0], sizes = [16, 128], strides = [1, 1]} : vector<48x128xf32> to vector<16x128xf32>
    %818 = vector.extract_strided_slice %796 {offsets = [32, 0], sizes = [16, 128], strides = [1, 1]} : vector<48x128xf32> to vector<16x128xf32>
    %819 = vector.broadcast %148 : vector<16x1xf32> to vector<16x128xf32>
    %820 = arith.addf %818, %819 : vector<16x128xf32>
    %821 = arith.mulf %806, %820 : vector<16x128xf32>
    %822 = arith.addf %817, %821 : vector<16x128xf32>
    %823 = math.tanh %822 : vector<16x128xf32>
    %cst_380 = arith.constant 1.000000e+00 : f32
    %824 = vector.broadcast %cst_380 : f32 to vector<16x128xf32>
    %825 = arith.subf %824, %816 : vector<16x128xf32>
    %826 = arith.mulf %825, %823 : vector<16x128xf32>
    %827 = arith.mulf %816, %752 : vector<16x128xf32>
    %828 = arith.addf %826, %827 : vector<16x128xf32>
    %c8_381 = arith.constant 8 : index
    %c0_382 = arith.constant 0 : index
    %c0_383 = arith.constant 0 : index
    %829 = vector.load %arg5[%c8_381, %c0_382, %c0_383] : memref<16x32x128xf32, #tpu.memory_space<vmem>>, vector<1x16x128xf32>
    %830 = vector.shape_cast %829 : vector<1x16x128xf32> to vector<16x128xf32>
    %831 = vector.shape_cast %793 : vector<16x128xf32> to vector<1x16x128xf32>
    tpu.vector_store %arg5[%c8_381, %c0_382, %c0_383], %831 {strides = array<i32>} : memref<16x32x128xf32, #tpu.memory_space<vmem>>, vector<1x16x128xf32>,
    %c7_384 = arith.constant 7 : index
    %c16_385 = arith.constant 16 : index
    %c0_386 = arith.constant 0 : index
    %832 = vector.load %arg5[%c7_384, %c16_385, %c0_386] : memref<16x32x128xf32, #tpu.memory_space<vmem>>, vector<1x16x128xf32>
    %833 = vector.shape_cast %832 : vector<1x16x128xf32> to vector<16x128xf32>
    %834 = vector.shape_cast %828 : vector<16x128xf32> to vector<1x16x128xf32>
    tpu.vector_store %arg5[%c7_384, %c16_385, %c0_386], %834 {strides = array<i32>} : memref<16x32x128xf32, #tpu.memory_space<vmem>>, vector<1x16x128xf32>,
    %c9_387 = arith.constant 9 : index
    %c0_388 = arith.constant 0 : index
    %c0_389 = arith.constant 0 : index
    %835 = vector.load %arg6[%c9_387, %c0_388, %c0_389] : memref<16x96x128xf32, #tpu.memory_space<vmem>>, vector<1x48x128xf32>
    %836 = vector.shape_cast %835 : vector<1x48x128xf32> to vector<48x128xf32>
    %cst_390 = arith.constant dense<0.000000e+00> : vector<48x128xf32>
    %837 = tpu.matmul %145, %793, %cst_390 {dimension_numbers = #tpu.dot_dimension_numbers<[1], [0], [0], [1], [0, 0, 1, 1], [], []>} : vector<48x16xf32>, vector<16x128xf32>, vector<48x128xf32> -> vector<48x128xf32>
    %838 = vector.extract_strided_slice %836 {offsets = [0, 0], sizes = [16, 128], strides = [1, 1]} : vector<48x128xf32> to vector<16x128xf32>
    %839 = vector.extract_strided_slice %837 {offsets = [0, 0], sizes = [16, 128], strides = [1, 1]} : vector<48x128xf32> to vector<16x128xf32>
    %840 = arith.addf %838, %839 : vector<16x128xf32>
    %cst_391 = arith.constant 5.000000e-01 : f32
    %841 = vector.broadcast %cst_391 : f32 to vector<16x128xf32>
    %842 = arith.mulf %841, %840 : vector<16x128xf32>
    %843 = math.tanh %842 : vector<16x128xf32>
    %cst_392 = arith.constant 5.000000e-01 : f32
    %844 = vector.broadcast %cst_392 : f32 to vector<16x128xf32>
    %845 = arith.mulf %844, %843 : vector<16x128xf32>
    %cst_393 = arith.constant 5.000000e-01 : f32
    %846 = vector.broadcast %cst_393 : f32 to vector<16x128xf32>
    %847 = arith.addf %845, %846 : vector<16x128xf32>
    %848 = vector.extract_strided_slice %836 {offsets = [16, 0], sizes = [16, 128], strides = [1, 1]} : vector<48x128xf32> to vector<16x128xf32>
    %849 = vector.extract_strided_slice %837 {offsets = [16, 0], sizes = [16, 128], strides = [1, 1]} : vector<48x128xf32> to vector<16x128xf32>
    %850 = arith.addf %848, %849 : vector<16x128xf32>
    %cst_394 = arith.constant 5.000000e-01 : f32
    %851 = vector.broadcast %cst_394 : f32 to vector<16x128xf32>
    %852 = arith.mulf %851, %850 : vector<16x128xf32>
    %853 = math.tanh %852 : vector<16x128xf32>
    %cst_395 = arith.constant 5.000000e-01 : f32
    %854 = vector.broadcast %cst_395 : f32 to vector<16x128xf32>
    %855 = arith.mulf %854, %853 : vector<16x128xf32>
    %cst_396 = arith.constant 5.000000e-01 : f32
    %856 = vector.broadcast %cst_396 : f32 to vector<16x128xf32>
    %857 = arith.addf %855, %856 : vector<16x128xf32>
    %858 = vector.extract_strided_slice %836 {offsets = [32, 0], sizes = [16, 128], strides = [1, 1]} : vector<48x128xf32> to vector<16x128xf32>
    %859 = vector.extract_strided_slice %837 {offsets = [32, 0], sizes = [16, 128], strides = [1, 1]} : vector<48x128xf32> to vector<16x128xf32>
    %860 = vector.broadcast %147 : vector<16x1xf32> to vector<16x128xf32>
    %861 = arith.addf %859, %860 : vector<16x128xf32>
    %862 = arith.mulf %847, %861 : vector<16x128xf32>
    %863 = arith.addf %858, %862 : vector<16x128xf32>
    %864 = math.tanh %863 : vector<16x128xf32>
    %cst_397 = arith.constant 1.000000e+00 : f32
    %865 = vector.broadcast %cst_397 : f32 to vector<16x128xf32>
    %866 = arith.subf %865, %857 : vector<16x128xf32>
    %867 = arith.mulf %866, %864 : vector<16x128xf32>
    %868 = arith.mulf %857, %793 : vector<16x128xf32>
    %869 = arith.addf %867, %868 : vector<16x128xf32>
    %c6_398 = arith.constant 6 : index
    %c48_399 = arith.constant 48 : index
    %c0_400 = arith.constant 0 : index
    %870 = vector.load %arg6[%c6_398, %c48_399, %c0_400] : memref<16x96x128xf32, #tpu.memory_space<vmem>>, vector<1x48x128xf32>
    %871 = vector.shape_cast %870 : vector<1x48x128xf32> to vector<48x128xf32>
    %cst_401 = arith.constant dense<0.000000e+00> : vector<48x128xf32>
    %872 = tpu.matmul %146, %828, %cst_401 {dimension_numbers = #tpu.dot_dimension_numbers<[1], [0], [0], [1], [0, 0, 1, 1], [], []>} : vector<48x16xf32>, vector<16x128xf32>, vector<48x128xf32> -> vector<48x128xf32>
    %873 = vector.extract_strided_slice %871 {offsets = [0, 0], sizes = [16, 128], strides = [1, 1]} : vector<48x128xf32> to vector<16x128xf32>
    %874 = vector.extract_strided_slice %872 {offsets = [0, 0], sizes = [16, 128], strides = [1, 1]} : vector<48x128xf32> to vector<16x128xf32>
    %875 = arith.addf %873, %874 : vector<16x128xf32>
    %cst_402 = arith.constant 5.000000e-01 : f32
    %876 = vector.broadcast %cst_402 : f32 to vector<16x128xf32>
    %877 = arith.mulf %876, %875 : vector<16x128xf32>
    %878 = math.tanh %877 : vector<16x128xf32>
    %cst_403 = arith.constant 5.000000e-01 : f32
    %879 = vector.broadcast %cst_403 : f32 to vector<16x128xf32>
    %880 = arith.mulf %879, %878 : vector<16x128xf32>
    %cst_404 = arith.constant 5.000000e-01 : f32
    %881 = vector.broadcast %cst_404 : f32 to vector<16x128xf32>
    %882 = arith.addf %880, %881 : vector<16x128xf32>
    %883 = vector.extract_strided_slice %871 {offsets = [16, 0], sizes = [16, 128], strides = [1, 1]} : vector<48x128xf32> to vector<16x128xf32>
    %884 = vector.extract_strided_slice %872 {offsets = [16, 0], sizes = [16, 128], strides = [1, 1]} : vector<48x128xf32> to vector<16x128xf32>
    %885 = arith.addf %883, %884 : vector<16x128xf32>
    %cst_405 = arith.constant 5.000000e-01 : f32
    %886 = vector.broadcast %cst_405 : f32 to vector<16x128xf32>
    %887 = arith.mulf %886, %885 : vector<16x128xf32>
    %888 = math.tanh %887 : vector<16x128xf32>
    %cst_406 = arith.constant 5.000000e-01 : f32
    %889 = vector.broadcast %cst_406 : f32 to vector<16x128xf32>
    %890 = arith.mulf %889, %888 : vector<16x128xf32>
    %cst_407 = arith.constant 5.000000e-01 : f32
    %891 = vector.broadcast %cst_407 : f32 to vector<16x128xf32>
    %892 = arith.addf %890, %891 : vector<16x128xf32>
    %893 = vector.extract_strided_slice %871 {offsets = [32, 0], sizes = [16, 128], strides = [1, 1]} : vector<48x128xf32> to vector<16x128xf32>
    %894 = vector.extract_strided_slice %872 {offsets = [32, 0], sizes = [16, 128], strides = [1, 1]} : vector<48x128xf32> to vector<16x128xf32>
    %895 = vector.broadcast %148 : vector<16x1xf32> to vector<16x128xf32>
    %896 = arith.addf %894, %895 : vector<16x128xf32>
    %897 = arith.mulf %882, %896 : vector<16x128xf32>
    %898 = arith.addf %893, %897 : vector<16x128xf32>
    %899 = math.tanh %898 : vector<16x128xf32>
    %cst_408 = arith.constant 1.000000e+00 : f32
    %900 = vector.broadcast %cst_408 : f32 to vector<16x128xf32>
    %901 = arith.subf %900, %892 : vector<16x128xf32>
    %902 = arith.mulf %901, %899 : vector<16x128xf32>
    %903 = arith.mulf %892, %828 : vector<16x128xf32>
    %904 = arith.addf %902, %903 : vector<16x128xf32>
    %c9_409 = arith.constant 9 : index
    %c0_410 = arith.constant 0 : index
    %c0_411 = arith.constant 0 : index
    %905 = vector.load %arg5[%c9_409, %c0_410, %c0_411] : memref<16x32x128xf32, #tpu.memory_space<vmem>>, vector<1x16x128xf32>
    %906 = vector.shape_cast %905 : vector<1x16x128xf32> to vector<16x128xf32>
    %907 = vector.shape_cast %869 : vector<16x128xf32> to vector<1x16x128xf32>
    tpu.vector_store %arg5[%c9_409, %c0_410, %c0_411], %907 {strides = array<i32>} : memref<16x32x128xf32, #tpu.memory_space<vmem>>, vector<1x16x128xf32>,
    %c6_412 = arith.constant 6 : index
    %c16_413 = arith.constant 16 : index
    %c0_414 = arith.constant 0 : index
    %908 = vector.load %arg5[%c6_412, %c16_413, %c0_414] : memref<16x32x128xf32, #tpu.memory_space<vmem>>, vector<1x16x128xf32>
    %909 = vector.shape_cast %908 : vector<1x16x128xf32> to vector<16x128xf32>
    %910 = vector.shape_cast %904 : vector<16x128xf32> to vector<1x16x128xf32>
    tpu.vector_store %arg5[%c6_412, %c16_413, %c0_414], %910 {strides = array<i32>} : memref<16x32x128xf32, #tpu.memory_space<vmem>>, vector<1x16x128xf32>,
    %c10_415 = arith.constant 10 : index
    %c0_416 = arith.constant 0 : index
    %c0_417 = arith.constant 0 : index
    %911 = vector.load %arg6[%c10_415, %c0_416, %c0_417] : memref<16x96x128xf32, #tpu.memory_space<vmem>>, vector<1x48x128xf32>
    %912 = vector.shape_cast %911 : vector<1x48x128xf32> to vector<48x128xf32>
    %cst_418 = arith.constant dense<0.000000e+00> : vector<48x128xf32>
    %913 = tpu.matmul %145, %869, %cst_418 {dimension_numbers = #tpu.dot_dimension_numbers<[1], [0], [0], [1], [0, 0, 1, 1], [], []>} : vector<48x16xf32>, vector<16x128xf32>, vector<48x128xf32> -> vector<48x128xf32>
    %914 = vector.extract_strided_slice %912 {offsets = [0, 0], sizes = [16, 128], strides = [1, 1]} : vector<48x128xf32> to vector<16x128xf32>
    %915 = vector.extract_strided_slice %913 {offsets = [0, 0], sizes = [16, 128], strides = [1, 1]} : vector<48x128xf32> to vector<16x128xf32>
    %916 = arith.addf %914, %915 : vector<16x128xf32>
    %cst_419 = arith.constant 5.000000e-01 : f32
    %917 = vector.broadcast %cst_419 : f32 to vector<16x128xf32>
    %918 = arith.mulf %917, %916 : vector<16x128xf32>
    %919 = math.tanh %918 : vector<16x128xf32>
    %cst_420 = arith.constant 5.000000e-01 : f32
    %920 = vector.broadcast %cst_420 : f32 to vector<16x128xf32>
    %921 = arith.mulf %920, %919 : vector<16x128xf32>
    %cst_421 = arith.constant 5.000000e-01 : f32
    %922 = vector.broadcast %cst_421 : f32 to vector<16x128xf32>
    %923 = arith.addf %921, %922 : vector<16x128xf32>
    %924 = vector.extract_strided_slice %912 {offsets = [16, 0], sizes = [16, 128], strides = [1, 1]} : vector<48x128xf32> to vector<16x128xf32>
    %925 = vector.extract_strided_slice %913 {offsets = [16, 0], sizes = [16, 128], strides = [1, 1]} : vector<48x128xf32> to vector<16x128xf32>
    %926 = arith.addf %924, %925 : vector<16x128xf32>
    %cst_422 = arith.constant 5.000000e-01 : f32
    %927 = vector.broadcast %cst_422 : f32 to vector<16x128xf32>
    %928 = arith.mulf %927, %926 : vector<16x128xf32>
    %929 = math.tanh %928 : vector<16x128xf32>
    %cst_423 = arith.constant 5.000000e-01 : f32
    %930 = vector.broadcast %cst_423 : f32 to vector<16x128xf32>
    %931 = arith.mulf %930, %929 : vector<16x128xf32>
    %cst_424 = arith.constant 5.000000e-01 : f32
    %932 = vector.broadcast %cst_424 : f32 to vector<16x128xf32>
    %933 = arith.addf %931, %932 : vector<16x128xf32>
    %934 = vector.extract_strided_slice %912 {offsets = [32, 0], sizes = [16, 128], strides = [1, 1]} : vector<48x128xf32> to vector<16x128xf32>
    %935 = vector.extract_strided_slice %913 {offsets = [32, 0], sizes = [16, 128], strides = [1, 1]} : vector<48x128xf32> to vector<16x128xf32>
    %936 = vector.broadcast %147 : vector<16x1xf32> to vector<16x128xf32>
    %937 = arith.addf %935, %936 : vector<16x128xf32>
    %938 = arith.mulf %923, %937 : vector<16x128xf32>
    %939 = arith.addf %934, %938 : vector<16x128xf32>
    %940 = math.tanh %939 : vector<16x128xf32>
    %cst_425 = arith.constant 1.000000e+00 : f32
    %941 = vector.broadcast %cst_425 : f32 to vector<16x128xf32>
    %942 = arith.subf %941, %933 : vector<16x128xf32>
    %943 = arith.mulf %942, %940 : vector<16x128xf32>
    %944 = arith.mulf %933, %869 : vector<16x128xf32>
    %945 = arith.addf %943, %944 : vector<16x128xf32>
    %c5_426 = arith.constant 5 : index
    %c48_427 = arith.constant 48 : index
    %c0_428 = arith.constant 0 : index
    %946 = vector.load %arg6[%c5_426, %c48_427, %c0_428] : memref<16x96x128xf32, #tpu.memory_space<vmem>>, vector<1x48x128xf32>
    %947 = vector.shape_cast %946 : vector<1x48x128xf32> to vector<48x128xf32>
    %cst_429 = arith.constant dense<0.000000e+00> : vector<48x128xf32>
    %948 = tpu.matmul %146, %904, %cst_429 {dimension_numbers = #tpu.dot_dimension_numbers<[1], [0], [0], [1], [0, 0, 1, 1], [], []>} : vector<48x16xf32>, vector<16x128xf32>, vector<48x128xf32> -> vector<48x128xf32>
    %949 = vector.extract_strided_slice %947 {offsets = [0, 0], sizes = [16, 128], strides = [1, 1]} : vector<48x128xf32> to vector<16x128xf32>
    %950 = vector.extract_strided_slice %948 {offsets = [0, 0], sizes = [16, 128], strides = [1, 1]} : vector<48x128xf32> to vector<16x128xf32>
    %951 = arith.addf %949, %950 : vector<16x128xf32>
    %cst_430 = arith.constant 5.000000e-01 : f32
    %952 = vector.broadcast %cst_430 : f32 to vector<16x128xf32>
    %953 = arith.mulf %952, %951 : vector<16x128xf32>
    %954 = math.tanh %953 : vector<16x128xf32>
    %cst_431 = arith.constant 5.000000e-01 : f32
    %955 = vector.broadcast %cst_431 : f32 to vector<16x128xf32>
    %956 = arith.mulf %955, %954 : vector<16x128xf32>
    %cst_432 = arith.constant 5.000000e-01 : f32
    %957 = vector.broadcast %cst_432 : f32 to vector<16x128xf32>
    %958 = arith.addf %956, %957 : vector<16x128xf32>
    %959 = vector.extract_strided_slice %947 {offsets = [16, 0], sizes = [16, 128], strides = [1, 1]} : vector<48x128xf32> to vector<16x128xf32>
    %960 = vector.extract_strided_slice %948 {offsets = [16, 0], sizes = [16, 128], strides = [1, 1]} : vector<48x128xf32> to vector<16x128xf32>
    %961 = arith.addf %959, %960 : vector<16x128xf32>
    %cst_433 = arith.constant 5.000000e-01 : f32
    %962 = vector.broadcast %cst_433 : f32 to vector<16x128xf32>
    %963 = arith.mulf %962, %961 : vector<16x128xf32>
    %964 = math.tanh %963 : vector<16x128xf32>
    %cst_434 = arith.constant 5.000000e-01 : f32
    %965 = vector.broadcast %cst_434 : f32 to vector<16x128xf32>
    %966 = arith.mulf %965, %964 : vector<16x128xf32>
    %cst_435 = arith.constant 5.000000e-01 : f32
    %967 = vector.broadcast %cst_435 : f32 to vector<16x128xf32>
    %968 = arith.addf %966, %967 : vector<16x128xf32>
    %969 = vector.extract_strided_slice %947 {offsets = [32, 0], sizes = [16, 128], strides = [1, 1]} : vector<48x128xf32> to vector<16x128xf32>
    %970 = vector.extract_strided_slice %948 {offsets = [32, 0], sizes = [16, 128], strides = [1, 1]} : vector<48x128xf32> to vector<16x128xf32>
    %971 = vector.broadcast %148 : vector<16x1xf32> to vector<16x128xf32>
    %972 = arith.addf %970, %971 : vector<16x128xf32>
    %973 = arith.mulf %958, %972 : vector<16x128xf32>
    %974 = arith.addf %969, %973 : vector<16x128xf32>
    %975 = math.tanh %974 : vector<16x128xf32>
    %cst_436 = arith.constant 1.000000e+00 : f32
    %976 = vector.broadcast %cst_436 : f32 to vector<16x128xf32>
    %977 = arith.subf %976, %968 : vector<16x128xf32>
    %978 = arith.mulf %977, %975 : vector<16x128xf32>
    %979 = arith.mulf %968, %904 : vector<16x128xf32>
    %980 = arith.addf %978, %979 : vector<16x128xf32>
    %c10_437 = arith.constant 10 : index
    %c0_438 = arith.constant 0 : index
    %c0_439 = arith.constant 0 : index
    %981 = vector.load %arg5[%c10_437, %c0_438, %c0_439] : memref<16x32x128xf32, #tpu.memory_space<vmem>>, vector<1x16x128xf32>
    %982 = vector.shape_cast %981 : vector<1x16x128xf32> to vector<16x128xf32>
    %983 = vector.shape_cast %945 : vector<16x128xf32> to vector<1x16x128xf32>
    tpu.vector_store %arg5[%c10_437, %c0_438, %c0_439], %983 {strides = array<i32>} : memref<16x32x128xf32, #tpu.memory_space<vmem>>, vector<1x16x128xf32>,
    %c5_440 = arith.constant 5 : index
    %c16_441 = arith.constant 16 : index
    %c0_442 = arith.constant 0 : index
    %984 = vector.load %arg5[%c5_440, %c16_441, %c0_442] : memref<16x32x128xf32, #tpu.memory_space<vmem>>, vector<1x16x128xf32>
    %985 = vector.shape_cast %984 : vector<1x16x128xf32> to vector<16x128xf32>
    %986 = vector.shape_cast %980 : vector<16x128xf32> to vector<1x16x128xf32>
    tpu.vector_store %arg5[%c5_440, %c16_441, %c0_442], %986 {strides = array<i32>} : memref<16x32x128xf32, #tpu.memory_space<vmem>>, vector<1x16x128xf32>,
    %c11_443 = arith.constant 11 : index
    %c0_444 = arith.constant 0 : index
    %c0_445 = arith.constant 0 : index
    %987 = vector.load %arg6[%c11_443, %c0_444, %c0_445] : memref<16x96x128xf32, #tpu.memory_space<vmem>>, vector<1x48x128xf32>
    %988 = vector.shape_cast %987 : vector<1x48x128xf32> to vector<48x128xf32>
    %cst_446 = arith.constant dense<0.000000e+00> : vector<48x128xf32>
    %989 = tpu.matmul %145, %945, %cst_446 {dimension_numbers = #tpu.dot_dimension_numbers<[1], [0], [0], [1], [0, 0, 1, 1], [], []>} : vector<48x16xf32>, vector<16x128xf32>, vector<48x128xf32> -> vector<48x128xf32>
    %990 = vector.extract_strided_slice %988 {offsets = [0, 0], sizes = [16, 128], strides = [1, 1]} : vector<48x128xf32> to vector<16x128xf32>
    %991 = vector.extract_strided_slice %989 {offsets = [0, 0], sizes = [16, 128], strides = [1, 1]} : vector<48x128xf32> to vector<16x128xf32>
    %992 = arith.addf %990, %991 : vector<16x128xf32>
    %cst_447 = arith.constant 5.000000e-01 : f32
    %993 = vector.broadcast %cst_447 : f32 to vector<16x128xf32>
    %994 = arith.mulf %993, %992 : vector<16x128xf32>
    %995 = math.tanh %994 : vector<16x128xf32>
    %cst_448 = arith.constant 5.000000e-01 : f32
    %996 = vector.broadcast %cst_448 : f32 to vector<16x128xf32>
    %997 = arith.mulf %996, %995 : vector<16x128xf32>
    %cst_449 = arith.constant 5.000000e-01 : f32
    %998 = vector.broadcast %cst_449 : f32 to vector<16x128xf32>
    %999 = arith.addf %997, %998 : vector<16x128xf32>
    %1000 = vector.extract_strided_slice %988 {offsets = [16, 0], sizes = [16, 128], strides = [1, 1]} : vector<48x128xf32> to vector<16x128xf32>
    %1001 = vector.extract_strided_slice %989 {offsets = [16, 0], sizes = [16, 128], strides = [1, 1]} : vector<48x128xf32> to vector<16x128xf32>
    %1002 = arith.addf %1000, %1001 : vector<16x128xf32>
    %cst_450 = arith.constant 5.000000e-01 : f32
    %1003 = vector.broadcast %cst_450 : f32 to vector<16x128xf32>
    %1004 = arith.mulf %1003, %1002 : vector<16x128xf32>
    %1005 = math.tanh %1004 : vector<16x128xf32>
    %cst_451 = arith.constant 5.000000e-01 : f32
    %1006 = vector.broadcast %cst_451 : f32 to vector<16x128xf32>
    %1007 = arith.mulf %1006, %1005 : vector<16x128xf32>
    %cst_452 = arith.constant 5.000000e-01 : f32
    %1008 = vector.broadcast %cst_452 : f32 to vector<16x128xf32>
    %1009 = arith.addf %1007, %1008 : vector<16x128xf32>
    %1010 = vector.extract_strided_slice %988 {offsets = [32, 0], sizes = [16, 128], strides = [1, 1]} : vector<48x128xf32> to vector<16x128xf32>
    %1011 = vector.extract_strided_slice %989 {offsets = [32, 0], sizes = [16, 128], strides = [1, 1]} : vector<48x128xf32> to vector<16x128xf32>
    %1012 = vector.broadcast %147 : vector<16x1xf32> to vector<16x128xf32>
    %1013 = arith.addf %1011, %1012 : vector<16x128xf32>
    %1014 = arith.mulf %999, %1013 : vector<16x128xf32>
    %1015 = arith.addf %1010, %1014 : vector<16x128xf32>
    %1016 = math.tanh %1015 : vector<16x128xf32>
    %cst_453 = arith.constant 1.000000e+00 : f32
    %1017 = vector.broadcast %cst_453 : f32 to vector<16x128xf32>
    %1018 = arith.subf %1017, %1009 : vector<16x128xf32>
    %1019 = arith.mulf %1018, %1016 : vector<16x128xf32>
    %1020 = arith.mulf %1009, %945 : vector<16x128xf32>
    %1021 = arith.addf %1019, %1020 : vector<16x128xf32>
    %c4_454 = arith.constant 4 : index
    %c48_455 = arith.constant 48 : index
    %c0_456 = arith.constant 0 : index
    %1022 = vector.load %arg6[%c4_454, %c48_455, %c0_456] : memref<16x96x128xf32, #tpu.memory_space<vmem>>, vector<1x48x128xf32>
    %1023 = vector.shape_cast %1022 : vector<1x48x128xf32> to vector<48x128xf32>
    %cst_457 = arith.constant dense<0.000000e+00> : vector<48x128xf32>
    %1024 = tpu.matmul %146, %980, %cst_457 {dimension_numbers = #tpu.dot_dimension_numbers<[1], [0], [0], [1], [0, 0, 1, 1], [], []>} : vector<48x16xf32>, vector<16x128xf32>, vector<48x128xf32> -> vector<48x128xf32>
    %1025 = vector.extract_strided_slice %1023 {offsets = [0, 0], sizes = [16, 128], strides = [1, 1]} : vector<48x128xf32> to vector<16x128xf32>
    %1026 = vector.extract_strided_slice %1024 {offsets = [0, 0], sizes = [16, 128], strides = [1, 1]} : vector<48x128xf32> to vector<16x128xf32>
    %1027 = arith.addf %1025, %1026 : vector<16x128xf32>
    %cst_458 = arith.constant 5.000000e-01 : f32
    %1028 = vector.broadcast %cst_458 : f32 to vector<16x128xf32>
    %1029 = arith.mulf %1028, %1027 : vector<16x128xf32>
    %1030 = math.tanh %1029 : vector<16x128xf32>
    %cst_459 = arith.constant 5.000000e-01 : f32
    %1031 = vector.broadcast %cst_459 : f32 to vector<16x128xf32>
    %1032 = arith.mulf %1031, %1030 : vector<16x128xf32>
    %cst_460 = arith.constant 5.000000e-01 : f32
    %1033 = vector.broadcast %cst_460 : f32 to vector<16x128xf32>
    %1034 = arith.addf %1032, %1033 : vector<16x128xf32>
    %1035 = vector.extract_strided_slice %1023 {offsets = [16, 0], sizes = [16, 128], strides = [1, 1]} : vector<48x128xf32> to vector<16x128xf32>
    %1036 = vector.extract_strided_slice %1024 {offsets = [16, 0], sizes = [16, 128], strides = [1, 1]} : vector<48x128xf32> to vector<16x128xf32>
    %1037 = arith.addf %1035, %1036 : vector<16x128xf32>
    %cst_461 = arith.constant 5.000000e-01 : f32
    %1038 = vector.broadcast %cst_461 : f32 to vector<16x128xf32>
    %1039 = arith.mulf %1038, %1037 : vector<16x128xf32>
    %1040 = math.tanh %1039 : vector<16x128xf32>
    %cst_462 = arith.constant 5.000000e-01 : f32
    %1041 = vector.broadcast %cst_462 : f32 to vector<16x128xf32>
    %1042 = arith.mulf %1041, %1040 : vector<16x128xf32>
    %cst_463 = arith.constant 5.000000e-01 : f32
    %1043 = vector.broadcast %cst_463 : f32 to vector<16x128xf32>
    %1044 = arith.addf %1042, %1043 : vector<16x128xf32>
    %1045 = vector.extract_strided_slice %1023 {offsets = [32, 0], sizes = [16, 128], strides = [1, 1]} : vector<48x128xf32> to vector<16x128xf32>
    %1046 = vector.extract_strided_slice %1024 {offsets = [32, 0], sizes = [16, 128], strides = [1, 1]} : vector<48x128xf32> to vector<16x128xf32>
    %1047 = vector.broadcast %148 : vector<16x1xf32> to vector<16x128xf32>
    %1048 = arith.addf %1046, %1047 : vector<16x128xf32>
    %1049 = arith.mulf %1034, %1048 : vector<16x128xf32>
    %1050 = arith.addf %1045, %1049 : vector<16x128xf32>
    %1051 = math.tanh %1050 : vector<16x128xf32>
    %cst_464 = arith.constant 1.000000e+00 : f32
    %1052 = vector.broadcast %cst_464 : f32 to vector<16x128xf32>
    %1053 = arith.subf %1052, %1044 : vector<16x128xf32>
    %1054 = arith.mulf %1053, %1051 : vector<16x128xf32>
    %1055 = arith.mulf %1044, %980 : vector<16x128xf32>
    %1056 = arith.addf %1054, %1055 : vector<16x128xf32>
    %c11_465 = arith.constant 11 : index
    %c0_466 = arith.constant 0 : index
    %c0_467 = arith.constant 0 : index
    %1057 = vector.load %arg5[%c11_465, %c0_466, %c0_467] : memref<16x32x128xf32, #tpu.memory_space<vmem>>, vector<1x16x128xf32>
    %1058 = vector.shape_cast %1057 : vector<1x16x128xf32> to vector<16x128xf32>
    %1059 = vector.shape_cast %1021 : vector<16x128xf32> to vector<1x16x128xf32>
    tpu.vector_store %arg5[%c11_465, %c0_466, %c0_467], %1059 {strides = array<i32>} : memref<16x32x128xf32, #tpu.memory_space<vmem>>, vector<1x16x128xf32>,
    %c4_468 = arith.constant 4 : index
    %c16_469 = arith.constant 16 : index
    %c0_470 = arith.constant 0 : index
    %1060 = vector.load %arg5[%c4_468, %c16_469, %c0_470] : memref<16x32x128xf32, #tpu.memory_space<vmem>>, vector<1x16x128xf32>
    %1061 = vector.shape_cast %1060 : vector<1x16x128xf32> to vector<16x128xf32>
    %1062 = vector.shape_cast %1056 : vector<16x128xf32> to vector<1x16x128xf32>
    tpu.vector_store %arg5[%c4_468, %c16_469, %c0_470], %1062 {strides = array<i32>} : memref<16x32x128xf32, #tpu.memory_space<vmem>>, vector<1x16x128xf32>,
    %c12_471 = arith.constant 12 : index
    %c0_472 = arith.constant 0 : index
    %c0_473 = arith.constant 0 : index
    %1063 = vector.load %arg6[%c12_471, %c0_472, %c0_473] : memref<16x96x128xf32, #tpu.memory_space<vmem>>, vector<1x48x128xf32>
    %1064 = vector.shape_cast %1063 : vector<1x48x128xf32> to vector<48x128xf32>
    %cst_474 = arith.constant dense<0.000000e+00> : vector<48x128xf32>
    %1065 = tpu.matmul %145, %1021, %cst_474 {dimension_numbers = #tpu.dot_dimension_numbers<[1], [0], [0], [1], [0, 0, 1, 1], [], []>} : vector<48x16xf32>, vector<16x128xf32>, vector<48x128xf32> -> vector<48x128xf32>
    %1066 = vector.extract_strided_slice %1064 {offsets = [0, 0], sizes = [16, 128], strides = [1, 1]} : vector<48x128xf32> to vector<16x128xf32>
    %1067 = vector.extract_strided_slice %1065 {offsets = [0, 0], sizes = [16, 128], strides = [1, 1]} : vector<48x128xf32> to vector<16x128xf32>
    %1068 = arith.addf %1066, %1067 : vector<16x128xf32>
    %cst_475 = arith.constant 5.000000e-01 : f32
    %1069 = vector.broadcast %cst_475 : f32 to vector<16x128xf32>
    %1070 = arith.mulf %1069, %1068 : vector<16x128xf32>
    %1071 = math.tanh %1070 : vector<16x128xf32>
    %cst_476 = arith.constant 5.000000e-01 : f32
    %1072 = vector.broadcast %cst_476 : f32 to vector<16x128xf32>
    %1073 = arith.mulf %1072, %1071 : vector<16x128xf32>
    %cst_477 = arith.constant 5.000000e-01 : f32
    %1074 = vector.broadcast %cst_477 : f32 to vector<16x128xf32>
    %1075 = arith.addf %1073, %1074 : vector<16x128xf32>
    %1076 = vector.extract_strided_slice %1064 {offsets = [16, 0], sizes = [16, 128], strides = [1, 1]} : vector<48x128xf32> to vector<16x128xf32>
    %1077 = vector.extract_strided_slice %1065 {offsets = [16, 0], sizes = [16, 128], strides = [1, 1]} : vector<48x128xf32> to vector<16x128xf32>
    %1078 = arith.addf %1076, %1077 : vector<16x128xf32>
    %cst_478 = arith.constant 5.000000e-01 : f32
    %1079 = vector.broadcast %cst_478 : f32 to vector<16x128xf32>
    %1080 = arith.mulf %1079, %1078 : vector<16x128xf32>
    %1081 = math.tanh %1080 : vector<16x128xf32>
    %cst_479 = arith.constant 5.000000e-01 : f32
    %1082 = vector.broadcast %cst_479 : f32 to vector<16x128xf32>
    %1083 = arith.mulf %1082, %1081 : vector<16x128xf32>
    %cst_480 = arith.constant 5.000000e-01 : f32
    %1084 = vector.broadcast %cst_480 : f32 to vector<16x128xf32>
    %1085 = arith.addf %1083, %1084 : vector<16x128xf32>
    %1086 = vector.extract_strided_slice %1064 {offsets = [32, 0], sizes = [16, 128], strides = [1, 1]} : vector<48x128xf32> to vector<16x128xf32>
    %1087 = vector.extract_strided_slice %1065 {offsets = [32, 0], sizes = [16, 128], strides = [1, 1]} : vector<48x128xf32> to vector<16x128xf32>
    %1088 = vector.broadcast %147 : vector<16x1xf32> to vector<16x128xf32>
    %1089 = arith.addf %1087, %1088 : vector<16x128xf32>
    %1090 = arith.mulf %1075, %1089 : vector<16x128xf32>
    %1091 = arith.addf %1086, %1090 : vector<16x128xf32>
    %1092 = math.tanh %1091 : vector<16x128xf32>
    %cst_481 = arith.constant 1.000000e+00 : f32
    %1093 = vector.broadcast %cst_481 : f32 to vector<16x128xf32>
    %1094 = arith.subf %1093, %1085 : vector<16x128xf32>
    %1095 = arith.mulf %1094, %1092 : vector<16x128xf32>
    %1096 = arith.mulf %1085, %1021 : vector<16x128xf32>
    %1097 = arith.addf %1095, %1096 : vector<16x128xf32>
    %c3_482 = arith.constant 3 : index
    %c48_483 = arith.constant 48 : index
    %c0_484 = arith.constant 0 : index
    %1098 = vector.load %arg6[%c3_482, %c48_483, %c0_484] : memref<16x96x128xf32, #tpu.memory_space<vmem>>, vector<1x48x128xf32>
    %1099 = vector.shape_cast %1098 : vector<1x48x128xf32> to vector<48x128xf32>
    %cst_485 = arith.constant dense<0.000000e+00> : vector<48x128xf32>
    %1100 = tpu.matmul %146, %1056, %cst_485 {dimension_numbers = #tpu.dot_dimension_numbers<[1], [0], [0], [1], [0, 0, 1, 1], [], []>} : vector<48x16xf32>, vector<16x128xf32>, vector<48x128xf32> -> vector<48x128xf32>
    %1101 = vector.extract_strided_slice %1099 {offsets = [0, 0], sizes = [16, 128], strides = [1, 1]} : vector<48x128xf32> to vector<16x128xf32>
    %1102 = vector.extract_strided_slice %1100 {offsets = [0, 0], sizes = [16, 128], strides = [1, 1]} : vector<48x128xf32> to vector<16x128xf32>
    %1103 = arith.addf %1101, %1102 : vector<16x128xf32>
    %cst_486 = arith.constant 5.000000e-01 : f32
    %1104 = vector.broadcast %cst_486 : f32 to vector<16x128xf32>
    %1105 = arith.mulf %1104, %1103 : vector<16x128xf32>
    %1106 = math.tanh %1105 : vector<16x128xf32>
    %cst_487 = arith.constant 5.000000e-01 : f32
    %1107 = vector.broadcast %cst_487 : f32 to vector<16x128xf32>
    %1108 = arith.mulf %1107, %1106 : vector<16x128xf32>
    %cst_488 = arith.constant 5.000000e-01 : f32
    %1109 = vector.broadcast %cst_488 : f32 to vector<16x128xf32>
    %1110 = arith.addf %1108, %1109 : vector<16x128xf32>
    %1111 = vector.extract_strided_slice %1099 {offsets = [16, 0], sizes = [16, 128], strides = [1, 1]} : vector<48x128xf32> to vector<16x128xf32>
    %1112 = vector.extract_strided_slice %1100 {offsets = [16, 0], sizes = [16, 128], strides = [1, 1]} : vector<48x128xf32> to vector<16x128xf32>
    %1113 = arith.addf %1111, %1112 : vector<16x128xf32>
    %cst_489 = arith.constant 5.000000e-01 : f32
    %1114 = vector.broadcast %cst_489 : f32 to vector<16x128xf32>
    %1115 = arith.mulf %1114, %1113 : vector<16x128xf32>
    %1116 = math.tanh %1115 : vector<16x128xf32>
    %cst_490 = arith.constant 5.000000e-01 : f32
    %1117 = vector.broadcast %cst_490 : f32 to vector<16x128xf32>
    %1118 = arith.mulf %1117, %1116 : vector<16x128xf32>
    %cst_491 = arith.constant 5.000000e-01 : f32
    %1119 = vector.broadcast %cst_491 : f32 to vector<16x128xf32>
    %1120 = arith.addf %1118, %1119 : vector<16x128xf32>
    %1121 = vector.extract_strided_slice %1099 {offsets = [32, 0], sizes = [16, 128], strides = [1, 1]} : vector<48x128xf32> to vector<16x128xf32>
    %1122 = vector.extract_strided_slice %1100 {offsets = [32, 0], sizes = [16, 128], strides = [1, 1]} : vector<48x128xf32> to vector<16x128xf32>
    %1123 = vector.broadcast %148 : vector<16x1xf32> to vector<16x128xf32>
    %1124 = arith.addf %1122, %1123 : vector<16x128xf32>
    %1125 = arith.mulf %1110, %1124 : vector<16x128xf32>
    %1126 = arith.addf %1121, %1125 : vector<16x128xf32>
    %1127 = math.tanh %1126 : vector<16x128xf32>
    %cst_492 = arith.constant 1.000000e+00 : f32
    %1128 = vector.broadcast %cst_492 : f32 to vector<16x128xf32>
    %1129 = arith.subf %1128, %1120 : vector<16x128xf32>
    %1130 = arith.mulf %1129, %1127 : vector<16x128xf32>
    %1131 = arith.mulf %1120, %1056 : vector<16x128xf32>
    %1132 = arith.addf %1130, %1131 : vector<16x128xf32>
    %c12_493 = arith.constant 12 : index
    %c0_494 = arith.constant 0 : index
    %c0_495 = arith.constant 0 : index
    %1133 = vector.load %arg5[%c12_493, %c0_494, %c0_495] : memref<16x32x128xf32, #tpu.memory_space<vmem>>, vector<1x16x128xf32>
    %1134 = vector.shape_cast %1133 : vector<1x16x128xf32> to vector<16x128xf32>
    %1135 = vector.shape_cast %1097 : vector<16x128xf32> to vector<1x16x128xf32>
    tpu.vector_store %arg5[%c12_493, %c0_494, %c0_495], %1135 {strides = array<i32>} : memref<16x32x128xf32, #tpu.memory_space<vmem>>, vector<1x16x128xf32>,
    %c3_496 = arith.constant 3 : index
    %c16_497 = arith.constant 16 : index
    %c0_498 = arith.constant 0 : index
    %1136 = vector.load %arg5[%c3_496, %c16_497, %c0_498] : memref<16x32x128xf32, #tpu.memory_space<vmem>>, vector<1x16x128xf32>
    %1137 = vector.shape_cast %1136 : vector<1x16x128xf32> to vector<16x128xf32>
    %1138 = vector.shape_cast %1132 : vector<16x128xf32> to vector<1x16x128xf32>
    tpu.vector_store %arg5[%c3_496, %c16_497, %c0_498], %1138 {strides = array<i32>} : memref<16x32x128xf32, #tpu.memory_space<vmem>>, vector<1x16x128xf32>,
    %c13_499 = arith.constant 13 : index
    %c0_500 = arith.constant 0 : index
    %c0_501 = arith.constant 0 : index
    %1139 = vector.load %arg6[%c13_499, %c0_500, %c0_501] : memref<16x96x128xf32, #tpu.memory_space<vmem>>, vector<1x48x128xf32>
    %1140 = vector.shape_cast %1139 : vector<1x48x128xf32> to vector<48x128xf32>
    %cst_502 = arith.constant dense<0.000000e+00> : vector<48x128xf32>
    %1141 = tpu.matmul %145, %1097, %cst_502 {dimension_numbers = #tpu.dot_dimension_numbers<[1], [0], [0], [1], [0, 0, 1, 1], [], []>} : vector<48x16xf32>, vector<16x128xf32>, vector<48x128xf32> -> vector<48x128xf32>
    %1142 = vector.extract_strided_slice %1140 {offsets = [0, 0], sizes = [16, 128], strides = [1, 1]} : vector<48x128xf32> to vector<16x128xf32>
    %1143 = vector.extract_strided_slice %1141 {offsets = [0, 0], sizes = [16, 128], strides = [1, 1]} : vector<48x128xf32> to vector<16x128xf32>
    %1144 = arith.addf %1142, %1143 : vector<16x128xf32>
    %cst_503 = arith.constant 5.000000e-01 : f32
    %1145 = vector.broadcast %cst_503 : f32 to vector<16x128xf32>
    %1146 = arith.mulf %1145, %1144 : vector<16x128xf32>
    %1147 = math.tanh %1146 : vector<16x128xf32>
    %cst_504 = arith.constant 5.000000e-01 : f32
    %1148 = vector.broadcast %cst_504 : f32 to vector<16x128xf32>
    %1149 = arith.mulf %1148, %1147 : vector<16x128xf32>
    %cst_505 = arith.constant 5.000000e-01 : f32
    %1150 = vector.broadcast %cst_505 : f32 to vector<16x128xf32>
    %1151 = arith.addf %1149, %1150 : vector<16x128xf32>
    %1152 = vector.extract_strided_slice %1140 {offsets = [16, 0], sizes = [16, 128], strides = [1, 1]} : vector<48x128xf32> to vector<16x128xf32>
    %1153 = vector.extract_strided_slice %1141 {offsets = [16, 0], sizes = [16, 128], strides = [1, 1]} : vector<48x128xf32> to vector<16x128xf32>
    %1154 = arith.addf %1152, %1153 : vector<16x128xf32>
    %cst_506 = arith.constant 5.000000e-01 : f32
    %1155 = vector.broadcast %cst_506 : f32 to vector<16x128xf32>
    %1156 = arith.mulf %1155, %1154 : vector<16x128xf32>
    %1157 = math.tanh %1156 : vector<16x128xf32>
    %cst_507 = arith.constant 5.000000e-01 : f32
    %1158 = vector.broadcast %cst_507 : f32 to vector<16x128xf32>
    %1159 = arith.mulf %1158, %1157 : vector<16x128xf32>
    %cst_508 = arith.constant 5.000000e-01 : f32
    %1160 = vector.broadcast %cst_508 : f32 to vector<16x128xf32>
    %1161 = arith.addf %1159, %1160 : vector<16x128xf32>
    %1162 = vector.extract_strided_slice %1140 {offsets = [32, 0], sizes = [16, 128], strides = [1, 1]} : vector<48x128xf32> to vector<16x128xf32>
    %1163 = vector.extract_strided_slice %1141 {offsets = [32, 0], sizes = [16, 128], strides = [1, 1]} : vector<48x128xf32> to vector<16x128xf32>
    %1164 = vector.broadcast %147 : vector<16x1xf32> to vector<16x128xf32>
    %1165 = arith.addf %1163, %1164 : vector<16x128xf32>
    %1166 = arith.mulf %1151, %1165 : vector<16x128xf32>
    %1167 = arith.addf %1162, %1166 : vector<16x128xf32>
    %1168 = math.tanh %1167 : vector<16x128xf32>
    %cst_509 = arith.constant 1.000000e+00 : f32
    %1169 = vector.broadcast %cst_509 : f32 to vector<16x128xf32>
    %1170 = arith.subf %1169, %1161 : vector<16x128xf32>
    %1171 = arith.mulf %1170, %1168 : vector<16x128xf32>
    %1172 = arith.mulf %1161, %1097 : vector<16x128xf32>
    %1173 = arith.addf %1171, %1172 : vector<16x128xf32>
    %c2_510 = arith.constant 2 : index
    %c48_511 = arith.constant 48 : index
    %c0_512 = arith.constant 0 : index
    %1174 = vector.load %arg6[%c2_510, %c48_511, %c0_512] : memref<16x96x128xf32, #tpu.memory_space<vmem>>, vector<1x48x128xf32>
    %1175 = vector.shape_cast %1174 : vector<1x48x128xf32> to vector<48x128xf32>
    %cst_513 = arith.constant dense<0.000000e+00> : vector<48x128xf32>
    %1176 = tpu.matmul %146, %1132, %cst_513 {dimension_numbers = #tpu.dot_dimension_numbers<[1], [0], [0], [1], [0, 0, 1, 1], [], []>} : vector<48x16xf32>, vector<16x128xf32>, vector<48x128xf32> -> vector<48x128xf32>
    %1177 = vector.extract_strided_slice %1175 {offsets = [0, 0], sizes = [16, 128], strides = [1, 1]} : vector<48x128xf32> to vector<16x128xf32>
    %1178 = vector.extract_strided_slice %1176 {offsets = [0, 0], sizes = [16, 128], strides = [1, 1]} : vector<48x128xf32> to vector<16x128xf32>
    %1179 = arith.addf %1177, %1178 : vector<16x128xf32>
    %cst_514 = arith.constant 5.000000e-01 : f32
    %1180 = vector.broadcast %cst_514 : f32 to vector<16x128xf32>
    %1181 = arith.mulf %1180, %1179 : vector<16x128xf32>
    %1182 = math.tanh %1181 : vector<16x128xf32>
    %cst_515 = arith.constant 5.000000e-01 : f32
    %1183 = vector.broadcast %cst_515 : f32 to vector<16x128xf32>
    %1184 = arith.mulf %1183, %1182 : vector<16x128xf32>
    %cst_516 = arith.constant 5.000000e-01 : f32
    %1185 = vector.broadcast %cst_516 : f32 to vector<16x128xf32>
    %1186 = arith.addf %1184, %1185 : vector<16x128xf32>
    %1187 = vector.extract_strided_slice %1175 {offsets = [16, 0], sizes = [16, 128], strides = [1, 1]} : vector<48x128xf32> to vector<16x128xf32>
    %1188 = vector.extract_strided_slice %1176 {offsets = [16, 0], sizes = [16, 128], strides = [1, 1]} : vector<48x128xf32> to vector<16x128xf32>
    %1189 = arith.addf %1187, %1188 : vector<16x128xf32>
    %cst_517 = arith.constant 5.000000e-01 : f32
    %1190 = vector.broadcast %cst_517 : f32 to vector<16x128xf32>
    %1191 = arith.mulf %1190, %1189 : vector<16x128xf32>
    %1192 = math.tanh %1191 : vector<16x128xf32>
    %cst_518 = arith.constant 5.000000e-01 : f32
    %1193 = vector.broadcast %cst_518 : f32 to vector<16x128xf32>
    %1194 = arith.mulf %1193, %1192 : vector<16x128xf32>
    %cst_519 = arith.constant 5.000000e-01 : f32
    %1195 = vector.broadcast %cst_519 : f32 to vector<16x128xf32>
    %1196 = arith.addf %1194, %1195 : vector<16x128xf32>
    %1197 = vector.extract_strided_slice %1175 {offsets = [32, 0], sizes = [16, 128], strides = [1, 1]} : vector<48x128xf32> to vector<16x128xf32>
    %1198 = vector.extract_strided_slice %1176 {offsets = [32, 0], sizes = [16, 128], strides = [1, 1]} : vector<48x128xf32> to vector<16x128xf32>
    %1199 = vector.broadcast %148 : vector<16x1xf32> to vector<16x128xf32>
    %1200 = arith.addf %1198, %1199 : vector<16x128xf32>
    %1201 = arith.mulf %1186, %1200 : vector<16x128xf32>
    %1202 = arith.addf %1197, %1201 : vector<16x128xf32>
    %1203 = math.tanh %1202 : vector<16x128xf32>
    %cst_520 = arith.constant 1.000000e+00 : f32
    %1204 = vector.broadcast %cst_520 : f32 to vector<16x128xf32>
    %1205 = arith.subf %1204, %1196 : vector<16x128xf32>
    %1206 = arith.mulf %1205, %1203 : vector<16x128xf32>
    %1207 = arith.mulf %1196, %1132 : vector<16x128xf32>
    %1208 = arith.addf %1206, %1207 : vector<16x128xf32>
    %c13_521 = arith.constant 13 : index
    %c0_522 = arith.constant 0 : index
    %c0_523 = arith.constant 0 : index
    %1209 = vector.load %arg5[%c13_521, %c0_522, %c0_523] : memref<16x32x128xf32, #tpu.memory_space<vmem>>, vector<1x16x128xf32>
    %1210 = vector.shape_cast %1209 : vector<1x16x128xf32> to vector<16x128xf32>
    %1211 = vector.shape_cast %1173 : vector<16x128xf32> to vector<1x16x128xf32>
    tpu.vector_store %arg5[%c13_521, %c0_522, %c0_523], %1211 {strides = array<i32>} : memref<16x32x128xf32, #tpu.memory_space<vmem>>, vector<1x16x128xf32>,
    %c2_524 = arith.constant 2 : index
    %c16_525 = arith.constant 16 : index
    %c0_526 = arith.constant 0 : index
    %1212 = vector.load %arg5[%c2_524, %c16_525, %c0_526] : memref<16x32x128xf32, #tpu.memory_space<vmem>>, vector<1x16x128xf32>
    %1213 = vector.shape_cast %1212 : vector<1x16x128xf32> to vector<16x128xf32>
    %1214 = vector.shape_cast %1208 : vector<16x128xf32> to vector<1x16x128xf32>
    tpu.vector_store %arg5[%c2_524, %c16_525, %c0_526], %1214 {strides = array<i32>} : memref<16x32x128xf32, #tpu.memory_space<vmem>>, vector<1x16x128xf32>,
    %c14_527 = arith.constant 14 : index
    %c0_528 = arith.constant 0 : index
    %c0_529 = arith.constant 0 : index
    %1215 = vector.load %arg6[%c14_527, %c0_528, %c0_529] : memref<16x96x128xf32, #tpu.memory_space<vmem>>, vector<1x48x128xf32>
    %1216 = vector.shape_cast %1215 : vector<1x48x128xf32> to vector<48x128xf32>
    %cst_530 = arith.constant dense<0.000000e+00> : vector<48x128xf32>
    %1217 = tpu.matmul %145, %1173, %cst_530 {dimension_numbers = #tpu.dot_dimension_numbers<[1], [0], [0], [1], [0, 0, 1, 1], [], []>} : vector<48x16xf32>, vector<16x128xf32>, vector<48x128xf32> -> vector<48x128xf32>
    %1218 = vector.extract_strided_slice %1216 {offsets = [0, 0], sizes = [16, 128], strides = [1, 1]} : vector<48x128xf32> to vector<16x128xf32>
    %1219 = vector.extract_strided_slice %1217 {offsets = [0, 0], sizes = [16, 128], strides = [1, 1]} : vector<48x128xf32> to vector<16x128xf32>
    %1220 = arith.addf %1218, %1219 : vector<16x128xf32>
    %cst_531 = arith.constant 5.000000e-01 : f32
    %1221 = vector.broadcast %cst_531 : f32 to vector<16x128xf32>
    %1222 = arith.mulf %1221, %1220 : vector<16x128xf32>
    %1223 = math.tanh %1222 : vector<16x128xf32>
    %cst_532 = arith.constant 5.000000e-01 : f32
    %1224 = vector.broadcast %cst_532 : f32 to vector<16x128xf32>
    %1225 = arith.mulf %1224, %1223 : vector<16x128xf32>
    %cst_533 = arith.constant 5.000000e-01 : f32
    %1226 = vector.broadcast %cst_533 : f32 to vector<16x128xf32>
    %1227 = arith.addf %1225, %1226 : vector<16x128xf32>
    %1228 = vector.extract_strided_slice %1216 {offsets = [16, 0], sizes = [16, 128], strides = [1, 1]} : vector<48x128xf32> to vector<16x128xf32>
    %1229 = vector.extract_strided_slice %1217 {offsets = [16, 0], sizes = [16, 128], strides = [1, 1]} : vector<48x128xf32> to vector<16x128xf32>
    %1230 = arith.addf %1228, %1229 : vector<16x128xf32>
    %cst_534 = arith.constant 5.000000e-01 : f32
    %1231 = vector.broadcast %cst_534 : f32 to vector<16x128xf32>
    %1232 = arith.mulf %1231, %1230 : vector<16x128xf32>
    %1233 = math.tanh %1232 : vector<16x128xf32>
    %cst_535 = arith.constant 5.000000e-01 : f32
    %1234 = vector.broadcast %cst_535 : f32 to vector<16x128xf32>
    %1235 = arith.mulf %1234, %1233 : vector<16x128xf32>
    %cst_536 = arith.constant 5.000000e-01 : f32
    %1236 = vector.broadcast %cst_536 : f32 to vector<16x128xf32>
    %1237 = arith.addf %1235, %1236 : vector<16x128xf32>
    %1238 = vector.extract_strided_slice %1216 {offsets = [32, 0], sizes = [16, 128], strides = [1, 1]} : vector<48x128xf32> to vector<16x128xf32>
    %1239 = vector.extract_strided_slice %1217 {offsets = [32, 0], sizes = [16, 128], strides = [1, 1]} : vector<48x128xf32> to vector<16x128xf32>
    %1240 = vector.broadcast %147 : vector<16x1xf32> to vector<16x128xf32>
    %1241 = arith.addf %1239, %1240 : vector<16x128xf32>
    %1242 = arith.mulf %1227, %1241 : vector<16x128xf32>
    %1243 = arith.addf %1238, %1242 : vector<16x128xf32>
    %1244 = math.tanh %1243 : vector<16x128xf32>
    %cst_537 = arith.constant 1.000000e+00 : f32
    %1245 = vector.broadcast %cst_537 : f32 to vector<16x128xf32>
    %1246 = arith.subf %1245, %1237 : vector<16x128xf32>
    %1247 = arith.mulf %1246, %1244 : vector<16x128xf32>
    %1248 = arith.mulf %1237, %1173 : vector<16x128xf32>
    %1249 = arith.addf %1247, %1248 : vector<16x128xf32>
    %c1_538 = arith.constant 1 : index
    %c48_539 = arith.constant 48 : index
    %c0_540 = arith.constant 0 : index
    %1250 = vector.load %arg6[%c1_538, %c48_539, %c0_540] : memref<16x96x128xf32, #tpu.memory_space<vmem>>, vector<1x48x128xf32>
    %1251 = vector.shape_cast %1250 : vector<1x48x128xf32> to vector<48x128xf32>
    %cst_541 = arith.constant dense<0.000000e+00> : vector<48x128xf32>
    %1252 = tpu.matmul %146, %1208, %cst_541 {dimension_numbers = #tpu.dot_dimension_numbers<[1], [0], [0], [1], [0, 0, 1, 1], [], []>} : vector<48x16xf32>, vector<16x128xf32>, vector<48x128xf32> -> vector<48x128xf32>
    %1253 = vector.extract_strided_slice %1251 {offsets = [0, 0], sizes = [16, 128], strides = [1, 1]} : vector<48x128xf32> to vector<16x128xf32>
    %1254 = vector.extract_strided_slice %1252 {offsets = [0, 0], sizes = [16, 128], strides = [1, 1]} : vector<48x128xf32> to vector<16x128xf32>
    %1255 = arith.addf %1253, %1254 : vector<16x128xf32>
    %cst_542 = arith.constant 5.000000e-01 : f32
    %1256 = vector.broadcast %cst_542 : f32 to vector<16x128xf32>
    %1257 = arith.mulf %1256, %1255 : vector<16x128xf32>
    %1258 = math.tanh %1257 : vector<16x128xf32>
    %cst_543 = arith.constant 5.000000e-01 : f32
    %1259 = vector.broadcast %cst_543 : f32 to vector<16x128xf32>
    %1260 = arith.mulf %1259, %1258 : vector<16x128xf32>
    %cst_544 = arith.constant 5.000000e-01 : f32
    %1261 = vector.broadcast %cst_544 : f32 to vector<16x128xf32>
    %1262 = arith.addf %1260, %1261 : vector<16x128xf32>
    %1263 = vector.extract_strided_slice %1251 {offsets = [16, 0], sizes = [16, 128], strides = [1, 1]} : vector<48x128xf32> to vector<16x128xf32>
    %1264 = vector.extract_strided_slice %1252 {offsets = [16, 0], sizes = [16, 128], strides = [1, 1]} : vector<48x128xf32> to vector<16x128xf32>
    %1265 = arith.addf %1263, %1264 : vector<16x128xf32>
    %cst_545 = arith.constant 5.000000e-01 : f32
    %1266 = vector.broadcast %cst_545 : f32 to vector<16x128xf32>
    %1267 = arith.mulf %1266, %1265 : vector<16x128xf32>
    %1268 = math.tanh %1267 : vector<16x128xf32>
    %cst_546 = arith.constant 5.000000e-01 : f32
    %1269 = vector.broadcast %cst_546 : f32 to vector<16x128xf32>
    %1270 = arith.mulf %1269, %1268 : vector<16x128xf32>
    %cst_547 = arith.constant 5.000000e-01 : f32
    %1271 = vector.broadcast %cst_547 : f32 to vector<16x128xf32>
    %1272 = arith.addf %1270, %1271 : vector<16x128xf32>
    %1273 = vector.extract_strided_slice %1251 {offsets = [32, 0], sizes = [16, 128], strides = [1, 1]} : vector<48x128xf32> to vector<16x128xf32>
    %1274 = vector.extract_strided_slice %1252 {offsets = [32, 0], sizes = [16, 128], strides = [1, 1]} : vector<48x128xf32> to vector<16x128xf32>
    %1275 = vector.broadcast %148 : vector<16x1xf32> to vector<16x128xf32>
    %1276 = arith.addf %1274, %1275 : vector<16x128xf32>
    %1277 = arith.mulf %1262, %1276 : vector<16x128xf32>
    %1278 = arith.addf %1273, %1277 : vector<16x128xf32>
    %1279 = math.tanh %1278 : vector<16x128xf32>
    %cst_548 = arith.constant 1.000000e+00 : f32
    %1280 = vector.broadcast %cst_548 : f32 to vector<16x128xf32>
    %1281 = arith.subf %1280, %1272 : vector<16x128xf32>
    %1282 = arith.mulf %1281, %1279 : vector<16x128xf32>
    %1283 = arith.mulf %1272, %1208 : vector<16x128xf32>
    %1284 = arith.addf %1282, %1283 : vector<16x128xf32>
    %c14_549 = arith.constant 14 : index
    %c0_550 = arith.constant 0 : index
    %c0_551 = arith.constant 0 : index
    %1285 = vector.load %arg5[%c14_549, %c0_550, %c0_551] : memref<16x32x128xf32, #tpu.memory_space<vmem>>, vector<1x16x128xf32>
    %1286 = vector.shape_cast %1285 : vector<1x16x128xf32> to vector<16x128xf32>
    %1287 = vector.shape_cast %1249 : vector<16x128xf32> to vector<1x16x128xf32>
    tpu.vector_store %arg5[%c14_549, %c0_550, %c0_551], %1287 {strides = array<i32>} : memref<16x32x128xf32, #tpu.memory_space<vmem>>, vector<1x16x128xf32>,
    %c1_552 = arith.constant 1 : index
    %c16_553 = arith.constant 16 : index
    %c0_554 = arith.constant 0 : index
    %1288 = vector.load %arg5[%c1_552, %c16_553, %c0_554] : memref<16x32x128xf32, #tpu.memory_space<vmem>>, vector<1x16x128xf32>
    %1289 = vector.shape_cast %1288 : vector<1x16x128xf32> to vector<16x128xf32>
    %1290 = vector.shape_cast %1284 : vector<16x128xf32> to vector<1x16x128xf32>
    tpu.vector_store %arg5[%c1_552, %c16_553, %c0_554], %1290 {strides = array<i32>} : memref<16x32x128xf32, #tpu.memory_space<vmem>>, vector<1x16x128xf32>,
    %c15_555 = arith.constant 15 : index
    %c0_556 = arith.constant 0 : index
    %c0_557 = arith.constant 0 : index
    %1291 = vector.load %arg6[%c15_555, %c0_556, %c0_557] : memref<16x96x128xf32, #tpu.memory_space<vmem>>, vector<1x48x128xf32>
    %1292 = vector.shape_cast %1291 : vector<1x48x128xf32> to vector<48x128xf32>
    %cst_558 = arith.constant dense<0.000000e+00> : vector<48x128xf32>
    %1293 = tpu.matmul %145, %1249, %cst_558 {dimension_numbers = #tpu.dot_dimension_numbers<[1], [0], [0], [1], [0, 0, 1, 1], [], []>} : vector<48x16xf32>, vector<16x128xf32>, vector<48x128xf32> -> vector<48x128xf32>
    %1294 = vector.extract_strided_slice %1292 {offsets = [0, 0], sizes = [16, 128], strides = [1, 1]} : vector<48x128xf32> to vector<16x128xf32>
    %1295 = vector.extract_strided_slice %1293 {offsets = [0, 0], sizes = [16, 128], strides = [1, 1]} : vector<48x128xf32> to vector<16x128xf32>
    %1296 = arith.addf %1294, %1295 : vector<16x128xf32>
    %cst_559 = arith.constant 5.000000e-01 : f32
    %1297 = vector.broadcast %cst_559 : f32 to vector<16x128xf32>
    %1298 = arith.mulf %1297, %1296 : vector<16x128xf32>
    %1299 = math.tanh %1298 : vector<16x128xf32>
    %cst_560 = arith.constant 5.000000e-01 : f32
    %1300 = vector.broadcast %cst_560 : f32 to vector<16x128xf32>
    %1301 = arith.mulf %1300, %1299 : vector<16x128xf32>
    %cst_561 = arith.constant 5.000000e-01 : f32
    %1302 = vector.broadcast %cst_561 : f32 to vector<16x128xf32>
    %1303 = arith.addf %1301, %1302 : vector<16x128xf32>
    %1304 = vector.extract_strided_slice %1292 {offsets = [16, 0], sizes = [16, 128], strides = [1, 1]} : vector<48x128xf32> to vector<16x128xf32>
    %1305 = vector.extract_strided_slice %1293 {offsets = [16, 0], sizes = [16, 128], strides = [1, 1]} : vector<48x128xf32> to vector<16x128xf32>
    %1306 = arith.addf %1304, %1305 : vector<16x128xf32>
    %cst_562 = arith.constant 5.000000e-01 : f32
    %1307 = vector.broadcast %cst_562 : f32 to vector<16x128xf32>
    %1308 = arith.mulf %1307, %1306 : vector<16x128xf32>
    %1309 = math.tanh %1308 : vector<16x128xf32>
    %cst_563 = arith.constant 5.000000e-01 : f32
    %1310 = vector.broadcast %cst_563 : f32 to vector<16x128xf32>
    %1311 = arith.mulf %1310, %1309 : vector<16x128xf32>
    %cst_564 = arith.constant 5.000000e-01 : f32
    %1312 = vector.broadcast %cst_564 : f32 to vector<16x128xf32>
    %1313 = arith.addf %1311, %1312 : vector<16x128xf32>
    %1314 = vector.extract_strided_slice %1292 {offsets = [32, 0], sizes = [16, 128], strides = [1, 1]} : vector<48x128xf32> to vector<16x128xf32>
    %1315 = vector.extract_strided_slice %1293 {offsets = [32, 0], sizes = [16, 128], strides = [1, 1]} : vector<48x128xf32> to vector<16x128xf32>
    %1316 = vector.broadcast %147 : vector<16x1xf32> to vector<16x128xf32>
    %1317 = arith.addf %1315, %1316 : vector<16x128xf32>
    %1318 = arith.mulf %1303, %1317 : vector<16x128xf32>
    %1319 = arith.addf %1314, %1318 : vector<16x128xf32>
    %1320 = math.tanh %1319 : vector<16x128xf32>
    %cst_565 = arith.constant 1.000000e+00 : f32
    %1321 = vector.broadcast %cst_565 : f32 to vector<16x128xf32>
    %1322 = arith.subf %1321, %1313 : vector<16x128xf32>
    %1323 = arith.mulf %1322, %1320 : vector<16x128xf32>
    %1324 = arith.mulf %1313, %1249 : vector<16x128xf32>
    %1325 = arith.addf %1323, %1324 : vector<16x128xf32>
    %c0_566 = arith.constant 0 : index
    %c48_567 = arith.constant 48 : index
    %c0_568 = arith.constant 0 : index
    %1326 = vector.load %arg6[%c0_566, %c48_567, %c0_568] : memref<16x96x128xf32, #tpu.memory_space<vmem>>, vector<1x48x128xf32>
    %1327 = vector.shape_cast %1326 : vector<1x48x128xf32> to vector<48x128xf32>
    %cst_569 = arith.constant dense<0.000000e+00> : vector<48x128xf32>
    %1328 = tpu.matmul %146, %1284, %cst_569 {dimension_numbers = #tpu.dot_dimension_numbers<[1], [0], [0], [1], [0, 0, 1, 1], [], []>} : vector<48x16xf32>, vector<16x128xf32>, vector<48x128xf32> -> vector<48x128xf32>
    %1329 = vector.extract_strided_slice %1327 {offsets = [0, 0], sizes = [16, 128], strides = [1, 1]} : vector<48x128xf32> to vector<16x128xf32>
    %1330 = vector.extract_strided_slice %1328 {offsets = [0, 0], sizes = [16, 128], strides = [1, 1]} : vector<48x128xf32> to vector<16x128xf32>
    %1331 = arith.addf %1329, %1330 : vector<16x128xf32>
    %cst_570 = arith.constant 5.000000e-01 : f32
    %1332 = vector.broadcast %cst_570 : f32 to vector<16x128xf32>
    %1333 = arith.mulf %1332, %1331 : vector<16x128xf32>
    %1334 = math.tanh %1333 : vector<16x128xf32>
    %cst_571 = arith.constant 5.000000e-01 : f32
    %1335 = vector.broadcast %cst_571 : f32 to vector<16x128xf32>
    %1336 = arith.mulf %1335, %1334 : vector<16x128xf32>
    %cst_572 = arith.constant 5.000000e-01 : f32
    %1337 = vector.broadcast %cst_572 : f32 to vector<16x128xf32>
    %1338 = arith.addf %1336, %1337 : vector<16x128xf32>
    %1339 = vector.extract_strided_slice %1327 {offsets = [16, 0], sizes = [16, 128], strides = [1, 1]} : vector<48x128xf32> to vector<16x128xf32>
    %1340 = vector.extract_strided_slice %1328 {offsets = [16, 0], sizes = [16, 128], strides = [1, 1]} : vector<48x128xf32> to vector<16x128xf32>
    %1341 = arith.addf %1339, %1340 : vector<16x128xf32>
    %cst_573 = arith.constant 5.000000e-01 : f32
    %1342 = vector.broadcast %cst_573 : f32 to vector<16x128xf32>
    %1343 = arith.mulf %1342, %1341 : vector<16x128xf32>
    %1344 = math.tanh %1343 : vector<16x128xf32>
    %cst_574 = arith.constant 5.000000e-01 : f32
    %1345 = vector.broadcast %cst_574 : f32 to vector<16x128xf32>
    %1346 = arith.mulf %1345, %1344 : vector<16x128xf32>
    %cst_575 = arith.constant 5.000000e-01 : f32
    %1347 = vector.broadcast %cst_575 : f32 to vector<16x128xf32>
    %1348 = arith.addf %1346, %1347 : vector<16x128xf32>
    %1349 = vector.extract_strided_slice %1327 {offsets = [32, 0], sizes = [16, 128], strides = [1, 1]} : vector<48x128xf32> to vector<16x128xf32>
    %1350 = vector.extract_strided_slice %1328 {offsets = [32, 0], sizes = [16, 128], strides = [1, 1]} : vector<48x128xf32> to vector<16x128xf32>
    %1351 = vector.broadcast %148 : vector<16x1xf32> to vector<16x128xf32>
    %1352 = arith.addf %1350, %1351 : vector<16x128xf32>
    %1353 = arith.mulf %1338, %1352 : vector<16x128xf32>
    %1354 = arith.addf %1349, %1353 : vector<16x128xf32>
    %1355 = math.tanh %1354 : vector<16x128xf32>
    %cst_576 = arith.constant 1.000000e+00 : f32
    %1356 = vector.broadcast %cst_576 : f32 to vector<16x128xf32>
    %1357 = arith.subf %1356, %1348 : vector<16x128xf32>
    %1358 = arith.mulf %1357, %1355 : vector<16x128xf32>
    %1359 = arith.mulf %1348, %1284 : vector<16x128xf32>
    %1360 = arith.addf %1358, %1359 : vector<16x128xf32>
    %c15_577 = arith.constant 15 : index
    %c0_578 = arith.constant 0 : index
    %c0_579 = arith.constant 0 : index
    %1361 = vector.load %arg5[%c15_577, %c0_578, %c0_579] : memref<16x32x128xf32, #tpu.memory_space<vmem>>, vector<1x16x128xf32>
    %1362 = vector.shape_cast %1361 : vector<1x16x128xf32> to vector<16x128xf32>
    %1363 = vector.shape_cast %1325 : vector<16x128xf32> to vector<1x16x128xf32>
    tpu.vector_store %arg5[%c15_577, %c0_578, %c0_579], %1363 {strides = array<i32>} : memref<16x32x128xf32, #tpu.memory_space<vmem>>, vector<1x16x128xf32>,
    %c0_580 = arith.constant 0 : index
    %c16_581 = arith.constant 16 : index
    %c0_582 = arith.constant 0 : index
    %1364 = vector.load %arg5[%c0_580, %c16_581, %c0_582] : memref<16x32x128xf32, #tpu.memory_space<vmem>>, vector<1x16x128xf32>
    %1365 = vector.shape_cast %1364 : vector<1x16x128xf32> to vector<16x128xf32>
    %1366 = vector.shape_cast %1360 : vector<16x128xf32> to vector<1x16x128xf32>
    tpu.vector_store %arg5[%c0_580, %c16_581, %c0_582], %1366 {strides = array<i32>} : memref<16x32x128xf32, #tpu.memory_space<vmem>>, vector<1x16x128xf32>,
    return
  }
  func.func @transform_0(%arg0: i32) -> (i32, i32, i32) {
    %c0_i32 = arith.constant 0 : i32
    %c0_i32_0 = arith.constant 0 : i32
    %c0_i32_1 = arith.constant 0 : i32
    return %c0_i32, %c0_i32_0, %arg0 : i32, i32, i32
  }
  func.func @transform_1(%arg0: i32) -> (i32, i32) {
    %c0_i32 = arith.constant 0 : i32
    %c0_i32_0 = arith.constant 0 : i32
    %c0_i32_1 = arith.constant 0 : i32
    return %c0_i32, %c0_i32_0 : i32, i32
  }
  func.func @transform_2(%arg0: i32) -> (i32, i32) {
    %c0_i32 = arith.constant 0 : i32
    %c0_i32_0 = arith.constant 0 : i32
    %c0_i32_1 = arith.constant 0 : i32
    return %c0_i32, %c0_i32_0 : i32, i32
  }
  func.func @transform_3(%arg0: i32) -> (i32, i32) {
    %c0_i32 = arith.constant 0 : i32
    %c0_i32_0 = arith.constant 0 : i32
    %c0_i32_1 = arith.constant 0 : i32
    return %c0_i32, %c0_i32_0 : i32, i32
  }
  func.func @transform_4(%arg0: i32) -> (i32, i32, i32) {
    %c0_i32 = arith.constant 0 : i32
    %c0_i32_0 = arith.constant 0 : i32
    %c0_i32_1 = arith.constant 0 : i32
    return %c0_i32, %c0_i32_0, %arg0 : i32, i32, i32
  }
}

</mosaic_0001>

<llo_original>
// kernel: gru_block_forward.1
$region0: #{gru_block_forward.1}
  #allocation0 [shape = 'u32[]', space=smem, size = 0x4, offset = 0x4, fixed_abs, tag = 'smem constant byte address 0x4 - core index']
  #allocation1 [shape = 'u32[144,128]{1,0:T(1,128)}', space=vmem, size = 0x12000, scoped, tag = 'internal scratch']
  #allocation2 [shape = 'f32[16,96,128]{2,1,0:T(8,128)}', space=vmem, size = 0xc0000, scoped, tag = 'scratch operand']
  %s0 = inlined_call_operand.vmem [shape: f32[16,4,128], index: 0, kind: input, shape index: {}]
  %s1 = inlined_call_operand.vmem [shape: f32[96,4], index: 1, kind: input, shape index: {}]
  %s2 = inlined_call_operand.vmem [shape: f32[96,16], index: 2, kind: input, shape index: {}]
  %s3 = inlined_call_operand.vmem [shape: f32[128,1], index: 3, kind: input, shape index: {}]
  %s4 = inlined_call_operand.vmem [shape: f32[16,32,128], index: 4, kind: output, shape index: {}]
  %s5 = sld [smem:[#allocation0]]
  $region26: #{gru_block_forward.1} parent=0
    _
  %s7 = ssub.s32 1, %s5
  %s8 = scalar_select 0, %s7, %s5
  // Predicated region
  $region2: #{gru_block_forward.1} parent=0 // pred_check
    _
  $region3: #{gru_block_forward.1} parent=0 // pred_check_branch
    %10 = sbr.rel (0) target = $region5
  $region4: #{gru_block_forward.1} parent=0 // pred_region
    _
  $region5: #{gru_block_forward.1} parent=0 // pred_fallthru
    _
  // Predicated region
  $region6: #{gru_block_forward.1} parent=0 // pred_check
    _
  $region7: #{gru_block_forward.1} parent=0 // pred_check_branch
    %12 = sbr.rel (0) target = $region9
  $region8: #{gru_block_forward.1} parent=0 // pred_region
    _
  $region9: #{gru_block_forward.1} parent=0 // pred_fallthru
    _
  // Predicated region
  $region10: #{gru_block_forward.1} parent=0 // pred_check
    _
  $region11: #{gru_block_forward.1} parent=0 // pred_check_branch
    %14 = sbr.rel (0) target = $region13
  $region12: #{gru_block_forward.1} parent=0 // pred_region
    _
  $region13: #{gru_block_forward.1} parent=0 // pred_fallthru
    _
  // Predicated region
  $region14: #{gru_block_forward.1} parent=0 // pred_check
    _
  $region15: #{gru_block_forward.1} parent=0 // pred_check_branch
    %16 = sbr.rel (0) target = $region17
  $region16: #{gru_block_forward.1} parent=0 // pred_region
    _
  $region17: #{gru_block_forward.1} parent=0 // pred_fallthru
    _
  %v17 = vld [vmem:[%s3] sm:$0xff]
  %v18 = vld [vmem:[%s3 + $0x8] sm:$0xff]
  %v19 = vld [vmem:[%s3 + $0x10] sm:$0xff]
  %v20 = vld [vmem:[%s3 + $0x18] sm:$0xff]
  %v21 = vld [vmem:[%s3 + $0x20] sm:$0xff]
  %v22 = vld [vmem:[%s3 + $0x28] sm:$0xff]
  %v23 = vld [vmem:[%s3 + $0x30] sm:$0xff]
  %v24 = vld [vmem:[%s3 + $0x38] sm:$0xff]
  %v25 = vld [vmem:[%s3 + $0x40] sm:$0xff]
  %v26 = vld [vmem:[%s3 + $0x48] sm:$0xff]
  %v27 = vld [vmem:[%s3 + $0x50] sm:$0xff]
  %v28 = vld [vmem:[%s3 + $0x58] sm:$0xff]
  %v29 = vld [vmem:[%s1] sm:$0xff]
  %v30 = vld [vmem:[%s1 + $0x8] sm:$0xff]
  %v31 = vld [vmem:[%s1 + $0x10] sm:$0xff]
  %v32 = vld [vmem:[%s1 + $0x18] sm:$0xff]
  %v33 = vld [vmem:[%s1 + $0x20] sm:$0xff]
  %v34 = vld [vmem:[%s1 + $0x28] sm:$0xff]
  %v35 = vld [vmem:[%s1 + $0x30] sm:$0xff]
  %v36 = vld [vmem:[%s1 + $0x38] sm:$0xff]
  %v37 = vld [vmem:[%s1 + $0x40] sm:$0xff]
  %v38 = vld [vmem:[%s1 + $0x48] sm:$0xff]
  %v39 = vld [vmem:[%s1 + $0x50] sm:$0xff]
  %v40 = vld [vmem:[%s1 + $0x58] sm:$0xff]
  %v41 = vld [vmem:[%s0] sm:$0xf]
  %43 = vset.pattern.permute.xlu0 0
  %44 = vperm.xlu0 %43, %v17
  %v45 = vpop.permute.xlu0 %44
  %48 = vset.pattern.permute.xlu0 0
  %49 = vperm.xlu0 %48, %v18
  %v50 = vpop.permute.xlu0 %49
  %53 = vset.pattern.permute.xlu0 0
  %54 = vperm.xlu0 %53, %v19
  %v55 = vpop.permute.xlu0 %54
  %58 = vset.pattern.permute.xlu0 0
  %59 = vperm.xlu0 %58, %v20
  %v60 = vpop.permute.xlu0 %59
  %63 = vset.pattern.permute.xlu0 0
  %64 = vperm.xlu0 %63, %v21
  %v65 = vpop.permute.xlu0 %64
  %68 = vset.pattern.permute.xlu0 0
  %69 = vperm.xlu0 %68, %v22
  %v70 = vpop.permute.xlu0 %69
  %73 = vset.pattern.permute.xlu0 0
  %74 = vperm.xlu0 %73, %v23
  %v75 = vpop.permute.xlu0 %74
  %78 = vset.pattern.permute.xlu0 0
  %79 = vperm.xlu0 %78, %v24
  %v80 = vpop.permute.xlu0 %79
  %83 = vset.pattern.permute.xlu0 0
  %84 = vperm.xlu0 %83, %v25
  %v85 = vpop.permute.xlu0 %84
  %88 = vset.pattern.permute.xlu0 0
  %89 = vperm.xlu0 %88, %v26
  %v90 = vpop.permute.xlu0 %89
  %93 = vset.pattern.permute.xlu0 0
  %94 = vperm.xlu0 %93, %v27
  %v95 = vpop.permute.xlu0 %94
  %98 = vset.pattern.permute.xlu0 0
  %99 = vperm.xlu0 %98, %v28
  %v100 = vpop.permute.xlu0 %99
  %vm102 = vcmask 31744
  %v104 = vsel %vm102, %v29, 0
  %v107 = vsel %vm102, %v30, 0
  %v110 = vsel %vm102, %v31, 0
  %v113 = vsel %vm102, %v32, 0
  %v116 = vsel %vm102, %v33, 0
  %v119 = vsel %vm102, %v34, 0
  %v122 = vsel %vm102, %v35, 0
  %v125 = vsel %vm102, %v36, 0
  %v128 = vsel %vm102, %v37, 0
  %v131 = vsel %vm102, %v38, 0
  %v134 = vsel %vm102, %v39, 0
  %v137 = vsel %vm102, %v40, 0
  %vm139 = vcmask 1043456
  %v141 = vsel %vm139, %v41, 0
  %143 = vmatprep.subr.mxu0 0.0
  %144 = vmatpush1.msra.mxu0 0.0
  %145 = vmatprep.subr.mxu0 0.0
  %146 = vmatpush1.msra.mxu0 0.0
  %147 = vmatprep.subr.mxu0 0.0
  %148 = vmatpush1.msra.mxu0 0.0
  %149 = vmatprep.subr.mxu0 0.0
  %150 = vmatpush1.msra.mxu0 0.0
  %151 = vmatprep.subr.mxu0 0.0
  %152 = vmatpush1.msra.mxu0 0.0
  %153 = vmatprep.subr.mxu0 0.0
  %154 = vmatpush1.msra.mxu0 0.0
  %155 = vmatprep.subr.mxu0 0.0
  %156 = vmatpush1.msra.mxu0 0.0
  %157 = vmatprep.subr.mxu0 0.0
  %158 = vmatpush1.msra.mxu0 0.0
  %159 = vmatprep.subr.mxu0 0.0
  %160 = vmatpush1.msra.mxu0 0.0
  %161 = vmatprep.subr.mxu0 0.0
  %162 = vmatpush1.msra.mxu0 0.0
  %163 = vmatprep.subr.mxu0 0.0
  %164 = vmatpush1.msra.mxu0 0.0
  %165 = vmatprep.subr.mxu0 0.0
  %166 = vmatpush1.msra.mxu0 0.0
  %167 = vmatprep.subr.mxu0 0.0
  %168 = vmatpush1.msra.mxu0 0.0
  %169 = vmatprep.subr.mxu0 0.0
  %170 = vmatpush1.msra.mxu0 0.0
  %171 = vmatprep.subr.mxu0 0.0
  %172 = vmatpush1.msra.mxu0 0.0
  %173 = vmatprep.subr.mxu0 0.0
  %174 = vmatpush1.msra.mxu0 %v141
  %175 = vmatprep.subr.mxu0 0.0
  %176 = vmatpush2.msra.mxu0 0.0
  %177 = vmatprep.subr.mxu0 0.0
  %178 = vmatpush2.msra.mxu0 0.0
  %179 = vmatprep.subr.mxu0 0.0
  %180 = vmatpush2.msra.mxu0 0.0
  %181 = vmatprep.subr.mxu0 0.0
  %182 = vmatpush2.msra.mxu0 0.0
  %183 = vmatprep.subr.mxu0 0.0
  %184 = vmatpush2.msra.mxu0 0.0
  %185 = vmatprep.subr.mxu0 0.0
  %186 = vmatpush2.msra.mxu0 0.0
  %187 = vmatprep.subr.mxu0 0.0
  %188 = vmatpush2.msra.mxu0 0.0
  %189 = vmatprep.subr.mxu0 0.0
  %190 = vmatpush2.msra.mxu0 0.0
  %191 = vmatprep.subr.mxu0 0.0
  %192 = vmatpush2.msra.mxu0 0.0
  %193 = vmatprep.subr.mxu0 0.0
  %194 = vmatpush2.msra.mxu0 0.0
  %195 = vmatprep.subr.mxu0 0.0
  %196 = vmatpush2.msra.mxu0 0.0
  %197 = vmatprep.subr.mxu0 0.0
  %198 = vmatpush2.msra.mxu0 0.0
  %199 = vmatprep.subr.mxu0 0.0
  %200 = vmatpush2.msra.mxu0 0.0
  %201 = vmatprep.subr.mxu0 0.0
  %202 = vmatpush2.msra.mxu0 0.0
  %203 = vmatprep.subr.mxu0 0.0
  %204 = vmatpush2.msra.mxu0 0.0
  %205 = vmatprep.subr.mxu0 0.0
  %206 = vmatpush2.msra.mxu0 0.0
  %207 = vmatprep.mubr.f32.mxu0 0.0
  %208 = vmatmul.mubr.f32.gmra.mxu0 %v104
  %v209 = vpop.f32.mrf.mxu0
  %v210 = vadd.f32 %v45, %v209
  %v211 = vpop.f32.mrf.mxu0
  %212 = vmatprep.mubr.f32.mxu0 0.0
  %213 = vmatmul.mubr.f32.gmra.mxu0 %v107
  %v214 = vpop.f32.mrf.mxu0
  %v215 = vadd.f32 %v50, %v214
  %v216 = vpop.f32.mrf.mxu0
  %217 = vmatprep.mubr.f32.mxu0 0.0
  %218 = vmatmul.mubr.f32.gmra.mxu0 %v110
  %v219 = vpop.f32.mrf.mxu0
  %v220 = vadd.f32 %v55, %v219
  %v221 = vpop.f32.mrf.mxu0
  %222 = vmatprep.mubr.f32.mxu0 0.0
  %223 = vmatmul.mubr.f32.gmra.mxu0 %v113
  %v224 = vpop.f32.mrf.mxu0
  %v225 = vadd.f32 %v60, %v224
  %v226 = vpop.f32.mrf.mxu0
  %227 = vmatprep.mubr.f32.mxu0 0.0
  %228 = vmatmul.mubr.f32.gmra.mxu0 %v116
  %v229 = vpop.f32.mrf.mxu0
  %v230 = vadd.f32 %v65, %v229
  %v231 = vpop.f32.mrf.mxu0
  %232 = vmatprep.mubr.f32.mxu0 0.0
  %233 = vmatmul.mubr.f32.gmra.mxu0 %v119
  %v234 = vpop.f32.mrf.mxu0
  %v235 = vadd.f32 %v70, %v234
  %v236 = vpop.f32.mrf.mxu0
  %237 = vmatprep.mubr.f32.mxu0 0.0
  %238 = vmatmul.mubr.f32.gmra.mxu0 %v122
  %v239 = vpop.f32.mrf.mxu0
  %v240 = vadd.f32 %v75, %v239
  %v241 = vpop.f32.mrf.mxu0
  %242 = vmatprep.mubr.f32.mxu0 0.0
  %243 = vmatmul.mubr.f32.gmra.mxu0 %v125
  %v244 = vpop.f32.mrf.mxu0
  %v245 = vadd.f32 %v80, %v244
  %v246 = vpop.f32.mrf.mxu0
  %247 = vmatprep.mubr.f32.mxu0 0.0
  %248 = vmatmul.mubr.f32.gmra.mxu0 %v128
  %v249 = vpop.f32.mrf.mxu0
  %v250 = vadd.f32 %v85, %v249
  %v251 = vpop.f32.mrf.mxu0
  %252 = vmatprep.mubr.f32.mxu0 0.0
  %253 = vmatmul.mubr.f32.gmra.mxu0 %v131
  %v254 = vpop.f32.mrf.mxu0
  %v255 = vadd.f32 %v90, %v254
  %v256 = vpop.f32.mrf.mxu0
  %257 = vmatprep.mubr.f32.mxu0 0.0
  %258 = vmatmul.mubr.f32.gmra.mxu0 %v134
  %v259 = vpop.f32.mrf.mxu0
  %v260 = vadd.f32 %v95, %v259
  %v261 = vpop.f32.mrf.mxu0
  %262 = vmatprep.mubr.f32.mxu0 0.0
  %263 = vmatmul.mubr.f32.gmra.mxu0 %v137
  %v264 = vpop.f32.mrf.mxu0
  %v265 = vadd.f32 %v100, %v264
  %v266 = vpop.f32.mrf.mxu0
  %267 = vdwg.mxu0
  %268 = vst [vmem:[#allocation2] sm:$0xff] %v210
  %269 = vst [vmem:[#allocation2 + $0x8] sm:$0xff] %v215
  %270 = vst [vmem:[#allocation2 + $0x10] sm:$0xff] %v220
  %271 = vst [vmem:[#allocation2 + $0x18] sm:$0xff] %v225
  %272 = vst [vmem:[#allocation2 + $0x20] sm:$0xff] %v230
  %273 = vst [vmem:[#allocation2 + $0x28] sm:$0xff] %v235
  %274 = vst [vmem:[#allocation2 + $0x30] sm:$0xff] %v240
  %275 = vst [vmem:[#allocation2 + $0x38] sm:$0xff] %v245
  %276 = vst [vmem:[#allocation2 + $0x40] sm:$0xff] %v250
  %277 = vst [vmem:[#allocation2 + $0x48] sm:$0xff] %v255
  %278 = vst [vmem:[#allocation2 + $0x50] sm:$0xff] %v260
  %279 = vst [vmem:[#allocation2 + $0x58] sm:$0xff] %v265
  %v280 = vld [vmem:[%s1] sm:$0xff]
  %v281 = vld [vmem:[%s1 + $0x8] sm:$0xff]
  %v282 = vld [vmem:[%s1 + $0x10] sm:$0xff]
  %v283 = vld [vmem:[%s1 + $0x18] sm:$0xff]
  %v284 = vld [vmem:[%s1 + $0x20] sm:$0xff]
  %v285 = vld [vmem:[%s1 + $0x28] sm:$0xff]
  %v286 = vld [vmem:[%s1 + $0x30] sm:$0xff]
  %v287 = vld [vmem:[%s1 + $0x38] sm:$0xff]
  %v288 = vld [vmem:[%s1 + $0x40] sm:$0xff]
  %v289 = vld [vmem:[%s1 + $0x48] sm:$0xff]
  %v290 = vld [vmem:[%s1 + $0x50] sm:$0xff]
  %v291 = vld [vmem:[%s1 + $0x58] sm:$0xff]
  %s292 = scalar_lea.vmem %s0, 4
  %v293 = vld [vmem:[%s292] sm:$0xf]
  %v295 = vsel %vm102, %v280, 0
  %v298 = vsel %vm102, %v281, 0
  %v301 = vsel %vm102, %v282, 0
  %v304 = vsel %vm102, %v283, 0
  %v307 = vsel %vm102, %v284, 0
  %v310 = vsel %vm102, %v285, 0
  %v313 = vsel %vm102, %v286, 0
  %v316 = vsel %vm102, %v287, 0
  %v319 = vsel %vm102, %v288, 0
  %v322 = vsel %vm102, %v289, 0
  %v325 = vsel %vm102, %v290, 0
  %v328 = vsel %vm102, %v291, 0
  %v331 = vsel %vm139, %v293, 0
  %333 = vmatprep.subr.mxu0 0.0
  %334 = vmatpush1.msra.mxu0 0.0
  %335 = vmatprep.subr.mxu0 0.0
  %336 = vmatpush1.msra.mxu0 0.0
  %337 = vmatprep.subr.mxu0 0.0
  %338 = vmatpush1.msra.mxu0 0.0
  %339 = vmatprep.subr.mxu0 0.0
  %340 = vmatpush1.msra.mxu0 0.0
  %341 = vmatprep.subr.mxu0 0.0
  %342 = vmatpush1.msra.mxu0 0.0
  %343 = vmatprep.subr.mxu0 0.0
  %344 = vmatpush1.msra.mxu0 0.0
  %345 = vmatprep.subr.mxu0 0.0
  %346 = vmatpush1.msra.mxu0 0.0
  %347 = vmatprep.subr.mxu0 0.0
  %348 = vmatpush1.msra.mxu0 0.0
  %349 = vmatprep.subr.mxu0 0.0
  %350 = vmatpush1.msra.mxu0 0.0
  %351 = vmatprep.subr.mxu0 0.0
  %352 = vmatpush1.msra.mxu0 0.0
  %353 = vmatprep.subr.mxu0 0.0
  %354 = vmatpush1.msra.mxu0 0.0
  %355 = vmatprep.subr.mxu0 0.0
  %356 = vmatpush1.msra.mxu0 0.0
  %357 = vmatprep.subr.mxu0 0.0
  %358 = vmatpush1.msra.mxu0 0.0
  %359 = vmatprep.subr.mxu0 0.0
  %360 = vmatpush1.msra.mxu0 0.0
  %361 = vmatprep.subr.mxu0 0.0
  %362 = vmatpush1.msra.mxu0 0.0
  %363 = vmatprep.subr.mxu0 0.0
  %364 = vmatpush1.msra.mxu0 %v331
  %365 = vmatprep.subr.mxu0 0.0
  %366 = vmatpush2.msra.mxu0 0.0
  %367 = vmatprep.subr.mxu0 0.0
  %368 = vmatpush2.msra.mxu0 0.0
  %369 = vmatprep.subr.mxu0 0.0
  %370 = vmatpush2.msra.mxu0 0.0
  %371 = vmatprep.subr.mxu0 0.0
  %372 = vmatpush2.msra.mxu0 0.0
  %373 = vmatprep.subr.mxu0 0.0
  %374 = vmatpush2.msra.mxu0 0.0
  %375 = vmatprep.subr.mxu0 0.0
  %376 = vmatpush2.msra.mxu0 0.0
  %377 = vmatprep.subr.mxu0 0.0
  %378 = vmatpush2.msra.mxu0 0.0
  %379 = vmatprep.subr.mxu0 0.0
  %380 = vmatpush2.msra.mxu0 0.0
  %381 = vmatprep.subr.mxu0 0.0
  %382 = vmatpush2.msra.mxu0 0.0
  %383 = vmatprep.subr.mxu0 0.0
  %384 = vmatpush2.msra.mxu0 0.0
  %385 = vmatprep.subr.mxu0 0.0
  %386 = vmatpush2.msra.mxu0 0.0
  %387 = vmatprep.subr.mxu0 0.0
  %388 = vmatpush2.msra.mxu0 0.0
  %389 = vmatprep.subr.mxu0 0.0
  %390 = vmatpush2.msra.mxu0 0.0
  %391 = vmatprep.subr.mxu0 0.0
  %392 = vmatpush2.msra.mxu0 0.0
  %393 = vmatprep.subr.mxu0 0.0
  %394 = vmatpush2.msra.mxu0 0.0
  %395 = vmatprep.subr.mxu0 0.0
  %396 = vmatpush2.msra.mxu0 0.0
  %397 = vmatprep.mubr.f32.mxu0 0.0
  %398 = vmatmul.mubr.f32.gmra.mxu0 %v295
  %v399 = vpop.f32.mrf.mxu0
  %v400 = vadd.f32 %v45, %v399
  %v401 = vpop.f32.mrf.mxu0
  %402 = vmatprep.mubr.f32.mxu0 0.0
  %403 = vmatmul.mubr.f32.gmra.mxu0 %v298
  %v404 = vpop.f32.mrf.mxu0
  %v405 = vadd.f32 %v50, %v404
  %v406 = vpop.f32.mrf.mxu0
  %407 = vmatprep.mubr.f32.mxu0 0.0
  %408 = vmatmul.mubr.f32.gmra.mxu0 %v301
  %v409 = vpop.f32.mrf.mxu0
  %v410 = vadd.f32 %v55, %v409
  %v411 = vpop.f32.mrf.mxu0
  %412 = vmatprep.mubr.f32.mxu0 0.0
  %413 = vmatmul.mubr.f32.gmra.mxu0 %v304
  %v414 = vpop.f32.mrf.mxu0
  %v415 = vadd.f32 %v60, %v414
  %v416 = vpop.f32.mrf.mxu0
  %417 = vmatprep.mubr.f32.mxu0 0.0
  %418 = vmatmul.mubr.f32.gmra.mxu0 %v307
  %v419 = vpop.f32.mrf.mxu0
  %v420 = vadd.f32 %v65, %v419
  %v421 = vpop.f32.mrf.mxu0
  %422 = vmatprep.mubr.f32.mxu0 0.0
  %423 = vmatmul.mubr.f32.gmra.mxu0 %v310
  %v424 = vpop.f32.mrf.mxu0
  %v425 = vadd.f32 %v70, %v424
  %v426 = vpop.f32.mrf.mxu0
  %427 = vmatprep.mubr.f32.mxu0 0.0
  %428 = vmatmul.mubr.f32.gmra.mxu0 %v313
  %v429 = vpop.f32.mrf.mxu0
  %v430 = vadd.f32 %v75, %v429
  %v431 = vpop.f32.mrf.mxu0
  %432 = vmatprep.mubr.f32.mxu0 0.0
  %433 = vmatmul.mubr.f32.gmra.mxu0 %v316
  %v434 = vpop.f32.mrf.mxu0
  %v435 = vadd.f32 %v80, %v434
  %v436 = vpop.f32.mrf.mxu0
  %437 = vmatprep.mubr.f32.mxu0 0.0
  %438 = vmatmul.mubr.f32.gmra.mxu0 %v319
  %v439 = vpop.f32.mrf.mxu0
  %v440 = vadd.f32 %v85, %v439
  %v441 = vpop.f32.mrf.mxu0
  %442 = vmatprep.mubr.f32.mxu0 0.0
  %443 = vmatmul.mubr.f32.gmra.mxu0 %v322
  %v444 = vpop.f32.mrf.mxu0
  %v445 = vadd.f32 %v90, %v444
  %v446 = vpop.f32.mrf.mxu0
  %447 = vmatprep.mubr.f32.mxu0 0.0
  %448 = vmatmul.mubr.f32.gmra.mxu0 %v325
  %v449 = vpop.f32.mrf.mxu0
  %v450 = vadd.f32 %v95, %v449
  %v451 = vpop.f32.mrf.mxu0
  %452 = vmatprep.mubr.f32.mxu0 0.0
  %453 = vmatmul.mubr.f32.gmra.mxu0 %v328
  %v454 = vpop.f32.mrf.mxu0
  %v455 = vadd.f32 %v100, %v454
  %v456 = vpop.f32.mrf.mxu0
  %457 = vdwg.mxu0
  %s458 = scalar_lea.vmem [#allocation2], 96
  %459 = vst [vmem:[%s458] sm:$0xff] %v400
  %460 = vst [vmem:[%s458 + $0x8] sm:$0xff] %v405
  %461 = vst [vmem:[%s458 + $0x10] sm:$0xff] %v410
  %462 = vst [vmem:[%s458 + $0x18] sm:$0xff] %v415
  %463 = vst [vmem:[%s458 + $0x20] sm:$0xff] %v420
  %464 = vst [vmem:[%s458 + $0x28] sm:$0xff] %v425
  %465 = vst [vmem:[%s458 + $0x30] sm:$0xff] %v430
  %466 = vst [vmem:[%s458 + $0x38] sm:$0xff] %v435
  %467 = vst [vmem:[%s458 + $0x40] sm:$0xff] %v440
  %468 = vst [vmem:[%s458 + $0x48] sm:$0xff] %v445
  %469 = vst [vmem:[%s458 + $0x50] sm:$0xff] %v450
  %470 = vst [vmem:[%s458 + $0x58] sm:$0xff] %v455
  %v471 = vld [vmem:[%s1] sm:$0xff]
  %v472 = vld [vmem:[%s1 + $0x8] sm:$0xff]
  %v473 = vld [vmem:[%s1 + $0x10] sm:$0xff]
  %v474 = vld [vmem:[%s1 + $0x18] sm:$0xff]
  %v475 = vld [vmem:[%s1 + $0x20] sm:$0xff]
  %v476 = vld [vmem:[%s1 + $0x28] sm:$0xff]
  %v477 = vld [vmem:[%s1 + $0x30] sm:$0xff]
  %v478 = vld [vmem:[%s1 + $0x38] sm:$0xff]
  %v479 = vld [vmem:[%s1 + $0x40] sm:$0xff]
  %v480 = vld [vmem:[%s1 + $0x48] sm:$0xff]
  %v481 = vld [vmem:[%s1 + $0x50] sm:$0xff]
  %v482 = vld [vmem:[%s1 + $0x58] sm:$0xff]
  %s483 = scalar_lea.vmem %s0, 8
  %v484 = vld [vmem:[%s483] sm:$0xf]
  %v486 = vsel %vm102, %v471, 0
  %v489 = vsel %vm102, %v472, 0
  %v492 = vsel %vm102, %v473, 0
  %v495 = vsel %vm102, %v474, 0
  %v498 = vsel %vm102, %v475, 0
  %v501 = vsel %vm102, %v476, 0
  %v504 = vsel %vm102, %v477, 0
  %v507 = vsel %vm102, %v478, 0
  %v510 = vsel %vm102, %v479, 0
  %v513 = vsel %vm102, %v480, 0
  %v516 = vsel %vm102, %v481, 0
  %v519 = vsel %vm102, %v482, 0
  %v522 = vsel %vm139, %v484, 0
  %524 = vmatprep.subr.mxu0 0.0
  %525 = vmatpush1.msra.mxu0 0.0
  %526 = vmatprep.subr.mxu0 0.0
  %527 = vmatpush1.msra.mxu0 0.0
  %528 = vmatprep.subr.mxu0 0.0
  %529 = vmatpush1.msra.mxu0 0.0
  %530 = vmatprep.subr.mxu0 0.0
  %531 = vmatpush1.msra.mxu0 0.0
  %532 = vmatprep.subr.mxu0 0.0
  %533 = vmatpush1.msra.mxu0 0.0
  %534 = vmatprep.subr.mxu0 0.0
  %535 = vmatpush1.msra.mxu0 0.0
  %536 = vmatprep.subr.mxu0 0.0
  %537 = vmatpush1.msra.mxu0 0.0
  %538 = vmatprep.subr.mxu0 0.0
  %539 = vmatpush1.msra.mxu0 0.0
  %540 = vmatprep.subr.mxu0 0.0
  %541 = vmatpush1.msra.mxu0 0.0
  %542 = vmatprep.subr.mxu0 0.0
  %543 = vmatpush1.msra.mxu0 0.0
  %544 = vmatprep.subr.mxu0 0.0
  %545 = vmatpush1.msra.mxu0 0.0
  %546 = vmatprep.subr.mxu0 0.0
  %547 = vmatpush1.msra.mxu0 0.0
  %548 = vmatprep.subr.mxu0 0.0
  %549 = vmatpush1.msra.mxu0 0.0
  %550 = vmatprep.subr.mxu0 0.0
  %551 = vmatpush1.msra.mxu0 0.0
  %552 = vmatprep.subr.mxu0 0.0
  %553 = vmatpush1.msra.mxu0 0.0
  %554 = vmatprep.subr.mxu0 0.0
  %555 = vmatpush1.msra.mxu0 %v522
  %556 = vmatprep.subr.mxu0 0.0
  %557 = vmatpush2.msra.mxu0 0.0
  %558 = vmatprep.subr.mxu0 0.0
  %559 = vmatpush2.msra.mxu0 0.0
  %560 = vmatprep.subr.mxu0 0.0
  %561 = vmatpush2.msra.mxu0 0.0
  %562 = vmatprep.subr.mxu0 0.0
  %563 = vmatpush2.msra.mxu0 0.0
  %564 = vmatprep.subr.mxu0 0.0
  %565 = vmatpush2.msra.mxu0 0.0
  %566 = vmatprep.subr.mxu0 0.0
  %567 = vmatpush2.msra.mxu0 0.0
  %568 = vmatprep.subr.mxu0 0.0
  %569 = vmatpush2.msra.mxu0 0.0
  %570 = vmatprep.subr.mxu0 0.0
  %571 = vmatpush2.msra.mxu0 0.0
  %572 = vmatprep.subr.mxu0 0.0
  %573 = vmatpush2.msra.mxu0 0.0
  %574 = vmatprep.subr.mxu0 0.0
  %575 = vmatpush2.msra.mxu0 0.0
  %576 = vmatprep.subr.mxu0 0.0
  %577 = vmatpush2.msra.mxu0 0.0
  %578 = vmatprep.subr.mxu0 0.0
  %579 = vmatpush2.msra.mxu0 0.0
  %580 = vmatprep.subr.mxu0 0.0
  %581 = vmatpush2.msra.mxu0 0.0
  %582 = vmatprep.subr.mxu0 0.0
  %583 = vmatpush2.msra.mxu0 0.0
  %584 = vmatprep.subr.mxu0 0.0
  %585 = vmatpush2.msra.mxu0 0.0
  %586 = vmatprep.subr.mxu0 0.0
  %587 = vmatpush2.msra.mxu0 0.0
  %588 = vmatprep.mubr.f32.mxu0 0.0
  %589 = vmatmul.mubr.f32.gmra.mxu0 %v486
  %v590 = vpop.f32.mrf.mxu0
  %v591 = vadd.f32 %v45, %v590
  %v592 = vpop.f32.mrf.mxu0
  %593 = vmatprep.mubr.f32.mxu0 0.0
  %594 = vmatmul.mubr.f32.gmra.mxu0 %v489
  %v595 = vpop.f32.mrf.mxu0
  %v596 = vadd.f32 %v50, %v595
  %v597 = vpop.f32.mrf.mxu0
  %598 = vmatprep.mubr.f32.mxu0 0.0
  %599 = vmatmul.mubr.f32.gmra.mxu0 %v492
  %v600 = vpop.f32.mrf.mxu0
  %v601 = vadd.f32 %v55, %v600
  %v602 = vpop.f32.mrf.mxu0
  %603 = vmatprep.mubr.f32.mxu0 0.0
  %604 = vmatmul.mubr.f32.gmra.mxu0 %v495
  %v605 = vpop.f32.mrf.mxu0
  %v606 = vadd.f32 %v60, %v605
  %v607 = vpop.f32.mrf.mxu0
  %608 = vmatprep.mubr.f32.mxu0 0.0
  %609 = vmatmul.mubr.f32.gmra.mxu0 %v498
  %v610 = vpop.f32.mrf.mxu0
  %v611 = vadd.f32 %v65, %v610
  %v612 = vpop.f32.mrf.mxu0
  %613 = vmatprep.mubr.f32.mxu0 0.0
  %614 = vmatmul.mubr.f32.gmra.mxu0 %v501
  %v615 = vpop.f32.mrf.mxu0
  %v616 = vadd.f32 %v70, %v615
  %v617 = vpop.f32.mrf.mxu0
  %618 = vmatprep.mubr.f32.mxu0 0.0
  %619 = vmatmul.mubr.f32.gmra.mxu0 %v504
  %v620 = vpop.f32.mrf.mxu0
  %v621 = vadd.f32 %v75, %v620
  %v622 = vpop.f32.mrf.mxu0
  %623 = vmatprep.mubr.f32.mxu0 0.0
  %624 = vmatmul.mubr.f32.gmra.mxu0 %v507
  %v625 = vpop.f32.mrf.mxu0
  %v626 = vadd.f32 %v80, %v625
  %v627 = vpop.f32.mrf.mxu0
  %628 = vmatprep.mubr.f32.mxu0 0.0
  %629 = vmatmul.mubr.f32.gmra.mxu0 %v510
  %v630 = vpop.f32.mrf.mxu0
  %v631 = vadd.f32 %v85, %v630
  %v632 = vpop.f32.mrf.mxu0
  %633 = vmatprep.mubr.f32.mxu0 0.0
  %634 = vmatmul.mubr.f32.gmra.mxu0 %v513
  %v635 = vpop.f32.mrf.mxu0
  %v636 = vadd.f32 %v90, %v635
  %v637 = vpop.f32.mrf.mxu0
  %638 = vmatprep.mubr.f32.mxu0 0.0
  %639 = vmatmul.mubr.f32.gmra.mxu0 %v516
  %v640 = vpop.f32.mrf.mxu0
  %v641 = vadd.f32 %v95, %v640
  %v642 = vpop.f32.mrf.mxu0
  %643 = vmatprep.mubr.f32.mxu0 0.0
  %644 = vmatmul.mubr.f32.gmra.mxu0 %v519
  %v645 = vpop.f32.mrf.mxu0
  %v646 = vadd.f32 %v100, %v645
  %v647 = vpop.f32.mrf.mxu0
  %648 = vdwg.mxu0
  %s649 = scalar_lea.vmem [#allocation2], 192
  %650 = vst [vmem:[%s649] sm:$0xff] %v591
  %651 = vst [vmem:[%s649 + $0x8] sm:$0xff] %v596
  %652 = vst [vmem:[%s649 + $0x10] sm:$0xff] %v601
  %653 = vst [vmem:[%s649 + $0x18] sm:$0xff] %v606
  %654 = vst [vmem:[%s649 + $0x20] sm:$0xff] %v611
  %655 = vst [vmem:[%s649 + $0x28] sm:$0xff] %v616
  %656 = vst [vmem:[%s649 + $0x30] sm:$0xff] %v621
  %657 = vst [vmem:[%s649 + $0x38] sm:$0xff] %v626
  %658 = vst [vmem:[%s649 + $0x40] sm:$0xff] %v631
  %659 = vst [vmem:[%s649 + $0x48] sm:$0xff] %v636
  %660 = vst [vmem:[%s649 + $0x50] sm:$0xff] %v641
  %661 = vst [vmem:[%s649 + $0x58] sm:$0xff] %v646
  %v662 = vld [vmem:[%s1] sm:$0xff]
  %v663 = vld [vmem:[%s1 + $0x8] sm:$0xff]
  %v664 = vld [vmem:[%s1 + $0x10] sm:$0xff]
  %v665 = vld [vmem:[%s1 + $0x18] sm:$0xff]
  %v666 = vld [vmem:[%s1 + $0x20] sm:$0xff]
  %v667 = vld [vmem:[%s1 + $0x28] sm:$0xff]
  %v668 = vld [vmem:[%s1 + $0x30] sm:$0xff]
  %v669 = vld [vmem:[%s1 + $0x38] sm:$0xff]
  %v670 = vld [vmem:[%s1 + $0x40] sm:$0xff]
  %v671 = vld [vmem:[%s1 + $0x48] sm:$0xff]
  %v672 = vld [vmem:[%s1 + $0x50] sm:$0xff]
  %v673 = vld [vmem:[%s1 + $0x58] sm:$0xff]
  %s674 = scalar_lea.vmem %s0, 12
  %v675 = vld [vmem:[%s674] sm:$0xf]
  %v677 = vsel %vm102, %v662, 0
  %v680 = vsel %vm102, %v663, 0
  %v683 = vsel %vm102, %v664, 0
  %v686 = vsel %vm102, %v665, 0
  %v689 = vsel %vm102, %v666, 0
  %v692 = vsel %vm102, %v667, 0
  %v695 = vsel %vm102, %v668, 0
  %v698 = vsel %vm102, %v669, 0
  %v701 = vsel %vm102, %v670, 0
  %v704 = vsel %vm102, %v671, 0
  %v707 = vsel %vm102, %v672, 0
  %v710 = vsel %vm102, %v673, 0
  %v713 = vsel %vm139, %v675, 0
  %715 = vmatprep.subr.mxu0 0.0
  %716 = vmatpush1.msra.mxu0 0.0
  %717 = vmatprep.subr.mxu0 0.0
  %718 = vmatpush1.msra.mxu0 0.0
  %719 = vmatprep.subr.mxu0 0.0
  %720 = vmatpush1.msra.mxu0 0.0
  %721 = vmatprep.subr.mxu0 0.0
  %722 = vmatpush1.msra.mxu0 0.0
  %723 = vmatprep.subr.mxu0 0.0
  %724 = vmatpush1.msra.mxu0 0.0
  %725 = vmatprep.subr.mxu0 0.0
  %726 = vmatpush1.msra.mxu0 0.0
  %727 = vmatprep.subr.mxu0 0.0
  %728 = vmatpush1.msra.mxu0 0.0
  %729 = vmatprep.subr.mxu0 0.0
  %730 = vmatpush1.msra.mxu0 0.0
  %731 = vmatprep.subr.mxu0 0.0
  %732 = vmatpush1.msra.mxu0 0.0
  %733 = vmatprep.subr.mxu0 0.0
  %734 = vmatpush1.msra.mxu0 0.0
  %735 = vmatprep.subr.mxu0 0.0
  %736 = vmatpush1.msra.mxu0 0.0
  %737 = vmatprep.subr.mxu0 0.0
  %738 = vmatpush1.msra.mxu0 0.0
  %739 = vmatprep.subr.mxu0 0.0
  %740 = vmatpush1.msra.mxu0 0.0
  %741 = vmatprep.subr.mxu0 0.0
  %742 = vmatpush1.msra.mxu0 0.0
  %743 = vmatprep.subr.mxu0 0.0
  %744 = vmatpush1.msra.mxu0 0.0
  %745 = vmatprep.subr.mxu0 0.0
  %746 = vmatpush1.msra.mxu0 %v713
  %747 = vmatprep.subr.mxu0 0.0
  %748 = vmatpush2.msra.mxu0 0.0
  %749 = vmatprep.subr.mxu0 0.0
  %750 = vmatpush2.msra.mxu0 0.0
  %751 = vmatprep.subr.mxu0 0.0
  %752 = vmatpush2.msra.mxu0 0.0
  %753 = vmatprep.subr.mxu0 0.0
  %754 = vmatpush2.msra.mxu0 0.0
  %755 = vmatprep.subr.mxu0 0.0
  %756 = vmatpush2.msra.mxu0 0.0
  %757 = vmatprep.subr.mxu0 0.0
  %758 = vmatpush2.msra.mxu0 0.0
  %759 = vmatprep.subr.mxu0 0.0
  %760 = vmatpush2.msra.mxu0 0.0
  %761 = vmatprep.subr.mxu0 0.0
  %762 = vmatpush2.msra.mxu0 0.0
  %763 = vmatprep.subr.mxu0 0.0
  %764 = vmatpush2.msra.mxu0 0.0
  %765 = vmatprep.subr.mxu0 0.0
  %766 = vmatpush2.msra.mxu0 0.0
  %767 = vmatprep.subr.mxu0 0.0
  %768 = vmatpush2.msra.mxu0 0.0
  %769 = vmatprep.subr.mxu0 0.0
  %770 = vmatpush2.msra.mxu0 0.0
  %771 = vmatprep.subr.mxu0 0.0
  %772 = vmatpush2.msra.mxu0 0.0
  %773 = vmatprep.subr.mxu0 0.0
  %774 = vmatpush2.msra.mxu0 0.0
  %775 = vmatprep.subr.mxu0 0.0
  %776 = vmatpush2.msra.mxu0 0.0
  %777 = vmatprep.subr.mxu0 0.0
  %778 = vmatpush2.msra.mxu0 0.0
  %779 = vmatprep.mubr.f32.mxu0 0.0
  %780 = vmatmul.mubr.f32.gmra.mxu0 %v677
  %v781 = vpop.f32.mrf.mxu0
  %v782 = vadd.f32 %v45, %v781
  %v783 = vpop.f32.mrf.mxu0
  %784 = vmatprep.mubr.f32.mxu0 0.0
  %785 = vmatmul.mubr.f32.gmra.mxu0 %v680
  %v786 = vpop.f32.mrf.mxu0
  %v787 = vadd.f32 %v50, %v786
  %v788 = vpop.f32.mrf.mxu0
  %789 = vmatprep.mubr.f32.mxu0 0.0
  %790 = vmatmul.mubr.f32.gmra.mxu0 %v683
  %v791 = vpop.f32.mrf.mxu0
  %v792 = vadd.f32 %v55, %v791
  %v793 = vpop.f32.mrf.mxu0
  %794 = vmatprep.mubr.f32.mxu0 0.0
  %795 = vmatmul.mubr.f32.gmra.mxu0 %v686
  %v796 = vpop.f32.mrf.mxu0
  %v797 = vadd.f32 %v60, %v796
  %v798 = vpop.f32.mrf.mxu0
  %799 = vmatprep.mubr.f32.mxu0 0.0
  %800 = vmatmul.mubr.f32.gmra.mxu0 %v689
  %v801 = vpop.f32.mrf.mxu0
  %v802 = vadd.f32 %v65, %v801
  %v803 = vpop.f32.mrf.mxu0
  %804 = vmatprep.mubr.f32.mxu0 0.0
  %805 = vmatmul.mubr.f32.gmra.mxu0 %v692
  %v806 = vpop.f32.mrf.mxu0
  %v807 = vadd.f32 %v70, %v806
  %v808 = vpop.f32.mrf.mxu0
  %809 = vmatprep.mubr.f32.mxu0 0.0
  %810 = vmatmul.mubr.f32.gmra.mxu0 %v695
  %v811 = vpop.f32.mrf.mxu0
  %v812 = vadd.f32 %v75, %v811
  %v813 = vpop.f32.mrf.mxu0
  %814 = vmatprep.mubr.f32.mxu0 0.0
  %815 = vmatmul.mubr.f32.gmra.mxu0 %v698
  %v816 = vpop.f32.mrf.mxu0
  %v817 = vadd.f32 %v80, %v816
  %v818 = vpop.f32.mrf.mxu0
  %819 = vmatprep.mubr.f32.mxu0 0.0
  %820 = vmatmul.mubr.f32.gmra.mxu0 %v701
  %v821 = vpop.f32.mrf.mxu0
  %v822 = vadd.f32 %v85, %v821
  %v823 = vpop.f32.mrf.mxu0
  %824 = vmatprep.mubr.f32.mxu0 0.0
  %825 = vmatmul.mubr.f32.gmra.mxu0 %v704
  %v826 = vpop.f32.mrf.mxu0
  %v827 = vadd.f32 %v90, %v826
  %v828 = vpop.f32.mrf.mxu0
  %829 = vmatprep.mubr.f32.mxu0 0.0
  %830 = vmatmul.mubr.f32.gmra.mxu0 %v707
  %v831 = vpop.f32.mrf.mxu0
  %v832 = vadd.f32 %v95, %v831
  %v833 = vpop.f32.mrf.mxu0
  %834 = vmatprep.mubr.f32.mxu0 0.0
  %835 = vmatmul.mubr.f32.gmra.mxu0 %v710
  %v836 = vpop.f32.mrf.mxu0
  %v837 = vadd.f32 %v100, %v836
  %v838 = vpop.f32.mrf.mxu0
  %839 = vdwg.mxu0
  %s840 = scalar_lea.vmem [#allocation2], 288
  %841 = vst [vmem:[%s840] sm:$0xff] %v782
  %842 = vst [vmem:[%s840 + $0x8] sm:$0xff] %v787
  %843 = vst [vmem:[%s840 + $0x10] sm:$0xff] %v792
  %844 = vst [vmem:[%s840 + $0x18] sm:$0xff] %v797
  %845 = vst [vmem:[%s840 + $0x20] sm:$0xff] %v802
  %846 = vst [vmem:[%s840 + $0x28] sm:$0xff] %v807
  %847 = vst [vmem:[%s840 + $0x30] sm:$0xff] %v812
  %848 = vst [vmem:[%s840 + $0x38] sm:$0xff] %v817
  %849 = vst [vmem:[%s840 + $0x40] sm:$0xff] %v822
  %850 = vst [vmem:[%s840 + $0x48] sm:$0xff] %v827
  %851 = vst [vmem:[%s840 + $0x50] sm:$0xff] %v832
  %852 = vst [vmem:[%s840 + $0x58] sm:$0xff] %v837
  %v853 = vld [vmem:[%s1] sm:$0xff]
  %v854 = vld [vmem:[%s1 + $0x8] sm:$0xff]
  %v855 = vld [vmem:[%s1 + $0x10] sm:$0xff]
  %v856 = vld [vmem:[%s1 + $0x18] sm:$0xff]
  %v857 = vld [vmem:[%s1 + $0x20] sm:$0xff]
  %v858 = vld [vmem:[%s1 + $0x28] sm:$0xff]
  %v859 = vld [vmem:[%s1 + $0x30] sm:$0xff]
  %v860 = vld [vmem:[%s1 + $0x38] sm:$0xff]
  %v861 = vld [vmem:[%s1 + $0x40] sm:$0xff]
  %v862 = vld [vmem:[%s1 + $0x48] sm:$0xff]
  %v863 = vld [vmem:[%s1 + $0x50] sm:$0xff]
  %v864 = vld [vmem:[%s1 + $0x58] sm:$0xff]
  %s865 = scalar_lea.vmem %s0, 16
  %v866 = vld [vmem:[%s865] sm:$0xf]
  %v868 = vsel %vm102, %v853, 0
  %v871 = vsel %vm102, %v854, 0
  %v874 = vsel %vm102, %v855, 0
  %v877 = vsel %vm102, %v856, 0
  %v880 = vsel %vm102, %v857, 0
  %v883 = vsel %vm102, %v858, 0
  %v886 = vsel %vm102, %v859, 0
  %v889 = vsel %vm102, %v860, 0
  %v892 = vsel %vm102, %v861, 0
  %v895 = vsel %vm102, %v862, 0
  %v898 = vsel %vm102, %v863, 0
  %v901 = vsel %vm102, %v864, 0
  %v904 = vsel %vm139, %v866, 0
  %906 = vmatprep.subr.mxu0 0.0
  %907 = vmatpush1.msra.mxu0 0.0
  %908 = vmatprep.subr.mxu0 0.0
  %909 = vmatpush1.msra.mxu0 0.0
  %910 = vmatprep.subr.mxu0 0.0
  %911 = vmatpush1.msra.mxu0 0.0
  %912 = vmatprep.subr.mxu0 0.0
  %913 = vmatpush1.msra.mxu0 0.0
  %914 = vmatprep.subr.mxu0 0.0
  %915 = vmatpush1.msra.mxu0 0.0
  %916 = vmatprep.subr.mxu0 0.0
  %917 = vmatpush1.msra.mxu0 0.0
  %918 = vmatprep.subr.mxu0 0.0
  %919 = vmatpush1.msra.mxu0 0.0
  %920 = vmatprep.subr.mxu0 0.0
  %921 = vmatpush1.msra.mxu0 0.0
  %922 = vmatprep.subr.mxu0 0.0
  %923 = vmatpush1.msra.mxu0 0.0
  %924 = vmatprep.subr.mxu0 0.0
  %925 = vmatpush1.msra.mxu0 0.0
  %926 = vmatprep.subr.mxu0 0.0
  %927 = vmatpush1.msra.mxu0 0.0
  %928 = vmatprep.subr.mxu0 0.0
  %929 = vmatpush1.msra.mxu0 0.0
  %930 = vmatprep.subr.mxu0 0.0
  %931 = vmatpush1.msra.mxu0 0.0
  %932 = vmatprep.subr.mxu0 0.0
  %933 = vmatpush1.msra.mxu0 0.0
  %934 = vmatprep.subr.mxu0 0.0
  %935 = vmatpush1.msra.mxu0 0.0
  %936 = vmatprep.subr.mxu0 0.0
  %937 = vmatpush1.msra.mxu0 %v904
  %938 = vmatprep.subr.mxu0 0.0
  %939 = vmatpush2.msra.mxu0 0.0
  %940 = vmatprep.subr.mxu0 0.0
  %941 = vmatpush2.msra.mxu0 0.0
  %942 = vmatprep.subr.mxu0 0.0
  %943 = vmatpush2.msra.mxu0 0.0
  %944 = vmatprep.subr.mxu0 0.0
  %945 = vmatpush2.msra.mxu0 0.0
  %946 = vmatprep.subr.mxu0 0.0
  %947 = vmatpush2.msra.mxu0 0.0
  %948 = vmatprep.subr.mxu0 0.0
  %949 = vmatpush2.msra.mxu0 0.0
  %950 = vmatprep.subr.mxu0 0.0
  %951 = vmatpush2.msra.mxu0 0.0
  %952 = vmatprep.subr.mxu0 0.0
  %953 = vmatpush2.msra.mxu0 0.0
  %954 = vmatprep.subr.mxu0 0.0
  %955 = vmatpush2.msra.mxu0 0.0
  %956 = vmatprep.subr.mxu0 0.0
  %957 = vmatpush2.msra.mxu0 0.0
  %958 = vmatprep.subr.mxu0 0.0
  %959 = vmatpush2.msra.mxu0 0.0
  %960 = vmatprep.subr.mxu0 0.0
  %961 = vmatpush2.msra.mxu0 0.0
  %962 = vmatprep.subr.mxu0 0.0
  %963 = vmatpush2.msra.mxu0 0.0
  %964 = vmatprep.subr.mxu0 0.0
  %965 = vmatpush2.msra.mxu0 0.0
  %966 = vmatprep.subr.mxu0 0.0
  %967 = vmatpush2.msra.mxu0 0.0
  %968 = vmatprep.subr.mxu0 0.0
  %969 = vmatpush2.msra.mxu0 0.0
  %970 = vmatprep.mubr.f32.mxu0 0.0
  %971 = vmatmul.mubr.f32.gmra.mxu0 %v868
  %v972 = vpop.f32.mrf.mxu0
  %v973 = vadd.f32 %v45, %v972
  %v974 = vpop.f32.mrf.mxu0
  %975 = vmatprep.mubr.f32.mxu0 0.0
  %976 = vmatmul.mubr.f32.gmra.mxu0 %v871
  %v977 = vpop.f32.mrf.mxu0
  %v978 = vadd.f32 %v50, %v977
  %v979 = vpop.f32.mrf.mxu0
  %980 = vmatprep.mubr.f32.mxu0 0.0
  %981 = vmatmul.mubr.f32.gmra.mxu0 %v874
  %v982 = vpop.f32.mrf.mxu0
  %v983 = vadd.f32 %v55, %v982
  %v984 = vpop.f32.mrf.mxu0
  %985 = vmatprep.mubr.f32.mxu0 0.0
  %986 = vmatmul.mubr.f32.gmra.mxu0 %v877
  %v987 = vpop.f32.mrf.mxu0
  %v988 = vadd.f32 %v60, %v987
  %v989 = vpop.f32.mrf.mxu0
  %990 = vmatprep.mubr.f32.mxu0 0.0
  %991 = vmatmul.mubr.f32.gmra.mxu0 %v880
  %v992 = vpop.f32.mrf.mxu0
  %v993 = vadd.f32 %v65, %v992
  %v994 = vpop.f32.mrf.mxu0
  %995 = vmatprep.mubr.f32.mxu0 0.0
  %996 = vmatmul.mubr.f32.gmra.mxu0 %v883
  %v997 = vpop.f32.mrf.mxu0
  %v998 = vadd.f32 %v70, %v997
  %v999 = vpop.f32.mrf.mxu0
  %1000 = vmatprep.mubr.f32.mxu0 0.0
  %1001 = vmatmul.mubr.f32.gmra.mxu0 %v886
  %v1002 = vpop.f32.mrf.mxu0
  %v1003 = vadd.f32 %v75, %v1002
  %v1004 = vpop.f32.mrf.mxu0
  %1005 = vmatprep.mubr.f32.mxu0 0.0
  %1006 = vmatmul.mubr.f32.gmra.mxu0 %v889
  %v1007 = vpop.f32.mrf.mxu0
  %v1008 = vadd.f32 %v80, %v1007
  %v1009 = vpop.f32.mrf.mxu0
  %1010 = vmatprep.mubr.f32.mxu0 0.0
  %1011 = vmatmul.mubr.f32.gmra.mxu0 %v892
  %v1012 = vpop.f32.mrf.mxu0
  %v1013 = vadd.f32 %v85, %v1012
  %v1014 = vpop.f32.mrf.mxu0
  %1015 = vmatprep.mubr.f32.mxu0 0.0
  %1016 = vmatmul.mubr.f32.gmra.mxu0 %v895
  %v1017 = vpop.f32.mrf.mxu0
  %v1018 = vadd.f32 %v90, %v1017
  %v1019 = vpop.f32.mrf.mxu0
  %1020 = vmatprep.mubr.f32.mxu0 0.0
  %1021 = vmatmul.mubr.f32.gmra.mxu0 %v898
  %v1022 = vpop.f32.mrf.mxu0
  %v1023 = vadd.f32 %v95, %v1022
  %v1024 = vpop.f32.mrf.mxu0
  %1025 = vmatprep.mubr.f32.mxu0 0.0
  %1026 = vmatmul.mubr.f32.gmra.mxu0 %v901
  %v1027 = vpop.f32.mrf.mxu0
  %v1028 = vadd.f32 %v100, %v1027
  %v1029 = vpop.f32.mrf.mxu0
  %1030 = vdwg.mxu0
  %s1031 = scalar_lea.vmem [#allocation2], 384
  %1032 = vst [vmem:[%s1031] sm:$0xff] %v973
  %1033 = vst [vmem:[%s1031 + $0x8] sm:$0xff] %v978
  %1034 = vst [vmem:[%s1031 + $0x10] sm:$0xff] %v983
  %1035 = vst [vmem:[%s1031 + $0x18] sm:$0xff] %v988
  %1036 = vst [vmem:[%s1031 + $0x20] sm:$0xff] %v993
  %1037 = vst [vmem:[%s1031 + $0x28] sm:$0xff] %v998
  %1038 = vst [vmem:[%s1031 + $0x30] sm:$0xff] %v1003
  %1039 = vst [vmem:[%s1031 + $0x38] sm:$0xff] %v1008
  %1040 = vst [vmem:[%s1031 + $0x40] sm:$0xff] %v1013
  %1041 = vst [vmem:[%s1031 + $0x48] sm:$0xff] %v1018
  %1042 = vst [vmem:[%s1031 + $0x50] sm:$0xff] %v1023
  %1043 = vst [vmem:[%s1031 + $0x58] sm:$0xff] %v1028
  %v1044 = vld [vmem:[%s1] sm:$0xff]
  %v1045 = vld [vmem:[%s1 + $0x8] sm:$0xff]
  %v1046 = vld [vmem:[%s1 + $0x10] sm:$0xff]
  %v1047 = vld [vmem:[%s1 + $0x18] sm:$0xff]
  %v1048 = vld [vmem:[%s1 + $0x20] sm:$0xff]
  %v1049 = vld [vmem:[%s1 + $0x28] sm:$0xff]
  %v1050 = vld [vmem:[%s1 + $0x30] sm:$0xff]
  %v1051 = vld [vmem:[%s1 + $0x38] sm:$0xff]
  %v1052 = vld [vmem:[%s1 + $0x40] sm:$0xff]
  %v1053 = vld [vmem:[%s1 + $0x48] sm:$0xff]
  %v1054 = vld [vmem:[%s1 + $0x50] sm:$0xff]
  %v1055 = vld [vmem:[%s1 + $0x58] sm:$0xff]
  %s1056 = scalar_lea.vmem %s0, 20
  %v1057 = vld [vmem:[%s1056] sm:$0xf]
  %v1059 = vsel %vm102, %v1044, 0
  %v1062 = vsel %vm102, %v1045, 0
  %v1065 = vsel %vm102, %v1046, 0
  %v1068 = vsel %vm102, %v1047, 0
  %v1071 = vsel %vm102, %v1048, 0
  %v1074 = vsel %vm102, %v1049, 0
  %v1077 = vsel %vm102, %v1050, 0
  %v1080 = vsel %vm102, %v1051, 0
  %v1083 = vsel %vm102, %v1052, 0
  %v1086 = vsel %vm102, %v1053, 0
  %v1089 = vsel %vm102, %v1054, 0
  %v1092 = vsel %vm102, %v1055, 0
  %v1095 = vsel %vm139, %v1057, 0
  %1097 = vmatprep.subr.mxu0 0.0
  %1098 = vmatpush1.msra.mxu0 0.0
  %1099 = vmatprep.subr.mxu0 0.0
  %1100 = vmatpush1.msra.mxu0 0.0
  %1101 = vmatprep.subr.mxu0 0.0
  %1102 = vmatpush1.msra.mxu0 0.0
  %1103 = vmatprep.subr.mxu0 0.0
  %1104 = vmatpush1.msra.mxu0 0.0
  %1105 = vmatprep.subr.mxu0 0.0
  %1106 = vmatpush1.msra.mxu0 0.0
  %1107 = vmatprep.subr.mxu0 0.0
  %1108 = vmatpush1.msra.mxu0 0.0
  %1109 = vmatprep.subr.mxu0 0.0
  %1110 = vmatpush1.msra.mxu0 0.0
  %1111 = vmatprep.subr.mxu0 0.0
  %1112 = vmatpush1.msra.mxu0 0.0
  %1113 = vmatprep.subr.mxu0 0.0
  %1114 = vmatpush1.msra.mxu0 0.0
  %1115 = vmatprep.subr.mxu0 0.0
  %1116 = vmatpush1.msra.mxu0 0.0
  %1117 = vmatprep.subr.mxu0 0.0
  %1118 = vmatpush1.msra.mxu0 0.0
  %1119 = vmatprep.subr.mxu0 0.0
  %1120 = vmatpush1.msra.mxu0 0.0
  %1121 = vmatprep.subr.mxu0 0.0
  %1122 = vmatpush1.msra.mxu0 0.0
  %1123 = vmatprep.subr.mxu0 0.0
  %1124 = vmatpush1.msra.mxu0 0.0
  %1125 = vmatprep.subr.mxu0 0.0
  %1126 = vmatpush1.msra.mxu0 0.0
  %1127 = vmatprep.subr.mxu0 0.0
  %1128 = vmatpush1.msra.mxu0 %v1095
  %1129 = vmatprep.subr.mxu0 0.0
  %1130 = vmatpush2.msra.mxu0 0.0
  %1131 = vmatprep.subr.mxu0 0.0
  %1132 = vmatpush2.msra.mxu0 0.0
  %1133 = vmatprep.subr.mxu0 0.0
  %1134 = vmatpush2.msra.mxu0 0.0
  %1135 = vmatprep.subr.mxu0 0.0
  %1136 = vmatpush2.msra.mxu0 0.0
  %1137 = vmatprep.subr.mxu0 0.0
  %1138 = vmatpush2.msra.mxu0 0.0
  %1139 = vmatprep.subr.mxu0 0.0
  %1140 = vmatpush2.msra.mxu0 0.0
  %1141 = vmatprep.subr.mxu0 0.0
  %1142 = vmatpush2.msra.mxu0 0.0
  %1143 = vmatprep.subr.mxu0 0.0
  %1144 = vmatpush2.msra.mxu0 0.0
  %1145 = vmatprep.subr.mxu0 0.0
  %1146 = vmatpush2.msra.mxu0 0.0
  %1147 = vmatprep.subr.mxu0 0.0
  %1148 = vmatpush2.msra.mxu0 0.0
  %1149 = vmatprep.subr.mxu0 0.0
  %1150 = vmatpush2.msra.mxu0 0.0
  %1151 = vmatprep.subr.mxu0 0.0
  %1152 = vmatpush2.msra.mxu0 0.0
  %1153 = vmatprep.subr.mxu0 0.0
  %1154 = vmatpush2.msra.mxu0 0.0
  %1155 = vmatprep.subr.mxu0 0.0
  %1156 = vmatpush2.msra.mxu0 0.0
  %1157 = vmatprep.subr.mxu0 0.0
  %1158 = vmatpush2.msra.mxu0 0.0
  %1159 = vmatprep.subr.mxu0 0.0
  %1160 = vmatpush2.msra.mxu0 0.0
  %1161 = vmatprep.mubr.f32.mxu0 0.0
  %1162 = vmatmul.mubr.f32.gmra.mxu0 %v1059
  %v1163 = vpop.f32.mrf.mxu0
  %v1164 = vadd.f32 %v45, %v1163
  %v1165 = vpop.f32.mrf.mxu0
  %1166 = vmatprep.mubr.f32.mxu0 0.0
  %1167 = vmatmul.mubr.f32.gmra.mxu0 %v1062
  %v1168 = vpop.f32.mrf.mxu0
  %v1169 = vadd.f32 %v50, %v1168
  %v1170 = vpop.f32.mrf.mxu0
  %1171 = vmatprep.mubr.f32.mxu0 0.0
  %1172 = vmatmul.mubr.f32.gmra.mxu0 %v1065
  %v1173 = vpop.f32.mrf.mxu0
  %v1174 = vadd.f32 %v55, %v1173
  %v1175 = vpop.f32.mrf.mxu0
  %1176 = vmatprep.mubr.f32.mxu0 0.0
  %1177 = vmatmul.mubr.f32.gmra.mxu0 %v1068
  %v1178 = vpop.f32.mrf.mxu0
  %v1179 = vadd.f32 %v60, %v1178
  %v1180 = vpop.f32.mrf.mxu0
  %1181 = vmatprep.mubr.f32.mxu0 0.0
  %1182 = vmatmul.mubr.f32.gmra.mxu0 %v1071
  %v1183 = vpop.f32.mrf.mxu0
  %v1184 = vadd.f32 %v65, %v1183
  %v1185 = vpop.f32.mrf.mxu0
  %1186 = vmatprep.mubr.f32.mxu0 0.0
  %1187 = vmatmul.mubr.f32.gmra.mxu0 %v1074
  %v1188 = vpop.f32.mrf.mxu0
  %v1189 = vadd.f32 %v70, %v1188
  %v1190 = vpop.f32.mrf.mxu0
  %1191 = vmatprep.mubr.f32.mxu0 0.0
  %1192 = vmatmul.mubr.f32.gmra.mxu0 %v1077
  %v1193 = vpop.f32.mrf.mxu0
  %v1194 = vadd.f32 %v75, %v1193
  %v1195 = vpop.f32.mrf.mxu0
  %1196 = vmatprep.mubr.f32.mxu0 0.0
  %1197 = vmatmul.mubr.f32.gmra.mxu0 %v1080
  %v1198 = vpop.f32.mrf.mxu0
  %v1199 = vadd.f32 %v80, %v1198
  %v1200 = vpop.f32.mrf.mxu0
  %1201 = vmatprep.mubr.f32.mxu0 0.0
  %1202 = vmatmul.mubr.f32.gmra.mxu0 %v1083
  %v1203 = vpop.f32.mrf.mxu0
  %v1204 = vadd.f32 %v85, %v1203
  %v1205 = vpop.f32.mrf.mxu0
  %1206 = vmatprep.mubr.f32.mxu0 0.0
  %1207 = vmatmul.mubr.f32.gmra.mxu0 %v1086
  %v1208 = vpop.f32.mrf.mxu0
  %v1209 = vadd.f32 %v90, %v1208
  %v1210 = vpop.f32.mrf.mxu0
  %1211 = vmatprep.mubr.f32.mxu0 0.0
  %1212 = vmatmul.mubr.f32.gmra.mxu0 %v1089
  %v1213 = vpop.f32.mrf.mxu0
  %v1214 = vadd.f32 %v95, %v1213
  %v1215 = vpop.f32.mrf.mxu0
  %1216 = vmatprep.mubr.f32.mxu0 0.0
  %1217 = vmatmul.mubr.f32.gmra.mxu0 %v1092
  %v1218 = vpop.f32.mrf.mxu0
  %v1219 = vadd.f32 %v100, %v1218
  %v1220 = vpop.f32.mrf.mxu0
  %1221 = vdwg.mxu0
  %s1222 = scalar_lea.vmem [#allocation2], 480
  %1223 = vst [vmem:[%s1222] sm:$0xff] %v1164
  %1224 = vst [vmem:[%s1222 + $0x8] sm:$0xff] %v1169
  %1225 = vst [vmem:[%s1222 + $0x10] sm:$0xff] %v1174
  %1226 = vst [vmem:[%s1222 + $0x18] sm:$0xff] %v1179
  %1227 = vst [vmem:[%s1222 + $0x20] sm:$0xff] %v1184
  %1228 = vst [vmem:[%s1222 + $0x28] sm:$0xff] %v1189
  %1229 = vst [vmem:[%s1222 + $0x30] sm:$0xff] %v1194
  %1230 = vst [vmem:[%s1222 + $0x38] sm:$0xff] %v1199
  %1231 = vst [vmem:[%s1222 + $0x40] sm:$0xff] %v1204
  %1232 = vst [vmem:[%s1222 + $0x48] sm:$0xff] %v1209
  %1233 = vst [vmem:[%s1222 + $0x50] sm:$0xff] %v1214
  %1234 = vst [vmem:[%s1222 + $0x58] sm:$0xff] %v1219
  %v1235 = vld [vmem:[%s1] sm:$0xff]
  %v1236 = vld [vmem:[%s1 + $0x8] sm:$0xff]
  %v1237 = vld [vmem:[%s1 + $0x10] sm:$0xff]
  %v1238 = vld [vmem:[%s1 + $0x18] sm:$0xff]
  %v1239 = vld [vmem:[%s1 + $0x20] sm:$0xff]
  %v1240 = vld [vmem:[%s1 + $0x28] sm:$0xff]
  %v1241 = vld [vmem:[%s1 + $0x30] sm:$0xff]
  %v1242 = vld [vmem:[%s1 + $0x38] sm:$0xff]
  %v1243 = vld [vmem:[%s1 + $0x40] sm:$0xff]
  %v1244 = vld [vmem:[%s1 + $0x48] sm:$0xff]
  %v1245 = vld [vmem:[%s1 + $0x50] sm:$0xff]
  %v1246 = vld [vmem:[%s1 + $0x58] sm:$0xff]
  %s1247 = scalar_lea.vmem %s0, 24
  %v1248 = vld [vmem:[%s1247] sm:$0xf]
  %v1250 = vsel %vm102, %v1235, 0
  %v1253 = vsel %vm102, %v1236, 0
  %v1256 = vsel %vm102, %v1237, 0
  %v1259 = vsel %vm102, %v1238, 0
  %v1262 = vsel %vm102, %v1239, 0
  %v1265 = vsel %vm102, %v1240, 0
  %v1268 = vsel %vm102, %v1241, 0
  %v1271 = vsel %vm102, %v1242, 0
  %v1274 = vsel %vm102, %v1243, 0
  %v1277 = vsel %vm102, %v1244, 0
  %v1280 = vsel %vm102, %v1245, 0
  %v1283 = vsel %vm102, %v1246, 0
  %v1286 = vsel %vm139, %v1248, 0
  %1288 = vmatprep.subr.mxu0 0.0
  %1289 = vmatpush1.msra.mxu0 0.0
  %1290 = vmatprep.subr.mxu0 0.0
  %1291 = vmatpush1.msra.mxu0 0.0
  %1292 = vmatprep.subr.mxu0 0.0
  %1293 = vmatpush1.msra.mxu0 0.0
  %1294 = vmatprep.subr.mxu0 0.0
  %1295 = vmatpush1.msra.mxu0 0.0
  %1296 = vmatprep.subr.mxu0 0.0
  %1297 = vmatpush1.msra.mxu0 0.0
  %1298 = vmatprep.subr.mxu0 0.0
  %1299 = vmatpush1.msra.mxu0 0.0
  %1300 = vmatprep.subr.mxu0 0.0
  %1301 = vmatpush1.msra.mxu0 0.0
  %1302 = vmatprep.subr.mxu0 0.0
  %1303 = vmatpush1.msra.mxu0 0.0
  %1304 = vmatprep.subr.mxu0 0.0
  %1305 = vmatpush1.msra.mxu0 0.0
  %1306 = vmatprep.subr.mxu0 0.0
  %1307 = vmatpush1.msra.mxu0 0.0
  %1308 = vmatprep.subr.mxu0 0.0
  %1309 = vmatpush1.msra.mxu0 0.0
  %1310 = vmatprep.subr.mxu0 0.0
  %1311 = vmatpush1.msra.mxu0 0.0
  %1312 = vmatprep.subr.mxu0 0.0
  %1313 = vmatpush1.msra.mxu0 0.0
  %1314 = vmatprep.subr.mxu0 0.0
  %1315 = vmatpush1.msra.mxu0 0.0
  %1316 = vmatprep.subr.mxu0 0.0
  %1317 = vmatpush1.msra.mxu0 0.0
  %1318 = vmatprep.subr.mxu0 0.0
  %1319 = vmatpush1.msra.mxu0 %v1286
  %1320 = vmatprep.subr.mxu0 0.0
  %1321 = vmatpush2.msra.mxu0 0.0
  %1322 = vmatprep.subr.mxu0 0.0
  %1323 = vmatpush2.msra.mxu0 0.0
  %1324 = vmatprep.subr.mxu0 0.0
  %1325 = vmatpush2.msra.mxu0 0.0
  %1326 = vmatprep.subr.mxu0 0.0
  %1327 = vmatpush2.msra.mxu0 0.0
  %1328 = vmatprep.subr.mxu0 0.0
  %1329 = vmatpush2.msra.mxu0 0.0
  %1330 = vmatprep.subr.mxu0 0.0
  %1331 = vmatpush2.msra.mxu0 0.0
  %1332 = vmatprep.subr.mxu0 0.0
  %1333 = vmatpush2.msra.mxu0 0.0
  %1334 = vmatprep.subr.mxu0 0.0
  %1335 = vmatpush2.msra.mxu0 0.0
  %1336 = vmatprep.subr.mxu0 0.0
  %1337 = vmatpush2.msra.mxu0 0.0
  %1338 = vmatprep.subr.mxu0 0.0
  %1339 = vmatpush2.msra.mxu0 0.0
  %1340 = vmatprep.subr.mxu0 0.0
  %1341 = vmatpush2.msra.mxu0 0.0
  %1342 = vmatprep.subr.mxu0 0.0
  %1343 = vmatpush2.msra.mxu0 0.0
  %1344 = vmatprep.subr.mxu0 0.0
  %1345 = vmatpush2.msra.mxu0 0.0
  %1346 = vmatprep.subr.mxu0 0.0
  %1347 = vmatpush2.msra.mxu0 0.0
  %1348 = vmatprep.subr.mxu0 0.0
  %1349 = vmatpush2.msra.mxu0 0.0
  %1350 = vmatprep.subr.mxu0 0.0
  %1351 = vmatpush2.msra.mxu0 0.0
  %1352 = vmatprep.mubr.f32.mxu0 0.0
  %1353 = vmatmul.mubr.f32.gmra.mxu0 %v1250
  %v1354 = vpop.f32.mrf.mxu0
  %v1355 = vadd.f32 %v45, %v1354
  %v1356 = vpop.f32.mrf.mxu0
  %1357 = vmatprep.mubr.f32.mxu0 0.0
  %1358 = vmatmul.mubr.f32.gmra.mxu0 %v1253
  %v1359 = vpop.f32.mrf.mxu0
  %v1360 = vadd.f32 %v50, %v1359
  %v1361 = vpop.f32.mrf.mxu0
  %1362 = vmatprep.mubr.f32.mxu0 0.0
  %1363 = vmatmul.mubr.f32.gmra.mxu0 %v1256
  %v1364 = vpop.f32.mrf.mxu0
  %v1365 = vadd.f32 %v55, %v1364
  %v1366 = vpop.f32.mrf.mxu0
  %1367 = vmatprep.mubr.f32.mxu0 0.0
  %1368 = vmatmul.mubr.f32.gmra.mxu0 %v1259
  %v1369 = vpop.f32.mrf.mxu0
  %v1370 = vadd.f32 %v60, %v1369
  %v1371 = vpop.f32.mrf.mxu0
  %1372 = vmatprep.mubr.f32.mxu0 0.0
  %1373 = vmatmul.mubr.f32.gmra.mxu0 %v1262
  %v1374 = vpop.f32.mrf.mxu0
  %v1375 = vadd.f32 %v65, %v1374
  %v1376 = vpop.f32.mrf.mxu0
  %1377 = vmatprep.mubr.f32.mxu0 0.0
  %1378 = vmatmul.mubr.f32.gmra.mxu0 %v1265
  %v1379 = vpop.f32.mrf.mxu0
  %v1380 = vadd.f32 %v70, %v1379
  %v1381 = vpop.f32.mrf.mxu0
  %1382 = vmatprep.mubr.f32.mxu0 0.0
  %1383 = vmatmul.mubr.f32.gmra.mxu0 %v1268
  %v1384 = vpop.f32.mrf.mxu0
  %v1385 = vadd.f32 %v75, %v1384
  %v1386 = vpop.f32.mrf.mxu0
  %1387 = vmatprep.mubr.f32.mxu0 0.0
  %1388 = vmatmul.mubr.f32.gmra.mxu0 %v1271
  %v1389 = vpop.f32.mrf.mxu0
  %v1390 = vadd.f32 %v80, %v1389
  %v1391 = vpop.f32.mrf.mxu0
  %1392 = vmatprep.mubr.f32.mxu0 0.0
  %1393 = vmatmul.mubr.f32.gmra.mxu0 %v1274
  %v1394 = vpop.f32.mrf.mxu0
  %v1395 = vadd.f32 %v85, %v1394
  %v1396 = vpop.f32.mrf.mxu0
  %1397 = vmatprep.mubr.f32.mxu0 0.0
  %1398 = vmatmul.mubr.f32.gmra.mxu0 %v1277
  %v1399 = vpop.f32.mrf.mxu0
  %v1400 = vadd.f32 %v90, %v1399
  %v1401 = vpop.f32.mrf.mxu0
  %1402 = vmatprep.mubr.f32.mxu0 0.0
  %1403 = vmatmul.mubr.f32.gmra.mxu0 %v1280
  %v1404 = vpop.f32.mrf.mxu0
  %v1405 = vadd.f32 %v95, %v1404
  %v1406 = vpop.f32.mrf.mxu0
  %1407 = vmatprep.mubr.f32.mxu0 0.0
  %1408 = vmatmul.mubr.f32.gmra.mxu0 %v1283
  %v1409 = vpop.f32.mrf.mxu0
  %v1410 = vadd.f32 %v100, %v1409
  %v1411 = vpop.f32.mrf.mxu0
  %1412 = vdwg.mxu0
  %s1413 = scalar_lea.vmem [#allocation2], 576
  %1414 = vst [vmem:[%s1413] sm:$0xff] %v1355
  %1415 = vst [vmem:[%s1413 + $0x8] sm:$0xff] %v1360
  %1416 = vst [vmem:[%s1413 + $0x10] sm:$0xff] %v1365
  %1417 = vst [vmem:[%s1413 + $0x18] sm:$0xff] %v1370
  %1418 = vst [vmem:[%s1413 + $0x20] sm:$0xff] %v1375
  %1419 = vst [vmem:[%s1413 + $0x28] sm:$0xff] %v1380
  %1420 = vst [vmem:[%s1413 + $0x30] sm:$0xff] %v1385
  %1421 = vst [vmem:[%s1413 + $0x38] sm:$0xff] %v1390
  %1422 = vst [vmem:[%s1413 + $0x40] sm:$0xff] %v1395
  %1423 = vst [vmem:[%s1413 + $0x48] sm:$0xff] %v1400
  %1424 = vst [vmem:[%s1413 + $0x50] sm:$0xff] %v1405
  %1425 = vst [vmem:[%s1413 + $0x58] sm:$0xff] %v1410
  %v1426 = vld [vmem:[%s1] sm:$0xff]
  %v1427 = vld [vmem:[%s1 + $0x8] sm:$0xff]
  %v1428 = vld [vmem:[%s1 + $0x10] sm:$0xff]
  %v1429 = vld [vmem:[%s1 + $0x18] sm:$0xff]
  %v1430 = vld [vmem:[%s1 + $0x20] sm:$0xff]
  %v1431 = vld [vmem:[%s1 + $0x28] sm:$0xff]
  %v1432 = vld [vmem:[%s1 + $0x30] sm:$0xff]
  %v1433 = vld [vmem:[%s1 + $0x38] sm:$0xff]
  %v1434 = vld [vmem:[%s1 + $0x40] sm:$0xff]
  %v1435 = vld [vmem:[%s1 + $0x48] sm:$0xff]
  %v1436 = vld [vmem:[%s1 + $0x50] sm:$0xff]
  %v1437 = vld [vmem:[%s1 + $0x58] sm:$0xff]
  %s1438 = scalar_lea.vmem %s0, 28
  %v1439 = vld [vmem:[%s1438] sm:$0xf]
  %v1441 = vsel %vm102, %v1426, 0
  %v1444 = vsel %vm102, %v1427, 0
  %v1447 = vsel %vm102, %v1428, 0
  %v1450 = vsel %vm102, %v1429, 0
  %v1453 = vsel %vm102, %v1430, 0
  %v1456 = vsel %vm102, %v1431, 0
  %v1459 = vsel %vm102, %v1432, 0
  %v1462 = vsel %vm102, %v1433, 0
  %v1465 = vsel %vm102, %v1434, 0
  %v1468 = vsel %vm102, %v1435, 0
  %v1471 = vsel %vm102, %v1436, 0
  %v1474 = vsel %vm102, %v1437, 0
  %v1477 = vsel %vm139, %v1439, 0
  %1479 = vmatprep.subr.mxu0 0.0
  %1480 = vmatpush1.msra.mxu0 0.0
  %1481 = vmatprep.subr.mxu0 0.0
  %1482 = vmatpush1.msra.mxu0 0.0
  %1483 = vmatprep.subr.mxu0 0.0
  %1484 = vmatpush1.msra.mxu0 0.0
  %1485 = vmatprep.subr.mxu0 0.0
  %1486 = vmatpush1.msra.mxu0 0.0
  %1487 = vmatprep.subr.mxu0 0.0
  %1488 = vmatpush1.msra.mxu0 0.0
  %1489 = vmatprep.subr.mxu0 0.0
  %1490 = vmatpush1.msra.mxu0 0.0
  %1491 = vmatprep.subr.mxu0 0.0
  %1492 = vmatpush1.msra.mxu0 0.0
  %1493 = vmatprep.subr.mxu0 0.0
  %1494 = vmatpush1.msra.mxu0 0.0
  %1495 = vmatprep.subr.mxu0 0.0
  %1496 = vmatpush1.msra.mxu0 0.0
  %1497 = vmatprep.subr.mxu0 0.0
  %1498 = vmatpush1.msra.mxu0 0.0
  %1499 = vmatprep.subr.mxu0 0.0
  %1500 = vmatpush1.msra.mxu0 0.0
  %1501 = vmatprep.subr.mxu0 0.0
  %1502 = vmatpush1.msra.mxu0 0.0
  %1503 = vmatprep.subr.mxu0 0.0
  %1504 = vmatpush1.msra.mxu0 0.0
  %1505 = vmatprep.subr.mxu0 0.0
  %1506 = vmatpush1.msra.mxu0 0.0
  %1507 = vmatprep.subr.mxu0 0.0
  %1508 = vmatpush1.msra.mxu0 0.0
  %1509 = vmatprep.subr.mxu0 0.0
  %1510 = vmatpush1.msra.mxu0 %v1477
  %1511 = vmatprep.subr.mxu0 0.0
  %1512 = vmatpush2.msra.mxu0 0.0
  %1513 = vmatprep.subr.mxu0 0.0
  %1514 = vmatpush2.msra.mxu0 0.0
  %1515 = vmatprep.subr.mxu0 0.0
  %1516 = vmatpush2.msra.mxu0 0.0
  %1517 = vmatprep.subr.mxu0 0.0
  %1518 = vmatpush2.msra.mxu0 0.0
  %1519 = vmatprep.subr.mxu0 0.0
  %1520 = vmatpush2.msra.mxu0 0.0
  %1521 = vmatprep.subr.mxu0 0.0
  %1522 = vmatpush2.msra.mxu0 0.0
  %1523 = vmatprep.subr.mxu0 0.0
  %1524 = vmatpush2.msra.mxu0 0.0
  %1525 = vmatprep.subr.mxu0 0.0
  %1526 = vmatpush2.msra.mxu0 0.0
  %1527 = vmatprep.subr.mxu0 0.0
  %1528 = vmatpush2.msra.mxu0 0.0
  %1529 = vmatprep.subr.mxu0 0.0
  %1530 = vmatpush2.msra.mxu0 0.0
  %1531 = vmatprep.subr.mxu0 0.0
  %1532 = vmatpush2.msra.mxu0 0.0
  %1533 = vmatprep.subr.mxu0 0.0
  %1534 = vmatpush2.msra.mxu0 0.0
  %1535 = vmatprep.subr.mxu0 0.0
  %1536 = vmatpush2.msra.mxu0 0.0
  %1537 = vmatprep.subr.mxu0 0.0
  %1538 = vmatpush2.msra.mxu0 0.0
  %1539 = vmatprep.subr.mxu0 0.0
  %1540 = vmatpush2.msra.mxu0 0.0
  %1541 = vmatprep.subr.mxu0 0.0
  %1542 = vmatpush2.msra.mxu0 0.0
  %1543 = vmatprep.mubr.f32.mxu0 0.0
  %1544 = vmatmul.mubr.f32.gmra.mxu0 %v1441
  %v1545 = vpop.f32.mrf.mxu0
  %v1546 = vadd.f32 %v45, %v1545
  %v1547 = vpop.f32.mrf.mxu0
  %1548 = vmatprep.mubr.f32.mxu0 0.0
  %1549 = vmatmul.mubr.f32.gmra.mxu0 %v1444
  %v1550 = vpop.f32.mrf.mxu0
  %v1551 = vadd.f32 %v50, %v1550
  %v1552 = vpop.f32.mrf.mxu0
  %1553 = vmatprep.mubr.f32.mxu0 0.0
  %1554 = vmatmul.mubr.f32.gmra.mxu0 %v1447
  %v1555 = vpop.f32.mrf.mxu0
  %v1556 = vadd.f32 %v55, %v1555
  %v1557 = vpop.f32.mrf.mxu0
  %1558 = vmatprep.mubr.f32.mxu0 0.0
  %1559 = vmatmul.mubr.f32.gmra.mxu0 %v1450
  %v1560 = vpop.f32.mrf.mxu0
  %v1561 = vadd.f32 %v60, %v1560
  %v1562 = vpop.f32.mrf.mxu0
  %1563 = vmatprep.mubr.f32.mxu0 0.0
  %1564 = vmatmul.mubr.f32.gmra.mxu0 %v1453
  %v1565 = vpop.f32.mrf.mxu0
  %v1566 = vadd.f32 %v65, %v1565
  %v1567 = vpop.f32.mrf.mxu0
  %1568 = vmatprep.mubr.f32.mxu0 0.0
  %1569 = vmatmul.mubr.f32.gmra.mxu0 %v1456
  %v1570 = vpop.f32.mrf.mxu0
  %v1571 = vadd.f32 %v70, %v1570
  %v1572 = vpop.f32.mrf.mxu0
  %1573 = vmatprep.mubr.f32.mxu0 0.0
  %1574 = vmatmul.mubr.f32.gmra.mxu0 %v1459
  %v1575 = vpop.f32.mrf.mxu0
  %v1576 = vadd.f32 %v75, %v1575
  %v1577 = vpop.f32.mrf.mxu0
  %1578 = vmatprep.mubr.f32.mxu0 0.0
  %1579 = vmatmul.mubr.f32.gmra.mxu0 %v1462
  %v1580 = vpop.f32.mrf.mxu0
  %v1581 = vadd.f32 %v80, %v1580
  %v1582 = vpop.f32.mrf.mxu0
  %1583 = vmatprep.mubr.f32.mxu0 0.0
  %1584 = vmatmul.mubr.f32.gmra.mxu0 %v1465
  %v1585 = vpop.f32.mrf.mxu0
  %v1586 = vadd.f32 %v85, %v1585
  %v1587 = vpop.f32.mrf.mxu0
  %1588 = vmatprep.mubr.f32.mxu0 0.0
  %1589 = vmatmul.mubr.f32.gmra.mxu0 %v1468
  %v1590 = vpop.f32.mrf.mxu0
  %v1591 = vadd.f32 %v90, %v1590
  %v1592 = vpop.f32.mrf.mxu0
  %1593 = vmatprep.mubr.f32.mxu0 0.0
  %1594 = vmatmul.mubr.f32.gmra.mxu0 %v1471
  %v1595 = vpop.f32.mrf.mxu0
  %v1596 = vadd.f32 %v95, %v1595
  %v1597 = vpop.f32.mrf.mxu0
  %1598 = vmatprep.mubr.f32.mxu0 0.0
  %1599 = vmatmul.mubr.f32.gmra.mxu0 %v1474
  %v1600 = vpop.f32.mrf.mxu0
  %v1601 = vadd.f32 %v100, %v1600
  %v1602 = vpop.f32.mrf.mxu0
  %1603 = vdwg.mxu0
  %s1604 = scalar_lea.vmem [#allocation2], 672
  %1605 = vst [vmem:[%s1604] sm:$0xff] %v1546
  %1606 = vst [vmem:[%s1604 + $0x8] sm:$0xff] %v1551
  %1607 = vst [vmem:[%s1604 + $0x10] sm:$0xff] %v1556
  %1608 = vst [vmem:[%s1604 + $0x18] sm:$0xff] %v1561
  %1609 = vst [vmem:[%s1604 + $0x20] sm:$0xff] %v1566
  %1610 = vst [vmem:[%s1604 + $0x28] sm:$0xff] %v1571
  %1611 = vst [vmem:[%s1604 + $0x30] sm:$0xff] %v1576
  %1612 = vst [vmem:[%s1604 + $0x38] sm:$0xff] %v1581
  %1613 = vst [vmem:[%s1604 + $0x40] sm:$0xff] %v1586
  %1614 = vst [vmem:[%s1604 + $0x48] sm:$0xff] %v1591
  %1615 = vst [vmem:[%s1604 + $0x50] sm:$0xff] %v1596
  %1616 = vst [vmem:[%s1604 + $0x58] sm:$0xff] %v1601
  %v1617 = vld [vmem:[%s1] sm:$0xff]
  %v1618 = vld [vmem:[%s1 + $0x8] sm:$0xff]
  %v1619 = vld [vmem:[%s1 + $0x10] sm:$0xff]
  %v1620 = vld [vmem:[%s1 + $0x18] sm:$0xff]
  %v1621 = vld [vmem:[%s1 + $0x20] sm:$0xff]
  %v1622 = vld [vmem:[%s1 + $0x28] sm:$0xff]
  %v1623 = vld [vmem:[%s1 + $0x30] sm:$0xff]
  %v1624 = vld [vmem:[%s1 + $0x38] sm:$0xff]
  %v1625 = vld [vmem:[%s1 + $0x40] sm:$0xff]
  %v1626 = vld [vmem:[%s1 + $0x48] sm:$0xff]
  %v1627 = vld [vmem:[%s1 + $0x50] sm:$0xff]
  %v1628 = vld [vmem:[%s1 + $0x58] sm:$0xff]
  %s1629 = scalar_lea.vmem %s0, 32
  %v1630 = vld [vmem:[%s1629] sm:$0xf]
  %v1632 = vsel %vm102, %v1617, 0
  %v1635 = vsel %vm102, %v1618, 0
  %v1638 = vsel %vm102, %v1619, 0
  %v1641 = vsel %vm102, %v1620, 0
  %v1644 = vsel %vm102, %v1621, 0
  %v1647 = vsel %vm102, %v1622, 0
  %v1650 = vsel %vm102, %v1623, 0
  %v1653 = vsel %vm102, %v1624, 0
  %v1656 = vsel %vm102, %v1625, 0
  %v1659 = vsel %vm102, %v1626, 0
  %v1662 = vsel %vm102, %v1627, 0
  %v1665 = vsel %vm102, %v1628, 0
  %v1668 = vsel %vm139, %v1630, 0
  %1670 = vmatprep.subr.mxu0 0.0
  %1671 = vmatpush1.msra.mxu0 0.0
  %1672 = vmatprep.subr.mxu0 0.0
  %1673 = vmatpush1.msra.mxu0 0.0
  %1674 = vmatprep.subr.mxu0 0.0
  %1675 = vmatpush1.msra.mxu0 0.0
  %1676 = vmatprep.subr.mxu0 0.0
  %1677 = vmatpush1.msra.mxu0 0.0
  %1678 = vmatprep.subr.mxu0 0.0
  %1679 = vmatpush1.msra.mxu0 0.0
  %1680 = vmatprep.subr.mxu0 0.0
  %1681 = vmatpush1.msra.mxu0 0.0
  %1682 = vmatprep.subr.mxu0 0.0
  %1683 = vmatpush1.msra.mxu0 0.0
  %1684 = vmatprep.subr.mxu0 0.0
  %1685 = vmatpush1.msra.mxu0 0.0
  %1686 = vmatprep.subr.mxu0 0.0
  %1687 = vmatpush1.msra.mxu0 0.0
  %1688 = vmatprep.subr.mxu0 0.0
  %1689 = vmatpush1.msra.mxu0 0.0
  %1690 = vmatprep.subr.mxu0 0.0
  %1691 = vmatpush1.msra.mxu0 0.0
  %1692 = vmatprep.subr.mxu0 0.0
  %1693 = vmatpush1.msra.mxu0 0.0
  %1694 = vmatprep.subr.mxu0 0.0
  %1695 = vmatpush1.msra.mxu0 0.0
  %1696 = vmatprep.subr.mxu0 0.0
  %1697 = vmatpush1.msra.mxu0 0.0
  %1698 = vmatprep.subr.mxu0 0.0
  %1699 = vmatpush1.msra.mxu0 0.0
  %1700 = vmatprep.subr.mxu0 0.0
  %1701 = vmatpush1.msra.mxu0 %v1668
  %1702 = vmatprep.subr.mxu0 0.0
  %1703 = vmatpush2.msra.mxu0 0.0
  %1704 = vmatprep.subr.mxu0 0.0
  %1705 = vmatpush2.msra.mxu0 0.0
  %1706 = vmatprep.subr.mxu0 0.0
  %1707 = vmatpush2.msra.mxu0 0.0
  %1708 = vmatprep.subr.mxu0 0.0
  %1709 = vmatpush2.msra.mxu0 0.0
  %1710 = vmatprep.subr.mxu0 0.0
  %1711 = vmatpush2.msra.mxu0 0.0
  %1712 = vmatprep.subr.mxu0 0.0
  %1713 = vmatpush2.msra.mxu0 0.0
  %1714 = vmatprep.subr.mxu0 0.0
  %1715 = vmatpush2.msra.mxu0 0.0
  %1716 = vmatprep.subr.mxu0 0.0
  %1717 = vmatpush2.msra.mxu0 0.0
  %1718 = vmatprep.subr.mxu0 0.0
  %1719 = vmatpush2.msra.mxu0 0.0
  %1720 = vmatprep.subr.mxu0 0.0
  %1721 = vmatpush2.msra.mxu0 0.0
  %1722 = vmatprep.subr.mxu0 0.0
  %1723 = vmatpush2.msra.mxu0 0.0
  %1724 = vmatprep.subr.mxu0 0.0
  %1725 = vmatpush2.msra.mxu0 0.0
  %1726 = vmatprep.subr.mxu0 0.0
  %1727 = vmatpush2.msra.mxu0 0.0
  %1728 = vmatprep.subr.mxu0 0.0
  %1729 = vmatpush2.msra.mxu0 0.0
  %1730 = vmatprep.subr.mxu0 0.0
  %1731 = vmatpush2.msra.mxu0 0.0
  %1732 = vmatprep.subr.mxu0 0.0
  %1733 = vmatpush2.msra.mxu0 0.0
  %1734 = vmatprep.mubr.f32.mxu0 0.0
  %1735 = vmatmul.mubr.f32.gmra.mxu0 %v1632
  %v1736 = vpop.f32.mrf.mxu0
  %v1737 = vadd.f32 %v45, %v1736
  %v1738 = vpop.f32.mrf.mxu0
  %1739 = vmatprep.mubr.f32.mxu0 0.0
  %1740 = vmatmul.mubr.f32.gmra.mxu0 %v1635
  %v1741 = vpop.f32.mrf.mxu0
  %v1742 = vadd.f32 %v50, %v1741
  %v1743 = vpop.f32.mrf.mxu0
  %1744 = vmatprep.mubr.f32.mxu0 0.0
  %1745 = vmatmul.mubr.f32.gmra.mxu0 %v1638
  %v1746 = vpop.f32.mrf.mxu0
  %v1747 = vadd.f32 %v55, %v1746
  %v1748 = vpop.f32.mrf.mxu0
  %1749 = vmatprep.mubr.f32.mxu0 0.0
  %1750 = vmatmul.mubr.f32.gmra.mxu0 %v1641
  %v1751 = vpop.f32.mrf.mxu0
  %v1752 = vadd.f32 %v60, %v1751
  %v1753 = vpop.f32.mrf.mxu0
  %1754 = vmatprep.mubr.f32.mxu0 0.0
  %1755 = vmatmul.mubr.f32.gmra.mxu0 %v1644
  %v1756 = vpop.f32.mrf.mxu0
  %v1757 = vadd.f32 %v65, %v1756
  %v1758 = vpop.f32.mrf.mxu0
  %1759 = vmatprep.mubr.f32.mxu0 0.0
  %1760 = vmatmul.mubr.f32.gmra.mxu0 %v1647
  %v1761 = vpop.f32.mrf.mxu0
  %v1762 = vadd.f32 %v70, %v1761
  %v1763 = vpop.f32.mrf.mxu0
  %1764 = vmatprep.mubr.f32.mxu0 0.0
  %1765 = vmatmul.mubr.f32.gmra.mxu0 %v1650
  %v1766 = vpop.f32.mrf.mxu0
  %v1767 = vadd.f32 %v75, %v1766
  %v1768 = vpop.f32.mrf.mxu0
  %1769 = vmatprep.mubr.f32.mxu0 0.0
  %1770 = vmatmul.mubr.f32.gmra.mxu0 %v1653
  %v1771 = vpop.f32.mrf.mxu0
  %v1772 = vadd.f32 %v80, %v1771
  %v1773 = vpop.f32.mrf.mxu0
  %1774 = vmatprep.mubr.f32.mxu0 0.0
  %1775 = vmatmul.mubr.f32.gmra.mxu0 %v1656
  %v1776 = vpop.f32.mrf.mxu0
  %v1777 = vadd.f32 %v85, %v1776
  %v1778 = vpop.f32.mrf.mxu0
  %1779 = vmatprep.mubr.f32.mxu0 0.0
  %1780 = vmatmul.mubr.f32.gmra.mxu0 %v1659
  %v1781 = vpop.f32.mrf.mxu0
  %v1782 = vadd.f32 %v90, %v1781
  %v1783 = vpop.f32.mrf.mxu0
  %1784 = vmatprep.mubr.f32.mxu0 0.0
  %1785 = vmatmul.mubr.f32.gmra.mxu0 %v1662
  %v1786 = vpop.f32.mrf.mxu0
  %v1787 = vadd.f32 %v95, %v1786
  %v1788 = vpop.f32.mrf.mxu0
  %1789 = vmatprep.mubr.f32.mxu0 0.0
  %1790 = vmatmul.mubr.f32.gmra.mxu0 %v1665
  %v1791 = vpop.f32.mrf.mxu0
  %v1792 = vadd.f32 %v100, %v1791
  %v1793 = vpop.f32.mrf.mxu0
  %1794 = vdwg.mxu0
  %s1795 = scalar_lea.vmem [#allocation2], 768
  %1796 = vst [vmem:[%s1795] sm:$0xff] %v1737
  %1797 = vst [vmem:[%s1795 + $0x8] sm:$0xff] %v1742
  %1798 = vst [vmem:[%s1795 + $0x10] sm:$0xff] %v1747
  %1799 = vst [vmem:[%s1795 + $0x18] sm:$0xff] %v1752
  %1800 = vst [vmem:[%s1795 + $0x20] sm:$0xff] %v1757
  %1801 = vst [vmem:[%s1795 + $0x28] sm:$0xff] %v1762
  %1802 = vst [vmem:[%s1795 + $0x30] sm:$0xff] %v1767
  %1803 = vst [vmem:[%s1795 + $0x38] sm:$0xff] %v1772
  %1804 = vst [vmem:[%s1795 + $0x40] sm:$0xff] %v1777
  %1805 = vst [vmem:[%s1795 + $0x48] sm:$0xff] %v1782
  %1806 = vst [vmem:[%s1795 + $0x50] sm:$0xff] %v1787
  %1807 = vst [vmem:[%s1795 + $0x58] sm:$0xff] %v1792
  %v1808 = vld [vmem:[%s1] sm:$0xff]
  %v1809 = vld [vmem:[%s1 + $0x8] sm:$0xff]
  %v1810 = vld [vmem:[%s1 + $0x10] sm:$0xff]
  %v1811 = vld [vmem:[%s1 + $0x18] sm:$0xff]
  %v1812 = vld [vmem:[%s1 + $0x20] sm:$0xff]
  %v1813 = vld [vmem:[%s1 + $0x28] sm:$0xff]
  %v1814 = vld [vmem:[%s1 + $0x30] sm:$0xff]
  %v1815 = vld [vmem:[%s1 + $0x38] sm:$0xff]
  %v1816 = vld [vmem:[%s1 + $0x40] sm:$0xff]
  %v1817 = vld [vmem:[%s1 + $0x48] sm:$0xff]
  %v1818 = vld [vmem:[%s1 + $0x50] sm:$0xff]
  %v1819 = vld [vmem:[%s1 + $0x58] sm:$0xff]
  %s1820 = scalar_lea.vmem %s0, 36
  %v1821 = vld [vmem:[%s1820] sm:$0xf]
  %v1823 = vsel %vm102, %v1808, 0
  %v1826 = vsel %vm102, %v1809, 0
  %v1829 = vsel %vm102, %v1810, 0
  %v1832 = vsel %vm102, %v1811, 0
  %v1835 = vsel %vm102, %v1812, 0
  %v1838 = vsel %vm102, %v1813, 0
  %v1841 = vsel %vm102, %v1814, 0
  %v1844 = vsel %vm102, %v1815, 0
  %v1847 = vsel %vm102, %v1816, 0
  %v1850 = vsel %vm102, %v1817, 0
  %v1853 = vsel %vm102, %v1818, 0
  %v1856 = vsel %vm102, %v1819, 0
  %v1859 = vsel %vm139, %v1821, 0
  %1861 = vmatprep.subr.mxu0 0.0
  %1862 = vmatpush1.msra.mxu0 0.0
  %1863 = vmatprep.subr.mxu0 0.0
  %1864 = vmatpush1.msra.mxu0 0.0
  %1865 = vmatprep.subr.mxu0 0.0
  %1866 = vmatpush1.msra.mxu0 0.0
  %1867 = vmatprep.subr.mxu0 0.0
  %1868 = vmatpush1.msra.mxu0 0.0
  %1869 = vmatprep.subr.mxu0 0.0
  %1870 = vmatpush1.msra.mxu0 0.0
  %1871 = vmatprep.subr.mxu0 0.0
  %1872 = vmatpush1.msra.mxu0 0.0
  %1873 = vmatprep.subr.mxu0 0.0
  %1874 = vmatpush1.msra.mxu0 0.0
  %1875 = vmatprep.subr.mxu0 0.0
  %1876 = vmatpush1.msra.mxu0 0.0
  %1877 = vmatprep.subr.mxu0 0.0
  %1878 = vmatpush1.msra.mxu0 0.0
  %1879 = vmatprep.subr.mxu0 0.0
  %1880 = vmatpush1.msra.mxu0 0.0
  %1881 = vmatprep.subr.mxu0 0.0
  %1882 = vmatpush1.msra.mxu0 0.0
  %1883 = vmatprep.subr.mxu0 0.0
  %1884 = vmatpush1.msra.mxu0 0.0
  %1885 = vmatprep.subr.mxu0 0.0
  %1886 = vmatpush1.msra.mxu0 0.0
  %1887 = vmatprep.subr.mxu0 0.0
  %1888 = vmatpush1.msra.mxu0 0.0
  %1889 = vmatprep.subr.mxu0 0.0
  %1890 = vmatpush1.msra.mxu0 0.0
  %1891 = vmatprep.subr.mxu0 0.0
  %1892 = vmatpush1.msra.mxu0 %v1859
  %1893 = vmatprep.subr.mxu0 0.0
  %1894 = vmatpush2.msra.mxu0 0.0
  %1895 = vmatprep.subr.mxu0 0.0
  %1896 = vmatpush2.msra.mxu0 0.0
  %1897 = vmatprep.subr.mxu0 0.0
  %1898 = vmatpush2.msra.mxu0 0.0
  %1899 = vmatprep.subr.mxu0 0.0
  %1900 = vmatpush2.msra.mxu0 0.0
  %1901 = vmatprep.subr.mxu0 0.0
  %1902 = vmatpush2.msra.mxu0 0.0
  %1903 = vmatprep.subr.mxu0 0.0
  %1904 = vmatpush2.msra.mxu0 0.0
  %1905 = vmatprep.subr.mxu0 0.0
  %1906 = vmatpush2.msra.mxu0 0.0
  %1907 = vmatprep.subr.mxu0 0.0
  %1908 = vmatpush2.msra.mxu0 0.0
  %1909 = vmatprep.subr.mxu0 0.0
  %1910 = vmatpush2.msra.mxu0 0.0
  %1911 = vmatprep.subr.mxu0 0.0
  %1912 = vmatpush2.msra.mxu0 0.0
  %1913 = vmatprep.subr.mxu0 0.0
  %1914 = vmatpush2.msra.mxu0 0.0
  %1915 = vmatprep.subr.mxu0 0.0
  %1916 = vmatpush2.msra.mxu0 0.0
  %1917 = vmatprep.subr.mxu0 0.0
  %1918 = vmatpush2.msra.mxu0 0.0
  %1919 = vmatprep.subr.mxu0 0.0
  %1920 = vmatpush2.msra.mxu0 0.0
  %1921 = vmatprep.subr.mxu0 0.0
  %1922 = vmatpush2.msra.mxu0 0.0
  %1923 = vmatprep.subr.mxu0 0.0
  %1924 = vmatpush2.msra.mxu0 0.0
  %1925 = vmatprep.mubr.f32.mxu0 0.0
  %1926 = vmatmul.mubr.f32.gmra.mxu0 %v1823
  %v1927 = vpop.f32.mrf.mxu0
  %v1928 = vadd.f32 %v45, %v1927
  %v1929 = vpop.f32.mrf.mxu0
  %1930 = vmatprep.mubr.f32.mxu0 0.0
  %1931 = vmatmul.mubr.f32.gmra.mxu0 %v1826
  %v1932 = vpop.f32.mrf.mxu0
  %v1933 = vadd.f32 %v50, %v1932
  %v1934 = vpop.f32.mrf.mxu0
  %1935 = vmatprep.mubr.f32.mxu0 0.0
  %1936 = vmatmul.mubr.f32.gmra.mxu0 %v1829
  %v1937 = vpop.f32.mrf.mxu0
  %v1938 = vadd.f32 %v55, %v1937
  %v1939 = vpop.f32.mrf.mxu0
  %1940 = vmatprep.mubr.f32.mxu0 0.0
  %1941 = vmatmul.mubr.f32.gmra.mxu0 %v1832
  %v1942 = vpop.f32.mrf.mxu0
  %v1943 = vadd.f32 %v60, %v1942
  %v1944 = vpop.f32.mrf.mxu0
  %1945 = vmatprep.mubr.f32.mxu0 0.0
  %1946 = vmatmul.mubr.f32.gmra.mxu0 %v1835
  %v1947 = vpop.f32.mrf.mxu0
  %v1948 = vadd.f32 %v65, %v1947
  %v1949 = vpop.f32.mrf.mxu0
  %1950 = vmatprep.mubr.f32.mxu0 0.0
  %1951 = vmatmul.mubr.f32.gmra.mxu0 %v1838
  %v1952 = vpop.f32.mrf.mxu0
  %v1953 = vadd.f32 %v70, %v1952
  %v1954 = vpop.f32.mrf.mxu0
  %1955 = vmatprep.mubr.f32.mxu0 0.0
  %1956 = vmatmul.mubr.f32.gmra.mxu0 %v1841
  %v1957 = vpop.f32.mrf.mxu0
  %v1958 = vadd.f32 %v75, %v1957
  %v1959 = vpop.f32.mrf.mxu0
  %1960 = vmatprep.mubr.f32.mxu0 0.0
  %1961 = vmatmul.mubr.f32.gmra.mxu0 %v1844
  %v1962 = vpop.f32.mrf.mxu0
  %v1963 = vadd.f32 %v80, %v1962
  %v1964 = vpop.f32.mrf.mxu0
  %1965 = vmatprep.mubr.f32.mxu0 0.0
  %1966 = vmatmul.mubr.f32.gmra.mxu0 %v1847
  %v1967 = vpop.f32.mrf.mxu0
  %v1968 = vadd.f32 %v85, %v1967
  %v1969 = vpop.f32.mrf.mxu0
  %1970 = vmatprep.mubr.f32.mxu0 0.0
  %1971 = vmatmul.mubr.f32.gmra.mxu0 %v1850
  %v1972 = vpop.f32.mrf.mxu0
  %v1973 = vadd.f32 %v90, %v1972
  %v1974 = vpop.f32.mrf.mxu0
  %1975 = vmatprep.mubr.f32.mxu0 0.0
  %1976 = vmatmul.mubr.f32.gmra.mxu0 %v1853
  %v1977 = vpop.f32.mrf.mxu0
  %v1978 = vadd.f32 %v95, %v1977
  %v1979 = vpop.f32.mrf.mxu0
  %1980 = vmatprep.mubr.f32.mxu0 0.0
  %1981 = vmatmul.mubr.f32.gmra.mxu0 %v1856
  %v1982 = vpop.f32.mrf.mxu0
  %v1983 = vadd.f32 %v100, %v1982
  %v1984 = vpop.f32.mrf.mxu0
  %1985 = vdwg.mxu0
  %s1986 = scalar_lea.vmem [#allocation2], 864
  %1987 = vst [vmem:[%s1986] sm:$0xff] %v1928
  %1988 = vst [vmem:[%s1986 + $0x8] sm:$0xff] %v1933
  %1989 = vst [vmem:[%s1986 + $0x10] sm:$0xff] %v1938
  %1990 = vst [vmem:[%s1986 + $0x18] sm:$0xff] %v1943
  %1991 = vst [vmem:[%s1986 + $0x20] sm:$0xff] %v1948
  %1992 = vst [vmem:[%s1986 + $0x28] sm:$0xff] %v1953
  %1993 = vst [vmem:[%s1986 + $0x30] sm:$0xff] %v1958
  %1994 = vst [vmem:[%s1986 + $0x38] sm:$0xff] %v1963
  %1995 = vst [vmem:[%s1986 + $0x40] sm:$0xff] %v1968
  %1996 = vst [vmem:[%s1986 + $0x48] sm:$0xff] %v1973
  %1997 = vst [vmem:[%s1986 + $0x50] sm:$0xff] %v1978
  %1998 = vst [vmem:[%s1986 + $0x58] sm:$0xff] %v1983
  %v1999 = vld [vmem:[%s1] sm:$0xff]
  %v2000 = vld [vmem:[%s1 + $0x8] sm:$0xff]
  %v2001 = vld [vmem:[%s1 + $0x10] sm:$0xff]
  %v2002 = vld [vmem:[%s1 + $0x18] sm:$0xff]
  %v2003 = vld [vmem:[%s1 + $0x20] sm:$0xff]
  %v2004 = vld [vmem:[%s1 + $0x28] sm:$0xff]
  %v2005 = vld [vmem:[%s1 + $0x30] sm:$0xff]
  %v2006 = vld [vmem:[%s1 + $0x38] sm:$0xff]
  %v2007 = vld [vmem:[%s1 + $0x40] sm:$0xff]
  %v2008 = vld [vmem:[%s1 + $0x48] sm:$0xff]
  %v2009 = vld [vmem:[%s1 + $0x50] sm:$0xff]
  %v2010 = vld [vmem:[%s1 + $0x58] sm:$0xff]
  %s2011 = scalar_lea.vmem %s0, 40
  %v2012 = vld [vmem:[%s2011] sm:$0xf]
  %v2014 = vsel %vm102, %v1999, 0
  %v2017 = vsel %vm102, %v2000, 0
  %v2020 = vsel %vm102, %v2001, 0
  %v2023 = vsel %vm102, %v2002, 0
  %v2026 = vsel %vm102, %v2003, 0
  %v2029 = vsel %vm102, %v2004, 0
  %v2032 = vsel %vm102, %v2005, 0
  %v2035 = vsel %vm102, %v2006, 0
  %v2038 = vsel %vm102, %v2007, 0
  %v2041 = vsel %vm102, %v2008, 0
  %v2044 = vsel %vm102, %v2009, 0
  %v2047 = vsel %vm102, %v2010, 0
  %v2050 = vsel %vm139, %v2012, 0
  %2052 = vmatprep.subr.mxu0 0.0
  %2053 = vmatpush1.msra.mxu0 0.0
  %2054 = vmatprep.subr.mxu0 0.0
  %2055 = vmatpush1.msra.mxu0 0.0
  %2056 = vmatprep.subr.mxu0 0.0
  %2057 = vmatpush1.msra.mxu0 0.0
  %2058 = vmatprep.subr.mxu0 0.0
  %2059 = vmatpush1.msra.mxu0 0.0
  %2060 = vmatprep.subr.mxu0 0.0
  %2061 = vmatpush1.msra.mxu0 0.0
  %2062 = vmatprep.subr.mxu0 0.0
  %2063 = vmatpush1.msra.mxu0 0.0
  %2064 = vmatprep.subr.mxu0 0.0
  %2065 = vmatpush1.msra.mxu0 0.0
  %2066 = vmatprep.subr.mxu0 0.0
  %2067 = vmatpush1.msra.mxu0 0.0
  %2068 = vmatprep.subr.mxu0 0.0
  %2069 = vmatpush1.msra.mxu0 0.0
  %2070 = vmatprep.subr.mxu0 0.0
  %2071 = vmatpush1.msra.mxu0 0.0
  %2072 = vmatprep.subr.mxu0 0.0
  %2073 = vmatpush1.msra.mxu0 0.0
  %2074 = vmatprep.subr.mxu0 0.0
  %2075 = vmatpush1.msra.mxu0 0.0
  %2076 = vmatprep.subr.mxu0 0.0
  %2077 = vmatpush1.msra.mxu0 0.0
  %2078 = vmatprep.subr.mxu0 0.0
  %2079 = vmatpush1.msra.mxu0 0.0
  %2080 = vmatprep.subr.mxu0 0.0
  %2081 = vmatpush1.msra.mxu0 0.0
  %2082 = vmatprep.subr.mxu0 0.0
  %2083 = vmatpush1.msra.mxu0 %v2050
  %2084 = vmatprep.subr.mxu0 0.0
  %2085 = vmatpush2.msra.mxu0 0.0
  %2086 = vmatprep.subr.mxu0 0.0
  %2087 = vmatpush2.msra.mxu0 0.0
  %2088 = vmatprep.subr.mxu0 0.0
  %2089 = vmatpush2.msra.mxu0 0.0
  %2090 = vmatprep.subr.mxu0 0.0
  %2091 = vmatpush2.msra.mxu0 0.0
  %2092 = vmatprep.subr.mxu0 0.0
  %2093 = vmatpush2.msra.mxu0 0.0
  %2094 = vmatprep.subr.mxu0 0.0
  %2095 = vmatpush2.msra.mxu0 0.0
  %2096 = vmatprep.subr.mxu0 0.0
  %2097 = vmatpush2.msra.mxu0 0.0
  %2098 = vmatprep.subr.mxu0 0.0
  %2099 = vmatpush2.msra.mxu0 0.0
  %2100 = vmatprep.subr.mxu0 0.0
  %2101 = vmatpush2.msra.mxu0 0.0
  %2102 = vmatprep.subr.mxu0 0.0
  %2103 = vmatpush2.msra.mxu0 0.0
  %2104 = vmatprep.subr.mxu0 0.0
  %2105 = vmatpush2.msra.mxu0 0.0
  %2106 = vmatprep.subr.mxu0 0.0
  %2107 = vmatpush2.msra.mxu0 0.0
  %2108 = vmatprep.subr.mxu0 0.0
  %2109 = vmatpush2.msra.mxu0 0.0
  %2110 = vmatprep.subr.mxu0 0.0
  %2111 = vmatpush2.msra.mxu0 0.0
  %2112 = vmatprep.subr.mxu0 0.0
  %2113 = vmatpush2.msra.mxu0 0.0
  %2114 = vmatprep.subr.mxu0 0.0
  %2115 = vmatpush2.msra.mxu0 0.0
  %2116 = vmatprep.mubr.f32.mxu0 0.0
  %2117 = vmatmul.mubr.f32.gmra.mxu0 %v2014
  %v2118 = vpop.f32.mrf.mxu0
  %v2119 = vadd.f32 %v45, %v2118
  %v2120 = vpop.f32.mrf.mxu0
  %2121 = vmatprep.mubr.f32.mxu0 0.0
  %2122 = vmatmul.mubr.f32.gmra.mxu0 %v2017
  %v2123 = vpop.f32.mrf.mxu0
  %v2124 = vadd.f32 %v50, %v2123
  %v2125 = vpop.f32.mrf.mxu0
  %2126 = vmatprep.mubr.f32.mxu0 0.0
  %2127 = vmatmul.mubr.f32.gmra.mxu0 %v2020
  %v2128 = vpop.f32.mrf.mxu0
  %v2129 = vadd.f32 %v55, %v2128
  %v2130 = vpop.f32.mrf.mxu0
  %2131 = vmatprep.mubr.f32.mxu0 0.0
  %2132 = vmatmul.mubr.f32.gmra.mxu0 %v2023
  %v2133 = vpop.f32.mrf.mxu0
  %v2134 = vadd.f32 %v60, %v2133
  %v2135 = vpop.f32.mrf.mxu0
  %2136 = vmatprep.mubr.f32.mxu0 0.0
  %2137 = vmatmul.mubr.f32.gmra.mxu0 %v2026
  %v2138 = vpop.f32.mrf.mxu0
  %v2139 = vadd.f32 %v65, %v2138
  %v2140 = vpop.f32.mrf.mxu0
  %2141 = vmatprep.mubr.f32.mxu0 0.0
  %2142 = vmatmul.mubr.f32.gmra.mxu0 %v2029
  %v2143 = vpop.f32.mrf.mxu0
  %v2144 = vadd.f32 %v70, %v2143
  %v2145 = vpop.f32.mrf.mxu0
  %2146 = vmatprep.mubr.f32.mxu0 0.0
  %2147 = vmatmul.mubr.f32.gmra.mxu0 %v2032
  %v2148 = vpop.f32.mrf.mxu0
  %v2149 = vadd.f32 %v75, %v2148
  %v2150 = vpop.f32.mrf.mxu0
  %2151 = vmatprep.mubr.f32.mxu0 0.0
  %2152 = vmatmul.mubr.f32.gmra.mxu0 %v2035
  %v2153 = vpop.f32.mrf.mxu0
  %v2154 = vadd.f32 %v80, %v2153
  %v2155 = vpop.f32.mrf.mxu0
  %2156 = vmatprep.mubr.f32.mxu0 0.0
  %2157 = vmatmul.mubr.f32.gmra.mxu0 %v2038
  %v2158 = vpop.f32.mrf.mxu0
  %v2159 = vadd.f32 %v85, %v2158
  %v2160 = vpop.f32.mrf.mxu0
  %2161 = vmatprep.mubr.f32.mxu0 0.0
  %2162 = vmatmul.mubr.f32.gmra.mxu0 %v2041
  %v2163 = vpop.f32.mrf.mxu0
  %v2164 = vadd.f32 %v90, %v2163
  %v2165 = vpop.f32.mrf.mxu0
  %2166 = vmatprep.mubr.f32.mxu0 0.0
  %2167 = vmatmul.mubr.f32.gmra.mxu0 %v2044
  %v2168 = vpop.f32.mrf.mxu0
  %v2169 = vadd.f32 %v95, %v2168
  %v2170 = vpop.f32.mrf.mxu0
  %2171 = vmatprep.mubr.f32.mxu0 0.0
  %2172 = vmatmul.mubr.f32.gmra.mxu0 %v2047
  %v2173 = vpop.f32.mrf.mxu0
  %v2174 = vadd.f32 %v100, %v2173
  %v2175 = vpop.f32.mrf.mxu0
  %2176 = vdwg.mxu0
  %s2177 = scalar_lea.vmem [#allocation2], 960
  %2178 = vst [vmem:[%s2177] sm:$0xff] %v2119
  %2179 = vst [vmem:[%s2177 + $0x8] sm:$0xff] %v2124
  %2180 = vst [vmem:[%s2177 + $0x10] sm:$0xff] %v2129
  %2181 = vst [vmem:[%s2177 + $0x18] sm:$0xff] %v2134
  %2182 = vst [vmem:[%s2177 + $0x20] sm:$0xff] %v2139
  %2183 = vst [vmem:[%s2177 + $0x28] sm:$0xff] %v2144
  %2184 = vst [vmem:[%s2177 + $0x30] sm:$0xff] %v2149
  %2185 = vst [vmem:[%s2177 + $0x38] sm:$0xff] %v2154
  %2186 = vst [vmem:[%s2177 + $0x40] sm:$0xff] %v2159
  %2187 = vst [vmem:[%s2177 + $0x48] sm:$0xff] %v2164
  %2188 = vst [vmem:[%s2177 + $0x50] sm:$0xff] %v2169
  %2189 = vst [vmem:[%s2177 + $0x58] sm:$0xff] %v2174
  %v2190 = vld [vmem:[%s1] sm:$0xff]
  %v2191 = vld [vmem:[%s1 + $0x8] sm:$0xff]
  %v2192 = vld [vmem:[%s1 + $0x10] sm:$0xff]
  %v2193 = vld [vmem:[%s1 + $0x18] sm:$0xff]
  %v2194 = vld [vmem:[%s1 + $0x20] sm:$0xff]
  %v2195 = vld [vmem:[%s1 + $0x28] sm:$0xff]
  %v2196 = vld [vmem:[%s1 + $0x30] sm:$0xff]
  %v2197 = vld [vmem:[%s1 + $0x38] sm:$0xff]
  %v2198 = vld [vmem:[%s1 + $0x40] sm:$0xff]
  %v2199 = vld [vmem:[%s1 + $0x48] sm:$0xff]
  %v2200 = vld [vmem:[%s1 + $0x50] sm:$0xff]
  %v2201 = vld [vmem:[%s1 + $0x58] sm:$0xff]
  %s2202 = scalar_lea.vmem %s0, 44
  %v2203 = vld [vmem:[%s2202] sm:$0xf]
  %v2205 = vsel %vm102, %v2190, 0
  %v2208 = vsel %vm102, %v2191, 0
  %v2211 = vsel %vm102, %v2192, 0
  %v2214 = vsel %vm102, %v2193, 0
  %v2217 = vsel %vm102, %v2194, 0
  %v2220 = vsel %vm102, %v2195, 0
  %v2223 = vsel %vm102, %v2196, 0
  %v2226 = vsel %vm102, %v2197, 0
  %v2229 = vsel %vm102, %v2198, 0
  %v2232 = vsel %vm102, %v2199, 0
  %v2235 = vsel %vm102, %v2200, 0
  %v2238 = vsel %vm102, %v2201, 0
  %v2241 = vsel %vm139, %v2203, 0
  %2243 = vmatprep.subr.mxu0 0.0
  %2244 = vmatpush1.msra.mxu0 0.0
  %2245 = vmatprep.subr.mxu0 0.0
  %2246 = vmatpush1.msra.mxu0 0.0
  %2247 = vmatprep.subr.mxu0 0.0
  %2248 = vmatpush1.msra.mxu0 0.0
  %2249 = vmatprep.subr.mxu0 0.0
  %2250 = vmatpush1.msra.mxu0 0.0
  %2251 = vmatprep.subr.mxu0 0.0
  %2252 = vmatpush1.msra.mxu0 0.0
  %2253 = vmatprep.subr.mxu0 0.0
  %2254 = vmatpush1.msra.mxu0 0.0
  %2255 = vmatprep.subr.mxu0 0.0
  %2256 = vmatpush1.msra.mxu0 0.0
  %2257 = vmatprep.subr.mxu0 0.0
  %2258 = vmatpush1.msra.mxu0 0.0
  %2259 = vmatprep.subr.mxu0 0.0
  %2260 = vmatpush1.msra.mxu0 0.0
  %2261 = vmatprep.subr.mxu0 0.0
  %2262 = vmatpush1.msra.mxu0 0.0
  %2263 = vmatprep.subr.mxu0 0.0
  %2264 = vmatpush1.msra.mxu0 0.0
  %2265 = vmatprep.subr.mxu0 0.0
  %2266 = vmatpush1.msra.mxu0 0.0
  %2267 = vmatprep.subr.mxu0 0.0
  %2268 = vmatpush1.msra.mxu0 0.0
  %2269 = vmatprep.subr.mxu0 0.0
  %2270 = vmatpush1.msra.mxu0 0.0
  %2271 = vmatprep.subr.mxu0 0.0
  %2272 = vmatpush1.msra.mxu0 0.0
  %2273 = vmatprep.subr.mxu0 0.0
  %2274 = vmatpush1.msra.mxu0 %v2241
  %2275 = vmatprep.subr.mxu0 0.0
  %2276 = vmatpush2.msra.mxu0 0.0
  %2277 = vmatprep.subr.mxu0 0.0
  %2278 = vmatpush2.msra.mxu0 0.0
  %2279 = vmatprep.subr.mxu0 0.0
  %2280 = vmatpush2.msra.mxu0 0.0
  %2281 = vmatprep.subr.mxu0 0.0
  %2282 = vmatpush2.msra.mxu0 0.0
  %2283 = vmatprep.subr.mxu0 0.0
  %2284 = vmatpush2.msra.mxu0 0.0
  %2285 = vmatprep.subr.mxu0 0.0
  %2286 = vmatpush2.msra.mxu0 0.0
  %2287 = vmatprep.subr.mxu0 0.0
  %2288 = vmatpush2.msra.mxu0 0.0
  %2289 = vmatprep.subr.mxu0 0.0
  %2290 = vmatpush2.msra.mxu0 0.0
  %2291 = vmatprep.subr.mxu0 0.0
  %2292 = vmatpush2.msra.mxu0 0.0
  %2293 = vmatprep.subr.mxu0 0.0
  %2294 = vmatpush2.msra.mxu0 0.0
  %2295 = vmatprep.subr.mxu0 0.0
  %2296 = vmatpush2.msra.mxu0 0.0
  %2297 = vmatprep.subr.mxu0 0.0
  %2298 = vmatpush2.msra.mxu0 0.0
  %2299 = vmatprep.subr.mxu0 0.0
  %2300 = vmatpush2.msra.mxu0 0.0
  %2301 = vmatprep.subr.mxu0 0.0
  %2302 = vmatpush2.msra.mxu0 0.0
  %2303 = vmatprep.subr.mxu0 0.0
  %2304 = vmatpush2.msra.mxu0 0.0
  %2305 = vmatprep.subr.mxu0 0.0
  %2306 = vmatpush2.msra.mxu0 0.0
  %2307 = vmatprep.mubr.f32.mxu0 0.0
  %2308 = vmatmul.mubr.f32.gmra.mxu0 %v2205
  %v2309 = vpop.f32.mrf.mxu0
  %v2310 = vadd.f32 %v45, %v2309
  %v2311 = vpop.f32.mrf.mxu0
  %2312 = vmatprep.mubr.f32.mxu0 0.0
  %2313 = vmatmul.mubr.f32.gmra.mxu0 %v2208
  %v2314 = vpop.f32.mrf.mxu0
  %v2315 = vadd.f32 %v50, %v2314
  %v2316 = vpop.f32.mrf.mxu0
  %2317 = vmatprep.mubr.f32.mxu0 0.0
  %2318 = vmatmul.mubr.f32.gmra.mxu0 %v2211
  %v2319 = vpop.f32.mrf.mxu0
  %v2320 = vadd.f32 %v55, %v2319
  %v2321 = vpop.f32.mrf.mxu0
  %2322 = vmatprep.mubr.f32.mxu0 0.0
  %2323 = vmatmul.mubr.f32.gmra.mxu0 %v2214
  %v2324 = vpop.f32.mrf.mxu0
  %v2325 = vadd.f32 %v60, %v2324
  %v2326 = vpop.f32.mrf.mxu0
  %2327 = vmatprep.mubr.f32.mxu0 0.0
  %2328 = vmatmul.mubr.f32.gmra.mxu0 %v2217
  %v2329 = vpop.f32.mrf.mxu0
  %v2330 = vadd.f32 %v65, %v2329
  %v2331 = vpop.f32.mrf.mxu0
  %2332 = vmatprep.mubr.f32.mxu0 0.0
  %2333 = vmatmul.mubr.f32.gmra.mxu0 %v2220
  %v2334 = vpop.f32.mrf.mxu0
  %v2335 = vadd.f32 %v70, %v2334
  %v2336 = vpop.f32.mrf.mxu0
  %2337 = vmatprep.mubr.f32.mxu0 0.0
  %2338 = vmatmul.mubr.f32.gmra.mxu0 %v2223
  %v2339 = vpop.f32.mrf.mxu0
  %v2340 = vadd.f32 %v75, %v2339
  %v2341 = vpop.f32.mrf.mxu0
  %2342 = vmatprep.mubr.f32.mxu0 0.0
  %2343 = vmatmul.mubr.f32.gmra.mxu0 %v2226
  %v2344 = vpop.f32.mrf.mxu0
  %v2345 = vadd.f32 %v80, %v2344
  %v2346 = vpop.f32.mrf.mxu0
  %2347 = vmatprep.mubr.f32.mxu0 0.0
  %2348 = vmatmul.mubr.f32.gmra.mxu0 %v2229
  %v2349 = vpop.f32.mrf.mxu0
  %v2350 = vadd.f32 %v85, %v2349
  %v2351 = vpop.f32.mrf.mxu0
  %2352 = vmatprep.mubr.f32.mxu0 0.0
  %2353 = vmatmul.mubr.f32.gmra.mxu0 %v2232
  %v2354 = vpop.f32.mrf.mxu0
  %v2355 = vadd.f32 %v90, %v2354
  %v2356 = vpop.f32.mrf.mxu0
  %2357 = vmatprep.mubr.f32.mxu0 0.0
  %2358 = vmatmul.mubr.f32.gmra.mxu0 %v2235
  %v2359 = vpop.f32.mrf.mxu0
  %v2360 = vadd.f32 %v95, %v2359
  %v2361 = vpop.f32.mrf.mxu0
  %2362 = vmatprep.mubr.f32.mxu0 0.0
  %2363 = vmatmul.mubr.f32.gmra.mxu0 %v2238
  %v2364 = vpop.f32.mrf.mxu0
  %v2365 = vadd.f32 %v100, %v2364
  %v2366 = vpop.f32.mrf.mxu0
  %2367 = vdwg.mxu0
  %s2368 = scalar_lea.vmem [#allocation2], 1056
  %2369 = vst [vmem:[%s2368] sm:$0xff] %v2310
  %2370 = vst [vmem:[%s2368 + $0x8] sm:$0xff] %v2315
  %2371 = vst [vmem:[%s2368 + $0x10] sm:$0xff] %v2320
  %2372 = vst [vmem:[%s2368 + $0x18] sm:$0xff] %v2325
  %2373 = vst [vmem:[%s2368 + $0x20] sm:$0xff] %v2330
  %2374 = vst [vmem:[%s2368 + $0x28] sm:$0xff] %v2335
  %2375 = vst [vmem:[%s2368 + $0x30] sm:$0xff] %v2340
  %2376 = vst [vmem:[%s2368 + $0x38] sm:$0xff] %v2345
  %2377 = vst [vmem:[%s2368 + $0x40] sm:$0xff] %v2350
  %2378 = vst [vmem:[%s2368 + $0x48] sm:$0xff] %v2355
  %2379 = vst [vmem:[%s2368 + $0x50] sm:$0xff] %v2360
  %2380 = vst [vmem:[%s2368 + $0x58] sm:$0xff] %v2365
  %v2381 = vld [vmem:[%s1] sm:$0xff]
  %v2382 = vld [vmem:[%s1 + $0x8] sm:$0xff]
  %v2383 = vld [vmem:[%s1 + $0x10] sm:$0xff]
  %v2384 = vld [vmem:[%s1 + $0x18] sm:$0xff]
  %v2385 = vld [vmem:[%s1 + $0x20] sm:$0xff]
  %v2386 = vld [vmem:[%s1 + $0x28] sm:$0xff]
  %v2387 = vld [vmem:[%s1 + $0x30] sm:$0xff]
  %v2388 = vld [vmem:[%s1 + $0x38] sm:$0xff]
  %v2389 = vld [vmem:[%s1 + $0x40] sm:$0xff]
  %v2390 = vld [vmem:[%s1 + $0x48] sm:$0xff]
  %v2391 = vld [vmem:[%s1 + $0x50] sm:$0xff]
  %v2392 = vld [vmem:[%s1 + $0x58] sm:$0xff]
  %s2393 = scalar_lea.vmem %s0, 48
  %v2394 = vld [vmem:[%s2393] sm:$0xf]
  %v2396 = vsel %vm102, %v2381, 0
  %v2399 = vsel %vm102, %v2382, 0
  %v2402 = vsel %vm102, %v2383, 0
  %v2405 = vsel %vm102, %v2384, 0
  %v2408 = vsel %vm102, %v2385, 0
  %v2411 = vsel %vm102, %v2386, 0
  %v2414 = vsel %vm102, %v2387, 0
  %v2417 = vsel %vm102, %v2388, 0
  %v2420 = vsel %vm102, %v2389, 0
  %v2423 = vsel %vm102, %v2390, 0
  %v2426 = vsel %vm102, %v2391, 0
  %v2429 = vsel %vm102, %v2392, 0
  %v2432 = vsel %vm139, %v2394, 0
  %2434 = vmatprep.subr.mxu0 0.0
  %2435 = vmatpush1.msra.mxu0 0.0
  %2436 = vmatprep.subr.mxu0 0.0
  %2437 = vmatpush1.msra.mxu0 0.0
  %2438 = vmatprep.subr.mxu0 0.0
  %2439 = vmatpush1.msra.mxu0 0.0
  %2440 = vmatprep.subr.mxu0 0.0
  %2441 = vmatpush1.msra.mxu0 0.0
  %2442 = vmatprep.subr.mxu0 0.0
  %2443 = vmatpush1.msra.mxu0 0.0
  %2444 = vmatprep.subr.mxu0 0.0
  %2445 = vmatpush1.msra.mxu0 0.0
  %2446 = vmatprep.subr.mxu0 0.0
  %2447 = vmatpush1.msra.mxu0 0.0
  %2448 = vmatprep.subr.mxu0 0.0
  %2449 = vmatpush1.msra.mxu0 0.0
  %2450 = vmatprep.subr.mxu0 0.0
  %2451 = vmatpush1.msra.mxu0 0.0
  %2452 = vmatprep.subr.mxu0 0.0
  %2453 = vmatpush1.msra.mxu0 0.0
  %2454 = vmatprep.subr.mxu0 0.0
  %2455 = vmatpush1.msra.mxu0 0.0
  %2456 = vmatprep.subr.mxu0 0.0
  %2457 = vmatpush1.msra.mxu0 0.0
  %2458 = vmatprep.subr.mxu0 0.0
  %2459 = vmatpush1.msra.mxu0 0.0
  %2460 = vmatprep.subr.mxu0 0.0
  %2461 = vmatpush1.msra.mxu0 0.0
  %2462 = vmatprep.subr.mxu0 0.0
  %2463 = vmatpush1.msra.mxu0 0.0
  %2464 = vmatprep.subr.mxu0 0.0
  %2465 = vmatpush1.msra.mxu0 %v2432
  %2466 = vmatprep.subr.mxu0 0.0
  %2467 = vmatpush2.msra.mxu0 0.0
  %2468 = vmatprep.subr.mxu0 0.0
  %2469 = vmatpush2.msra.mxu0 0.0
  %2470 = vmatprep.subr.mxu0 0.0
  %2471 = vmatpush2.msra.mxu0 0.0
  %2472 = vmatprep.subr.mxu0 0.0
  %2473 = vmatpush2.msra.mxu0 0.0
  %2474 = vmatprep.subr.mxu0 0.0
  %2475 = vmatpush2.msra.mxu0 0.0
  %2476 = vmatprep.subr.mxu0 0.0
  %2477 = vmatpush2.msra.mxu0 0.0
  %2478 = vmatprep.subr.mxu0 0.0
  %2479 = vmatpush2.msra.mxu0 0.0
  %2480 = vmatprep.subr.mxu0 0.0
  %2481 = vmatpush2.msra.mxu0 0.0
  %2482 = vmatprep.subr.mxu0 0.0
  %2483 = vmatpush2.msra.mxu0 0.0
  %2484 = vmatprep.subr.mxu0 0.0
  %2485 = vmatpush2.msra.mxu0 0.0
  %2486 = vmatprep.subr.mxu0 0.0
  %2487 = vmatpush2.msra.mxu0 0.0
  %2488 = vmatprep.subr.mxu0 0.0
  %2489 = vmatpush2.msra.mxu0 0.0
  %2490 = vmatprep.subr.mxu0 0.0
  %2491 = vmatpush2.msra.mxu0 0.0
  %2492 = vmatprep.subr.mxu0 0.0
  %2493 = vmatpush2.msra.mxu0 0.0
  %2494 = vmatprep.subr.mxu0 0.0
  %2495 = vmatpush2.msra.mxu0 0.0
  %2496 = vmatprep.subr.mxu0 0.0
  %2497 = vmatpush2.msra.mxu0 0.0
  %2498 = vmatprep.mubr.f32.mxu0 0.0
  %2499 = vmatmul.mubr.f32.gmra.mxu0 %v2396
  %v2500 = vpop.f32.mrf.mxu0
  %v2501 = vadd.f32 %v45, %v2500
  %v2502 = vpop.f32.mrf.mxu0
  %2503 = vmatprep.mubr.f32.mxu0 0.0
  %2504 = vmatmul.mubr.f32.gmra.mxu0 %v2399
  %v2505 = vpop.f32.mrf.mxu0
  %v2506 = vadd.f32 %v50, %v2505
  %v2507 = vpop.f32.mrf.mxu0
  %2508 = vmatprep.mubr.f32.mxu0 0.0
  %2509 = vmatmul.mubr.f32.gmra.mxu0 %v2402
  %v2510 = vpop.f32.mrf.mxu0
  %v2511 = vadd.f32 %v55, %v2510
  %v2512 = vpop.f32.mrf.mxu0
  %2513 = vmatprep.mubr.f32.mxu0 0.0
  %2514 = vmatmul.mubr.f32.gmra.mxu0 %v2405
  %v2515 = vpop.f32.mrf.mxu0
  %v2516 = vadd.f32 %v60, %v2515
  %v2517 = vpop.f32.mrf.mxu0
  %2518 = vmatprep.mubr.f32.mxu0 0.0
  %2519 = vmatmul.mubr.f32.gmra.mxu0 %v2408
  %v2520 = vpop.f32.mrf.mxu0
  %v2521 = vadd.f32 %v65, %v2520
  %v2522 = vpop.f32.mrf.mxu0
  %2523 = vmatprep.mubr.f32.mxu0 0.0
  %2524 = vmatmul.mubr.f32.gmra.mxu0 %v2411
  %v2525 = vpop.f32.mrf.mxu0
  %v2526 = vadd.f32 %v70, %v2525
  %v2527 = vpop.f32.mrf.mxu0
  %2528 = vmatprep.mubr.f32.mxu0 0.0
  %2529 = vmatmul.mubr.f32.gmra.mxu0 %v2414
  %v2530 = vpop.f32.mrf.mxu0
  %v2531 = vadd.f32 %v75, %v2530
  %v2532 = vpop.f32.mrf.mxu0
  %2533 = vmatprep.mubr.f32.mxu0 0.0
  %2534 = vmatmul.mubr.f32.gmra.mxu0 %v2417
  %v2535 = vpop.f32.mrf.mxu0
  %v2536 = vadd.f32 %v80, %v2535
  %v2537 = vpop.f32.mrf.mxu0
  %2538 = vmatprep.mubr.f32.mxu0 0.0
  %2539 = vmatmul.mubr.f32.gmra.mxu0 %v2420
  %v2540 = vpop.f32.mrf.mxu0
  %v2541 = vadd.f32 %v85, %v2540
  %v2542 = vpop.f32.mrf.mxu0
  %2543 = vmatprep.mubr.f32.mxu0 0.0
  %2544 = vmatmul.mubr.f32.gmra.mxu0 %v2423
  %v2545 = vpop.f32.mrf.mxu0
  %v2546 = vadd.f32 %v90, %v2545
  %v2547 = vpop.f32.mrf.mxu0
  %2548 = vmatprep.mubr.f32.mxu0 0.0
  %2549 = vmatmul.mubr.f32.gmra.mxu0 %v2426
  %v2550 = vpop.f32.mrf.mxu0
  %v2551 = vadd.f32 %v95, %v2550
  %v2552 = vpop.f32.mrf.mxu0
  %2553 = vmatprep.mubr.f32.mxu0 0.0
  %2554 = vmatmul.mubr.f32.gmra.mxu0 %v2429
  %v2555 = vpop.f32.mrf.mxu0
  %v2556 = vadd.f32 %v100, %v2555
  %v2557 = vpop.f32.mrf.mxu0
  %2558 = vdwg.mxu0
  %s2559 = scalar_lea.vmem [#allocation2], 1152
  %2560 = vst [vmem:[%s2559] sm:$0xff] %v2501
  %2561 = vst [vmem:[%s2559 + $0x8] sm:$0xff] %v2506
  %2562 = vst [vmem:[%s2559 + $0x10] sm:$0xff] %v2511
  %2563 = vst [vmem:[%s2559 + $0x18] sm:$0xff] %v2516
  %2564 = vst [vmem:[%s2559 + $0x20] sm:$0xff] %v2521
  %2565 = vst [vmem:[%s2559 + $0x28] sm:$0xff] %v2526
  %2566 = vst [vmem:[%s2559 + $0x30] sm:$0xff] %v2531
  %2567 = vst [vmem:[%s2559 + $0x38] sm:$0xff] %v2536
  %2568 = vst [vmem:[%s2559 + $0x40] sm:$0xff] %v2541
  %2569 = vst [vmem:[%s2559 + $0x48] sm:$0xff] %v2546
  %2570 = vst [vmem:[%s2559 + $0x50] sm:$0xff] %v2551
  %2571 = vst [vmem:[%s2559 + $0x58] sm:$0xff] %v2556
  %v2572 = vld [vmem:[%s1] sm:$0xff]
  %v2573 = vld [vmem:[%s1 + $0x8] sm:$0xff]
  %v2574 = vld [vmem:[%s1 + $0x10] sm:$0xff]
  %v2575 = vld [vmem:[%s1 + $0x18] sm:$0xff]
  %v2576 = vld [vmem:[%s1 + $0x20] sm:$0xff]
  %v2577 = vld [vmem:[%s1 + $0x28] sm:$0xff]
  %v2578 = vld [vmem:[%s1 + $0x30] sm:$0xff]
  %v2579 = vld [vmem:[%s1 + $0x38] sm:$0xff]
  %v2580 = vld [vmem:[%s1 + $0x40] sm:$0xff]
  %v2581 = vld [vmem:[%s1 + $0x48] sm:$0xff]
  %v2582 = vld [vmem:[%s1 + $0x50] sm:$0xff]
  %v2583 = vld [vmem:[%s1 + $0x58] sm:$0xff]
  %s2584 = scalar_lea.vmem %s0, 52
  %v2585 = vld [vmem:[%s2584] sm:$0xf]
  %v2587 = vsel %vm102, %v2572, 0
  %v2590 = vsel %vm102, %v2573, 0
  %v2593 = vsel %vm102, %v2574, 0
  %v2596 = vsel %vm102, %v2575, 0
  %v2599 = vsel %vm102, %v2576, 0
  %v2602 = vsel %vm102, %v2577, 0
  %v2605 = vsel %vm102, %v2578, 0
  %v2608 = vsel %vm102, %v2579, 0
  %v2611 = vsel %vm102, %v2580, 0
  %v2614 = vsel %vm102, %v2581, 0
  %v2617 = vsel %vm102, %v2582, 0
  %v2620 = vsel %vm102, %v2583, 0
  %v2623 = vsel %vm139, %v2585, 0
  %2625 = vmatprep.subr.mxu0 0.0
  %2626 = vmatpush1.msra.mxu0 0.0
  %2627 = vmatprep.subr.mxu0 0.0
  %2628 = vmatpush1.msra.mxu0 0.0
  %2629 = vmatprep.subr.mxu0 0.0
  %2630 = vmatpush1.msra.mxu0 0.0
  %2631 = vmatprep.subr.mxu0 0.0
  %2632 = vmatpush1.msra.mxu0 0.0
  %2633 = vmatprep.subr.mxu0 0.0
  %2634 = vmatpush1.msra.mxu0 0.0
  %2635 = vmatprep.subr.mxu0 0.0
  %2636 = vmatpush1.msra.mxu0 0.0
  %2637 = vmatprep.subr.mxu0 0.0
  %2638 = vmatpush1.msra.mxu0 0.0
  %2639 = vmatprep.subr.mxu0 0.0
  %2640 = vmatpush1.msra.mxu0 0.0
  %2641 = vmatprep.subr.mxu0 0.0
  %2642 = vmatpush1.msra.mxu0 0.0
  %2643 = vmatprep.subr.mxu0 0.0
  %2644 = vmatpush1.msra.mxu0 0.0
  %2645 = vmatprep.subr.mxu0 0.0
  %2646 = vmatpush1.msra.mxu0 0.0
  %2647 = vmatprep.subr.mxu0 0.0
  %2648 = vmatpush1.msra.mxu0 0.0
  %2649 = vmatprep.subr.mxu0 0.0
  %2650 = vmatpush1.msra.mxu0 0.0
  %2651 = vmatprep.subr.mxu0 0.0
  %2652 = vmatpush1.msra.mxu0 0.0
  %2653 = vmatprep.subr.mxu0 0.0
  %2654 = vmatpush1.msra.mxu0 0.0
  %2655 = vmatprep.subr.mxu0 0.0
  %2656 = vmatpush1.msra.mxu0 %v2623
  %2657 = vmatprep.subr.mxu0 0.0
  %2658 = vmatpush2.msra.mxu0 0.0
  %2659 = vmatprep.subr.mxu0 0.0
  %2660 = vmatpush2.msra.mxu0 0.0
  %2661 = vmatprep.subr.mxu0 0.0
  %2662 = vmatpush2.msra.mxu0 0.0
  %2663 = vmatprep.subr.mxu0 0.0
  %2664 = vmatpush2.msra.mxu0 0.0
  %2665 = vmatprep.subr.mxu0 0.0
  %2666 = vmatpush2.msra.mxu0 0.0
  %2667 = vmatprep.subr.mxu0 0.0
  %2668 = vmatpush2.msra.mxu0 0.0
  %2669 = vmatprep.subr.mxu0 0.0
  %2670 = vmatpush2.msra.mxu0 0.0
  %2671 = vmatprep.subr.mxu0 0.0
  %2672 = vmatpush2.msra.mxu0 0.0
  %2673 = vmatprep.subr.mxu0 0.0
  %2674 = vmatpush2.msra.mxu0 0.0
  %2675 = vmatprep.subr.mxu0 0.0
  %2676 = vmatpush2.msra.mxu0 0.0
  %2677 = vmatprep.subr.mxu0 0.0
  %2678 = vmatpush2.msra.mxu0 0.0
  %2679 = vmatprep.subr.mxu0 0.0
  %2680 = vmatpush2.msra.mxu0 0.0
  %2681 = vmatprep.subr.mxu0 0.0
  %2682 = vmatpush2.msra.mxu0 0.0
  %2683 = vmatprep.subr.mxu0 0.0
  %2684 = vmatpush2.msra.mxu0 0.0
  %2685 = vmatprep.subr.mxu0 0.0
  %2686 = vmatpush2.msra.mxu0 0.0
  %2687 = vmatprep.subr.mxu0 0.0
  %2688 = vmatpush2.msra.mxu0 0.0
  %2689 = vmatprep.mubr.f32.mxu0 0.0
  %2690 = vmatmul.mubr.f32.gmra.mxu0 %v2587
  %v2691 = vpop.f32.mrf.mxu0
  %v2692 = vadd.f32 %v45, %v2691
  %v2693 = vpop.f32.mrf.mxu0
  %2694 = vmatprep.mubr.f32.mxu0 0.0
  %2695 = vmatmul.mubr.f32.gmra.mxu0 %v2590
  %v2696 = vpop.f32.mrf.mxu0
  %v2697 = vadd.f32 %v50, %v2696
  %v2698 = vpop.f32.mrf.mxu0
  %2699 = vmatprep.mubr.f32.mxu0 0.0
  %2700 = vmatmul.mubr.f32.gmra.mxu0 %v2593
  %v2701 = vpop.f32.mrf.mxu0
  %v2702 = vadd.f32 %v55, %v2701
  %v2703 = vpop.f32.mrf.mxu0
  %2704 = vmatprep.mubr.f32.mxu0 0.0
  %2705 = vmatmul.mubr.f32.gmra.mxu0 %v2596
  %v2706 = vpop.f32.mrf.mxu0
  %v2707 = vadd.f32 %v60, %v2706
  %v2708 = vpop.f32.mrf.mxu0
  %2709 = vmatprep.mubr.f32.mxu0 0.0
  %2710 = vmatmul.mubr.f32.gmra.mxu0 %v2599
  %v2711 = vpop.f32.mrf.mxu0
  %v2712 = vadd.f32 %v65, %v2711
  %v2713 = vpop.f32.mrf.mxu0
  %2714 = vmatprep.mubr.f32.mxu0 0.0
  %2715 = vmatmul.mubr.f32.gmra.mxu0 %v2602
  %v2716 = vpop.f32.mrf.mxu0
  %v2717 = vadd.f32 %v70, %v2716
  %v2718 = vpop.f32.mrf.mxu0
  %2719 = vmatprep.mubr.f32.mxu0 0.0
  %2720 = vmatmul.mubr.f32.gmra.mxu0 %v2605
  %v2721 = vpop.f32.mrf.mxu0
  %v2722 = vadd.f32 %v75, %v2721
  %v2723 = vpop.f32.mrf.mxu0
  %2724 = vmatprep.mubr.f32.mxu0 0.0
  %2725 = vmatmul.mubr.f32.gmra.mxu0 %v2608
  %v2726 = vpop.f32.mrf.mxu0
  %v2727 = vadd.f32 %v80, %v2726
  %v2728 = vpop.f32.mrf.mxu0
  %2729 = vmatprep.mubr.f32.mxu0 0.0
  %2730 = vmatmul.mubr.f32.gmra.mxu0 %v2611
  %v2731 = vpop.f32.mrf.mxu0
  %v2732 = vadd.f32 %v85, %v2731
  %v2733 = vpop.f32.mrf.mxu0
  %2734 = vmatprep.mubr.f32.mxu0 0.0
  %2735 = vmatmul.mubr.f32.gmra.mxu0 %v2614
  %v2736 = vpop.f32.mrf.mxu0
  %v2737 = vadd.f32 %v90, %v2736
  %v2738 = vpop.f32.mrf.mxu0
  %2739 = vmatprep.mubr.f32.mxu0 0.0
  %2740 = vmatmul.mubr.f32.gmra.mxu0 %v2617
  %v2741 = vpop.f32.mrf.mxu0
  %v2742 = vadd.f32 %v95, %v2741
  %v2743 = vpop.f32.mrf.mxu0
  %2744 = vmatprep.mubr.f32.mxu0 0.0
  %2745 = vmatmul.mubr.f32.gmra.mxu0 %v2620
  %v2746 = vpop.f32.mrf.mxu0
  %v2747 = vadd.f32 %v100, %v2746
  %v2748 = vpop.f32.mrf.mxu0
  %2749 = vdwg.mxu0
  %s2750 = scalar_lea.vmem [#allocation2], 1248
  %2751 = vst [vmem:[%s2750] sm:$0xff] %v2692
  %2752 = vst [vmem:[%s2750 + $0x8] sm:$0xff] %v2697
  %2753 = vst [vmem:[%s2750 + $0x10] sm:$0xff] %v2702
  %2754 = vst [vmem:[%s2750 + $0x18] sm:$0xff] %v2707
  %2755 = vst [vmem:[%s2750 + $0x20] sm:$0xff] %v2712
  %2756 = vst [vmem:[%s2750 + $0x28] sm:$0xff] %v2717
  %2757 = vst [vmem:[%s2750 + $0x30] sm:$0xff] %v2722
  %2758 = vst [vmem:[%s2750 + $0x38] sm:$0xff] %v2727
  %2759 = vst [vmem:[%s2750 + $0x40] sm:$0xff] %v2732
  %2760 = vst [vmem:[%s2750 + $0x48] sm:$0xff] %v2737
  %2761 = vst [vmem:[%s2750 + $0x50] sm:$0xff] %v2742
  %2762 = vst [vmem:[%s2750 + $0x58] sm:$0xff] %v2747
  %v2763 = vld [vmem:[%s1] sm:$0xff]
  %v2764 = vld [vmem:[%s1 + $0x8] sm:$0xff]
  %v2765 = vld [vmem:[%s1 + $0x10] sm:$0xff]
  %v2766 = vld [vmem:[%s1 + $0x18] sm:$0xff]
  %v2767 = vld [vmem:[%s1 + $0x20] sm:$0xff]
  %v2768 = vld [vmem:[%s1 + $0x28] sm:$0xff]
  %v2769 = vld [vmem:[%s1 + $0x30] sm:$0xff]
  %v2770 = vld [vmem:[%s1 + $0x38] sm:$0xff]
  %v2771 = vld [vmem:[%s1 + $0x40] sm:$0xff]
  %v2772 = vld [vmem:[%s1 + $0x48] sm:$0xff]
  %v2773 = vld [vmem:[%s1 + $0x50] sm:$0xff]
  %v2774 = vld [vmem:[%s1 + $0x58] sm:$0xff]
  %s2775 = scalar_lea.vmem %s0, 56
  %v2776 = vld [vmem:[%s2775] sm:$0xf]
  %v2778 = vsel %vm102, %v2763, 0
  %v2781 = vsel %vm102, %v2764, 0
  %v2784 = vsel %vm102, %v2765, 0
  %v2787 = vsel %vm102, %v2766, 0
  %v2790 = vsel %vm102, %v2767, 0
  %v2793 = vsel %vm102, %v2768, 0
  %v2796 = vsel %vm102, %v2769, 0
  %v2799 = vsel %vm102, %v2770, 0
  %v2802 = vsel %vm102, %v2771, 0
  %v2805 = vsel %vm102, %v2772, 0
  %v2808 = vsel %vm102, %v2773, 0
  %v2811 = vsel %vm102, %v2774, 0
  %v2814 = vsel %vm139, %v2776, 0
  %2816 = vmatprep.subr.mxu0 0.0
  %2817 = vmatpush1.msra.mxu0 0.0
  %2818 = vmatprep.subr.mxu0 0.0
  %2819 = vmatpush1.msra.mxu0 0.0
  %2820 = vmatprep.subr.mxu0 0.0
  %2821 = vmatpush1.msra.mxu0 0.0
  %2822 = vmatprep.subr.mxu0 0.0
  %2823 = vmatpush1.msra.mxu0 0.0
  %2824 = vmatprep.subr.mxu0 0.0
  %2825 = vmatpush1.msra.mxu0 0.0
  %2826 = vmatprep.subr.mxu0 0.0
  %2827 = vmatpush1.msra.mxu0 0.0
  %2828 = vmatprep.subr.mxu0 0.0
  %2829 = vmatpush1.msra.mxu0 0.0
  %2830 = vmatprep.subr.mxu0 0.0
  %2831 = vmatpush1.msra.mxu0 0.0
  %2832 = vmatprep.subr.mxu0 0.0
  %2833 = vmatpush1.msra.mxu0 0.0
  %2834 = vmatprep.subr.mxu0 0.0
  %2835 = vmatpush1.msra.mxu0 0.0
  %2836 = vmatprep.subr.mxu0 0.0
  %2837 = vmatpush1.msra.mxu0 0.0
  %2838 = vmatprep.subr.mxu0 0.0
  %2839 = vmatpush1.msra.mxu0 0.0
  %2840 = vmatprep.subr.mxu0 0.0
  %2841 = vmatpush1.msra.mxu0 0.0
  %2842 = vmatprep.subr.mxu0 0.0
  %2843 = vmatpush1.msra.mxu0 0.0
  %2844 = vmatprep.subr.mxu0 0.0
  %2845 = vmatpush1.msra.mxu0 0.0
  %2846 = vmatprep.subr.mxu0 0.0
  %2847 = vmatpush1.msra.mxu0 %v2814
  %2848 = vmatprep.subr.mxu0 0.0
  %2849 = vmatpush2.msra.mxu0 0.0
  %2850 = vmatprep.subr.mxu0 0.0
  %2851 = vmatpush2.msra.mxu0 0.0
  %2852 = vmatprep.subr.mxu0 0.0
  %2853 = vmatpush2.msra.mxu0 0.0
  %2854 = vmatprep.subr.mxu0 0.0
  %2855 = vmatpush2.msra.mxu0 0.0
  %2856 = vmatprep.subr.mxu0 0.0
  %2857 = vmatpush2.msra.mxu0 0.0
  %2858 = vmatprep.subr.mxu0 0.0
  %2859 = vmatpush2.msra.mxu0 0.0
  %2860 = vmatprep.subr.mxu0 0.0
  %2861 = vmatpush2.msra.mxu0 0.0
  %2862 = vmatprep.subr.mxu0 0.0
  %2863 = vmatpush2.msra.mxu0 0.0
  %2864 = vmatprep.subr.mxu0 0.0
  %2865 = vmatpush2.msra.mxu0 0.0
  %2866 = vmatprep.subr.mxu0 0.0
  %2867 = vmatpush2.msra.mxu0 0.0
  %2868 = vmatprep.subr.mxu0 0.0
  %2869 = vmatpush2.msra.mxu0 0.0
  %2870 = vmatprep.subr.mxu0 0.0
  %2871 = vmatpush2.msra.mxu0 0.0
  %2872 = vmatprep.subr.mxu0 0.0
  %2873 = vmatpush2.msra.mxu0 0.0
  %2874 = vmatprep.subr.mxu0 0.0
  %2875 = vmatpush2.msra.mxu0 0.0
  %2876 = vmatprep.subr.mxu0 0.0
  %2877 = vmatpush2.msra.mxu0 0.0
  %2878 = vmatprep.subr.mxu0 0.0
  %2879 = vmatpush2.msra.mxu0 0.0
  %2880 = vmatprep.mubr.f32.mxu0 0.0
  %2881 = vmatmul.mubr.f32.gmra.mxu0 %v2778
  %v2882 = vpop.f32.mrf.mxu0
  %v2883 = vadd.f32 %v45, %v2882
  %v2884 = vpop.f32.mrf.mxu0
  %2885 = vmatprep.mubr.f32.mxu0 0.0
  %2886 = vmatmul.mubr.f32.gmra.mxu0 %v2781
  %v2887 = vpop.f32.mrf.mxu0
  %v2888 = vadd.f32 %v50, %v2887
  %v2889 = vpop.f32.mrf.mxu0
  %2890 = vmatprep.mubr.f32.mxu0 0.0
  %2891 = vmatmul.mubr.f32.gmra.mxu0 %v2784
  %v2892 = vpop.f32.mrf.mxu0
  %v2893 = vadd.f32 %v55, %v2892
  %v2894 = vpop.f32.mrf.mxu0
  %2895 = vmatprep.mubr.f32.mxu0 0.0
  %2896 = vmatmul.mubr.f32.gmra.mxu0 %v2787
  %v2897 = vpop.f32.mrf.mxu0
  %v2898 = vadd.f32 %v60, %v2897
  %v2899 = vpop.f32.mrf.mxu0
  %2900 = vmatprep.mubr.f32.mxu0 0.0
  %2901 = vmatmul.mubr.f32.gmra.mxu0 %v2790
  %v2902 = vpop.f32.mrf.mxu0
  %v2903 = vadd.f32 %v65, %v2902
  %v2904 = vpop.f32.mrf.mxu0
  %2905 = vmatprep.mubr.f32.mxu0 0.0
  %2906 = vmatmul.mubr.f32.gmra.mxu0 %v2793
  %v2907 = vpop.f32.mrf.mxu0
  %v2908 = vadd.f32 %v70, %v2907
  %v2909 = vpop.f32.mrf.mxu0
  %2910 = vmatprep.mubr.f32.mxu0 0.0
  %2911 = vmatmul.mubr.f32.gmra.mxu0 %v2796
  %v2912 = vpop.f32.mrf.mxu0
  %v2913 = vadd.f32 %v75, %v2912
  %v2914 = vpop.f32.mrf.mxu0
  %2915 = vmatprep.mubr.f32.mxu0 0.0
  %2916 = vmatmul.mubr.f32.gmra.mxu0 %v2799
  %v2917 = vpop.f32.mrf.mxu0
  %v2918 = vadd.f32 %v80, %v2917
  %v2919 = vpop.f32.mrf.mxu0
  %2920 = vmatprep.mubr.f32.mxu0 0.0
  %2921 = vmatmul.mubr.f32.gmra.mxu0 %v2802
  %v2922 = vpop.f32.mrf.mxu0
  %v2923 = vadd.f32 %v85, %v2922
  %v2924 = vpop.f32.mrf.mxu0
  %2925 = vmatprep.mubr.f32.mxu0 0.0
  %2926 = vmatmul.mubr.f32.gmra.mxu0 %v2805
  %v2927 = vpop.f32.mrf.mxu0
  %v2928 = vadd.f32 %v90, %v2927
  %v2929 = vpop.f32.mrf.mxu0
  %2930 = vmatprep.mubr.f32.mxu0 0.0
  %2931 = vmatmul.mubr.f32.gmra.mxu0 %v2808
  %v2932 = vpop.f32.mrf.mxu0
  %v2933 = vadd.f32 %v95, %v2932
  %v2934 = vpop.f32.mrf.mxu0
  %2935 = vmatprep.mubr.f32.mxu0 0.0
  %2936 = vmatmul.mubr.f32.gmra.mxu0 %v2811
  %v2937 = vpop.f32.mrf.mxu0
  %v2938 = vadd.f32 %v100, %v2937
  %v2939 = vpop.f32.mrf.mxu0
  %2940 = vdwg.mxu0
  %s2941 = scalar_lea.vmem [#allocation2], 1344
  %2942 = vst [vmem:[%s2941] sm:$0xff] %v2883
  %2943 = vst [vmem:[%s2941 + $0x8] sm:$0xff] %v2888
  %2944 = vst [vmem:[%s2941 + $0x10] sm:$0xff] %v2893
  %2945 = vst [vmem:[%s2941 + $0x18] sm:$0xff] %v2898
  %2946 = vst [vmem:[%s2941 + $0x20] sm:$0xff] %v2903
  %2947 = vst [vmem:[%s2941 + $0x28] sm:$0xff] %v2908
  %2948 = vst [vmem:[%s2941 + $0x30] sm:$0xff] %v2913
  %2949 = vst [vmem:[%s2941 + $0x38] sm:$0xff] %v2918
  %2950 = vst [vmem:[%s2941 + $0x40] sm:$0xff] %v2923
  %2951 = vst [vmem:[%s2941 + $0x48] sm:$0xff] %v2928
  %2952 = vst [vmem:[%s2941 + $0x50] sm:$0xff] %v2933
  %2953 = vst [vmem:[%s2941 + $0x58] sm:$0xff] %v2938
  %v2954 = vld [vmem:[%s1] sm:$0xff]
  %v2955 = vld [vmem:[%s1 + $0x8] sm:$0xff]
  %v2956 = vld [vmem:[%s1 + $0x10] sm:$0xff]
  %v2957 = vld [vmem:[%s1 + $0x18] sm:$0xff]
  %v2958 = vld [vmem:[%s1 + $0x20] sm:$0xff]
  %v2959 = vld [vmem:[%s1 + $0x28] sm:$0xff]
  %v2960 = vld [vmem:[%s1 + $0x30] sm:$0xff]
  %v2961 = vld [vmem:[%s1 + $0x38] sm:$0xff]
  %v2962 = vld [vmem:[%s1 + $0x40] sm:$0xff]
  %v2963 = vld [vmem:[%s1 + $0x48] sm:$0xff]
  %v2964 = vld [vmem:[%s1 + $0x50] sm:$0xff]
  %v2965 = vld [vmem:[%s1 + $0x58] sm:$0xff]
  %s2966 = scalar_lea.vmem %s0, 60
  %v2967 = vld [vmem:[%s2966] sm:$0xf]
  %v2969 = vsel %vm102, %v2954, 0
  %v2972 = vsel %vm102, %v2955, 0
  %v2975 = vsel %vm102, %v2956, 0
  %v2978 = vsel %vm102, %v2957, 0
  %v2981 = vsel %vm102, %v2958, 0
  %v2984 = vsel %vm102, %v2959, 0
  %v2987 = vsel %vm102, %v2960, 0
  %v2990 = vsel %vm102, %v2961, 0
  %v2993 = vsel %vm102, %v2962, 0
  %v2996 = vsel %vm102, %v2963, 0
  %v2999 = vsel %vm102, %v2964, 0
  %v3002 = vsel %vm102, %v2965, 0
  %v3005 = vsel %vm139, %v2967, 0
  %3007 = vmatprep.subr.mxu0 0.0
  %3008 = vmatpush1.msra.mxu0 0.0
  %3009 = vmatprep.subr.mxu0 0.0
  %3010 = vmatpush1.msra.mxu0 0.0
  %3011 = vmatprep.subr.mxu0 0.0
  %3012 = vmatpush1.msra.mxu0 0.0
  %3013 = vmatprep.subr.mxu0 0.0
  %3014 = vmatpush1.msra.mxu0 0.0
  %3015 = vmatprep.subr.mxu0 0.0
  %3016 = vmatpush1.msra.mxu0 0.0
  %3017 = vmatprep.subr.mxu0 0.0
  %3018 = vmatpush1.msra.mxu0 0.0
  %3019 = vmatprep.subr.mxu0 0.0
  %3020 = vmatpush1.msra.mxu0 0.0
  %3021 = vmatprep.subr.mxu0 0.0
  %3022 = vmatpush1.msra.mxu0 0.0
  %3023 = vmatprep.subr.mxu0 0.0
  %3024 = vmatpush1.msra.mxu0 0.0
  %3025 = vmatprep.subr.mxu0 0.0
  %3026 = vmatpush1.msra.mxu0 0.0
  %3027 = vmatprep.subr.mxu0 0.0
  %3028 = vmatpush1.msra.mxu0 0.0
  %3029 = vmatprep.subr.mxu0 0.0
  %3030 = vmatpush1.msra.mxu0 0.0
  %3031 = vmatprep.subr.mxu0 0.0
  %3032 = vmatpush1.msra.mxu0 0.0
  %3033 = vmatprep.subr.mxu0 0.0
  %3034 = vmatpush1.msra.mxu0 0.0
  %3035 = vmatprep.subr.mxu0 0.0
  %3036 = vmatpush1.msra.mxu0 0.0
  %3037 = vmatprep.subr.mxu0 0.0
  %3038 = vmatpush1.msra.mxu0 %v3005
  %3039 = vmatprep.subr.mxu0 0.0
  %3040 = vmatpush2.msra.mxu0 0.0
  %3041 = vmatprep.subr.mxu0 0.0
  %3042 = vmatpush2.msra.mxu0 0.0
  %3043 = vmatprep.subr.mxu0 0.0
  %3044 = vmatpush2.msra.mxu0 0.0
  %3045 = vmatprep.subr.mxu0 0.0
  %3046 = vmatpush2.msra.mxu0 0.0
  %3047 = vmatprep.subr.mxu0 0.0
  %3048 = vmatpush2.msra.mxu0 0.0
  %3049 = vmatprep.subr.mxu0 0.0
  %3050 = vmatpush2.msra.mxu0 0.0
  %3051 = vmatprep.subr.mxu0 0.0
  %3052 = vmatpush2.msra.mxu0 0.0
  %3053 = vmatprep.subr.mxu0 0.0
  %3054 = vmatpush2.msra.mxu0 0.0
  %3055 = vmatprep.subr.mxu0 0.0
  %3056 = vmatpush2.msra.mxu0 0.0
  %3057 = vmatprep.subr.mxu0 0.0
  %3058 = vmatpush2.msra.mxu0 0.0
  %3059 = vmatprep.subr.mxu0 0.0
  %3060 = vmatpush2.msra.mxu0 0.0
  %3061 = vmatprep.subr.mxu0 0.0
  %3062 = vmatpush2.msra.mxu0 0.0
  %3063 = vmatprep.subr.mxu0 0.0
  %3064 = vmatpush2.msra.mxu0 0.0
  %3065 = vmatprep.subr.mxu0 0.0
  %3066 = vmatpush2.msra.mxu0 0.0
  %3067 = vmatprep.subr.mxu0 0.0
  %3068 = vmatpush2.msra.mxu0 0.0
  %3069 = vmatprep.subr.mxu0 0.0
  %3070 = vmatpush2.msra.mxu0 0.0
  %3071 = vmatprep.mubr.f32.mxu0 0.0
  %3072 = vmatmul.mubr.f32.gmra.mxu0 %v2969
  %v3073 = vpop.f32.mrf.mxu0
  %v3074 = vadd.f32 %v45, %v3073
  %v3075 = vpop.f32.mrf.mxu0
  %3076 = vmatprep.mubr.f32.mxu0 0.0
  %3077 = vmatmul.mubr.f32.gmra.mxu0 %v2972
  %v3078 = vpop.f32.mrf.mxu0
  %v3079 = vadd.f32 %v50, %v3078
  %v3080 = vpop.f32.mrf.mxu0
  %3081 = vmatprep.mubr.f32.mxu0 0.0
  %3082 = vmatmul.mubr.f32.gmra.mxu0 %v2975
  %v3083 = vpop.f32.mrf.mxu0
  %v3084 = vadd.f32 %v55, %v3083
  %v3085 = vpop.f32.mrf.mxu0
  %3086 = vmatprep.mubr.f32.mxu0 0.0
  %3087 = vmatmul.mubr.f32.gmra.mxu0 %v2978
  %v3088 = vpop.f32.mrf.mxu0
  %v3089 = vadd.f32 %v60, %v3088
  %v3090 = vpop.f32.mrf.mxu0
  %3091 = vmatprep.mubr.f32.mxu0 0.0
  %3092 = vmatmul.mubr.f32.gmra.mxu0 %v2981
  %v3093 = vpop.f32.mrf.mxu0
  %v3094 = vadd.f32 %v65, %v3093
  %v3095 = vpop.f32.mrf.mxu0
  %3096 = vmatprep.mubr.f32.mxu0 0.0
  %3097 = vmatmul.mubr.f32.gmra.mxu0 %v2984
  %v3098 = vpop.f32.mrf.mxu0
  %v3099 = vadd.f32 %v70, %v3098
  %v3100 = vpop.f32.mrf.mxu0
  %3101 = vmatprep.mubr.f32.mxu0 0.0
  %3102 = vmatmul.mubr.f32.gmra.mxu0 %v2987
  %v3103 = vpop.f32.mrf.mxu0
  %v3104 = vadd.f32 %v75, %v3103
  %v3105 = vpop.f32.mrf.mxu0
  %3106 = vmatprep.mubr.f32.mxu0 0.0
  %3107 = vmatmul.mubr.f32.gmra.mxu0 %v2990
  %v3108 = vpop.f32.mrf.mxu0
  %v3109 = vadd.f32 %v80, %v3108
  %v3110 = vpop.f32.mrf.mxu0
  %3111 = vmatprep.mubr.f32.mxu0 0.0
  %3112 = vmatmul.mubr.f32.gmra.mxu0 %v2993
  %v3113 = vpop.f32.mrf.mxu0
  %v3114 = vadd.f32 %v85, %v3113
  %v3115 = vpop.f32.mrf.mxu0
  %3116 = vmatprep.mubr.f32.mxu0 0.0
  %3117 = vmatmul.mubr.f32.gmra.mxu0 %v2996
  %v3118 = vpop.f32.mrf.mxu0
  %v3119 = vadd.f32 %v90, %v3118
  %v3120 = vpop.f32.mrf.mxu0
  %3121 = vmatprep.mubr.f32.mxu0 0.0
  %3122 = vmatmul.mubr.f32.gmra.mxu0 %v2999
  %v3123 = vpop.f32.mrf.mxu0
  %v3124 = vadd.f32 %v95, %v3123
  %v3125 = vpop.f32.mrf.mxu0
  %3126 = vmatprep.mubr.f32.mxu0 0.0
  %3127 = vmatmul.mubr.f32.gmra.mxu0 %v3002
  %v3128 = vpop.f32.mrf.mxu0
  %v3129 = vadd.f32 %v100, %v3128
  %v3130 = vpop.f32.mrf.mxu0
  %3131 = vdwg.mxu0
  %s3132 = scalar_lea.vmem [#allocation2], 1440
  %3133 = vst [vmem:[%s3132] sm:$0xff] %v3074
  %3134 = vst [vmem:[%s3132 + $0x8] sm:$0xff] %v3079
  %3135 = vst [vmem:[%s3132 + $0x10] sm:$0xff] %v3084
  %3136 = vst [vmem:[%s3132 + $0x18] sm:$0xff] %v3089
  %3137 = vst [vmem:[%s3132 + $0x20] sm:$0xff] %v3094
  %3138 = vst [vmem:[%s3132 + $0x28] sm:$0xff] %v3099
  %3139 = vst [vmem:[%s3132 + $0x30] sm:$0xff] %v3104
  %3140 = vst [vmem:[%s3132 + $0x38] sm:$0xff] %v3109
  %3141 = vst [vmem:[%s3132 + $0x40] sm:$0xff] %v3114
  %3142 = vst [vmem:[%s3132 + $0x48] sm:$0xff] %v3119
  %3143 = vst [vmem:[%s3132 + $0x50] sm:$0xff] %v3124
  %3144 = vst [vmem:[%s3132 + $0x58] sm:$0xff] %v3129
  %v3145 = vld [vmem:[%s2] sm:$0xff]
  %v3146 = vld [vmem:[%s2 + $0x8] sm:$0xff]
  %v3147 = vld [vmem:[%s2 + $0x10] sm:$0xff]
  %v3148 = vld [vmem:[%s2 + $0x18] sm:$0xff]
  %v3149 = vld [vmem:[%s2 + $0x20] sm:$0xff]
  %v3150 = vld [vmem:[%s2 + $0x28] sm:$0xff]
  %v3151 = vld [vmem:[%s2 + $0x30] sm:$0xff]
  %v3152 = vld [vmem:[%s2 + $0x38] sm:$0xff]
  %v3153 = vld [vmem:[%s2 + $0x40] sm:$0xff]
  %v3154 = vld [vmem:[%s2 + $0x48] sm:$0xff]
  %v3155 = vld [vmem:[%s2 + $0x50] sm:$0xff]
  %v3156 = vld [vmem:[%s2 + $0x58] sm:$0xff]
  %v3157 = vld [vmem:[%s3 + $0x60] sm:$0xff]
  %v3158 = vld [vmem:[%s3 + $0x68] sm:$0xff]
  %v3159 = vld [vmem:[%s3 + $0x70] sm:$0xff]
  %v3160 = vld [vmem:[%s3 + $0x78] sm:$0xff]
  %v3161 = vld [vmem:[#allocation2] sm:$0xff]
  %v3162 = vld [vmem:[#allocation2 + $0x8] sm:$0xff]
  %v3163 = vld [vmem:[#allocation2 + $0x10] sm:$0xff]
  %v3164 = vld [vmem:[#allocation2 + $0x18] sm:$0xff]
  %v3165 = vld [vmem:[#allocation2 + $0x20] sm:$0xff]
  %v3166 = vld [vmem:[#allocation2 + $0x28] sm:$0xff]
  %vm3167 = vcmask 130048
  %v3169 = vsel %vm3167, %v3145, 0
  %v3172 = vsel %vm3167, %v3146, 0
  %v3175 = vsel %vm3167, %v3147, 0
  %v3178 = vsel %vm3167, %v3148, 0
  %v3181 = vsel %vm3167, %v3149, 0
  %v3184 = vsel %vm3167, %v3150, 0
  %3186 = vmatprep.subr.mxu0 0.0
  %3187 = vmatpush1.msra.mxu0 0.0
  %3188 = vmatprep.subr.mxu0 0.0
  %3189 = vmatpush1.msra.mxu0 0.0
  %3190 = vmatprep.subr.mxu0 0.0
  %3191 = vmatpush1.msra.mxu0 0.0
  %3192 = vmatprep.subr.mxu0 0.0
  %3193 = vmatpush1.msra.mxu0 0.0
  %3194 = vmatprep.subr.mxu0 0.0
  %3195 = vmatpush1.msra.mxu0 0.0
  %3196 = vmatprep.subr.mxu0 0.0
  %3197 = vmatpush1.msra.mxu0 0.0
  %3198 = vmatprep.subr.mxu0 0.0
  %3199 = vmatpush1.msra.mxu0 0.0
  %3200 = vmatprep.subr.mxu0 0.0
  %3201 = vmatpush1.msra.mxu0 0.0
  %3202 = vmatprep.subr.mxu0 0.0
  %3203 = vmatpush1.msra.mxu0 0.0
  %3204 = vmatprep.subr.mxu0 0.0
  %3205 = vmatpush1.msra.mxu0 0.0
  %3206 = vmatprep.subr.mxu0 0.0
  %3207 = vmatpush1.msra.mxu0 0.0
  %3208 = vmatprep.subr.mxu0 0.0
  %3209 = vmatpush1.msra.mxu0 0.0
  %3210 = vmatprep.subr.mxu0 0.0
  %3211 = vmatpush1.msra.mxu0 0.0
  %3212 = vmatprep.subr.mxu0 0.0
  %3213 = vmatpush1.msra.mxu0 0.0
  %3214 = vmatprep.subr.mxu0 0.0
  %3215 = vmatpush1.msra.mxu0 0.0
  %3216 = vmatprep.subr.mxu0 0.0
  %3217 = vmatpush1.msra.mxu0 0.0
  %3218 = vmatprep.subr.mxu0 0.0
  %3219 = vmatpush2.msra.mxu0 0.0
  %3220 = vmatprep.subr.mxu0 0.0
  %3221 = vmatpush2.msra.mxu0 0.0
  %3222 = vmatprep.subr.mxu0 0.0
  %3223 = vmatpush2.msra.mxu0 0.0
  %3224 = vmatprep.subr.mxu0 0.0
  %3225 = vmatpush2.msra.mxu0 0.0
  %3226 = vmatprep.subr.mxu0 0.0
  %3227 = vmatpush2.msra.mxu0 0.0
  %3228 = vmatprep.subr.mxu0 0.0
  %3229 = vmatpush2.msra.mxu0 0.0
  %3230 = vmatprep.subr.mxu0 0.0
  %3231 = vmatpush2.msra.mxu0 0.0
  %3232 = vmatprep.subr.mxu0 0.0
  %3233 = vmatpush2.msra.mxu0 0.0
  %3234 = vmatprep.subr.mxu0 0.0
  %3235 = vmatpush2.msra.mxu0 0.0
  %3236 = vmatprep.subr.mxu0 0.0
  %3237 = vmatpush2.msra.mxu0 0.0
  %3238 = vmatprep.subr.mxu0 0.0
  %3239 = vmatpush2.msra.mxu0 0.0
  %3240 = vmatprep.subr.mxu0 0.0
  %3241 = vmatpush2.msra.mxu0 0.0
  %3242 = vmatprep.subr.mxu0 0.0
  %3243 = vmatpush2.msra.mxu0 0.0
  %3244 = vmatprep.subr.mxu0 0.0
  %3245 = vmatpush2.msra.mxu0 0.0
  %3246 = vmatprep.subr.mxu0 0.0
  %3247 = vmatpush2.msra.mxu0 0.0
  %3248 = vmatprep.subr.mxu0 0.0
  %3249 = vmatpush2.msra.mxu0 0.0
  %3250 = vmatprep.mubr.f32.mxu0 0.0
  %3251 = vmatmul.mubr.f32.gmra.mxu0 %v3169
  %v3252 = vpop.f32.mrf.mxu0
  %v3253 = vadd.f32 0.0, %v3252
  %v3254 = vpop.f32.mrf.mxu0
  %3255 = vmatprep.mubr.f32.mxu0 0.0
  %3256 = vmatmul.mubr.f32.gmra.mxu0 %v3172
  %v3257 = vpop.f32.mrf.mxu0
  %v3258 = vadd.f32 0.0, %v3257
  %v3259 = vpop.f32.mrf.mxu0
  %3260 = vmatprep.mubr.f32.mxu0 0.0
  %3261 = vmatmul.mubr.f32.gmra.mxu0 %v3175
  %v3262 = vpop.f32.mrf.mxu0
  %v3263 = vadd.f32 0.0, %v3262
  %v3264 = vpop.f32.mrf.mxu0
  %3265 = vmatprep.mubr.f32.mxu0 0.0
  %3266 = vmatmul.mubr.f32.gmra.mxu0 %v3178
  %v3267 = vpop.f32.mrf.mxu0
  %v3268 = vadd.f32 0.0, %v3267
  %v3269 = vpop.f32.mrf.mxu0
  %3270 = vmatprep.mubr.f32.mxu0 0.0
  %3271 = vmatmul.mubr.f32.gmra.mxu0 %v3181
  %v3272 = vpop.f32.mrf.mxu0
  %v3273 = vadd.f32 0.0, %v3272
  %v3274 = vpop.f32.mrf.mxu0
  %3275 = vmatprep.mubr.f32.mxu0 0.0
  %3276 = vmatmul.mubr.f32.gmra.mxu0 %v3184
  %v3277 = vpop.f32.mrf.mxu0
  %v3278 = vadd.f32 0.0, %v3277
  %v3279 = vpop.f32.mrf.mxu0
  %3280 = vdwg.mxu0
  %v3281 = vadd.f32 %v3161, %v3253
  %v3282 = vadd.f32 %v3162, %v3258
  %v3283 = vmul.f32 %v3281, 0.5
  %v3284 = vmul.f32 %v3282, 0.5
  %v3285 = vtanh.pop %v3283
  %v3286 = vtanh.pop %v3284
  %v3287 = vmul.f32 %v3285, 0.5
  %v3288 = vmul.f32 %v3286, 0.5
  %v3289 = vadd.f32 %v3287, 0.5
  %v3290 = vadd.f32 %v3288, 0.5
  %v3291 = vadd.f32 %v3163, %v3263
  %v3292 = vadd.f32 %v3164, %v3268
  %v3293 = vmul.f32 %v3291, 0.5
  %v3294 = vmul.f32 %v3292, 0.5
  %v3295 = vtanh.pop %v3293
  %v3296 = vtanh.pop %v3294
  %v3297 = vmul.f32 %v3295, 0.5
  %v3298 = vmul.f32 %v3296, 0.5
  %v3299 = vadd.f32 %v3297, 0.5
  %v3300 = vadd.f32 %v3298, 0.5
  %3302 = vset.pattern.permute.xlu0 0
  %3303 = vperm.xlu0 %3302, %v3157
  %v3304 = vpop.permute.xlu0 %3303
  %3307 = vset.pattern.permute.xlu0 0
  %3308 = vperm.xlu0 %3307, %v3158
  %v3309 = vpop.permute.xlu0 %3308
  %v3311 = vadd.f32 %v3273, %v3304
  %v3312 = vadd.f32 %v3278, %v3309
  %v3313 = vmul.f32 %v3289, %v3311
  %v3314 = vmul.f32 %v3290, %v3312
  %v3315 = vadd.f32 %v3165, %v3313
  %v3316 = vadd.f32 %v3166, %v3314
  %v3317 = vtanh.pop %v3315
  %v3318 = vtanh.pop %v3316
  %v3319 = vsub.f32 1.0, %v3299
  %v3320 = vsub.f32 1.0, %v3300
  %v3321 = vmul.f32 %v3319, %v3317
  %v3322 = vmul.f32 %v3320, %v3318
  %v3323 = vmul.f32 %v3299, 0.0
  %v3324 = vmul.f32 %v3300, 0.0
  %v3325 = vadd.f32 %v3321, %v3323
  %v3326 = vadd.f32 %v3322, %v3324
  %v3327 = vld [vmem:[%s3132 + $0x30] sm:$0xff]
  %v3328 = vld [vmem:[%s3132 + $0x38] sm:$0xff]
  %v3329 = vld [vmem:[%s3132 + $0x40] sm:$0xff]
  %v3330 = vld [vmem:[%s3132 + $0x48] sm:$0xff]
  %v3331 = vld [vmem:[%s3132 + $0x50] sm:$0xff]
  %v3332 = vld [vmem:[%s3132 + $0x58] sm:$0xff]
  %v3334 = vsel %vm3167, %v3151, 0
  %v3337 = vsel %vm3167, %v3152, 0
  %v3340 = vsel %vm3167, %v3153, 0
  %v3343 = vsel %vm3167, %v3154, 0
  %v3346 = vsel %vm3167, %v3155, 0
  %v3349 = vsel %vm3167, %v3156, 0
  %3351 = vmatprep.subr.mxu0 0.0
  %3352 = vmatpush1.msra.mxu0 0.0
  %3353 = vmatprep.subr.mxu0 0.0
  %3354 = vmatpush1.msra.mxu0 0.0
  %3355 = vmatprep.subr.mxu0 0.0
  %3356 = vmatpush1.msra.mxu0 0.0
  %3357 = vmatprep.subr.mxu0 0.0
  %3358 = vmatpush1.msra.mxu0 0.0
  %3359 = vmatprep.subr.mxu0 0.0
  %3360 = vmatpush1.msra.mxu0 0.0
  %3361 = vmatprep.subr.mxu0 0.0
  %3362 = vmatpush1.msra.mxu0 0.0
  %3363 = vmatprep.subr.mxu0 0.0
  %3364 = vmatpush1.msra.mxu0 0.0
  %3365 = vmatprep.subr.mxu0 0.0
  %3366 = vmatpush1.msra.mxu0 0.0
  %3367 = vmatprep.subr.mxu0 0.0
  %3368 = vmatpush1.msra.mxu0 0.0
  %3369 = vmatprep.subr.mxu0 0.0
  %3370 = vmatpush1.msra.mxu0 0.0
  %3371 = vmatprep.subr.mxu0 0.0
  %3372 = vmatpush1.msra.mxu0 0.0
  %3373 = vmatprep.subr.mxu0 0.0
  %3374 = vmatpush1.msra.mxu0 0.0
  %3375 = vmatprep.subr.mxu0 0.0
  %3376 = vmatpush1.msra.mxu0 0.0
  %3377 = vmatprep.subr.mxu0 0.0
  %3378 = vmatpush1.msra.mxu0 0.0
  %3379 = vmatprep.subr.mxu0 0.0
  %3380 = vmatpush1.msra.mxu0 0.0
  %3381 = vmatprep.subr.mxu0 0.0
  %3382 = vmatpush1.msra.mxu0 0.0
  %3383 = vmatprep.subr.mxu0 0.0
  %3384 = vmatpush2.msra.mxu0 0.0
  %3385 = vmatprep.subr.mxu0 0.0
  %3386 = vmatpush2.msra.mxu0 0.0
  %3387 = vmatprep.subr.mxu0 0.0
  %3388 = vmatpush2.msra.mxu0 0.0
  %3389 = vmatprep.subr.mxu0 0.0
  %3390 = vmatpush2.msra.mxu0 0.0
  %3391 = vmatprep.subr.mxu0 0.0
  %3392 = vmatpush2.msra.mxu0 0.0
  %3393 = vmatprep.subr.mxu0 0.0
  %3394 = vmatpush2.msra.mxu0 0.0
  %3395 = vmatprep.subr.mxu0 0.0
  %3396 = vmatpush2.msra.mxu0 0.0
  %3397 = vmatprep.subr.mxu0 0.0
  %3398 = vmatpush2.msra.mxu0 0.0
  %3399 = vmatprep.subr.mxu0 0.0
  %3400 = vmatpush2.msra.mxu0 0.0
  %3401 = vmatprep.subr.mxu0 0.0
  %3402 = vmatpush2.msra.mxu0 0.0
  %3403 = vmatprep.subr.mxu0 0.0
  %3404 = vmatpush2.msra.mxu0 0.0
  %3405 = vmatprep.subr.mxu0 0.0
  %3406 = vmatpush2.msra.mxu0 0.0
  %3407 = vmatprep.subr.mxu0 0.0
  %3408 = vmatpush2.msra.mxu0 0.0
  %3409 = vmatprep.subr.mxu0 0.0
  %3410 = vmatpush2.msra.mxu0 0.0
  %3411 = vmatprep.subr.mxu0 0.0
  %3412 = vmatpush2.msra.mxu0 0.0
  %3413 = vmatprep.subr.mxu0 0.0
  %3414 = vmatpush2.msra.mxu0 0.0
  %3415 = vmatprep.mubr.f32.mxu0 0.0
  %3416 = vmatmul.mubr.f32.gmra.mxu0 %v3334
  %v3417 = vpop.f32.mrf.mxu0
  %v3418 = vadd.f32 0.0, %v3417
  %v3419 = vpop.f32.mrf.mxu0
  %3420 = vmatprep.mubr.f32.mxu0 0.0
  %3421 = vmatmul.mubr.f32.gmra.mxu0 %v3337
  %v3422 = vpop.f32.mrf.mxu0
  %v3423 = vadd.f32 0.0, %v3422
  %v3424 = vpop.f32.mrf.mxu0
  %3425 = vmatprep.mubr.f32.mxu0 0.0
  %3426 = vmatmul.mubr.f32.gmra.mxu0 %v3340
  %v3427 = vpop.f32.mrf.mxu0
  %v3428 = vadd.f32 0.0, %v3427
  %v3429 = vpop.f32.mrf.mxu0
  %3430 = vmatprep.mubr.f32.mxu0 0.0
  %3431 = vmatmul.mubr.f32.gmra.mxu0 %v3343
  %v3432 = vpop.f32.mrf.mxu0
  %v3433 = vadd.f32 0.0, %v3432
  %v3434 = vpop.f32.mrf.mxu0
  %3435 = vmatprep.mubr.f32.mxu0 0.0
  %3436 = vmatmul.mubr.f32.gmra.mxu0 %v3346
  %v3437 = vpop.f32.mrf.mxu0
  %v3438 = vadd.f32 0.0, %v3437
  %v3439 = vpop.f32.mrf.mxu0
  %3440 = vmatprep.mubr.f32.mxu0 0.0
  %3441 = vmatmul.mubr.f32.gmra.mxu0 %v3349
  %v3442 = vpop.f32.mrf.mxu0
  %v3443 = vadd.f32 0.0, %v3442
  %v3444 = vpop.f32.mrf.mxu0
  %3445 = vdwg.mxu0
  %v3446 = vadd.f32 %v3327, %v3418
  %v3447 = vadd.f32 %v3328, %v3423
  %v3448 = vmul.f32 %v3446, 0.5
  %v3449 = vmul.f32 %v3447, 0.5
  %v3450 = vtanh.pop %v3448
  %v3451 = vtanh.pop %v3449
  %v3452 = vmul.f32 %v3450, 0.5
  %v3453 = vmul.f32 %v3451, 0.5
  %v3454 = vadd.f32 %v3452, 0.5
  %v3455 = vadd.f32 %v3453, 0.5
  %v3456 = vadd.f32 %v3329, %v3428
  %v3457 = vadd.f32 %v3330, %v3433
  %v3458 = vmul.f32 %v3456, 0.5
  %v3459 = vmul.f32 %v3457, 0.5
  %v3460 = vtanh.pop %v3458
  %v3461 = vtanh.pop %v3459
  %v3462 = vmul.f32 %v3460, 0.5
  %v3463 = vmul.f32 %v3461, 0.5
  %v3464 = vadd.f32 %v3462, 0.5
  %v3465 = vadd.f32 %v3463, 0.5
  %3467 = vset.pattern.permute.xlu0 0
  %3468 = vperm.xlu0 %3467, %v3159
  %v3469 = vpop.permute.xlu0 %3468
  %3472 = vset.pattern.permute.xlu0 0
  %3473 = vperm.xlu0 %3472, %v3160
  %v3474 = vpop.permute.xlu0 %3473
  %v3476 = vadd.f32 %v3438, %v3469
  %v3477 = vadd.f32 %v3443, %v3474
  %v3478 = vmul.f32 %v3454, %v3476
  %v3479 = vmul.f32 %v3455, %v3477
  %v3480 = vadd.f32 %v3331, %v3478
  %v3481 = vadd.f32 %v3332, %v3479
  %v3482 = vtanh.pop %v3480
  %v3483 = vtanh.pop %v3481
  %v3484 = vsub.f32 1.0, %v3464
  %v3485 = vsub.f32 1.0, %v3465
  %v3486 = vmul.f32 %v3484, %v3482
  %v3487 = vmul.f32 %v3485, %v3483
  %v3488 = vmul.f32 %v3464, 0.0
  %v3489 = vmul.f32 %v3465, 0.0
  %v3490 = vadd.f32 %v3486, %v3488
  %v3491 = vadd.f32 %v3487, %v3489
  %3492 = vst [vmem:[%s4] sm:$0xff] %v3325
  %3493 = vst [vmem:[%s4 + $0x8] sm:$0xff] %v3326
  %s3494 = scalar_lea.vmem %s4, 480
  %3495 = vst [vmem:[%s3494 + $0x10] sm:$0xff] %v3490
  %3496 = vst [vmem:[%s3494 + $0x18] sm:$0xff] %v3491
  %v3497 = vld [vmem:[%s458] sm:$0xff]
  %v3498 = vld [vmem:[%s458 + $0x8] sm:$0xff]
  %v3499 = vld [vmem:[%s458 + $0x10] sm:$0xff]
  %v3500 = vld [vmem:[%s458 + $0x18] sm:$0xff]
  %v3501 = vld [vmem:[%s458 + $0x20] sm:$0xff]
  %v3502 = vld [vmem:[%s458 + $0x28] sm:$0xff]
  %3503 = vmatprep.subr.mxu0 0.0
  %3504 = vmatpush1.msra.mxu0 0.0
  %3505 = vmatprep.subr.mxu0 0.0
  %3506 = vmatpush1.msra.mxu0 0.0
  %3507 = vmatprep.subr.mxu0 0.0
  %3508 = vmatpush1.msra.mxu0 0.0
  %3509 = vmatprep.subr.mxu0 0.0
  %3510 = vmatpush1.msra.mxu0 0.0
  %3511 = vmatprep.subr.mxu0 0.0
  %3512 = vmatpush1.msra.mxu0 0.0
  %3513 = vmatprep.subr.mxu0 0.0
  %3514 = vmatpush1.msra.mxu0 0.0
  %3515 = vmatprep.subr.mxu0 0.0
  %3516 = vmatpush1.msra.mxu0 0.0
  %3517 = vmatprep.subr.mxu0 0.0
  %3518 = vmatpush1.msra.mxu0 0.0
  %3519 = vmatprep.subr.mxu0 0.0
  %3520 = vmatpush1.msra.mxu0 0.0
  %3521 = vmatprep.subr.mxu0 0.0
  %3522 = vmatpush1.msra.mxu0 0.0
  %3523 = vmatprep.subr.mxu0 0.0
  %3524 = vmatpush1.msra.mxu0 0.0
  %3525 = vmatprep.subr.mxu0 0.0
  %3526 = vmatpush1.msra.mxu0 0.0
  %3527 = vmatprep.subr.mxu0 0.0
  %3528 = vmatpush1.msra.mxu0 0.0
  %3529 = vmatprep.subr.mxu0 0.0
  %3530 = vmatpush1.msra.mxu0 0.0
  %3531 = vmatprep.subr.mxu0 0.0
  %3532 = vmatpush1.msra.mxu0 %v3326
  %3533 = vmatprep.subr.mxu0 0.0
  %3534 = vmatpush1.msra.mxu0 %v3325
  %3535 = vmatprep.subr.mxu0 0.0
  %3536 = vmatpush2.msra.mxu0 0.0
  %3537 = vmatprep.subr.mxu0 0.0
  %3538 = vmatpush2.msra.mxu0 0.0
  %3539 = vmatprep.subr.mxu0 0.0
  %3540 = vmatpush2.msra.mxu0 0.0
  %3541 = vmatprep.subr.mxu0 0.0
  %3542 = vmatpush2.msra.mxu0 0.0
  %3543 = vmatprep.subr.mxu0 0.0
  %3544 = vmatpush2.msra.mxu0 0.0
  %3545 = vmatprep.subr.mxu0 0.0
  %3546 = vmatpush2.msra.mxu0 0.0
  %3547 = vmatprep.subr.mxu0 0.0
  %3548 = vmatpush2.msra.mxu0 0.0
  %3549 = vmatprep.subr.mxu0 0.0
  %3550 = vmatpush2.msra.mxu0 0.0
  %3551 = vmatprep.subr.mxu0 0.0
  %3552 = vmatpush2.msra.mxu0 0.0
  %3553 = vmatprep.subr.mxu0 0.0
  %3554 = vmatpush2.msra.mxu0 0.0
  %3555 = vmatprep.subr.mxu0 0.0
  %3556 = vmatpush2.msra.mxu0 0.0
  %3557 = vmatprep.subr.mxu0 0.0
  %3558 = vmatpush2.msra.mxu0 0.0
  %3559 = vmatprep.subr.mxu0 0.0
  %3560 = vmatpush2.msra.mxu0 0.0
  %3561 = vmatprep.subr.mxu0 0.0
  %3562 = vmatpush2.msra.mxu0 0.0
  %3563 = vmatprep.subr.mxu0 0.0
  %3564 = vmatpush2.msra.mxu0 0.0
  %3565 = vmatprep.subr.mxu0 0.0
  %3566 = vmatpush2.msra.mxu0 0.0
  %3567 = vmatprep.mubr.f32.mxu0 0.0
  %3568 = vmatmul.mubr.f32.gmra.mxu0 %v3169
  %v3569 = vpop.f32.mrf.mxu0
  %v3570 = vadd.f32 0.0, %v3569
  %v3571 = vpop.f32.mrf.mxu0
  %3572 = vmatprep.mubr.f32.mxu0 0.0
  %3573 = vmatmul.mubr.f32.gmra.mxu0 %v3172
  %v3574 = vpop.f32.mrf.mxu0
  %v3575 = vadd.f32 0.0, %v3574
  %v3576 = vpop.f32.mrf.mxu0
  %3577 = vmatprep.mubr.f32.mxu0 0.0
  %3578 = vmatmul.mubr.f32.gmra.mxu0 %v3175
  %v3579 = vpop.f32.mrf.mxu0
  %v3580 = vadd.f32 0.0, %v3579
  %v3581 = vpop.f32.mrf.mxu0
  %3582 = vmatprep.mubr.f32.mxu0 0.0
  %3583 = vmatmul.mubr.f32.gmra.mxu0 %v3178
  %v3584 = vpop.f32.mrf.mxu0
  %v3585 = vadd.f32 0.0, %v3584
  %v3586 = vpop.f32.mrf.mxu0
  %3587 = vmatprep.mubr.f32.mxu0 0.0
  %3588 = vmatmul.mubr.f32.gmra.mxu0 %v3181
  %v3589 = vpop.f32.mrf.mxu0
  %v3590 = vadd.f32 0.0, %v3589
  %v3591 = vpop.f32.mrf.mxu0
  %3592 = vmatprep.mubr.f32.mxu0 0.0
  %3593 = vmatmul.mubr.f32.gmra.mxu0 %v3184
  %v3594 = vpop.f32.mrf.mxu0
  %v3595 = vadd.f32 0.0, %v3594
  %v3596 = vpop.f32.mrf.mxu0
  %3597 = vdwg.mxu0
  %v3598 = vadd.f32 %v3497, %v3570
  %v3599 = vadd.f32 %v3498, %v3575
  %v3600 = vmul.f32 %v3598, 0.5
  %v3601 = vmul.f32 %v3599, 0.5
  %v3602 = vtanh.pop %v3600
  %v3603 = vtanh.pop %v3601
  %v3604 = vmul.f32 %v3602, 0.5
  %v3605 = vmul.f32 %v3603, 0.5
  %v3606 = vadd.f32 %v3604, 0.5
  %v3607 = vadd.f32 %v3605, 0.5
  %v3608 = vadd.f32 %v3499, %v3580
  %v3609 = vadd.f32 %v3500, %v3585
  %v3610 = vmul.f32 %v3608, 0.5
  %v3611 = vmul.f32 %v3609, 0.5
  %v3612 = vtanh.pop %v3610
  %v3613 = vtanh.pop %v3611
  %v3614 = vmul.f32 %v3612, 0.5
  %v3615 = vmul.f32 %v3613, 0.5
  %v3616 = vadd.f32 %v3614, 0.5
  %v3617 = vadd.f32 %v3615, 0.5
  %v3618 = vadd.f32 %v3590, %v3304
  %v3619 = vadd.f32 %v3595, %v3309
  %v3620 = vmul.f32 %v3606, %v3618
  %v3621 = vmul.f32 %v3607, %v3619
  %v3622 = vadd.f32 %v3501, %v3620
  %v3623 = vadd.f32 %v3502, %v3621
  %v3624 = vtanh.pop %v3622
  %v3625 = vtanh.pop %v3623
  %v3626 = vsub.f32 1.0, %v3616
  %v3627 = vsub.f32 1.0, %v3617
  %v3628 = vmul.f32 %v3626, %v3624
  %v3629 = vmul.f32 %v3627, %v3625
  %v3630 = vmul.f32 %v3616, %v3325
  %v3631 = vmul.f32 %v3617, %v3326
  %v3632 = vadd.f32 %v3628, %v3630
  %v3633 = vadd.f32 %v3629, %v3631
  %v3634 = vld [vmem:[%s2941 + $0x30] sm:$0xff]
  %v3635 = vld [vmem:[%s2941 + $0x38] sm:$0xff]
  %v3636 = vld [vmem:[%s2941 + $0x40] sm:$0xff]
  %v3637 = vld [vmem:[%s2941 + $0x48] sm:$0xff]
  %v3638 = vld [vmem:[%s2941 + $0x50] sm:$0xff]
  %v3639 = vld [vmem:[%s2941 + $0x58] sm:$0xff]
  %3640 = vmatprep.subr.mxu0 0.0
  %3641 = vmatpush1.msra.mxu0 0.0
  %3642 = vmatprep.subr.mxu0 0.0
  %3643 = vmatpush1.msra.mxu0 0.0
  %3644 = vmatprep.subr.mxu0 0.0
  %3645 = vmatpush1.msra.mxu0 0.0
  %3646 = vmatprep.subr.mxu0 0.0
  %3647 = vmatpush1.msra.mxu0 0.0
  %3648 = vmatprep.subr.mxu0 0.0
  %3649 = vmatpush1.msra.mxu0 0.0
  %3650 = vmatprep.subr.mxu0 0.0
  %3651 = vmatpush1.msra.mxu0 0.0
  %3652 = vmatprep.subr.mxu0 0.0
  %3653 = vmatpush1.msra.mxu0 0.0
  %3654 = vmatprep.subr.mxu0 0.0
  %3655 = vmatpush1.msra.mxu0 0.0
  %3656 = vmatprep.subr.mxu0 0.0
  %3657 = vmatpush1.msra.mxu0 0.0
  %3658 = vmatprep.subr.mxu0 0.0
  %3659 = vmatpush1.msra.mxu0 0.0
  %3660 = vmatprep.subr.mxu0 0.0
  %3661 = vmatpush1.msra.mxu0 0.0
  %3662 = vmatprep.subr.mxu0 0.0
  %3663 = vmatpush1.msra.mxu0 0.0
  %3664 = vmatprep.subr.mxu0 0.0
  %3665 = vmatpush1.msra.mxu0 0.0
  %3666 = vmatprep.subr.mxu0 0.0
  %3667 = vmatpush1.msra.mxu0 0.0
  %3668 = vmatprep.subr.mxu0 0.0
  %3669 = vmatpush1.msra.mxu0 %v3491
  %3670 = vmatprep.subr.mxu0 0.0
  %3671 = vmatpush1.msra.mxu0 %v3490
  %3672 = vmatprep.subr.mxu0 0.0
  %3673 = vmatpush2.msra.mxu0 0.0
  %3674 = vmatprep.subr.mxu0 0.0
  %3675 = vmatpush2.msra.mxu0 0.0
  %3676 = vmatprep.subr.mxu0 0.0
  %3677 = vmatpush2.msra.mxu0 0.0
  %3678 = vmatprep.subr.mxu0 0.0
  %3679 = vmatpush2.msra.mxu0 0.0
  %3680 = vmatprep.subr.mxu0 0.0
  %3681 = vmatpush2.msra.mxu0 0.0
  %3682 = vmatprep.subr.mxu0 0.0
  %3683 = vmatpush2.msra.mxu0 0.0
  %3684 = vmatprep.subr.mxu0 0.0
  %3685 = vmatpush2.msra.mxu0 0.0
  %3686 = vmatprep.subr.mxu0 0.0
  %3687 = vmatpush2.msra.mxu0 0.0
  %3688 = vmatprep.subr.mxu0 0.0
  %3689 = vmatpush2.msra.mxu0 0.0
  %3690 = vmatprep.subr.mxu0 0.0
  %3691 = vmatpush2.msra.mxu0 0.0
  %3692 = vmatprep.subr.mxu0 0.0
  %3693 = vmatpush2.msra.mxu0 0.0
  %3694 = vmatprep.subr.mxu0 0.0
  %3695 = vmatpush2.msra.mxu0 0.0
  %3696 = vmatprep.subr.mxu0 0.0
  %3697 = vmatpush2.msra.mxu0 0.0
  %3698 = vmatprep.subr.mxu0 0.0
  %3699 = vmatpush2.msra.mxu0 0.0
  %3700 = vmatprep.subr.mxu0 0.0
  %3701 = vmatpush2.msra.mxu0 0.0
  %3702 = vmatprep.subr.mxu0 0.0
  %3703 = vmatpush2.msra.mxu0 0.0
  %3704 = vmatprep.mubr.f32.mxu0 0.0
  %3705 = vmatmul.mubr.f32.gmra.mxu0 %v3334
  %v3706 = vpop.f32.mrf.mxu0
  %v3707 = vadd.f32 0.0, %v3706
  %v3708 = vpop.f32.mrf.mxu0
  %3709 = vmatprep.mubr.f32.mxu0 0.0
  %3710 = vmatmul.mubr.f32.gmra.mxu0 %v3337
  %v3711 = vpop.f32.mrf.mxu0
  %v3712 = vadd.f32 0.0, %v3711
  %v3713 = vpop.f32.mrf.mxu0
  %3714 = vmatprep.mubr.f32.mxu0 0.0
  %3715 = vmatmul.mubr.f32.gmra.mxu0 %v3340
  %v3716 = vpop.f32.mrf.mxu0
  %v3717 = vadd.f32 0.0, %v3716
  %v3718 = vpop.f32.mrf.mxu0
  %3719 = vmatprep.mubr.f32.mxu0 0.0
  %3720 = vmatmul.mubr.f32.gmra.mxu0 %v3343
  %v3721 = vpop.f32.mrf.mxu0
  %v3722 = vadd.f32 0.0, %v3721
  %v3723 = vpop.f32.mrf.mxu0
  %3724 = vmatprep.mubr.f32.mxu0 0.0
  %3725 = vmatmul.mubr.f32.gmra.mxu0 %v3346
  %v3726 = vpop.f32.mrf.mxu0
  %v3727 = vadd.f32 0.0, %v3726
  %v3728 = vpop.f32.mrf.mxu0
  %3729 = vmatprep.mubr.f32.mxu0 0.0
  %3730 = vmatmul.mubr.f32.gmra.mxu0 %v3349
  %v3731 = vpop.f32.mrf.mxu0
  %v3732 = vadd.f32 0.0, %v3731
  %v3733 = vpop.f32.mrf.mxu0
  %3734 = vdwg.mxu0
  %v3735 = vadd.f32 %v3634, %v3707
  %v3736 = vadd.f32 %v3635, %v3712
  %v3737 = vmul.f32 %v3735, 0.5
  %v3738 = vmul.f32 %v3736, 0.5
  %v3739 = vtanh.pop %v3737
  %v3740 = vtanh.pop %v3738
  %v3741 = vmul.f32 %v3739, 0.5
  %v3742 = vmul.f32 %v3740, 0.5
  %v3743 = vadd.f32 %v3741, 0.5
  %v3744 = vadd.f32 %v3742, 0.5
  %v3745 = vadd.f32 %v3636, %v3717
  %v3746 = vadd.f32 %v3637, %v3722
  %v3747 = vmul.f32 %v3745, 0.5
  %v3748 = vmul.f32 %v3746, 0.5
  %v3749 = vtanh.pop %v3747
  %v3750 = vtanh.pop %v3748
  %v3751 = vmul.f32 %v3749, 0.5
  %v3752 = vmul.f32 %v3750, 0.5
  %v3753 = vadd.f32 %v3751, 0.5
  %v3754 = vadd.f32 %v3752, 0.5
  %v3755 = vadd.f32 %v3727, %v3469
  %v3756 = vadd.f32 %v3732, %v3474
  %v3757 = vmul.f32 %v3743, %v3755
  %v3758 = vmul.f32 %v3744, %v3756
  %v3759 = vadd.f32 %v3638, %v3757
  %v3760 = vadd.f32 %v3639, %v3758
  %v3761 = vtanh.pop %v3759
  %v3762 = vtanh.pop %v3760
  %v3763 = vsub.f32 1.0, %v3753
  %v3764 = vsub.f32 1.0, %v3754
  %v3765 = vmul.f32 %v3763, %v3761
  %v3766 = vmul.f32 %v3764, %v3762
  %v3767 = vmul.f32 %v3753, %v3490
  %v3768 = vmul.f32 %v3754, %v3491
  %v3769 = vadd.f32 %v3765, %v3767
  %v3770 = vadd.f32 %v3766, %v3768
  %s3771 = scalar_lea.vmem %s4, 32
  %3772 = vst [vmem:[%s3771] sm:$0xff] %v3632
  %3773 = vst [vmem:[%s3771 + $0x8] sm:$0xff] %v3633
  %s3774 = scalar_lea.vmem %s4, 448
  %3775 = vst [vmem:[%s3774 + $0x10] sm:$0xff] %v3769
  %3776 = vst [vmem:[%s3774 + $0x18] sm:$0xff] %v3770
  %v3777 = vld [vmem:[%s649] sm:$0xff]
  %v3778 = vld [vmem:[%s649 + $0x8] sm:$0xff]
  %v3779 = vld [vmem:[%s649 + $0x10] sm:$0xff]
  %v3780 = vld [vmem:[%s649 + $0x18] sm:$0xff]
  %v3781 = vld [vmem:[%s649 + $0x20] sm:$0xff]
  %v3782 = vld [vmem:[%s649 + $0x28] sm:$0xff]
  %3783 = vmatprep.subr.mxu0 0.0
  %3784 = vmatpush1.msra.mxu0 0.0
  %3785 = vmatprep.subr.mxu0 0.0
  %3786 = vmatpush1.msra.mxu0 0.0
  %3787 = vmatprep.subr.mxu0 0.0
  %3788 = vmatpush1.msra.mxu0 0.0
  %3789 = vmatprep.subr.mxu0 0.0
  %3790 = vmatpush1.msra.mxu0 0.0
  %3791 = vmatprep.subr.mxu0 0.0
  %3792 = vmatpush1.msra.mxu0 0.0
  %3793 = vmatprep.subr.mxu0 0.0
  %3794 = vmatpush1.msra.mxu0 0.0
  %3795 = vmatprep.subr.mxu0 0.0
  %3796 = vmatpush1.msra.mxu0 0.0
  %3797 = vmatprep.subr.mxu0 0.0
  %3798 = vmatpush1.msra.mxu0 0.0
  %3799 = vmatprep.subr.mxu0 0.0
  %3800 = vmatpush1.msra.mxu0 0.0
  %3801 = vmatprep.subr.mxu0 0.0
  %3802 = vmatpush1.msra.mxu0 0.0
  %3803 = vmatprep.subr.mxu0 0.0
  %3804 = vmatpush1.msra.mxu0 0.0
  %3805 = vmatprep.subr.mxu0 0.0
  %3806 = vmatpush1.msra.mxu0 0.0
  %3807 = vmatprep.subr.mxu0 0.0
  %3808 = vmatpush1.msra.mxu0 0.0
  %3809 = vmatprep.subr.mxu0 0.0
  %3810 = vmatpush1.msra.mxu0 0.0
  %3811 = vmatprep.subr.mxu0 0.0
  %3812 = vmatpush1.msra.mxu0 %v3633
  %3813 = vmatprep.subr.mxu0 0.0
  %3814 = vmatpush1.msra.mxu0 %v3632
  %3815 = vmatprep.subr.mxu0 0.0
  %3816 = vmatpush2.msra.mxu0 0.0
  %3817 = vmatprep.subr.mxu0 0.0
  %3818 = vmatpush2.msra.mxu0 0.0
  %3819 = vmatprep.subr.mxu0 0.0
  %3820 = vmatpush2.msra.mxu0 0.0
  %3821 = vmatprep.subr.mxu0 0.0
  %3822 = vmatpush2.msra.mxu0 0.0
  %3823 = vmatprep.subr.mxu0 0.0
  %3824 = vmatpush2.msra.mxu0 0.0
  %3825 = vmatprep.subr.mxu0 0.0
  %3826 = vmatpush2.msra.mxu0 0.0
  %3827 = vmatprep.subr.mxu0 0.0
  %3828 = vmatpush2.msra.mxu0 0.0
  %3829 = vmatprep.subr.mxu0 0.0
  %3830 = vmatpush2.msra.mxu0 0.0
  %3831 = vmatprep.subr.mxu0 0.0
  %3832 = vmatpush2.msra.mxu0 0.0
  %3833 = vmatprep.subr.mxu0 0.0
  %3834 = vmatpush2.msra.mxu0 0.0
  %3835 = vmatprep.subr.mxu0 0.0
  %3836 = vmatpush2.msra.mxu0 0.0
  %3837 = vmatprep.subr.mxu0 0.0
  %3838 = vmatpush2.msra.mxu0 0.0
  %3839 = vmatprep.subr.mxu0 0.0
  %3840 = vmatpush2.msra.mxu0 0.0
  %3841 = vmatprep.subr.mxu0 0.0
  %3842 = vmatpush2.msra.mxu0 0.0
  %3843 = vmatprep.subr.mxu0 0.0
  %3844 = vmatpush2.msra.mxu0 0.0
  %3845 = vmatprep.subr.mxu0 0.0
  %3846 = vmatpush2.msra.mxu0 0.0
  %3847 = vmatprep.mubr.f32.mxu0 0.0
  %3848 = vmatmul.mubr.f32.gmra.mxu0 %v3169
  %v3849 = vpop.f32.mrf.mxu0
  %v3850 = vadd.f32 0.0, %v3849
  %v3851 = vpop.f32.mrf.mxu0
  %3852 = vmatprep.mubr.f32.mxu0 0.0
  %3853 = vmatmul.mubr.f32.gmra.mxu0 %v3172
  %v3854 = vpop.f32.mrf.mxu0
  %v3855 = vadd.f32 0.0, %v3854
  %v3856 = vpop.f32.mrf.mxu0
  %3857 = vmatprep.mubr.f32.mxu0 0.0
  %3858 = vmatmul.mubr.f32.gmra.mxu0 %v3175
  %v3859 = vpop.f32.mrf.mxu0
  %v3860 = vadd.f32 0.0, %v3859
  %v3861 = vpop.f32.mrf.mxu0
  %3862 = vmatprep.mubr.f32.mxu0 0.0
  %3863 = vmatmul.mubr.f32.gmra.mxu0 %v3178
  %v3864 = vpop.f32.mrf.mxu0
  %v3865 = vadd.f32 0.0, %v3864
  %v3866 = vpop.f32.mrf.mxu0
  %3867 = vmatprep.mubr.f32.mxu0 0.0
  %3868 = vmatmul.mubr.f32.gmra.mxu0 %v3181
  %v3869 = vpop.f32.mrf.mxu0
  %v3870 = vadd.f32 0.0, %v3869
  %v3871 = vpop.f32.mrf.mxu0
  %3872 = vmatprep.mubr.f32.mxu0 0.0
  %3873 = vmatmul.mubr.f32.gmra.mxu0 %v3184
  %v3874 = vpop.f32.mrf.mxu0
  %v3875 = vadd.f32 0.0, %v3874
  %v3876 = vpop.f32.mrf.mxu0
  %3877 = vdwg.mxu0
  %v3878 = vadd.f32 %v3777, %v3850
  %v3879 = vadd.f32 %v3778, %v3855
  %v3880 = vmul.f32 %v3878, 0.5
  %v3881 = vmul.f32 %v3879, 0.5
  %v3882 = vtanh.pop %v3880
  %v3883 = vtanh.pop %v3881
  %v3884 = vmul.f32 %v3882, 0.5
  %v3885 = vmul.f32 %v3883, 0.5
  %v3886 = vadd.f32 %v3884, 0.5
  %v3887 = vadd.f32 %v3885, 0.5
  %v3888 = vadd.f32 %v3779, %v3860
  %v3889 = vadd.f32 %v3780, %v3865
  %v3890 = vmul.f32 %v3888, 0.5
  %v3891 = vmul.f32 %v3889, 0.5
  %v3892 = vtanh.pop %v3890
  %v3893 = vtanh.pop %v3891
  %v3894 = vmul.f32 %v3892, 0.5
  %v3895 = vmul.f32 %v3893, 0.5
  %v3896 = vadd.f32 %v3894, 0.5
  %v3897 = vadd.f32 %v3895, 0.5
  %v3898 = vadd.f32 %v3870, %v3304
  %v3899 = vadd.f32 %v3875, %v3309
  %v3900 = vmul.f32 %v3886, %v3898
  %v3901 = vmul.f32 %v3887, %v3899
  %v3902 = vadd.f32 %v3781, %v3900
  %v3903 = vadd.f32 %v3782, %v3901
  %v3904 = vtanh.pop %v3902
  %v3905 = vtanh.pop %v3903
  %v3906 = vsub.f32 1.0, %v3896
  %v3907 = vsub.f32 1.0, %v3897
  %v3908 = vmul.f32 %v3906, %v3904
  %v3909 = vmul.f32 %v3907, %v3905
  %v3910 = vmul.f32 %v3896, %v3632
  %v3911 = vmul.f32 %v3897, %v3633
  %v3912 = vadd.f32 %v3908, %v3910
  %v3913 = vadd.f32 %v3909, %v3911
  %v3914 = vld [vmem:[%s2750 + $0x30] sm:$0xff]
  %v3915 = vld [vmem:[%s2750 + $0x38] sm:$0xff]
  %v3916 = vld [vmem:[%s2750 + $0x40] sm:$0xff]
  %v3917 = vld [vmem:[%s2750 + $0x48] sm:$0xff]
  %v3918 = vld [vmem:[%s2750 + $0x50] sm:$0xff]
  %v3919 = vld [vmem:[%s2750 + $0x58] sm:$0xff]
  %3920 = vmatprep.subr.mxu0 0.0
  %3921 = vmatpush1.msra.mxu0 0.0
  %3922 = vmatprep.subr.mxu0 0.0
  %3923 = vmatpush1.msra.mxu0 0.0
  %3924 = vmatprep.subr.mxu0 0.0
  %3925 = vmatpush1.msra.mxu0 0.0
  %3926 = vmatprep.subr.mxu0 0.0
  %3927 = vmatpush1.msra.mxu0 0.0
  %3928 = vmatprep.subr.mxu0 0.0
  %3929 = vmatpush1.msra.mxu0 0.0
  %3930 = vmatprep.subr.mxu0 0.0
  %3931 = vmatpush1.msra.mxu0 0.0
  %3932 = vmatprep.subr.mxu0 0.0
  %3933 = vmatpush1.msra.mxu0 0.0
  %3934 = vmatprep.subr.mxu0 0.0
  %3935 = vmatpush1.msra.mxu0 0.0
  %3936 = vmatprep.subr.mxu0 0.0
  %3937 = vmatpush1.msra.mxu0 0.0
  %3938 = vmatprep.subr.mxu0 0.0
  %3939 = vmatpush1.msra.mxu0 0.0
  %3940 = vmatprep.subr.mxu0 0.0
  %3941 = vmatpush1.msra.mxu0 0.0
  %3942 = vmatprep.subr.mxu0 0.0
  %3943 = vmatpush1.msra.mxu0 0.0
  %3944 = vmatprep.subr.mxu0 0.0
  %3945 = vmatpush1.msra.mxu0 0.0
  %3946 = vmatprep.subr.mxu0 0.0
  %3947 = vmatpush1.msra.mxu0 0.0
  %3948 = vmatprep.subr.mxu0 0.0
  %3949 = vmatpush1.msra.mxu0 %v3770
  %3950 = vmatprep.subr.mxu0 0.0
  %3951 = vmatpush1.msra.mxu0 %v3769
  %3952 = vmatprep.subr.mxu0 0.0
  %3953 = vmatpush2.msra.mxu0 0.0
  %3954 = vmatprep.subr.mxu0 0.0
  %3955 = vmatpush2.msra.mxu0 0.0
  %3956 = vmatprep.subr.mxu0 0.0
  %3957 = vmatpush2.msra.mxu0 0.0
  %3958 = vmatprep.subr.mxu0 0.0
  %3959 = vmatpush2.msra.mxu0 0.0
  %3960 = vmatprep.subr.mxu0 0.0
  %3961 = vmatpush2.msra.mxu0 0.0
  %3962 = vmatprep.subr.mxu0 0.0
  %3963 = vmatpush2.msra.mxu0 0.0
  %3964 = vmatprep.subr.mxu0 0.0
  %3965 = vmatpush2.msra.mxu0 0.0
  %3966 = vmatprep.subr.mxu0 0.0
  %3967 = vmatpush2.msra.mxu0 0.0
  %3968 = vmatprep.subr.mxu0 0.0
  %3969 = vmatpush2.msra.mxu0 0.0
  %3970 = vmatprep.subr.mxu0 0.0
  %3971 = vmatpush2.msra.mxu0 0.0
  %3972 = vmatprep.subr.mxu0 0.0
  %3973 = vmatpush2.msra.mxu0 0.0
  %3974 = vmatprep.subr.mxu0 0.0
  %3975 = vmatpush2.msra.mxu0 0.0
  %3976 = vmatprep.subr.mxu0 0.0
  %3977 = vmatpush2.msra.mxu0 0.0
  %3978 = vmatprep.subr.mxu0 0.0
  %3979 = vmatpush2.msra.mxu0 0.0
  %3980 = vmatprep.subr.mxu0 0.0
  %3981 = vmatpush2.msra.mxu0 0.0
  %3982 = vmatprep.subr.mxu0 0.0
  %3983 = vmatpush2.msra.mxu0 0.0
  %3984 = vmatprep.mubr.f32.mxu0 0.0
  %3985 = vmatmul.mubr.f32.gmra.mxu0 %v3334
  %v3986 = vpop.f32.mrf.mxu0
  %v3987 = vadd.f32 0.0, %v3986
  %v3988 = vpop.f32.mrf.mxu0
  %3989 = vmatprep.mubr.f32.mxu0 0.0
  %3990 = vmatmul.mubr.f32.gmra.mxu0 %v3337
  %v3991 = vpop.f32.mrf.mxu0
  %v3992 = vadd.f32 0.0, %v3991
  %v3993 = vpop.f32.mrf.mxu0
  %3994 = vmatprep.mubr.f32.mxu0 0.0
  %3995 = vmatmul.mubr.f32.gmra.mxu0 %v3340
  %v3996 = vpop.f32.mrf.mxu0
  %v3997 = vadd.f32 0.0, %v3996
  %v3998 = vpop.f32.mrf.mxu0
  %3999 = vmatprep.mubr.f32.mxu0 0.0
  %4000 = vmatmul.mubr.f32.gmra.mxu0 %v3343
  %v4001 = vpop.f32.mrf.mxu0
  %v4002 = vadd.f32 0.0, %v4001
  %v4003 = vpop.f32.mrf.mxu0
  %4004 = vmatprep.mubr.f32.mxu0 0.0
  %4005 = vmatmul.mubr.f32.gmra.mxu0 %v3346
  %v4006 = vpop.f32.mrf.mxu0
  %v4007 = vadd.f32 0.0, %v4006
  %v4008 = vpop.f32.mrf.mxu0
  %4009 = vmatprep.mubr.f32.mxu0 0.0
  %4010 = vmatmul.mubr.f32.gmra.mxu0 %v3349
  %v4011 = vpop.f32.mrf.mxu0
  %v4012 = vadd.f32 0.0, %v4011
  %v4013 = vpop.f32.mrf.mxu0
  %4014 = vdwg.mxu0
  %v4015 = vadd.f32 %v3914, %v3987
  %v4016 = vadd.f32 %v3915, %v3992
  %v4017 = vmul.f32 %v4015, 0.5
  %v4018 = vmul.f32 %v4016, 0.5
  %v4019 = vtanh.pop %v4017
  %v4020 = vtanh.pop %v4018
  %v4021 = vmul.f32 %v4019, 0.5
  %v4022 = vmul.f32 %v4020, 0.5
  %v4023 = vadd.f32 %v4021, 0.5
  %v4024 = vadd.f32 %v4022, 0.5
  %v4025 = vadd.f32 %v3916, %v3997
  %v4026 = vadd.f32 %v3917, %v4002
  %v4027 = vmul.f32 %v4025, 0.5
  %v4028 = vmul.f32 %v4026, 0.5
  %v4029 = vtanh.pop %v4027
  %v4030 = vtanh.pop %v4028
  %v4031 = vmul.f32 %v4029, 0.5
  %v4032 = vmul.f32 %v4030, 0.5
  %v4033 = vadd.f32 %v4031, 0.5
  %v4034 = vadd.f32 %v4032, 0.5
  %v4035 = vadd.f32 %v4007, %v3469
  %v4036 = vadd.f32 %v4012, %v3474
  %v4037 = vmul.f32 %v4023, %v4035
  %v4038 = vmul.f32 %v4024, %v4036
  %v4039 = vadd.f32 %v3918, %v4037
  %v4040 = vadd.f32 %v3919, %v4038
  %v4041 = vtanh.pop %v4039
  %v4042 = vtanh.pop %v4040
  %v4043 = vsub.f32 1.0, %v4033
  %v4044 = vsub.f32 1.0, %v4034
  %v4045 = vmul.f32 %v4043, %v4041
  %v4046 = vmul.f32 %v4044, %v4042
  %v4047 = vmul.f32 %v4033, %v3769
  %v4048 = vmul.f32 %v4034, %v3770
  %v4049 = vadd.f32 %v4045, %v4047
  %v4050 = vadd.f32 %v4046, %v4048
  %s4051 = scalar_lea.vmem %s4, 64
  %4052 = vst [vmem:[%s4051] sm:$0xff] %v3912
  %4053 = vst [vmem:[%s4051 + $0x8] sm:$0xff] %v3913
  %s4054 = scalar_lea.vmem %s4, 416
  %4055 = vst [vmem:[%s4054 + $0x10] sm:$0xff] %v4049
  %4056 = vst [vmem:[%s4054 + $0x18] sm:$0xff] %v4050
  %v4057 = vld [vmem:[%s840] sm:$0xff]
  %v4058 = vld [vmem:[%s840 + $0x8] sm:$0xff]
  %v4059 = vld [vmem:[%s840 + $0x10] sm:$0xff]
  %v4060 = vld [vmem:[%s840 + $0x18] sm:$0xff]
  %v4061 = vld [vmem:[%s840 + $0x20] sm:$0xff]
  %v4062 = vld [vmem:[%s840 + $0x28] sm:$0xff]
  %4063 = vmatprep.subr.mxu0 0.0
  %4064 = vmatpush1.msra.mxu0 0.0
  %4065 = vmatprep.subr.mxu0 0.0
  %4066 = vmatpush1.msra.mxu0 0.0
  %4067 = vmatprep.subr.mxu0 0.0
  %4068 = vmatpush1.msra.mxu0 0.0
  %4069 = vmatprep.subr.mxu0 0.0
  %4070 = vmatpush1.msra.mxu0 0.0
  %4071 = vmatprep.subr.mxu0 0.0
  %4072 = vmatpush1.msra.mxu0 0.0
  %4073 = vmatprep.subr.mxu0 0.0
  %4074 = vmatpush1.msra.mxu0 0.0
  %4075 = vmatprep.subr.mxu0 0.0
  %4076 = vmatpush1.msra.mxu0 0.0
  %4077 = vmatprep.subr.mxu0 0.0
  %4078 = vmatpush1.msra.mxu0 0.0
  %4079 = vmatprep.subr.mxu0 0.0
  %4080 = vmatpush1.msra.mxu0 0.0
  %4081 = vmatprep.subr.mxu0 0.0
  %4082 = vmatpush1.msra.mxu0 0.0
  %4083 = vmatprep.subr.mxu0 0.0
  %4084 = vmatpush1.msra.mxu0 0.0
  %4085 = vmatprep.subr.mxu0 0.0
  %4086 = vmatpush1.msra.mxu0 0.0
  %4087 = vmatprep.subr.mxu0 0.0
  %4088 = vmatpush1.msra.mxu0 0.0
  %4089 = vmatprep.subr.mxu0 0.0
  %4090 = vmatpush1.msra.mxu0 0.0
  %4091 = vmatprep.subr.mxu0 0.0
  %4092 = vmatpush1.msra.mxu0 %v3913
  %4093 = vmatprep.subr.mxu0 0.0
  %4094 = vmatpush1.msra.mxu0 %v3912
  %4095 = vmatprep.subr.mxu0 0.0
  %4096 = vmatpush2.msra.mxu0 0.0
  %4097 = vmatprep.subr.mxu0 0.0
  %4098 = vmatpush2.msra.mxu0 0.0
  %4099 = vmatprep.subr.mxu0 0.0
  %4100 = vmatpush2.msra.mxu0 0.0
  %4101 = vmatprep.subr.mxu0 0.0
  %4102 = vmatpush2.msra.mxu0 0.0
  %4103 = vmatprep.subr.mxu0 0.0
  %4104 = vmatpush2.msra.mxu0 0.0
  %4105 = vmatprep.subr.mxu0 0.0
  %4106 = vmatpush2.msra.mxu0 0.0
  %4107 = vmatprep.subr.mxu0 0.0
  %4108 = vmatpush2.msra.mxu0 0.0
  %4109 = vmatprep.subr.mxu0 0.0
  %4110 = vmatpush2.msra.mxu0 0.0
  %4111 = vmatprep.subr.mxu0 0.0
  %4112 = vmatpush2.msra.mxu0 0.0
  %4113 = vmatprep.subr.mxu0 0.0
  %4114 = vmatpush2.msra.mxu0 0.0
  %4115 = vmatprep.subr.mxu0 0.0
  %4116 = vmatpush2.msra.mxu0 0.0
  %4117 = vmatprep.subr.mxu0 0.0
  %4118 = vmatpush2.msra.mxu0 0.0
  %4119 = vmatprep.subr.mxu0 0.0
  %4120 = vmatpush2.msra.mxu0 0.0
  %4121 = vmatprep.subr.mxu0 0.0
  %4122 = vmatpush2.msra.mxu0 0.0
  %4123 = vmatprep.subr.mxu0 0.0
  %4124 = vmatpush2.msra.mxu0 0.0
  %4125 = vmatprep.subr.mxu0 0.0
  %4126 = vmatpush2.msra.mxu0 0.0
  %4127 = vmatprep.mubr.f32.mxu0 0.0
  %4128 = vmatmul.mubr.f32.gmra.mxu0 %v3169
  %v4129 = vpop.f32.mrf.mxu0
  %v4130 = vadd.f32 0.0, %v4129
  %v4131 = vpop.f32.mrf.mxu0
  %4132 = vmatprep.mubr.f32.mxu0 0.0
  %4133 = vmatmul.mubr.f32.gmra.mxu0 %v3172
  %v4134 = vpop.f32.mrf.mxu0
  %v4135 = vadd.f32 0.0, %v4134
  %v4136 = vpop.f32.mrf.mxu0
  %4137 = vmatprep.mubr.f32.mxu0 0.0
  %4138 = vmatmul.mubr.f32.gmra.mxu0 %v3175
  %v4139 = vpop.f32.mrf.mxu0
  %v4140 = vadd.f32 0.0, %v4139
  %v4141 = vpop.f32.mrf.mxu0
  %4142 = vmatprep.mubr.f32.mxu0 0.0
  %4143 = vmatmul.mubr.f32.gmra.mxu0 %v3178
  %v4144 = vpop.f32.mrf.mxu0
  %v4145 = vadd.f32 0.0, %v4144
  %v4146 = vpop.f32.mrf.mxu0
  %4147 = vmatprep.mubr.f32.mxu0 0.0
  %4148 = vmatmul.mubr.f32.gmra.mxu0 %v3181
  %v4149 = vpop.f32.mrf.mxu0
  %v4150 = vadd.f32 0.0, %v4149
  %v4151 = vpop.f32.mrf.mxu0
  %4152 = vmatprep.mubr.f32.mxu0 0.0
  %4153 = vmatmul.mubr.f32.gmra.mxu0 %v3184
  %v4154 = vpop.f32.mrf.mxu0
  %v4155 = vadd.f32 0.0, %v4154
  %v4156 = vpop.f32.mrf.mxu0
  %4157 = vdwg.mxu0
  %v4158 = vadd.f32 %v4057, %v4130
  %v4159 = vadd.f32 %v4058, %v4135
  %v4160 = vmul.f32 %v4158, 0.5
  %v4161 = vmul.f32 %v4159, 0.5
  %v4162 = vtanh.pop %v4160
  %v4163 = vtanh.pop %v4161
  %v4164 = vmul.f32 %v4162, 0.5
  %v4165 = vmul.f32 %v4163, 0.5
  %v4166 = vadd.f32 %v4164, 0.5
  %v4167 = vadd.f32 %v4165, 0.5
  %v4168 = vadd.f32 %v4059, %v4140
  %v4169 = vadd.f32 %v4060, %v4145
  %v4170 = vmul.f32 %v4168, 0.5
  %v4171 = vmul.f32 %v4169, 0.5
  %v4172 = vtanh.pop %v4170
  %v4173 = vtanh.pop %v4171
  %v4174 = vmul.f32 %v4172, 0.5
  %v4175 = vmul.f32 %v4173, 0.5
  %v4176 = vadd.f32 %v4174, 0.5
  %v4177 = vadd.f32 %v4175, 0.5
  %v4178 = vadd.f32 %v4150, %v3304
  %v4179 = vadd.f32 %v4155, %v3309
  %v4180 = vmul.f32 %v4166, %v4178
  %v4181 = vmul.f32 %v4167, %v4179
  %v4182 = vadd.f32 %v4061, %v4180
  %v4183 = vadd.f32 %v4062, %v4181
  %v4184 = vtanh.pop %v4182
  %v4185 = vtanh.pop %v4183
  %v4186 = vsub.f32 1.0, %v4176
  %v4187 = vsub.f32 1.0, %v4177
  %v4188 = vmul.f32 %v4186, %v4184
  %v4189 = vmul.f32 %v4187, %v4185
  %v4190 = vmul.f32 %v4176, %v3912
  %v4191 = vmul.f32 %v4177, %v3913
  %v4192 = vadd.f32 %v4188, %v4190
  %v4193 = vadd.f32 %v4189, %v4191
  %v4194 = vld [vmem:[%s2559 + $0x30] sm:$0xff]
  %v4195 = vld [vmem:[%s2559 + $0x38] sm:$0xff]
  %v4196 = vld [vmem:[%s2559 + $0x40] sm:$0xff]
  %v4197 = vld [vmem:[%s2559 + $0x48] sm:$0xff]
  %v4198 = vld [vmem:[%s2559 + $0x50] sm:$0xff]
  %v4199 = vld [vmem:[%s2559 + $0x58] sm:$0xff]
  %4200 = vmatprep.subr.mxu0 0.0
  %4201 = vmatpush1.msra.mxu0 0.0
  %4202 = vmatprep.subr.mxu0 0.0
  %4203 = vmatpush1.msra.mxu0 0.0
  %4204 = vmatprep.subr.mxu0 0.0
  %4205 = vmatpush1.msra.mxu0 0.0
  %4206 = vmatprep.subr.mxu0 0.0
  %4207 = vmatpush1.msra.mxu0 0.0
  %4208 = vmatprep.subr.mxu0 0.0
  %4209 = vmatpush1.msra.mxu0 0.0
  %4210 = vmatprep.subr.mxu0 0.0
  %4211 = vmatpush1.msra.mxu0 0.0
  %4212 = vmatprep.subr.mxu0 0.0
  %4213 = vmatpush1.msra.mxu0 0.0
  %4214 = vmatprep.subr.mxu0 0.0
  %4215 = vmatpush1.msra.mxu0 0.0
  %4216 = vmatprep.subr.mxu0 0.0
  %4217 = vmatpush1.msra.mxu0 0.0
  %4218 = vmatprep.subr.mxu0 0.0
  %4219 = vmatpush1.msra.mxu0 0.0
  %4220 = vmatprep.subr.mxu0 0.0
  %4221 = vmatpush1.msra.mxu0 0.0
  %4222 = vmatprep.subr.mxu0 0.0
  %4223 = vmatpush1.msra.mxu0 0.0
  %4224 = vmatprep.subr.mxu0 0.0
  %4225 = vmatpush1.msra.mxu0 0.0
  %4226 = vmatprep.subr.mxu0 0.0
  %4227 = vmatpush1.msra.mxu0 0.0
  %4228 = vmatprep.subr.mxu0 0.0
  %4229 = vmatpush1.msra.mxu0 %v4050
  %4230 = vmatprep.subr.mxu0 0.0
  %4231 = vmatpush1.msra.mxu0 %v4049
  %4232 = vmatprep.subr.mxu0 0.0
  %4233 = vmatpush2.msra.mxu0 0.0
  %4234 = vmatprep.subr.mxu0 0.0
  %4235 = vmatpush2.msra.mxu0 0.0
  %4236 = vmatprep.subr.mxu0 0.0
  %4237 = vmatpush2.msra.mxu0 0.0
  %4238 = vmatprep.subr.mxu0 0.0
  %4239 = vmatpush2.msra.mxu0 0.0
  %4240 = vmatprep.subr.mxu0 0.0
  %4241 = vmatpush2.msra.mxu0 0.0
  %4242 = vmatprep.subr.mxu0 0.0
  %4243 = vmatpush2.msra.mxu0 0.0
  %4244 = vmatprep.subr.mxu0 0.0
  %4245 = vmatpush2.msra.mxu0 0.0
  %4246 = vmatprep.subr.mxu0 0.0
  %4247 = vmatpush2.msra.mxu0 0.0
  %4248 = vmatprep.subr.mxu0 0.0
  %4249 = vmatpush2.msra.mxu0 0.0
  %4250 = vmatprep.subr.mxu0 0.0
  %4251 = vmatpush2.msra.mxu0 0.0
  %4252 = vmatprep.subr.mxu0 0.0
  %4253 = vmatpush2.msra.mxu0 0.0
  %4254 = vmatprep.subr.mxu0 0.0
  %4255 = vmatpush2.msra.mxu0 0.0
  %4256 = vmatprep.subr.mxu0 0.0
  %4257 = vmatpush2.msra.mxu0 0.0
  %4258 = vmatprep.subr.mxu0 0.0
  %4259 = vmatpush2.msra.mxu0 0.0
  %4260 = vmatprep.subr.mxu0 0.0
  %4261 = vmatpush2.msra.mxu0 0.0
  %4262 = vmatprep.subr.mxu0 0.0
  %4263 = vmatpush2.msra.mxu0 0.0
  %4264 = vmatprep.mubr.f32.mxu0 0.0
  %4265 = vmatmul.mubr.f32.gmra.mxu0 %v3334
  %v4266 = vpop.f32.mrf.mxu0
  %v4267 = vadd.f32 0.0, %v4266
  %v4268 = vpop.f32.mrf.mxu0
  %4269 = vmatprep.mubr.f32.mxu0 0.0
  %4270 = vmatmul.mubr.f32.gmra.mxu0 %v3337
  %v4271 = vpop.f32.mrf.mxu0
  %v4272 = vadd.f32 0.0, %v4271
  %v4273 = vpop.f32.mrf.mxu0
  %4274 = vmatprep.mubr.f32.mxu0 0.0
  %4275 = vmatmul.mubr.f32.gmra.mxu0 %v3340
  %v4276 = vpop.f32.mrf.mxu0
  %v4277 = vadd.f32 0.0, %v4276
  %v4278 = vpop.f32.mrf.mxu0
  %4279 = vmatprep.mubr.f32.mxu0 0.0
  %4280 = vmatmul.mubr.f32.gmra.mxu0 %v3343
  %v4281 = vpop.f32.mrf.mxu0
  %v4282 = vadd.f32 0.0, %v4281
  %v4283 = vpop.f32.mrf.mxu0
  %4284 = vmatprep.mubr.f32.mxu0 0.0
  %4285 = vmatmul.mubr.f32.gmra.mxu0 %v3346
  %v4286 = vpop.f32.mrf.mxu0
  %v4287 = vadd.f32 0.0, %v4286
  %v4288 = vpop.f32.mrf.mxu0
  %4289 = vmatprep.mubr.f32.mxu0 0.0
  %4290 = vmatmul.mubr.f32.gmra.mxu0 %v3349
  %v4291 = vpop.f32.mrf.mxu0
  %v4292 = vadd.f32 0.0, %v4291
  %v4293 = vpop.f32.mrf.mxu0
  %4294 = vdwg.mxu0
  %v4295 = vadd.f32 %v4194, %v4267
  %v4296 = vadd.f32 %v4195, %v4272
  %v4297 = vmul.f32 %v4295, 0.5
  %v4298 = vmul.f32 %v4296, 0.5
  %v4299 = vtanh.pop %v4297
  %v4300 = vtanh.pop %v4298
  %v4301 = vmul.f32 %v4299, 0.5
  %v4302 = vmul.f32 %v4300, 0.5
  %v4303 = vadd.f32 %v4301, 0.5
  %v4304 = vadd.f32 %v4302, 0.5
  %v4305 = vadd.f32 %v4196, %v4277
  %v4306 = vadd.f32 %v4197, %v4282
  %v4307 = vmul.f32 %v4305, 0.5
  %v4308 = vmul.f32 %v4306, 0.5
  %v4309 = vtanh.pop %v4307
  %v4310 = vtanh.pop %v4308
  %v4311 = vmul.f32 %v4309, 0.5
  %v4312 = vmul.f32 %v4310, 0.5
  %v4313 = vadd.f32 %v4311, 0.5
  %v4314 = vadd.f32 %v4312, 0.5
  %v4315 = vadd.f32 %v4287, %v3469
  %v4316 = vadd.f32 %v4292, %v3474
  %v4317 = vmul.f32 %v4303, %v4315
  %v4318 = vmul.f32 %v4304, %v4316
  %v4319 = vadd.f32 %v4198, %v4317
  %v4320 = vadd.f32 %v4199, %v4318
  %v4321 = vtanh.pop %v4319
  %v4322 = vtanh.pop %v4320
  %v4323 = vsub.f32 1.0, %v4313
  %v4324 = vsub.f32 1.0, %v4314
  %v4325 = vmul.f32 %v4323, %v4321
  %v4326 = vmul.f32 %v4324, %v4322
  %v4327 = vmul.f32 %v4313, %v4049
  %v4328 = vmul.f32 %v4314, %v4050
  %v4329 = vadd.f32 %v4325, %v4327
  %v4330 = vadd.f32 %v4326, %v4328
  %s4331 = scalar_lea.vmem %s4, 96
  %4332 = vst [vmem:[%s4331] sm:$0xff] %v4192
  %4333 = vst [vmem:[%s4331 + $0x8] sm:$0xff] %v4193
  %s4334 = scalar_lea.vmem %s4, 384
  %4335 = vst [vmem:[%s4334 + $0x10] sm:$0xff] %v4329
  %4336 = vst [vmem:[%s4334 + $0x18] sm:$0xff] %v4330
  %v4337 = vld [vmem:[%s1031] sm:$0xff]
  %v4338 = vld [vmem:[%s1031 + $0x8] sm:$0xff]
  %v4339 = vld [vmem:[%s1031 + $0x10] sm:$0xff]
  %v4340 = vld [vmem:[%s1031 + $0x18] sm:$0xff]
  %v4341 = vld [vmem:[%s1031 + $0x20] sm:$0xff]
  %v4342 = vld [vmem:[%s1031 + $0x28] sm:$0xff]
  %4343 = vmatprep.subr.mxu0 0.0
  %4344 = vmatpush1.msra.mxu0 0.0
  %4345 = vmatprep.subr.mxu0 0.0
  %4346 = vmatpush1.msra.mxu0 0.0
  %4347 = vmatprep.subr.mxu0 0.0
  %4348 = vmatpush1.msra.mxu0 0.0
  %4349 = vmatprep.subr.mxu0 0.0
  %4350 = vmatpush1.msra.mxu0 0.0
  %4351 = vmatprep.subr.mxu0 0.0
  %4352 = vmatpush1.msra.mxu0 0.0
  %4353 = vmatprep.subr.mxu0 0.0
  %4354 = vmatpush1.msra.mxu0 0.0
  %4355 = vmatprep.subr.mxu0 0.0
  %4356 = vmatpush1.msra.mxu0 0.0
  %4357 = vmatprep.subr.mxu0 0.0
  %4358 = vmatpush1.msra.mxu0 0.0
  %4359 = vmatprep.subr.mxu0 0.0
  %4360 = vmatpush1.msra.mxu0 0.0
  %4361 = vmatprep.subr.mxu0 0.0
  %4362 = vmatpush1.msra.mxu0 0.0
  %4363 = vmatprep.subr.mxu0 0.0
  %4364 = vmatpush1.msra.mxu0 0.0
  %4365 = vmatprep.subr.mxu0 0.0
  %4366 = vmatpush1.msra.mxu0 0.0
  %4367 = vmatprep.subr.mxu0 0.0
  %4368 = vmatpush1.msra.mxu0 0.0
  %4369 = vmatprep.subr.mxu0 0.0
  %4370 = vmatpush1.msra.mxu0 0.0
  %4371 = vmatprep.subr.mxu0 0.0
  %4372 = vmatpush1.msra.mxu0 %v4193
  %4373 = vmatprep.subr.mxu0 0.0
  %4374 = vmatpush1.msra.mxu0 %v4192
  %4375 = vmatprep.subr.mxu0 0.0
  %4376 = vmatpush2.msra.mxu0 0.0
  %4377 = vmatprep.subr.mxu0 0.0
  %4378 = vmatpush2.msra.mxu0 0.0
  %4379 = vmatprep.subr.mxu0 0.0
  %4380 = vmatpush2.msra.mxu0 0.0
  %4381 = vmatprep.subr.mxu0 0.0
  %4382 = vmatpush2.msra.mxu0 0.0
  %4383 = vmatprep.subr.mxu0 0.0
  %4384 = vmatpush2.msra.mxu0 0.0
  %4385 = vmatprep.subr.mxu0 0.0
  %4386 = vmatpush2.msra.mxu0 0.0
  %4387 = vmatprep.subr.mxu0 0.0
  %4388 = vmatpush2.msra.mxu0 0.0
  %4389 = vmatprep.subr.mxu0 0.0
  %4390 = vmatpush2.msra.mxu0 0.0
  %4391 = vmatprep.subr.mxu0 0.0
  %4392 = vmatpush2.msra.mxu0 0.0
  %4393 = vmatprep.subr.mxu0 0.0
  %4394 = vmatpush2.msra.mxu0 0.0
  %4395 = vmatprep.subr.mxu0 0.0
  %4396 = vmatpush2.msra.mxu0 0.0
  %4397 = vmatprep.subr.mxu0 0.0
  %4398 = vmatpush2.msra.mxu0 0.0
  %4399 = vmatprep.subr.mxu0 0.0
  %4400 = vmatpush2.msra.mxu0 0.0
  %4401 = vmatprep.subr.mxu0 0.0
  %4402 = vmatpush2.msra.mxu0 0.0
  %4403 = vmatprep.subr.mxu0 0.0
  %4404 = vmatpush2.msra.mxu0 0.0
  %4405 = vmatprep.subr.mxu0 0.0
  %4406 = vmatpush2.msra.mxu0 0.0
  %4407 = vmatprep.mubr.f32.mxu0 0.0
  %4408 = vmatmul.mubr.f32.gmra.mxu0 %v3169
  %v4409 = vpop.f32.mrf.mxu0
  %v4410 = vadd.f32 0.0, %v4409
  %v4411 = vpop.f32.mrf.mxu0
  %4412 = vmatprep.mubr.f32.mxu0 0.0
  %4413 = vmatmul.mubr.f32.gmra.mxu0 %v3172
  %v4414 = vpop.f32.mrf.mxu0
  %v4415 = vadd.f32 0.0, %v4414
  %v4416 = vpop.f32.mrf.mxu0
  %4417 = vmatprep.mubr.f32.mxu0 0.0
  %4418 = vmatmul.mubr.f32.gmra.mxu0 %v3175
  %v4419 = vpop.f32.mrf.mxu0
  %v4420 = vadd.f32 0.0, %v4419
  %v4421 = vpop.f32.mrf.mxu0
  %4422 = vmatprep.mubr.f32.mxu0 0.0
  %4423 = vmatmul.mubr.f32.gmra.mxu0 %v3178
  %v4424 = vpop.f32.mrf.mxu0
  %v4425 = vadd.f32 0.0, %v4424
  %v4426 = vpop.f32.mrf.mxu0
  %4427 = vmatprep.mubr.f32.mxu0 0.0
  %4428 = vmatmul.mubr.f32.gmra.mxu0 %v3181
  %v4429 = vpop.f32.mrf.mxu0
  %v4430 = vadd.f32 0.0, %v4429
  %v4431 = vpop.f32.mrf.mxu0
  %4432 = vmatprep.mubr.f32.mxu0 0.0
  %4433 = vmatmul.mubr.f32.gmra.mxu0 %v3184
  %v4434 = vpop.f32.mrf.mxu0
  %v4435 = vadd.f32 0.0, %v4434
  %v4436 = vpop.f32.mrf.mxu0
  %4437 = vdwg.mxu0
  %v4438 = vadd.f32 %v4337, %v4410
  %v4439 = vadd.f32 %v4338, %v4415
  %v4440 = vmul.f32 %v4438, 0.5
  %v4441 = vmul.f32 %v4439, 0.5
  %v4442 = vtanh.pop %v4440
  %v4443 = vtanh.pop %v4441
  %v4444 = vmul.f32 %v4442, 0.5
  %v4445 = vmul.f32 %v4443, 0.5
  %v4446 = vadd.f32 %v4444, 0.5
  %v4447 = vadd.f32 %v4445, 0.5
  %v4448 = vadd.f32 %v4339, %v4420
  %v4449 = vadd.f32 %v4340, %v4425
  %v4450 = vmul.f32 %v4448, 0.5
  %v4451 = vmul.f32 %v4449, 0.5
  %v4452 = vtanh.pop %v4450
  %v4453 = vtanh.pop %v4451
  %v4454 = vmul.f32 %v4452, 0.5
  %v4455 = vmul.f32 %v4453, 0.5
  %v4456 = vadd.f32 %v4454, 0.5
  %v4457 = vadd.f32 %v4455, 0.5
  %v4458 = vadd.f32 %v4430, %v3304
  %v4459 = vadd.f32 %v4435, %v3309
  %v4460 = vmul.f32 %v4446, %v4458
  %v4461 = vmul.f32 %v4447, %v4459
  %v4462 = vadd.f32 %v4341, %v4460
  %v4463 = vadd.f32 %v4342, %v4461
  %v4464 = vtanh.pop %v4462
  %v4465 = vtanh.pop %v4463
  %v4466 = vsub.f32 1.0, %v4456
  %v4467 = vsub.f32 1.0, %v4457
  %v4468 = vmul.f32 %v4466, %v4464
  %v4469 = vmul.f32 %v4467, %v4465
  %v4470 = vmul.f32 %v4456, %v4192
  %v4471 = vmul.f32 %v4457, %v4193
  %v4472 = vadd.f32 %v4468, %v4470
  %v4473 = vadd.f32 %v4469, %v4471
  %v4474 = vld [vmem:[%s2368 + $0x30] sm:$0xff]
  %v4475 = vld [vmem:[%s2368 + $0x38] sm:$0xff]
  %v4476 = vld [vmem:[%s2368 + $0x40] sm:$0xff]
  %v4477 = vld [vmem:[%s2368 + $0x48] sm:$0xff]
  %v4478 = vld [vmem:[%s2368 + $0x50] sm:$0xff]
  %v4479 = vld [vmem:[%s2368 + $0x58] sm:$0xff]
  %4480 = vmatprep.subr.mxu0 0.0
  %4481 = vmatpush1.msra.mxu0 0.0
  %4482 = vmatprep.subr.mxu0 0.0
  %4483 = vmatpush1.msra.mxu0 0.0
  %4484 = vmatprep.subr.mxu0 0.0
  %4485 = vmatpush1.msra.mxu0 0.0
  %4486 = vmatprep.subr.mxu0 0.0
  %4487 = vmatpush1.msra.mxu0 0.0
  %4488 = vmatprep.subr.mxu0 0.0
  %4489 = vmatpush1.msra.mxu0 0.0
  %4490 = vmatprep.subr.mxu0 0.0
  %4491 = vmatpush1.msra.mxu0 0.0
  %4492 = vmatprep.subr.mxu0 0.0
  %4493 = vmatpush1.msra.mxu0 0.0
  %4494 = vmatprep.subr.mxu0 0.0
  %4495 = vmatpush1.msra.mxu0 0.0
  %4496 = vmatprep.subr.mxu0 0.0
  %4497 = vmatpush1.msra.mxu0 0.0
  %4498 = vmatprep.subr.mxu0 0.0
  %4499 = vmatpush1.msra.mxu0 0.0
  %4500 = vmatprep.subr.mxu0 0.0
  %4501 = vmatpush1.msra.mxu0 0.0
  %4502 = vmatprep.subr.mxu0 0.0
  %4503 = vmatpush1.msra.mxu0 0.0
  %4504 = vmatprep.subr.mxu0 0.0
  %4505 = vmatpush1.msra.mxu0 0.0
  %4506 = vmatprep.subr.mxu0 0.0
  %4507 = vmatpush1.msra.mxu0 0.0
  %4508 = vmatprep.subr.mxu0 0.0
  %4509 = vmatpush1.msra.mxu0 %v4330
  %4510 = vmatprep.subr.mxu0 0.0
  %4511 = vmatpush1.msra.mxu0 %v4329
  %4512 = vmatprep.subr.mxu0 0.0
  %4513 = vmatpush2.msra.mxu0 0.0
  %4514 = vmatprep.subr.mxu0 0.0
  %4515 = vmatpush2.msra.mxu0 0.0
  %4516 = vmatprep.subr.mxu0 0.0
  %4517 = vmatpush2.msra.mxu0 0.0
  %4518 = vmatprep.subr.mxu0 0.0
  %4519 = vmatpush2.msra.mxu0 0.0
  %4520 = vmatprep.subr.mxu0 0.0
  %4521 = vmatpush2.msra.mxu0 0.0
  %4522 = vmatprep.subr.mxu0 0.0
  %4523 = vmatpush2.msra.mxu0 0.0
  %4524 = vmatprep.subr.mxu0 0.0
  %4525 = vmatpush2.msra.mxu0 0.0
  %4526 = vmatprep.subr.mxu0 0.0
  %4527 = vmatpush2.msra.mxu0 0.0
  %4528 = vmatprep.subr.mxu0 0.0
  %4529 = vmatpush2.msra.mxu0 0.0
  %4530 = vmatprep.subr.mxu0 0.0
  %4531 = vmatpush2.msra.mxu0 0.0
  %4532 = vmatprep.subr.mxu0 0.0
  %4533 = vmatpush2.msra.mxu0 0.0
  %4534 = vmatprep.subr.mxu0 0.0
  %4535 = vmatpush2.msra.mxu0 0.0
  %4536 = vmatprep.subr.mxu0 0.0
  %4537 = vmatpush2.msra.mxu0 0.0
  %4538 = vmatprep.subr.mxu0 0.0
  %4539 = vmatpush2.msra.mxu0 0.0
  %4540 = vmatprep.subr.mxu0 0.0
  %4541 = vmatpush2.msra.mxu0 0.0
  %4542 = vmatprep.subr.mxu0 0.0
  %4543 = vmatpush2.msra.mxu0 0.0
  %4544 = vmatprep.mubr.f32.mxu0 0.0
  %4545 = vmatmul.mubr.f32.gmra.mxu0 %v3334
  %v4546 = vpop.f32.mrf.mxu0
  %v4547 = vadd.f32 0.0, %v4546
  %v4548 = vpop.f32.mrf.mxu0
  %4549 = vmatprep.mubr.f32.mxu0 0.0
  %4550 = vmatmul.mubr.f32.gmra.mxu0 %v3337
  %v4551 = vpop.f32.mrf.mxu0
  %v4552 = vadd.f32 0.0, %v4551
  %v4553 = vpop.f32.mrf.mxu0
  %4554 = vmatprep.mubr.f32.mxu0 0.0
  %4555 = vmatmul.mubr.f32.gmra.mxu0 %v3340
  %v4556 = vpop.f32.mrf.mxu0
  %v4557 = vadd.f32 0.0, %v4556
  %v4558 = vpop.f32.mrf.mxu0
  %4559 = vmatprep.mubr.f32.mxu0 0.0
  %4560 = vmatmul.mubr.f32.gmra.mxu0 %v3343
  %v4561 = vpop.f32.mrf.mxu0
  %v4562 = vadd.f32 0.0, %v4561
  %v4563 = vpop.f32.mrf.mxu0
  %4564 = vmatprep.mubr.f32.mxu0 0.0
  %4565 = vmatmul.mubr.f32.gmra.mxu0 %v3346
  %v4566 = vpop.f32.mrf.mxu0
  %v4567 = vadd.f32 0.0, %v4566
  %v4568 = vpop.f32.mrf.mxu0
  %4569 = vmatprep.mubr.f32.mxu0 0.0
  %4570 = vmatmul.mubr.f32.gmra.mxu0 %v3349
  %v4571 = vpop.f32.mrf.mxu0
  %v4572 = vadd.f32 0.0, %v4571
  %v4573 = vpop.f32.mrf.mxu0
  %4574 = vdwg.mxu0
  %v4575 = vadd.f32 %v4474, %v4547
  %v4576 = vadd.f32 %v4475, %v4552
  %v4577 = vmul.f32 %v4575, 0.5
  %v4578 = vmul.f32 %v4576, 0.5
  %v4579 = vtanh.pop %v4577
  %v4580 = vtanh.pop %v4578
  %v4581 = vmul.f32 %v4579, 0.5
  %v4582 = vmul.f32 %v4580, 0.5
  %v4583 = vadd.f32 %v4581, 0.5
  %v4584 = vadd.f32 %v4582, 0.5
  %v4585 = vadd.f32 %v4476, %v4557
  %v4586 = vadd.f32 %v4477, %v4562
  %v4587 = vmul.f32 %v4585, 0.5
  %v4588 = vmul.f32 %v4586, 0.5
  %v4589 = vtanh.pop %v4587
  %v4590 = vtanh.pop %v4588
  %v4591 = vmul.f32 %v4589, 0.5
  %v4592 = vmul.f32 %v4590, 0.5
  %v4593 = vadd.f32 %v4591, 0.5
  %v4594 = vadd.f32 %v4592, 0.5
  %v4595 = vadd.f32 %v4567, %v3469
  %v4596 = vadd.f32 %v4572, %v3474
  %v4597 = vmul.f32 %v4583, %v4595
  %v4598 = vmul.f32 %v4584, %v4596
  %v4599 = vadd.f32 %v4478, %v4597
  %v4600 = vadd.f32 %v4479, %v4598
  %v4601 = vtanh.pop %v4599
  %v4602 = vtanh.pop %v4600
  %v4603 = vsub.f32 1.0, %v4593
  %v4604 = vsub.f32 1.0, %v4594
  %v4605 = vmul.f32 %v4603, %v4601
  %v4606 = vmul.f32 %v4604, %v4602
  %v4607 = vmul.f32 %v4593, %v4329
  %v4608 = vmul.f32 %v4594, %v4330
  %v4609 = vadd.f32 %v4605, %v4607
  %v4610 = vadd.f32 %v4606, %v4608
  %s4611 = scalar_lea.vmem %s4, 128
  %4612 = vst [vmem:[%s4611] sm:$0xff] %v4472
  %4613 = vst [vmem:[%s4611 + $0x8] sm:$0xff] %v4473
  %s4614 = scalar_lea.vmem %s4, 352
  %4615 = vst [vmem:[%s4614 + $0x10] sm:$0xff] %v4609
  %4616 = vst [vmem:[%s4614 + $0x18] sm:$0xff] %v4610
  %v4617 = vld [vmem:[%s1222] sm:$0xff]
  %v4618 = vld [vmem:[%s1222 + $0x8] sm:$0xff]
  %v4619 = vld [vmem:[%s1222 + $0x10] sm:$0xff]
  %v4620 = vld [vmem:[%s1222 + $0x18] sm:$0xff]
  %v4621 = vld [vmem:[%s1222 + $0x20] sm:$0xff]
  %v4622 = vld [vmem:[%s1222 + $0x28] sm:$0xff]
  %4623 = vmatprep.subr.mxu0 0.0
  %4624 = vmatpush1.msra.mxu0 0.0
  %4625 = vmatprep.subr.mxu0 0.0
  %4626 = vmatpush1.msra.mxu0 0.0
  %4627 = vmatprep.subr.mxu0 0.0
  %4628 = vmatpush1.msra.mxu0 0.0
  %4629 = vmatprep.subr.mxu0 0.0
  %4630 = vmatpush1.msra.mxu0 0.0
  %4631 = vmatprep.subr.mxu0 0.0
  %4632 = vmatpush1.msra.mxu0 0.0
  %4633 = vmatprep.subr.mxu0 0.0
  %4634 = vmatpush1.msra.mxu0 0.0
  %4635 = vmatprep.subr.mxu0 0.0
  %4636 = vmatpush1.msra.mxu0 0.0
  %4637 = vmatprep.subr.mxu0 0.0
  %4638 = vmatpush1.msra.mxu0 0.0
  %4639 = vmatprep.subr.mxu0 0.0
  %4640 = vmatpush1.msra.mxu0 0.0
  %4641 = vmatprep.subr.mxu0 0.0
  %4642 = vmatpush1.msra.mxu0 0.0
  %4643 = vmatprep.subr.mxu0 0.0
  %4644 = vmatpush1.msra.mxu0 0.0
  %4645 = vmatprep.subr.mxu0 0.0
  %4646 = vmatpush1.msra.mxu0 0.0
  %4647 = vmatprep.subr.mxu0 0.0
  %4648 = vmatpush1.msra.mxu0 0.0
  %4649 = vmatprep.subr.mxu0 0.0
  %4650 = vmatpush1.msra.mxu0 0.0
  %4651 = vmatprep.subr.mxu0 0.0
  %4652 = vmatpush1.msra.mxu0 %v4473
  %4653 = vmatprep.subr.mxu0 0.0
  %4654 = vmatpush1.msra.mxu0 %v4472
  %4655 = vmatprep.subr.mxu0 0.0
  %4656 = vmatpush2.msra.mxu0 0.0
  %4657 = vmatprep.subr.mxu0 0.0
  %4658 = vmatpush2.msra.mxu0 0.0
  %4659 = vmatprep.subr.mxu0 0.0
  %4660 = vmatpush2.msra.mxu0 0.0
  %4661 = vmatprep.subr.mxu0 0.0
  %4662 = vmatpush2.msra.mxu0 0.0
  %4663 = vmatprep.subr.mxu0 0.0
  %4664 = vmatpush2.msra.mxu0 0.0
  %4665 = vmatprep.subr.mxu0 0.0
  %4666 = vmatpush2.msra.mxu0 0.0
  %4667 = vmatprep.subr.mxu0 0.0
  %4668 = vmatpush2.msra.mxu0 0.0
  %4669 = vmatprep.subr.mxu0 0.0
  %4670 = vmatpush2.msra.mxu0 0.0
  %4671 = vmatprep.subr.mxu0 0.0
  %4672 = vmatpush2.msra.mxu0 0.0
  %4673 = vmatprep.subr.mxu0 0.0
  %4674 = vmatpush2.msra.mxu0 0.0
  %4675 = vmatprep.subr.mxu0 0.0
  %4676 = vmatpush2.msra.mxu0 0.0
  %4677 = vmatprep.subr.mxu0 0.0
  %4678 = vmatpush2.msra.mxu0 0.0
  %4679 = vmatprep.subr.mxu0 0.0
  %4680 = vmatpush2.msra.mxu0 0.0
  %4681 = vmatprep.subr.mxu0 0.0
  %4682 = vmatpush2.msra.mxu0 0.0
  %4683 = vmatprep.subr.mxu0 0.0
  %4684 = vmatpush2.msra.mxu0 0.0
  %4685 = vmatprep.subr.mxu0 0.0
  %4686 = vmatpush2.msra.mxu0 0.0
  %4687 = vmatprep.mubr.f32.mxu0 0.0
  %4688 = vmatmul.mubr.f32.gmra.mxu0 %v3169
  %v4689 = vpop.f32.mrf.mxu0
  %v4690 = vadd.f32 0.0, %v4689
  %v4691 = vpop.f32.mrf.mxu0
  %4692 = vmatprep.mubr.f32.mxu0 0.0
  %4693 = vmatmul.mubr.f32.gmra.mxu0 %v3172
  %v4694 = vpop.f32.mrf.mxu0
  %v4695 = vadd.f32 0.0, %v4694
  %v4696 = vpop.f32.mrf.mxu0
  %4697 = vmatprep.mubr.f32.mxu0 0.0
  %4698 = vmatmul.mubr.f32.gmra.mxu0 %v3175
  %v4699 = vpop.f32.mrf.mxu0
  %v4700 = vadd.f32 0.0, %v4699
  %v4701 = vpop.f32.mrf.mxu0
  %4702 = vmatprep.mubr.f32.mxu0 0.0
  %4703 = vmatmul.mubr.f32.gmra.mxu0 %v3178
  %v4704 = vpop.f32.mrf.mxu0
  %v4705 = vadd.f32 0.0, %v4704
  %v4706 = vpop.f32.mrf.mxu0
  %4707 = vmatprep.mubr.f32.mxu0 0.0
  %4708 = vmatmul.mubr.f32.gmra.mxu0 %v3181
  %v4709 = vpop.f32.mrf.mxu0
  %v4710 = vadd.f32 0.0, %v4709
  %v4711 = vpop.f32.mrf.mxu0
  %4712 = vmatprep.mubr.f32.mxu0 0.0
  %4713 = vmatmul.mubr.f32.gmra.mxu0 %v3184
  %v4714 = vpop.f32.mrf.mxu0
  %v4715 = vadd.f32 0.0, %v4714
  %v4716 = vpop.f32.mrf.mxu0
  %4717 = vdwg.mxu0
  %v4718 = vadd.f32 %v4617, %v4690
  %v4719 = vadd.f32 %v4618, %v4695
  %v4720 = vmul.f32 %v4718, 0.5
  %v4721 = vmul.f32 %v4719, 0.5
  %v4722 = vtanh.pop %v4720
  %v4723 = vtanh.pop %v4721
  %v4724 = vmul.f32 %v4722, 0.5
  %v4725 = vmul.f32 %v4723, 0.5
  %v4726 = vadd.f32 %v4724, 0.5
  %v4727 = vadd.f32 %v4725, 0.5
  %v4728 = vadd.f32 %v4619, %v4700
  %v4729 = vadd.f32 %v4620, %v4705
  %v4730 = vmul.f32 %v4728, 0.5
  %v4731 = vmul.f32 %v4729, 0.5
  %v4732 = vtanh.pop %v4730
  %v4733 = vtanh.pop %v4731
  %v4734 = vmul.f32 %v4732, 0.5
  %v4735 = vmul.f32 %v4733, 0.5
  %v4736 = vadd.f32 %v4734, 0.5
  %v4737 = vadd.f32 %v4735, 0.5
  %v4738 = vadd.f32 %v4710, %v3304
  %v4739 = vadd.f32 %v4715, %v3309
  %v4740 = vmul.f32 %v4726, %v4738
  %v4741 = vmul.f32 %v4727, %v4739
  %v4742 = vadd.f32 %v4621, %v4740
  %v4743 = vadd.f32 %v4622, %v4741
  %v4744 = vtanh.pop %v4742
  %v4745 = vtanh.pop %v4743
  %v4746 = vsub.f32 1.0, %v4736
  %v4747 = vsub.f32 1.0, %v4737
  %v4748 = vmul.f32 %v4746, %v4744
  %v4749 = vmul.f32 %v4747, %v4745
  %v4750 = vmul.f32 %v4736, %v4472
  %v4751 = vmul.f32 %v4737, %v4473
  %v4752 = vadd.f32 %v4748, %v4750
  %v4753 = vadd.f32 %v4749, %v4751
  %v4754 = vld [vmem:[%s2177 + $0x30] sm:$0xff]
  %v4755 = vld [vmem:[%s2177 + $0x38] sm:$0xff]
  %v4756 = vld [vmem:[%s2177 + $0x40] sm:$0xff]
  %v4757 = vld [vmem:[%s2177 + $0x48] sm:$0xff]
  %v4758 = vld [vmem:[%s2177 + $0x50] sm:$0xff]
  %v4759 = vld [vmem:[%s2177 + $0x58] sm:$0xff]
  %4760 = vmatprep.subr.mxu0 0.0
  %4761 = vmatpush1.msra.mxu0 0.0
  %4762 = vmatprep.subr.mxu0 0.0
  %4763 = vmatpush1.msra.mxu0 0.0
  %4764 = vmatprep.subr.mxu0 0.0
  %4765 = vmatpush1.msra.mxu0 0.0
  %4766 = vmatprep.subr.mxu0 0.0
  %4767 = vmatpush1.msra.mxu0 0.0
  %4768 = vmatprep.subr.mxu0 0.0
  %4769 = vmatpush1.msra.mxu0 0.0
  %4770 = vmatprep.subr.mxu0 0.0
  %4771 = vmatpush1.msra.mxu0 0.0
  %4772 = vmatprep.subr.mxu0 0.0
  %4773 = vmatpush1.msra.mxu0 0.0
  %4774 = vmatprep.subr.mxu0 0.0
  %4775 = vmatpush1.msra.mxu0 0.0
  %4776 = vmatprep.subr.mxu0 0.0
  %4777 = vmatpush1.msra.mxu0 0.0
  %4778 = vmatprep.subr.mxu0 0.0
  %4779 = vmatpush1.msra.mxu0 0.0
  %4780 = vmatprep.subr.mxu0 0.0
  %4781 = vmatpush1.msra.mxu0 0.0
  %4782 = vmatprep.subr.mxu0 0.0
  %4783 = vmatpush1.msra.mxu0 0.0
  %4784 = vmatprep.subr.mxu0 0.0
  %4785 = vmatpush1.msra.mxu0 0.0
  %4786 = vmatprep.subr.mxu0 0.0
  %4787 = vmatpush1.msra.mxu0 0.0
  %4788 = vmatprep.subr.mxu0 0.0
  %4789 = vmatpush1.msra.mxu0 %v4610
  %4790 = vmatprep.subr.mxu0 0.0
  %4791 = vmatpush1.msra.mxu0 %v4609
  %4792 = vmatprep.subr.mxu0 0.0
  %4793 = vmatpush2.msra.mxu0 0.0
  %4794 = vmatprep.subr.mxu0 0.0
  %4795 = vmatpush2.msra.mxu0 0.0
  %4796 = vmatprep.subr.mxu0 0.0
  %4797 = vmatpush2.msra.mxu0 0.0
  %4798 = vmatprep.subr.mxu0 0.0
  %4799 = vmatpush2.msra.mxu0 0.0
  %4800 = vmatprep.subr.mxu0 0.0
  %4801 = vmatpush2.msra.mxu0 0.0
  %4802 = vmatprep.subr.mxu0 0.0
  %4803 = vmatpush2.msra.mxu0 0.0
  %4804 = vmatprep.subr.mxu0 0.0
  %4805 = vmatpush2.msra.mxu0 0.0
  %4806 = vmatprep.subr.mxu0 0.0
  %4807 = vmatpush2.msra.mxu0 0.0
  %4808 = vmatprep.subr.mxu0 0.0
  %4809 = vmatpush2.msra.mxu0 0.0
  %4810 = vmatprep.subr.mxu0 0.0
  %4811 = vmatpush2.msra.mxu0 0.0
  %4812 = vmatprep.subr.mxu0 0.0
  %4813 = vmatpush2.msra.mxu0 0.0
  %4814 = vmatprep.subr.mxu0 0.0
  %4815 = vmatpush2.msra.mxu0 0.0
  %4816 = vmatprep.subr.mxu0 0.0
  %4817 = vmatpush2.msra.mxu0 0.0
  %4818 = vmatprep.subr.mxu0 0.0
  %4819 = vmatpush2.msra.mxu0 0.0
  %4820 = vmatprep.subr.mxu0 0.0
  %4821 = vmatpush2.msra.mxu0 0.0
  %4822 = vmatprep.subr.mxu0 0.0
  %4823 = vmatpush2.msra.mxu0 0.0
  %4824 = vmatprep.mubr.f32.mxu0 0.0
  %4825 = vmatmul.mubr.f32.gmra.mxu0 %v3334
  %v4826 = vpop.f32.mrf.mxu0
  %v4827 = vadd.f32 0.0, %v4826
  %v4828 = vpop.f32.mrf.mxu0
  %4829 = vmatprep.mubr.f32.mxu0 0.0
  %4830 = vmatmul.mubr.f32.gmra.mxu0 %v3337
  %v4831 = vpop.f32.mrf.mxu0
  %v4832 = vadd.f32 0.0, %v4831
  %v4833 = vpop.f32.mrf.mxu0
  %4834 = vmatprep.mubr.f32.mxu0 0.0
  %4835 = vmatmul.mubr.f32.gmra.mxu0 %v3340
  %v4836 = vpop.f32.mrf.mxu0
  %v4837 = vadd.f32 0.0, %v4836
  %v4838 = vpop.f32.mrf.mxu0
  %4839 = vmatprep.mubr.f32.mxu0 0.0
  %4840 = vmatmul.mubr.f32.gmra.mxu0 %v3343
  %v4841 = vpop.f32.mrf.mxu0
  %v4842 = vadd.f32 0.0, %v4841
  %v4843 = vpop.f32.mrf.mxu0
  %4844 = vmatprep.mubr.f32.mxu0 0.0
  %4845 = vmatmul.mubr.f32.gmra.mxu0 %v3346
  %v4846 = vpop.f32.mrf.mxu0
  %v4847 = vadd.f32 0.0, %v4846
  %v4848 = vpop.f32.mrf.mxu0
  %4849 = vmatprep.mubr.f32.mxu0 0.0
  %4850 = vmatmul.mubr.f32.gmra.mxu0 %v3349
  %v4851 = vpop.f32.mrf.mxu0
  %v4852 = vadd.f32 0.0, %v4851
  %v4853 = vpop.f32.mrf.mxu0
  %4854 = vdwg.mxu0
  %v4855 = vadd.f32 %v4754, %v4827
  %v4856 = vadd.f32 %v4755, %v4832
  %v4857 = vmul.f32 %v4855, 0.5
  %v4858 = vmul.f32 %v4856, 0.5
  %v4859 = vtanh.pop %v4857
  %v4860 = vtanh.pop %v4858
  %v4861 = vmul.f32 %v4859, 0.5
  %v4862 = vmul.f32 %v4860, 0.5
  %v4863 = vadd.f32 %v4861, 0.5
  %v4864 = vadd.f32 %v4862, 0.5
  %v4865 = vadd.f32 %v4756, %v4837
  %v4866 = vadd.f32 %v4757, %v4842
  %v4867 = vmul.f32 %v4865, 0.5
  %v4868 = vmul.f32 %v4866, 0.5
  %v4869 = vtanh.pop %v4867
  %v4870 = vtanh.pop %v4868
  %v4871 = vmul.f32 %v4869, 0.5
  %v4872 = vmul.f32 %v4870, 0.5
  %v4873 = vadd.f32 %v4871, 0.5
  %v4874 = vadd.f32 %v4872, 0.5
  %v4875 = vadd.f32 %v4847, %v3469
  %v4876 = vadd.f32 %v4852, %v3474
  %v4877 = vmul.f32 %v4863, %v4875
  %v4878 = vmul.f32 %v4864, %v4876
  %v4879 = vadd.f32 %v4758, %v4877
  %v4880 = vadd.f32 %v4759, %v4878
  %v4881 = vtanh.pop %v4879
  %v4882 = vtanh.pop %v4880
  %v4883 = vsub.f32 1.0, %v4873
  %v4884 = vsub.f32 1.0, %v4874
  %v4885 = vmul.f32 %v4883, %v4881
  %v4886 = vmul.f32 %v4884, %v4882
  %v4887 = vmul.f32 %v4873, %v4609
  %v4888 = vmul.f32 %v4874, %v4610
  %v4889 = vadd.f32 %v4885, %v4887
  %v4890 = vadd.f32 %v4886, %v4888
  %s4891 = scalar_lea.vmem %s4, 160
  %4892 = vst [vmem:[%s4891] sm:$0xff] %v4752
  %4893 = vst [vmem:[%s4891 + $0x8] sm:$0xff] %v4753
  %s4894 = scalar_lea.vmem %s4, 320
  %4895 = vst [vmem:[%s4894 + $0x10] sm:$0xff] %v4889
  %4896 = vst [vmem:[%s4894 + $0x18] sm:$0xff] %v4890
  %v4897 = vld [vmem:[%s1413] sm:$0xff]
  %v4898 = vld [vmem:[%s1413 + $0x8] sm:$0xff]
  %v4899 = vld [vmem:[%s1413 + $0x10] sm:$0xff]
  %v4900 = vld [vmem:[%s1413 + $0x18] sm:$0xff]
  %v4901 = vld [vmem:[%s1413 + $0x20] sm:$0xff]
  %v4902 = vld [vmem:[%s1413 + $0x28] sm:$0xff]
  %4903 = vmatprep.subr.mxu0 0.0
  %4904 = vmatpush1.msra.mxu0 0.0
  %4905 = vmatprep.subr.mxu0 0.0
  %4906 = vmatpush1.msra.mxu0 0.0
  %4907 = vmatprep.subr.mxu0 0.0
  %4908 = vmatpush1.msra.mxu0 0.0
  %4909 = vmatprep.subr.mxu0 0.0
  %4910 = vmatpush1.msra.mxu0 0.0
  %4911 = vmatprep.subr.mxu0 0.0
  %4912 = vmatpush1.msra.mxu0 0.0
  %4913 = vmatprep.subr.mxu0 0.0
  %4914 = vmatpush1.msra.mxu0 0.0
  %4915 = vmatprep.subr.mxu0 0.0
  %4916 = vmatpush1.msra.mxu0 0.0
  %4917 = vmatprep.subr.mxu0 0.0
  %4918 = vmatpush1.msra.mxu0 0.0
  %4919 = vmatprep.subr.mxu0 0.0
  %4920 = vmatpush1.msra.mxu0 0.0
  %4921 = vmatprep.subr.mxu0 0.0
  %4922 = vmatpush1.msra.mxu0 0.0
  %4923 = vmatprep.subr.mxu0 0.0
  %4924 = vmatpush1.msra.mxu0 0.0
  %4925 = vmatprep.subr.mxu0 0.0
  %4926 = vmatpush1.msra.mxu0 0.0
  %4927 = vmatprep.subr.mxu0 0.0
  %4928 = vmatpush1.msra.mxu0 0.0
  %4929 = vmatprep.subr.mxu0 0.0
  %4930 = vmatpush1.msra.mxu0 0.0
  %4931 = vmatprep.subr.mxu0 0.0
  %4932 = vmatpush1.msra.mxu0 %v4753
  %4933 = vmatprep.subr.mxu0 0.0
  %4934 = vmatpush1.msra.mxu0 %v4752
  %4935 = vmatprep.subr.mxu0 0.0
  %4936 = vmatpush2.msra.mxu0 0.0
  %4937 = vmatprep.subr.mxu0 0.0
  %4938 = vmatpush2.msra.mxu0 0.0
  %4939 = vmatprep.subr.mxu0 0.0
  %4940 = vmatpush2.msra.mxu0 0.0
  %4941 = vmatprep.subr.mxu0 0.0
  %4942 = vmatpush2.msra.mxu0 0.0
  %4943 = vmatprep.subr.mxu0 0.0
  %4944 = vmatpush2.msra.mxu0 0.0
  %4945 = vmatprep.subr.mxu0 0.0
  %4946 = vmatpush2.msra.mxu0 0.0
  %4947 = vmatprep.subr.mxu0 0.0
  %4948 = vmatpush2.msra.mxu0 0.0
  %4949 = vmatprep.subr.mxu0 0.0
  %4950 = vmatpush2.msra.mxu0 0.0
  %4951 = vmatprep.subr.mxu0 0.0
  %4952 = vmatpush2.msra.mxu0 0.0
  %4953 = vmatprep.subr.mxu0 0.0
  %4954 = vmatpush2.msra.mxu0 0.0
  %4955 = vmatprep.subr.mxu0 0.0
  %4956 = vmatpush2.msra.mxu0 0.0
  %4957 = vmatprep.subr.mxu0 0.0
  %4958 = vmatpush2.msra.mxu0 0.0
  %4959 = vmatprep.subr.mxu0 0.0
  %4960 = vmatpush2.msra.mxu0 0.0
  %4961 = vmatprep.subr.mxu0 0.0
  %4962 = vmatpush2.msra.mxu0 0.0
  %4963 = vmatprep.subr.mxu0 0.0
  %4964 = vmatpush2.msra.mxu0 0.0
  %4965 = vmatprep.subr.mxu0 0.0
  %4966 = vmatpush2.msra.mxu0 0.0
  %4967 = vmatprep.mubr.f32.mxu0 0.0
  %4968 = vmatmul.mubr.f32.gmra.mxu0 %v3169
  %v4969 = vpop.f32.mrf.mxu0
  %v4970 = vadd.f32 0.0, %v4969
  %v4971 = vpop.f32.mrf.mxu0
  %4972 = vmatprep.mubr.f32.mxu0 0.0
  %4973 = vmatmul.mubr.f32.gmra.mxu0 %v3172
  %v4974 = vpop.f32.mrf.mxu0
  %v4975 = vadd.f32 0.0, %v4974
  %v4976 = vpop.f32.mrf.mxu0
  %4977 = vmatprep.mubr.f32.mxu0 0.0
  %4978 = vmatmul.mubr.f32.gmra.mxu0 %v3175
  %v4979 = vpop.f32.mrf.mxu0
  %v4980 = vadd.f32 0.0, %v4979
  %v4981 = vpop.f32.mrf.mxu0
  %4982 = vmatprep.mubr.f32.mxu0 0.0
  %4983 = vmatmul.mubr.f32.gmra.mxu0 %v3178
  %v4984 = vpop.f32.mrf.mxu0
  %v4985 = vadd.f32 0.0, %v4984
  %v4986 = vpop.f32.mrf.mxu0
  %4987 = vmatprep.mubr.f32.mxu0 0.0
  %4988 = vmatmul.mubr.f32.gmra.mxu0 %v3181
  %v4989 = vpop.f32.mrf.mxu0
  %v4990 = vadd.f32 0.0, %v4989
  %v4991 = vpop.f32.mrf.mxu0
  %4992 = vmatprep.mubr.f32.mxu0 0.0
  %4993 = vmatmul.mubr.f32.gmra.mxu0 %v3184
  %v4994 = vpop.f32.mrf.mxu0
  %v4995 = vadd.f32 0.0, %v4994
  %v4996 = vpop.f32.mrf.mxu0
  %4997 = vdwg.mxu0
  %v4998 = vadd.f32 %v4897, %v4970
  %v4999 = vadd.f32 %v4898, %v4975
  %v5000 = vmul.f32 %v4998, 0.5
  %v5001 = vmul.f32 %v4999, 0.5
  %v5002 = vtanh.pop %v5000
  %v5003 = vtanh.pop %v5001
  %v5004 = vmul.f32 %v5002, 0.5
  %v5005 = vmul.f32 %v5003, 0.5
  %v5006 = vadd.f32 %v5004, 0.5
  %v5007 = vadd.f32 %v5005, 0.5
  %v5008 = vadd.f32 %v4899, %v4980
  %v5009 = vadd.f32 %v4900, %v4985
  %v5010 = vmul.f32 %v5008, 0.5
  %v5011 = vmul.f32 %v5009, 0.5
  %v5012 = vtanh.pop %v5010
  %v5013 = vtanh.pop %v5011
  %v5014 = vmul.f32 %v5012, 0.5
  %v5015 = vmul.f32 %v5013, 0.5
  %v5016 = vadd.f32 %v5014, 0.5
  %v5017 = vadd.f32 %v5015, 0.5
  %v5018 = vadd.f32 %v4990, %v3304
  %v5019 = vadd.f32 %v4995, %v3309
  %v5020 = vmul.f32 %v5006, %v5018
  %v5021 = vmul.f32 %v5007, %v5019
  %v5022 = vadd.f32 %v4901, %v5020
  %v5023 = vadd.f32 %v4902, %v5021
  %v5024 = vtanh.pop %v5022
  %v5025 = vtanh.pop %v5023
  %v5026 = vsub.f32 1.0, %v5016
  %v5027 = vsub.f32 1.0, %v5017
  %v5028 = vmul.f32 %v5026, %v5024
  %v5029 = vmul.f32 %v5027, %v5025
  %v5030 = vmul.f32 %v5016, %v4752
  %v5031 = vmul.f32 %v5017, %v4753
  %v5032 = vadd.f32 %v5028, %v5030
  %v5033 = vadd.f32 %v5029, %v5031
  %v5034 = vld [vmem:[%s1986 + $0x30] sm:$0xff]
  %v5035 = vld [vmem:[%s1986 + $0x38] sm:$0xff]
  %v5036 = vld [vmem:[%s1986 + $0x40] sm:$0xff]
  %v5037 = vld [vmem:[%s1986 + $0x48] sm:$0xff]
  %v5038 = vld [vmem:[%s1986 + $0x50] sm:$0xff]
  %v5039 = vld [vmem:[%s1986 + $0x58] sm:$0xff]
  %5040 = vmatprep.subr.mxu0 0.0
  %5041 = vmatpush1.msra.mxu0 0.0
  %5042 = vmatprep.subr.mxu0 0.0
  %5043 = vmatpush1.msra.mxu0 0.0
  %5044 = vmatprep.subr.mxu0 0.0
  %5045 = vmatpush1.msra.mxu0 0.0
  %5046 = vmatprep.subr.mxu0 0.0
  %5047 = vmatpush1.msra.mxu0 0.0
  %5048 = vmatprep.subr.mxu0 0.0
  %5049 = vmatpush1.msra.mxu0 0.0
  %5050 = vmatprep.subr.mxu0 0.0
  %5051 = vmatpush1.msra.mxu0 0.0
  %5052 = vmatprep.subr.mxu0 0.0
  %5053 = vmatpush1.msra.mxu0 0.0
  %5054 = vmatprep.subr.mxu0 0.0
  %5055 = vmatpush1.msra.mxu0 0.0
  %5056 = vmatprep.subr.mxu0 0.0
  %5057 = vmatpush1.msra.mxu0 0.0
  %5058 = vmatprep.subr.mxu0 0.0
  %5059 = vmatpush1.msra.mxu0 0.0
  %5060 = vmatprep.subr.mxu0 0.0
  %5061 = vmatpush1.msra.mxu0 0.0
  %5062 = vmatprep.subr.mxu0 0.0
  %5063 = vmatpush1.msra.mxu0 0.0
  %5064 = vmatprep.subr.mxu0 0.0
  %5065 = vmatpush1.msra.mxu0 0.0
  %5066 = vmatprep.subr.mxu0 0.0
  %5067 = vmatpush1.msra.mxu0 0.0
  %5068 = vmatprep.subr.mxu0 0.0
  %5069 = vmatpush1.msra.mxu0 %v4890
  %5070 = vmatprep.subr.mxu0 0.0
  %5071 = vmatpush1.msra.mxu0 %v4889
  %5072 = vmatprep.subr.mxu0 0.0
  %5073 = vmatpush2.msra.mxu0 0.0
  %5074 = vmatprep.subr.mxu0 0.0
  %5075 = vmatpush2.msra.mxu0 0.0
  %5076 = vmatprep.subr.mxu0 0.0
  %5077 = vmatpush2.msra.mxu0 0.0
  %5078 = vmatprep.subr.mxu0 0.0
  %5079 = vmatpush2.msra.mxu0 0.0
  %5080 = vmatprep.subr.mxu0 0.0
  %5081 = vmatpush2.msra.mxu0 0.0
  %5082 = vmatprep.subr.mxu0 0.0
  %5083 = vmatpush2.msra.mxu0 0.0
  %5084 = vmatprep.subr.mxu0 0.0
  %5085 = vmatpush2.msra.mxu0 0.0
  %5086 = vmatprep.subr.mxu0 0.0
  %5087 = vmatpush2.msra.mxu0 0.0
  %5088 = vmatprep.subr.mxu0 0.0
  %5089 = vmatpush2.msra.mxu0 0.0
  %5090 = vmatprep.subr.mxu0 0.0
  %5091 = vmatpush2.msra.mxu0 0.0
  %5092 = vmatprep.subr.mxu0 0.0
  %5093 = vmatpush2.msra.mxu0 0.0
  %5094 = vmatprep.subr.mxu0 0.0
  %5095 = vmatpush2.msra.mxu0 0.0
  %5096 = vmatprep.subr.mxu0 0.0
  %5097 = vmatpush2.msra.mxu0 0.0
  %5098 = vmatprep.subr.mxu0 0.0
  %5099 = vmatpush2.msra.mxu0 0.0
  %5100 = vmatprep.subr.mxu0 0.0
  %5101 = vmatpush2.msra.mxu0 0.0
  %5102 = vmatprep.subr.mxu0 0.0
  %5103 = vmatpush2.msra.mxu0 0.0
  %5104 = vmatprep.mubr.f32.mxu0 0.0
  %5105 = vmatmul.mubr.f32.gmra.mxu0 %v3334
  %v5106 = vpop.f32.mrf.mxu0
  %v5107 = vadd.f32 0.0, %v5106
  %v5108 = vpop.f32.mrf.mxu0
  %5109 = vmatprep.mubr.f32.mxu0 0.0
  %5110 = vmatmul.mubr.f32.gmra.mxu0 %v3337
  %v5111 = vpop.f32.mrf.mxu0
  %v5112 = vadd.f32 0.0, %v5111
  %v5113 = vpop.f32.mrf.mxu0
  %5114 = vmatprep.mubr.f32.mxu0 0.0
  %5115 = vmatmul.mubr.f32.gmra.mxu0 %v3340
  %v5116 = vpop.f32.mrf.mxu0
  %v5117 = vadd.f32 0.0, %v5116
  %v5118 = vpop.f32.mrf.mxu0
  %5119 = vmatprep.mubr.f32.mxu0 0.0
  %5120 = vmatmul.mubr.f32.gmra.mxu0 %v3343
  %v5121 = vpop.f32.mrf.mxu0
  %v5122 = vadd.f32 0.0, %v5121
  %v5123 = vpop.f32.mrf.mxu0
  %5124 = vmatprep.mubr.f32.mxu0 0.0
  %5125 = vmatmul.mubr.f32.gmra.mxu0 %v3346
  %v5126 = vpop.f32.mrf.mxu0
  %v5127 = vadd.f32 0.0, %v5126
  %v5128 = vpop.f32.mrf.mxu0
  %5129 = vmatprep.mubr.f32.mxu0 0.0
  %5130 = vmatmul.mubr.f32.gmra.mxu0 %v3349
  %v5131 = vpop.f32.mrf.mxu0
  %v5132 = vadd.f32 0.0, %v5131
  %v5133 = vpop.f32.mrf.mxu0
  %5134 = vdwg.mxu0
  %v5135 = vadd.f32 %v5034, %v5107
  %v5136 = vadd.f32 %v5035, %v5112
  %v5137 = vmul.f32 %v5135, 0.5
  %v5138 = vmul.f32 %v5136, 0.5
  %v5139 = vtanh.pop %v5137
  %v5140 = vtanh.pop %v5138
  %v5141 = vmul.f32 %v5139, 0.5
  %v5142 = vmul.f32 %v5140, 0.5
  %v5143 = vadd.f32 %v5141, 0.5
  %v5144 = vadd.f32 %v5142, 0.5
  %v5145 = vadd.f32 %v5036, %v5117
  %v5146 = vadd.f32 %v5037, %v5122
  %v5147 = vmul.f32 %v5145, 0.5
  %v5148 = vmul.f32 %v5146, 0.5
  %v5149 = vtanh.pop %v5147
  %v5150 = vtanh.pop %v5148
  %v5151 = vmul.f32 %v5149, 0.5
  %v5152 = vmul.f32 %v5150, 0.5
  %v5153 = vadd.f32 %v5151, 0.5
  %v5154 = vadd.f32 %v5152, 0.5
  %v5155 = vadd.f32 %v5127, %v3469
  %v5156 = vadd.f32 %v5132, %v3474
  %v5157 = vmul.f32 %v5143, %v5155
  %v5158 = vmul.f32 %v5144, %v5156
  %v5159 = vadd.f32 %v5038, %v5157
  %v5160 = vadd.f32 %v5039, %v5158
  %v5161 = vtanh.pop %v5159
  %v5162 = vtanh.pop %v5160
  %v5163 = vsub.f32 1.0, %v5153
  %v5164 = vsub.f32 1.0, %v5154
  %v5165 = vmul.f32 %v5163, %v5161
  %v5166 = vmul.f32 %v5164, %v5162
  %v5167 = vmul.f32 %v5153, %v4889
  %v5168 = vmul.f32 %v5154, %v4890
  %v5169 = vadd.f32 %v5165, %v5167
  %v5170 = vadd.f32 %v5166, %v5168
  %s5171 = scalar_lea.vmem %s4, 192
  %5172 = vst [vmem:[%s5171] sm:$0xff] %v5032
  %5173 = vst [vmem:[%s5171 + $0x8] sm:$0xff] %v5033
  %s5174 = scalar_lea.vmem %s4, 288
  %5175 = vst [vmem:[%s5174 + $0x10] sm:$0xff] %v5169
  %5176 = vst [vmem:[%s5174 + $0x18] sm:$0xff] %v5170
  %v5177 = vld [vmem:[%s1604] sm:$0xff]
  %v5178 = vld [vmem:[%s1604 + $0x8] sm:$0xff]
  %v5179 = vld [vmem:[%s1604 + $0x10] sm:$0xff]
  %v5180 = vld [vmem:[%s1604 + $0x18] sm:$0xff]
  %v5181 = vld [vmem:[%s1604 + $0x20] sm:$0xff]
  %v5182 = vld [vmem:[%s1604 + $0x28] sm:$0xff]
  %5183 = vmatprep.subr.mxu0 0.0
  %5184 = vmatpush1.msra.mxu0 0.0
  %5185 = vmatprep.subr.mxu0 0.0
  %5186 = vmatpush1.msra.mxu0 0.0
  %5187 = vmatprep.subr.mxu0 0.0
  %5188 = vmatpush1.msra.mxu0 0.0
  %5189 = vmatprep.subr.mxu0 0.0
  %5190 = vmatpush1.msra.mxu0 0.0
  %5191 = vmatprep.subr.mxu0 0.0
  %5192 = vmatpush1.msra.mxu0 0.0
  %5193 = vmatprep.subr.mxu0 0.0
  %5194 = vmatpush1.msra.mxu0 0.0
  %5195 = vmatprep.subr.mxu0 0.0
  %5196 = vmatpush1.msra.mxu0 0.0
  %5197 = vmatprep.subr.mxu0 0.0
  %5198 = vmatpush1.msra.mxu0 0.0
  %5199 = vmatprep.subr.mxu0 0.0
  %5200 = vmatpush1.msra.mxu0 0.0
  %5201 = vmatprep.subr.mxu0 0.0
  %5202 = vmatpush1.msra.mxu0 0.0
  %5203 = vmatprep.subr.mxu0 0.0
  %5204 = vmatpush1.msra.mxu0 0.0
  %5205 = vmatprep.subr.mxu0 0.0
  %5206 = vmatpush1.msra.mxu0 0.0
  %5207 = vmatprep.subr.mxu0 0.0
  %5208 = vmatpush1.msra.mxu0 0.0
  %5209 = vmatprep.subr.mxu0 0.0
  %5210 = vmatpush1.msra.mxu0 0.0
  %5211 = vmatprep.subr.mxu0 0.0
  %5212 = vmatpush1.msra.mxu0 %v5033
  %5213 = vmatprep.subr.mxu0 0.0
  %5214 = vmatpush1.msra.mxu0 %v5032
  %5215 = vmatprep.subr.mxu0 0.0
  %5216 = vmatpush2.msra.mxu0 0.0
  %5217 = vmatprep.subr.mxu0 0.0
  %5218 = vmatpush2.msra.mxu0 0.0
  %5219 = vmatprep.subr.mxu0 0.0
  %5220 = vmatpush2.msra.mxu0 0.0
  %5221 = vmatprep.subr.mxu0 0.0
  %5222 = vmatpush2.msra.mxu0 0.0
  %5223 = vmatprep.subr.mxu0 0.0
  %5224 = vmatpush2.msra.mxu0 0.0
  %5225 = vmatprep.subr.mxu0 0.0
  %5226 = vmatpush2.msra.mxu0 0.0
  %5227 = vmatprep.subr.mxu0 0.0
  %5228 = vmatpush2.msra.mxu0 0.0
  %5229 = vmatprep.subr.mxu0 0.0
  %5230 = vmatpush2.msra.mxu0 0.0
  %5231 = vmatprep.subr.mxu0 0.0
  %5232 = vmatpush2.msra.mxu0 0.0
  %5233 = vmatprep.subr.mxu0 0.0
  %5234 = vmatpush2.msra.mxu0 0.0
  %5235 = vmatprep.subr.mxu0 0.0
  %5236 = vmatpush2.msra.mxu0 0.0
  %5237 = vmatprep.subr.mxu0 0.0
  %5238 = vmatpush2.msra.mxu0 0.0
  %5239 = vmatprep.subr.mxu0 0.0
  %5240 = vmatpush2.msra.mxu0 0.0
  %5241 = vmatprep.subr.mxu0 0.0
  %5242 = vmatpush2.msra.mxu0 0.0
  %5243 = vmatprep.subr.mxu0 0.0
  %5244 = vmatpush2.msra.mxu0 0.0
  %5245 = vmatprep.subr.mxu0 0.0
  %5246 = vmatpush2.msra.mxu0 0.0
  %5247 = vmatprep.mubr.f32.mxu0 0.0
  %5248 = vmatmul.mubr.f32.gmra.mxu0 %v3169
  %v5249 = vpop.f32.mrf.mxu0
  %v5250 = vadd.f32 0.0, %v5249
  %v5251 = vpop.f32.mrf.mxu0
  %5252 = vmatprep.mubr.f32.mxu0 0.0
  %5253 = vmatmul.mubr.f32.gmra.mxu0 %v3172
  %v5254 = vpop.f32.mrf.mxu0
  %v5255 = vadd.f32 0.0, %v5254
  %v5256 = vpop.f32.mrf.mxu0
  %5257 = vmatprep.mubr.f32.mxu0 0.0
  %5258 = vmatmul.mubr.f32.gmra.mxu0 %v3175
  %v5259 = vpop.f32.mrf.mxu0
  %v5260 = vadd.f32 0.0, %v5259
  %v5261 = vpop.f32.mrf.mxu0
  %5262 = vmatprep.mubr.f32.mxu0 0.0
  %5263 = vmatmul.mubr.f32.gmra.mxu0 %v3178
  %v5264 = vpop.f32.mrf.mxu0
  %v5265 = vadd.f32 0.0, %v5264
  %v5266 = vpop.f32.mrf.mxu0
  %5267 = vmatprep.mubr.f32.mxu0 0.0
  %5268 = vmatmul.mubr.f32.gmra.mxu0 %v3181
  %v5269 = vpop.f32.mrf.mxu0
  %v5270 = vadd.f32 0.0, %v5269
  %v5271 = vpop.f32.mrf.mxu0
  %5272 = vmatprep.mubr.f32.mxu0 0.0
  %5273 = vmatmul.mubr.f32.gmra.mxu0 %v3184
  %v5274 = vpop.f32.mrf.mxu0
  %v5275 = vadd.f32 0.0, %v5274
  %v5276 = vpop.f32.mrf.mxu0
  %5277 = vdwg.mxu0
  %v5278 = vadd.f32 %v5177, %v5250
  %v5279 = vadd.f32 %v5178, %v5255
  %v5280 = vmul.f32 %v5278, 0.5
  %v5281 = vmul.f32 %v5279, 0.5
  %v5282 = vtanh.pop %v5280
  %v5283 = vtanh.pop %v5281
  %v5284 = vmul.f32 %v5282, 0.5
  %v5285 = vmul.f32 %v5283, 0.5
  %v5286 = vadd.f32 %v5284, 0.5
  %v5287 = vadd.f32 %v5285, 0.5
  %v5288 = vadd.f32 %v5179, %v5260
  %v5289 = vadd.f32 %v5180, %v5265
  %v5290 = vmul.f32 %v5288, 0.5
  %v5291 = vmul.f32 %v5289, 0.5
  %v5292 = vtanh.pop %v5290
  %v5293 = vtanh.pop %v5291
  %v5294 = vmul.f32 %v5292, 0.5
  %v5295 = vmul.f32 %v5293, 0.5
  %v5296 = vadd.f32 %v5294, 0.5
  %v5297 = vadd.f32 %v5295, 0.5
  %v5298 = vadd.f32 %v5270, %v3304
  %v5299 = vadd.f32 %v5275, %v3309
  %v5300 = vmul.f32 %v5286, %v5298
  %v5301 = vmul.f32 %v5287, %v5299
  %v5302 = vadd.f32 %v5181, %v5300
  %v5303 = vadd.f32 %v5182, %v5301
  %v5304 = vtanh.pop %v5302
  %v5305 = vtanh.pop %v5303
  %v5306 = vsub.f32 1.0, %v5296
  %v5307 = vsub.f32 1.0, %v5297
  %v5308 = vmul.f32 %v5306, %v5304
  %v5309 = vmul.f32 %v5307, %v5305
  %v5310 = vmul.f32 %v5296, %v5032
  %v5311 = vmul.f32 %v5297, %v5033
  %v5312 = vadd.f32 %v5308, %v5310
  %v5313 = vadd.f32 %v5309, %v5311
  %v5314 = vld [vmem:[%s1795 + $0x30] sm:$0xff]
  %v5315 = vld [vmem:[%s1795 + $0x38] sm:$0xff]
  %v5316 = vld [vmem:[%s1795 + $0x40] sm:$0xff]
  %v5317 = vld [vmem:[%s1795 + $0x48] sm:$0xff]
  %v5318 = vld [vmem:[%s1795 + $0x50] sm:$0xff]
  %v5319 = vld [vmem:[%s1795 + $0x58] sm:$0xff]
  %5320 = vmatprep.subr.mxu0 0.0
  %5321 = vmatpush1.msra.mxu0 0.0
  %5322 = vmatprep.subr.mxu0 0.0
  %5323 = vmatpush1.msra.mxu0 0.0
  %5324 = vmatprep.subr.mxu0 0.0
  %5325 = vmatpush1.msra.mxu0 0.0
  %5326 = vmatprep.subr.mxu0 0.0
  %5327 = vmatpush1.msra.mxu0 0.0
  %5328 = vmatprep.subr.mxu0 0.0
  %5329 = vmatpush1.msra.mxu0 0.0
  %5330 = vmatprep.subr.mxu0 0.0
  %5331 = vmatpush1.msra.mxu0 0.0
  %5332 = vmatprep.subr.mxu0 0.0
  %5333 = vmatpush1.msra.mxu0 0.0
  %5334 = vmatprep.subr.mxu0 0.0
  %5335 = vmatpush1.msra.mxu0 0.0
  %5336 = vmatprep.subr.mxu0 0.0
  %5337 = vmatpush1.msra.mxu0 0.0
  %5338 = vmatprep.subr.mxu0 0.0
  %5339 = vmatpush1.msra.mxu0 0.0
  %5340 = vmatprep.subr.mxu0 0.0
  %5341 = vmatpush1.msra.mxu0 0.0
  %5342 = vmatprep.subr.mxu0 0.0
  %5343 = vmatpush1.msra.mxu0 0.0
  %5344 = vmatprep.subr.mxu0 0.0
  %5345 = vmatpush1.msra.mxu0 0.0
  %5346 = vmatprep.subr.mxu0 0.0
  %5347 = vmatpush1.msra.mxu0 0.0
  %5348 = vmatprep.subr.mxu0 0.0
  %5349 = vmatpush1.msra.mxu0 %v5170
  %5350 = vmatprep.subr.mxu0 0.0
  %5351 = vmatpush1.msra.mxu0 %v5169
  %5352 = vmatprep.subr.mxu0 0.0
  %5353 = vmatpush2.msra.mxu0 0.0
  %5354 = vmatprep.subr.mxu0 0.0
  %5355 = vmatpush2.msra.mxu0 0.0
  %5356 = vmatprep.subr.mxu0 0.0
  %5357 = vmatpush2.msra.mxu0 0.0
  %5358 = vmatprep.subr.mxu0 0.0
  %5359 = vmatpush2.msra.mxu0 0.0
  %5360 = vmatprep.subr.mxu0 0.0
  %5361 = vmatpush2.msra.mxu0 0.0
  %5362 = vmatprep.subr.mxu0 0.0
  %5363 = vmatpush2.msra.mxu0 0.0
  %5364 = vmatprep.subr.mxu0 0.0
  %5365 = vmatpush2.msra.mxu0 0.0
  %5366 = vmatprep.subr.mxu0 0.0
  %5367 = vmatpush2.msra.mxu0 0.0
  %5368 = vmatprep.subr.mxu0 0.0
  %5369 = vmatpush2.msra.mxu0 0.0
  %5370 = vmatprep.subr.mxu0 0.0
  %5371 = vmatpush2.msra.mxu0 0.0
  %5372 = vmatprep.subr.mxu0 0.0
  %5373 = vmatpush2.msra.mxu0 0.0
  %5374 = vmatprep.subr.mxu0 0.0
  %5375 = vmatpush2.msra.mxu0 0.0
  %5376 = vmatprep.subr.mxu0 0.0
  %5377 = vmatpush2.msra.mxu0 0.0
  %5378 = vmatprep.subr.mxu0 0.0
  %5379 = vmatpush2.msra.mxu0 0.0
  %5380 = vmatprep.subr.mxu0 0.0
  %5381 = vmatpush2.msra.mxu0 0.0
  %5382 = vmatprep.subr.mxu0 0.0
  %5383 = vmatpush2.msra.mxu0 0.0
  %5384 = vmatprep.mubr.f32.mxu0 0.0
  %5385 = vmatmul.mubr.f32.gmra.mxu0 %v3334
  %v5386 = vpop.f32.mrf.mxu0
  %v5387 = vadd.f32 0.0, %v5386
  %v5388 = vpop.f32.mrf.mxu0
  %5389 = vmatprep.mubr.f32.mxu0 0.0
  %5390 = vmatmul.mubr.f32.gmra.mxu0 %v3337
  %v5391 = vpop.f32.mrf.mxu0
  %v5392 = vadd.f32 0.0, %v5391
  %v5393 = vpop.f32.mrf.mxu0
  %5394 = vmatprep.mubr.f32.mxu0 0.0
  %5395 = vmatmul.mubr.f32.gmra.mxu0 %v3340
  %v5396 = vpop.f32.mrf.mxu0
  %v5397 = vadd.f32 0.0, %v5396
  %v5398 = vpop.f32.mrf.mxu0
  %5399 = vmatprep.mubr.f32.mxu0 0.0
  %5400 = vmatmul.mubr.f32.gmra.mxu0 %v3343
  %v5401 = vpop.f32.mrf.mxu0
  %v5402 = vadd.f32 0.0, %v5401
  %v5403 = vpop.f32.mrf.mxu0
  %5404 = vmatprep.mubr.f32.mxu0 0.0
  %5405 = vmatmul.mubr.f32.gmra.mxu0 %v3346
  %v5406 = vpop.f32.mrf.mxu0
  %v5407 = vadd.f32 0.0, %v5406
  %v5408 = vpop.f32.mrf.mxu0
  %5409 = vmatprep.mubr.f32.mxu0 0.0
  %5410 = vmatmul.mubr.f32.gmra.mxu0 %v3349
  %v5411 = vpop.f32.mrf.mxu0
  %v5412 = vadd.f32 0.0, %v5411
  %v5413 = vpop.f32.mrf.mxu0
  %5414 = vdwg.mxu0
  %v5415 = vadd.f32 %v5314, %v5387
  %v5416 = vadd.f32 %v5315, %v5392
  %v5417 = vmul.f32 %v5415, 0.5
  %v5418 = vmul.f32 %v5416, 0.5
  %v5419 = vtanh.pop %v5417
  %v5420 = vtanh.pop %v5418
  %v5421 = vmul.f32 %v5419, 0.5
  %v5422 = vmul.f32 %v5420, 0.5
  %v5423 = vadd.f32 %v5421, 0.5
  %v5424 = vadd.f32 %v5422, 0.5
  %v5425 = vadd.f32 %v5316, %v5397
  %v5426 = vadd.f32 %v5317, %v5402
  %v5427 = vmul.f32 %v5425, 0.5
  %v5428 = vmul.f32 %v5426, 0.5
  %v5429 = vtanh.pop %v5427
  %v5430 = vtanh.pop %v5428
  %v5431 = vmul.f32 %v5429, 0.5
  %v5432 = vmul.f32 %v5430, 0.5
  %v5433 = vadd.f32 %v5431, 0.5
  %v5434 = vadd.f32 %v5432, 0.5
  %v5435 = vadd.f32 %v5407, %v3469
  %v5436 = vadd.f32 %v5412, %v3474
  %v5437 = vmul.f32 %v5423, %v5435
  %v5438 = vmul.f32 %v5424, %v5436
  %v5439 = vadd.f32 %v5318, %v5437
  %v5440 = vadd.f32 %v5319, %v5438
  %v5441 = vtanh.pop %v5439
  %v5442 = vtanh.pop %v5440
  %v5443 = vsub.f32 1.0, %v5433
  %v5444 = vsub.f32 1.0, %v5434
  %v5445 = vmul.f32 %v5443, %v5441
  %v5446 = vmul.f32 %v5444, %v5442
  %v5447 = vmul.f32 %v5433, %v5169
  %v5448 = vmul.f32 %v5434, %v5170
  %v5449 = vadd.f32 %v5445, %v5447
  %v5450 = vadd.f32 %v5446, %v5448
  %s5451 = scalar_lea.vmem %s4, 224
  %5452 = vst [vmem:[%s5451] sm:$0xff] %v5312
  %5453 = vst [vmem:[%s5451 + $0x8] sm:$0xff] %v5313
  %s5454 = scalar_lea.vmem %s4, 256
  %5455 = vst [vmem:[%s5454 + $0x10] sm:$0xff] %v5449
  %5456 = vst [vmem:[%s5454 + $0x18] sm:$0xff] %v5450
  %v5457 = vld [vmem:[%s1795] sm:$0xff]
  %v5458 = vld [vmem:[%s1795 + $0x8] sm:$0xff]
  %v5459 = vld [vmem:[%s1795 + $0x10] sm:$0xff]
  %v5460 = vld [vmem:[%s1795 + $0x18] sm:$0xff]
  %v5461 = vld [vmem:[%s1795 + $0x20] sm:$0xff]
  %v5462 = vld [vmem:[%s1795 + $0x28] sm:$0xff]
  %5463 = vmatprep.subr.mxu0 0.0
  %5464 = vmatpush1.msra.mxu0 0.0
  %5465 = vmatprep.subr.mxu0 0.0
  %5466 = vmatpush1.msra.mxu0 0.0
  %5467 = vmatprep.subr.mxu0 0.0
  %5468 = vmatpush1.msra.mxu0 0.0
  %5469 = vmatprep.subr.mxu0 0.0
  %5470 = vmatpush1.msra.mxu0 0.0
  %5471 = vmatprep.subr.mxu0 0.0
  %5472 = vmatpush1.msra.mxu0 0.0
  %5473 = vmatprep.subr.mxu0 0.0
  %5474 = vmatpush1.msra.mxu0 0.0
  %5475 = vmatprep.subr.mxu0 0.0
  %5476 = vmatpush1.msra.mxu0 0.0
  %5477 = vmatprep.subr.mxu0 0.0
  %5478 = vmatpush1.msra.mxu0 0.0
  %5479 = vmatprep.subr.mxu0 0.0
  %5480 = vmatpush1.msra.mxu0 0.0
  %5481 = vmatprep.subr.mxu0 0.0
  %5482 = vmatpush1.msra.mxu0 0.0
  %5483 = vmatprep.subr.mxu0 0.0
  %5484 = vmatpush1.msra.mxu0 0.0
  %5485 = vmatprep.subr.mxu0 0.0
  %5486 = vmatpush1.msra.mxu0 0.0
  %5487 = vmatprep.subr.mxu0 0.0
  %5488 = vmatpush1.msra.mxu0 0.0
  %5489 = vmatprep.subr.mxu0 0.0
  %5490 = vmatpush1.msra.mxu0 0.0
  %5491 = vmatprep.subr.mxu0 0.0
  %5492 = vmatpush1.msra.mxu0 %v5313
  %5493 = vmatprep.subr.mxu0 0.0
  %5494 = vmatpush1.msra.mxu0 %v5312
  %5495 = vmatprep.subr.mxu0 0.0
  %5496 = vmatpush2.msra.mxu0 0.0
  %5497 = vmatprep.subr.mxu0 0.0
  %5498 = vmatpush2.msra.mxu0 0.0
  %5499 = vmatprep.subr.mxu0 0.0
  %5500 = vmatpush2.msra.mxu0 0.0
  %5501 = vmatprep.subr.mxu0 0.0
  %5502 = vmatpush2.msra.mxu0 0.0
  %5503 = vmatprep.subr.mxu0 0.0
  %5504 = vmatpush2.msra.mxu0 0.0
  %5505 = vmatprep.subr.mxu0 0.0
  %5506 = vmatpush2.msra.mxu0 0.0
  %5507 = vmatprep.subr.mxu0 0.0
  %5508 = vmatpush2.msra.mxu0 0.0
  %5509 = vmatprep.subr.mxu0 0.0
  %5510 = vmatpush2.msra.mxu0 0.0
  %5511 = vmatprep.subr.mxu0 0.0
  %5512 = vmatpush2.msra.mxu0 0.0
  %5513 = vmatprep.subr.mxu0 0.0
  %5514 = vmatpush2.msra.mxu0 0.0
  %5515 = vmatprep.subr.mxu0 0.0
  %5516 = vmatpush2.msra.mxu0 0.0
  %5517 = vmatprep.subr.mxu0 0.0
  %5518 = vmatpush2.msra.mxu0 0.0
  %5519 = vmatprep.subr.mxu0 0.0
  %5520 = vmatpush2.msra.mxu0 0.0
  %5521 = vmatprep.subr.mxu0 0.0
  %5522 = vmatpush2.msra.mxu0 0.0
  %5523 = vmatprep.subr.mxu0 0.0
  %5524 = vmatpush2.msra.mxu0 0.0
  %5525 = vmatprep.subr.mxu0 0.0
  %5526 = vmatpush2.msra.mxu0 0.0
  %5527 = vmatprep.mubr.f32.mxu0 0.0
  %5528 = vmatmul.mubr.f32.gmra.mxu0 %v3169
  %v5529 = vpop.f32.mrf.mxu0
  %v5530 = vadd.f32 0.0, %v5529
  %v5531 = vpop.f32.mrf.mxu0
  %5532 = vmatprep.mubr.f32.mxu0 0.0
  %5533 = vmatmul.mubr.f32.gmra.mxu0 %v3172
  %v5534 = vpop.f32.mrf.mxu0
  %v5535 = vadd.f32 0.0, %v5534
  %v5536 = vpop.f32.mrf.mxu0
  %5537 = vmatprep.mubr.f32.mxu0 0.0
  %5538 = vmatmul.mubr.f32.gmra.mxu0 %v3175
  %v5539 = vpop.f32.mrf.mxu0
  %v5540 = vadd.f32 0.0, %v5539
  %v5541 = vpop.f32.mrf.mxu0
  %5542 = vmatprep.mubr.f32.mxu0 0.0
  %5543 = vmatmul.mubr.f32.gmra.mxu0 %v3178
  %v5544 = vpop.f32.mrf.mxu0
  %v5545 = vadd.f32 0.0, %v5544
  %v5546 = vpop.f32.mrf.mxu0
  %5547 = vmatprep.mubr.f32.mxu0 0.0
  %5548 = vmatmul.mubr.f32.gmra.mxu0 %v3181
  %v5549 = vpop.f32.mrf.mxu0
  %v5550 = vadd.f32 0.0, %v5549
  %v5551 = vpop.f32.mrf.mxu0
  %5552 = vmatprep.mubr.f32.mxu0 0.0
  %5553 = vmatmul.mubr.f32.gmra.mxu0 %v3184
  %v5554 = vpop.f32.mrf.mxu0
  %v5555 = vadd.f32 0.0, %v5554
  %v5556 = vpop.f32.mrf.mxu0
  %5557 = vdwg.mxu0
  %v5558 = vadd.f32 %v5457, %v5530
  %v5559 = vadd.f32 %v5458, %v5535
  %v5560 = vmul.f32 %v5558, 0.5
  %v5561 = vmul.f32 %v5559, 0.5
  %v5562 = vtanh.pop %v5560
  %v5563 = vtanh.pop %v5561
  %v5564 = vmul.f32 %v5562, 0.5
  %v5565 = vmul.f32 %v5563, 0.5
  %v5566 = vadd.f32 %v5564, 0.5
  %v5567 = vadd.f32 %v5565, 0.5
  %v5568 = vadd.f32 %v5459, %v5540
  %v5569 = vadd.f32 %v5460, %v5545
  %v5570 = vmul.f32 %v5568, 0.5
  %v5571 = vmul.f32 %v5569, 0.5
  %v5572 = vtanh.pop %v5570
  %v5573 = vtanh.pop %v5571
  %v5574 = vmul.f32 %v5572, 0.5
  %v5575 = vmul.f32 %v5573, 0.5
  %v5576 = vadd.f32 %v5574, 0.5
  %v5577 = vadd.f32 %v5575, 0.5
  %v5578 = vadd.f32 %v5550, %v3304
  %v5579 = vadd.f32 %v5555, %v3309
  %v5580 = vmul.f32 %v5566, %v5578
  %v5581 = vmul.f32 %v5567, %v5579
  %v5582 = vadd.f32 %v5461, %v5580
  %v5583 = vadd.f32 %v5462, %v5581
  %v5584 = vtanh.pop %v5582
  %v5585 = vtanh.pop %v5583
  %v5586 = vsub.f32 1.0, %v5576
  %v5587 = vsub.f32 1.0, %v5577
  %v5588 = vmul.f32 %v5586, %v5584
  %v5589 = vmul.f32 %v5587, %v5585
  %v5590 = vmul.f32 %v5576, %v5312
  %v5591 = vmul.f32 %v5577, %v5313
  %v5592 = vadd.f32 %v5588, %v5590
  %v5593 = vadd.f32 %v5589, %v5591
  %v5594 = vld [vmem:[%s1604 + $0x30] sm:$0xff]
  %v5595 = vld [vmem:[%s1604 + $0x38] sm:$0xff]
  %v5596 = vld [vmem:[%s1604 + $0x40] sm:$0xff]
  %v5597 = vld [vmem:[%s1604 + $0x48] sm:$0xff]
  %v5598 = vld [vmem:[%s1604 + $0x50] sm:$0xff]
  %v5599 = vld [vmem:[%s1604 + $0x58] sm:$0xff]
  %5600 = vmatprep.subr.mxu0 0.0
  %5601 = vmatpush1.msra.mxu0 0.0
  %5602 = vmatprep.subr.mxu0 0.0
  %5603 = vmatpush1.msra.mxu0 0.0
  %5604 = vmatprep.subr.mxu0 0.0
  %5605 = vmatpush1.msra.mxu0 0.0
  %5606 = vmatprep.subr.mxu0 0.0
  %5607 = vmatpush1.msra.mxu0 0.0
  %5608 = vmatprep.subr.mxu0 0.0
  %5609 = vmatpush1.msra.mxu0 0.0
  %5610 = vmatprep.subr.mxu0 0.0
  %5611 = vmatpush1.msra.mxu0 0.0
  %5612 = vmatprep.subr.mxu0 0.0
  %5613 = vmatpush1.msra.mxu0 0.0
  %5614 = vmatprep.subr.mxu0 0.0
  %5615 = vmatpush1.msra.mxu0 0.0
  %5616 = vmatprep.subr.mxu0 0.0
  %5617 = vmatpush1.msra.mxu0 0.0
  %5618 = vmatprep.subr.mxu0 0.0
  %5619 = vmatpush1.msra.mxu0 0.0
  %5620 = vmatprep.subr.mxu0 0.0
  %5621 = vmatpush1.msra.mxu0 0.0
  %5622 = vmatprep.subr.mxu0 0.0
  %5623 = vmatpush1.msra.mxu0 0.0
  %5624 = vmatprep.subr.mxu0 0.0
  %5625 = vmatpush1.msra.mxu0 0.0
  %5626 = vmatprep.subr.mxu0 0.0
  %5627 = vmatpush1.msra.mxu0 0.0
  %5628 = vmatprep.subr.mxu0 0.0
  %5629 = vmatpush1.msra.mxu0 %v5450
  %5630 = vmatprep.subr.mxu0 0.0
  %5631 = vmatpush1.msra.mxu0 %v5449
  %5632 = vmatprep.subr.mxu0 0.0
  %5633 = vmatpush2.msra.mxu0 0.0
  %5634 = vmatprep.subr.mxu0 0.0
  %5635 = vmatpush2.msra.mxu0 0.0
  %5636 = vmatprep.subr.mxu0 0.0
  %5637 = vmatpush2.msra.mxu0 0.0
  %5638 = vmatprep.subr.mxu0 0.0
  %5639 = vmatpush2.msra.mxu0 0.0
  %5640 = vmatprep.subr.mxu0 0.0
  %5641 = vmatpush2.msra.mxu0 0.0
  %5642 = vmatprep.subr.mxu0 0.0
  %5643 = vmatpush2.msra.mxu0 0.0
  %5644 = vmatprep.subr.mxu0 0.0
  %5645 = vmatpush2.msra.mxu0 0.0
  %5646 = vmatprep.subr.mxu0 0.0
  %5647 = vmatpush2.msra.mxu0 0.0
  %5648 = vmatprep.subr.mxu0 0.0
  %5649 = vmatpush2.msra.mxu0 0.0
  %5650 = vmatprep.subr.mxu0 0.0
  %5651 = vmatpush2.msra.mxu0 0.0
  %5652 = vmatprep.subr.mxu0 0.0
  %5653 = vmatpush2.msra.mxu0 0.0
  %5654 = vmatprep.subr.mxu0 0.0
  %5655 = vmatpush2.msra.mxu0 0.0
  %5656 = vmatprep.subr.mxu0 0.0
  %5657 = vmatpush2.msra.mxu0 0.0
  %5658 = vmatprep.subr.mxu0 0.0
  %5659 = vmatpush2.msra.mxu0 0.0
  %5660 = vmatprep.subr.mxu0 0.0
  %5661 = vmatpush2.msra.mxu0 0.0
  %5662 = vmatprep.subr.mxu0 0.0
  %5663 = vmatpush2.msra.mxu0 0.0
  %5664 = vmatprep.mubr.f32.mxu0 0.0
  %5665 = vmatmul.mubr.f32.gmra.mxu0 %v3334
  %v5666 = vpop.f32.mrf.mxu0
  %v5667 = vadd.f32 0.0, %v5666
  %v5668 = vpop.f32.mrf.mxu0
  %5669 = vmatprep.mubr.f32.mxu0 0.0
  %5670 = vmatmul.mubr.f32.gmra.mxu0 %v3337
  %v5671 = vpop.f32.mrf.mxu0
  %v5672 = vadd.f32 0.0, %v5671
  %v5673 = vpop.f32.mrf.mxu0
  %5674 = vmatprep.mubr.f32.mxu0 0.0
  %5675 = vmatmul.mubr.f32.gmra.mxu0 %v3340
  %v5676 = vpop.f32.mrf.mxu0
  %v5677 = vadd.f32 0.0, %v5676
  %v5678 = vpop.f32.mrf.mxu0
  %5679 = vmatprep.mubr.f32.mxu0 0.0
  %5680 = vmatmul.mubr.f32.gmra.mxu0 %v3343
  %v5681 = vpop.f32.mrf.mxu0
  %v5682 = vadd.f32 0.0, %v5681
  %v5683 = vpop.f32.mrf.mxu0
  %5684 = vmatprep.mubr.f32.mxu0 0.0
  %5685 = vmatmul.mubr.f32.gmra.mxu0 %v3346
  %v5686 = vpop.f32.mrf.mxu0
  %v5687 = vadd.f32 0.0, %v5686
  %v5688 = vpop.f32.mrf.mxu0
  %5689 = vmatprep.mubr.f32.mxu0 0.0
  %5690 = vmatmul.mubr.f32.gmra.mxu0 %v3349
  %v5691 = vpop.f32.mrf.mxu0
  %v5692 = vadd.f32 0.0, %v5691
  %v5693 = vpop.f32.mrf.mxu0
  %5694 = vdwg.mxu0
  %v5695 = vadd.f32 %v5594, %v5667
  %v5696 = vadd.f32 %v5595, %v5672
  %v5697 = vmul.f32 %v5695, 0.5
  %v5698 = vmul.f32 %v5696, 0.5
  %v5699 = vtanh.pop %v5697
  %v5700 = vtanh.pop %v5698
  %v5701 = vmul.f32 %v5699, 0.5
  %v5702 = vmul.f32 %v5700, 0.5
  %v5703 = vadd.f32 %v5701, 0.5
  %v5704 = vadd.f32 %v5702, 0.5
  %v5705 = vadd.f32 %v5596, %v5677
  %v5706 = vadd.f32 %v5597, %v5682
  %v5707 = vmul.f32 %v5705, 0.5
  %v5708 = vmul.f32 %v5706, 0.5
  %v5709 = vtanh.pop %v5707
  %v5710 = vtanh.pop %v5708
  %v5711 = vmul.f32 %v5709, 0.5
  %v5712 = vmul.f32 %v5710, 0.5
  %v5713 = vadd.f32 %v5711, 0.5
  %v5714 = vadd.f32 %v5712, 0.5
  %v5715 = vadd.f32 %v5687, %v3469
  %v5716 = vadd.f32 %v5692, %v3474
  %v5717 = vmul.f32 %v5703, %v5715
  %v5718 = vmul.f32 %v5704, %v5716
  %v5719 = vadd.f32 %v5598, %v5717
  %v5720 = vadd.f32 %v5599, %v5718
  %v5721 = vtanh.pop %v5719
  %v5722 = vtanh.pop %v5720
  %v5723 = vsub.f32 1.0, %v5713
  %v5724 = vsub.f32 1.0, %v5714
  %v5725 = vmul.f32 %v5723, %v5721
  %v5726 = vmul.f32 %v5724, %v5722
  %v5727 = vmul.f32 %v5713, %v5449
  %v5728 = vmul.f32 %v5714, %v5450
  %v5729 = vadd.f32 %v5725, %v5727
  %v5730 = vadd.f32 %v5726, %v5728
  %5731 = vst [vmem:[%s5454] sm:$0xff] %v5592
  %5732 = vst [vmem:[%s5454 + $0x8] sm:$0xff] %v5593
  %5733 = vst [vmem:[%s5451 + $0x10] sm:$0xff] %v5729
  %5734 = vst [vmem:[%s5451 + $0x18] sm:$0xff] %v5730
  %v5735 = vld [vmem:[%s1986] sm:$0xff]
  %v5736 = vld [vmem:[%s1986 + $0x8] sm:$0xff]
  %v5737 = vld [vmem:[%s1986 + $0x10] sm:$0xff]
  %v5738 = vld [vmem:[%s1986 + $0x18] sm:$0xff]
  %v5739 = vld [vmem:[%s1986 + $0x20] sm:$0xff]
  %v5740 = vld [vmem:[%s1986 + $0x28] sm:$0xff]
  %5741 = vmatprep.subr.mxu0 0.0
  %5742 = vmatpush1.msra.mxu0 0.0
  %5743 = vmatprep.subr.mxu0 0.0
  %5744 = vmatpush1.msra.mxu0 0.0
  %5745 = vmatprep.subr.mxu0 0.0
  %5746 = vmatpush1.msra.mxu0 0.0
  %5747 = vmatprep.subr.mxu0 0.0
  %5748 = vmatpush1.msra.mxu0 0.0
  %5749 = vmatprep.subr.mxu0 0.0
  %5750 = vmatpush1.msra.mxu0 0.0
  %5751 = vmatprep.subr.mxu0 0.0
  %5752 = vmatpush1.msra.mxu0 0.0
  %5753 = vmatprep.subr.mxu0 0.0
  %5754 = vmatpush1.msra.mxu0 0.0
  %5755 = vmatprep.subr.mxu0 0.0
  %5756 = vmatpush1.msra.mxu0 0.0
  %5757 = vmatprep.subr.mxu0 0.0
  %5758 = vmatpush1.msra.mxu0 0.0
  %5759 = vmatprep.subr.mxu0 0.0
  %5760 = vmatpush1.msra.mxu0 0.0
  %5761 = vmatprep.subr.mxu0 0.0
  %5762 = vmatpush1.msra.mxu0 0.0
  %5763 = vmatprep.subr.mxu0 0.0
  %5764 = vmatpush1.msra.mxu0 0.0
  %5765 = vmatprep.subr.mxu0 0.0
  %5766 = vmatpush1.msra.mxu0 0.0
  %5767 = vmatprep.subr.mxu0 0.0
  %5768 = vmatpush1.msra.mxu0 0.0
  %5769 = vmatprep.subr.mxu0 0.0
  %5770 = vmatpush1.msra.mxu0 %v5593
  %5771 = vmatprep.subr.mxu0 0.0
  %5772 = vmatpush1.msra.mxu0 %v5592
  %5773 = vmatprep.subr.mxu0 0.0
  %5774 = vmatpush2.msra.mxu0 0.0
  %5775 = vmatprep.subr.mxu0 0.0
  %5776 = vmatpush2.msra.mxu0 0.0
  %5777 = vmatprep.subr.mxu0 0.0
  %5778 = vmatpush2.msra.mxu0 0.0
  %5779 = vmatprep.subr.mxu0 0.0
  %5780 = vmatpush2.msra.mxu0 0.0
  %5781 = vmatprep.subr.mxu0 0.0
  %5782 = vmatpush2.msra.mxu0 0.0
  %5783 = vmatprep.subr.mxu0 0.0
  %5784 = vmatpush2.msra.mxu0 0.0
  %5785 = vmatprep.subr.mxu0 0.0
  %5786 = vmatpush2.msra.mxu0 0.0
  %5787 = vmatprep.subr.mxu0 0.0
  %5788 = vmatpush2.msra.mxu0 0.0
  %5789 = vmatprep.subr.mxu0 0.0
  %5790 = vmatpush2.msra.mxu0 0.0
  %5791 = vmatprep.subr.mxu0 0.0
  %5792 = vmatpush2.msra.mxu0 0.0
  %5793 = vmatprep.subr.mxu0 0.0
  %5794 = vmatpush2.msra.mxu0 0.0
  %5795 = vmatprep.subr.mxu0 0.0
  %5796 = vmatpush2.msra.mxu0 0.0
  %5797 = vmatprep.subr.mxu0 0.0
  %5798 = vmatpush2.msra.mxu0 0.0
  %5799 = vmatprep.subr.mxu0 0.0
  %5800 = vmatpush2.msra.mxu0 0.0
  %5801 = vmatprep.subr.mxu0 0.0
  %5802 = vmatpush2.msra.mxu0 0.0
  %5803 = vmatprep.subr.mxu0 0.0
  %5804 = vmatpush2.msra.mxu0 0.0
  %5805 = vmatprep.mubr.f32.mxu0 0.0
  %5806 = vmatmul.mubr.f32.gmra.mxu0 %v3169
  %v5807 = vpop.f32.mrf.mxu0
  %v5808 = vadd.f32 0.0, %v5807
  %v5809 = vpop.f32.mrf.mxu0
  %5810 = vmatprep.mubr.f32.mxu0 0.0
  %5811 = vmatmul.mubr.f32.gmra.mxu0 %v3172
  %v5812 = vpop.f32.mrf.mxu0
  %v5813 = vadd.f32 0.0, %v5812
  %v5814 = vpop.f32.mrf.mxu0
  %5815 = vmatprep.mubr.f32.mxu0 0.0
  %5816 = vmatmul.mubr.f32.gmra.mxu0 %v3175
  %v5817 = vpop.f32.mrf.mxu0
  %v5818 = vadd.f32 0.0, %v5817
  %v5819 = vpop.f32.mrf.mxu0
  %5820 = vmatprep.mubr.f32.mxu0 0.0
  %5821 = vmatmul.mubr.f32.gmra.mxu0 %v3178
  %v5822 = vpop.f32.mrf.mxu0
  %v5823 = vadd.f32 0.0, %v5822
  %v5824 = vpop.f32.mrf.mxu0
  %5825 = vmatprep.mubr.f32.mxu0 0.0
  %5826 = vmatmul.mubr.f32.gmra.mxu0 %v3181
  %v5827 = vpop.f32.mrf.mxu0
  %v5828 = vadd.f32 0.0, %v5827
  %v5829 = vpop.f32.mrf.mxu0
  %5830 = vmatprep.mubr.f32.mxu0 0.0
  %5831 = vmatmul.mubr.f32.gmra.mxu0 %v3184
  %v5832 = vpop.f32.mrf.mxu0
  %v5833 = vadd.f32 0.0, %v5832
  %v5834 = vpop.f32.mrf.mxu0
  %5835 = vdwg.mxu0
  %v5836 = vadd.f32 %v5735, %v5808
  %v5837 = vadd.f32 %v5736, %v5813
  %v5838 = vmul.f32 %v5836, 0.5
  %v5839 = vmul.f32 %v5837, 0.5
  %v5840 = vtanh.pop %v5838
  %v5841 = vtanh.pop %v5839
  %v5842 = vmul.f32 %v5840, 0.5
  %v5843 = vmul.f32 %v5841, 0.5
  %v5844 = vadd.f32 %v5842, 0.5
  %v5845 = vadd.f32 %v5843, 0.5
  %v5846 = vadd.f32 %v5737, %v5818
  %v5847 = vadd.f32 %v5738, %v5823
  %v5848 = vmul.f32 %v5846, 0.5
  %v5849 = vmul.f32 %v5847, 0.5
  %v5850 = vtanh.pop %v5848
  %v5851 = vtanh.pop %v5849
  %v5852 = vmul.f32 %v5850, 0.5
  %v5853 = vmul.f32 %v5851, 0.5
  %v5854 = vadd.f32 %v5852, 0.5
  %v5855 = vadd.f32 %v5853, 0.5
  %v5856 = vadd.f32 %v5828, %v3304
  %v5857 = vadd.f32 %v5833, %v3309
  %v5858 = vmul.f32 %v5844, %v5856
  %v5859 = vmul.f32 %v5845, %v5857
  %v5860 = vadd.f32 %v5739, %v5858
  %v5861 = vadd.f32 %v5740, %v5859
  %v5862 = vtanh.pop %v5860
  %v5863 = vtanh.pop %v5861
  %v5864 = vsub.f32 1.0, %v5854
  %v5865 = vsub.f32 1.0, %v5855
  %v5866 = vmul.f32 %v5864, %v5862
  %v5867 = vmul.f32 %v5865, %v5863
  %v5868 = vmul.f32 %v5854, %v5592
  %v5869 = vmul.f32 %v5855, %v5593
  %v5870 = vadd.f32 %v5866, %v5868
  %v5871 = vadd.f32 %v5867, %v5869
  %v5872 = vld [vmem:[%s1413 + $0x30] sm:$0xff]
  %v5873 = vld [vmem:[%s1413 + $0x38] sm:$0xff]
  %v5874 = vld [vmem:[%s1413 + $0x40] sm:$0xff]
  %v5875 = vld [vmem:[%s1413 + $0x48] sm:$0xff]
  %v5876 = vld [vmem:[%s1413 + $0x50] sm:$0xff]
  %v5877 = vld [vmem:[%s1413 + $0x58] sm:$0xff]
  %5878 = vmatprep.subr.mxu0 0.0
  %5879 = vmatpush1.msra.mxu0 0.0
  %5880 = vmatprep.subr.mxu0 0.0
  %5881 = vmatpush1.msra.mxu0 0.0
  %5882 = vmatprep.subr.mxu0 0.0
  %5883 = vmatpush1.msra.mxu0 0.0
  %5884 = vmatprep.subr.mxu0 0.0
  %5885 = vmatpush1.msra.mxu0 0.0
  %5886 = vmatprep.subr.mxu0 0.0
  %5887 = vmatpush1.msra.mxu0 0.0
  %5888 = vmatprep.subr.mxu0 0.0
  %5889 = vmatpush1.msra.mxu0 0.0
  %5890 = vmatprep.subr.mxu0 0.0
  %5891 = vmatpush1.msra.mxu0 0.0
  %5892 = vmatprep.subr.mxu0 0.0
  %5893 = vmatpush1.msra.mxu0 0.0
  %5894 = vmatprep.subr.mxu0 0.0
  %5895 = vmatpush1.msra.mxu0 0.0
  %5896 = vmatprep.subr.mxu0 0.0
  %5897 = vmatpush1.msra.mxu0 0.0
  %5898 = vmatprep.subr.mxu0 0.0
  %5899 = vmatpush1.msra.mxu0 0.0
  %5900 = vmatprep.subr.mxu0 0.0
  %5901 = vmatpush1.msra.mxu0 0.0
  %5902 = vmatprep.subr.mxu0 0.0
  %5903 = vmatpush1.msra.mxu0 0.0
  %5904 = vmatprep.subr.mxu0 0.0
  %5905 = vmatpush1.msra.mxu0 0.0
  %5906 = vmatprep.subr.mxu0 0.0
  %5907 = vmatpush1.msra.mxu0 %v5730
  %5908 = vmatprep.subr.mxu0 0.0
  %5909 = vmatpush1.msra.mxu0 %v5729
  %5910 = vmatprep.subr.mxu0 0.0
  %5911 = vmatpush2.msra.mxu0 0.0
  %5912 = vmatprep.subr.mxu0 0.0
  %5913 = vmatpush2.msra.mxu0 0.0
  %5914 = vmatprep.subr.mxu0 0.0
  %5915 = vmatpush2.msra.mxu0 0.0
  %5916 = vmatprep.subr.mxu0 0.0
  %5917 = vmatpush2.msra.mxu0 0.0
  %5918 = vmatprep.subr.mxu0 0.0
  %5919 = vmatpush2.msra.mxu0 0.0
  %5920 = vmatprep.subr.mxu0 0.0
  %5921 = vmatpush2.msra.mxu0 0.0
  %5922 = vmatprep.subr.mxu0 0.0
  %5923 = vmatpush2.msra.mxu0 0.0
  %5924 = vmatprep.subr.mxu0 0.0
  %5925 = vmatpush2.msra.mxu0 0.0
  %5926 = vmatprep.subr.mxu0 0.0
  %5927 = vmatpush2.msra.mxu0 0.0
  %5928 = vmatprep.subr.mxu0 0.0
  %5929 = vmatpush2.msra.mxu0 0.0
  %5930 = vmatprep.subr.mxu0 0.0
  %5931 = vmatpush2.msra.mxu0 0.0
  %5932 = vmatprep.subr.mxu0 0.0
  %5933 = vmatpush2.msra.mxu0 0.0
  %5934 = vmatprep.subr.mxu0 0.0
  %5935 = vmatpush2.msra.mxu0 0.0
  %5936 = vmatprep.subr.mxu0 0.0
  %5937 = vmatpush2.msra.mxu0 0.0
  %5938 = vmatprep.subr.mxu0 0.0
  %5939 = vmatpush2.msra.mxu0 0.0
  %5940 = vmatprep.subr.mxu0 0.0
  %5941 = vmatpush2.msra.mxu0 0.0
  %5942 = vmatprep.mubr.f32.mxu0 0.0
  %5943 = vmatmul.mubr.f32.gmra.mxu0 %v3334
  %v5944 = vpop.f32.mrf.mxu0
  %v5945 = vadd.f32 0.0, %v5944
  %v5946 = vpop.f32.mrf.mxu0
  %5947 = vmatprep.mubr.f32.mxu0 0.0
  %5948 = vmatmul.mubr.f32.gmra.mxu0 %v3337
  %v5949 = vpop.f32.mrf.mxu0
  %v5950 = vadd.f32 0.0, %v5949
  %v5951 = vpop.f32.mrf.mxu0
  %5952 = vmatprep.mubr.f32.mxu0 0.0
  %5953 = vmatmul.mubr.f32.gmra.mxu0 %v3340
  %v5954 = vpop.f32.mrf.mxu0
  %v5955 = vadd.f32 0.0, %v5954
  %v5956 = vpop.f32.mrf.mxu0
  %5957 = vmatprep.mubr.f32.mxu0 0.0
  %5958 = vmatmul.mubr.f32.gmra.mxu0 %v3343
  %v5959 = vpop.f32.mrf.mxu0
  %v5960 = vadd.f32 0.0, %v5959
  %v5961 = vpop.f32.mrf.mxu0
  %5962 = vmatprep.mubr.f32.mxu0 0.0
  %5963 = vmatmul.mubr.f32.gmra.mxu0 %v3346
  %v5964 = vpop.f32.mrf.mxu0
  %v5965 = vadd.f32 0.0, %v5964
  %v5966 = vpop.f32.mrf.mxu0
  %5967 = vmatprep.mubr.f32.mxu0 0.0
  %5968 = vmatmul.mubr.f32.gmra.mxu0 %v3349
  %v5969 = vpop.f32.mrf.mxu0
  %v5970 = vadd.f32 0.0, %v5969
  %v5971 = vpop.f32.mrf.mxu0
  %5972 = vdwg.mxu0
  %v5973 = vadd.f32 %v5872, %v5945
  %v5974 = vadd.f32 %v5873, %v5950
  %v5975 = vmul.f32 %v5973, 0.5
  %v5976 = vmul.f32 %v5974, 0.5
  %v5977 = vtanh.pop %v5975
  %v5978 = vtanh.pop %v5976
  %v5979 = vmul.f32 %v5977, 0.5
  %v5980 = vmul.f32 %v5978, 0.5
  %v5981 = vadd.f32 %v5979, 0.5
  %v5982 = vadd.f32 %v5980, 0.5
  %v5983 = vadd.f32 %v5874, %v5955
  %v5984 = vadd.f32 %v5875, %v5960
  %v5985 = vmul.f32 %v5983, 0.5
  %v5986 = vmul.f32 %v5984, 0.5
  %v5987 = vtanh.pop %v5985
  %v5988 = vtanh.pop %v5986
  %v5989 = vmul.f32 %v5987, 0.5
  %v5990 = vmul.f32 %v5988, 0.5
  %v5991 = vadd.f32 %v5989, 0.5
  %v5992 = vadd.f32 %v5990, 0.5
  %v5993 = vadd.f32 %v5965, %v3469
  %v5994 = vadd.f32 %v5970, %v3474
  %v5995 = vmul.f32 %v5981, %v5993
  %v5996 = vmul.f32 %v5982, %v5994
  %v5997 = vadd.f32 %v5876, %v5995
  %v5998 = vadd.f32 %v5877, %v5996
  %v5999 = vtanh.pop %v5997
  %v6000 = vtanh.pop %v5998
  %v6001 = vsub.f32 1.0, %v5991
  %v6002 = vsub.f32 1.0, %v5992
  %v6003 = vmul.f32 %v6001, %v5999
  %v6004 = vmul.f32 %v6002, %v6000
  %v6005 = vmul.f32 %v5991, %v5729
  %v6006 = vmul.f32 %v5992, %v5730
  %v6007 = vadd.f32 %v6003, %v6005
  %v6008 = vadd.f32 %v6004, %v6006
  %6009 = vst [vmem:[%s5174] sm:$0xff] %v5870
  %6010 = vst [vmem:[%s5174 + $0x8] sm:$0xff] %v5871
  %6011 = vst [vmem:[%s5171 + $0x10] sm:$0xff] %v6007
  %6012 = vst [vmem:[%s5171 + $0x18] sm:$0xff] %v6008
  %v6013 = vld [vmem:[%s2177] sm:$0xff]
  %v6014 = vld [vmem:[%s2177 + $0x8] sm:$0xff]
  %v6015 = vld [vmem:[%s2177 + $0x10] sm:$0xff]
  %v6016 = vld [vmem:[%s2177 + $0x18] sm:$0xff]
  %v6017 = vld [vmem:[%s2177 + $0x20] sm:$0xff]
  %v6018 = vld [vmem:[%s2177 + $0x28] sm:$0xff]
  %6019 = vmatprep.subr.mxu0 0.0
  %6020 = vmatpush1.msra.mxu0 0.0
  %6021 = vmatprep.subr.mxu0 0.0
  %6022 = vmatpush1.msra.mxu0 0.0
  %6023 = vmatprep.subr.mxu0 0.0
  %6024 = vmatpush1.msra.mxu0 0.0
  %6025 = vmatprep.subr.mxu0 0.0
  %6026 = vmatpush1.msra.mxu0 0.0
  %6027 = vmatprep.subr.mxu0 0.0
  %6028 = vmatpush1.msra.mxu0 0.0
  %6029 = vmatprep.subr.mxu0 0.0
  %6030 = vmatpush1.msra.mxu0 0.0
  %6031 = vmatprep.subr.mxu0 0.0
  %6032 = vmatpush1.msra.mxu0 0.0
  %6033 = vmatprep.subr.mxu0 0.0
  %6034 = vmatpush1.msra.mxu0 0.0
  %6035 = vmatprep.subr.mxu0 0.0
  %6036 = vmatpush1.msra.mxu0 0.0
  %6037 = vmatprep.subr.mxu0 0.0
  %6038 = vmatpush1.msra.mxu0 0.0
  %6039 = vmatprep.subr.mxu0 0.0
  %6040 = vmatpush1.msra.mxu0 0.0
  %6041 = vmatprep.subr.mxu0 0.0
  %6042 = vmatpush1.msra.mxu0 0.0
  %6043 = vmatprep.subr.mxu0 0.0
  %6044 = vmatpush1.msra.mxu0 0.0
  %6045 = vmatprep.subr.mxu0 0.0
  %6046 = vmatpush1.msra.mxu0 0.0
  %6047 = vmatprep.subr.mxu0 0.0
  %6048 = vmatpush1.msra.mxu0 %v5871
  %6049 = vmatprep.subr.mxu0 0.0
  %6050 = vmatpush1.msra.mxu0 %v5870
  %6051 = vmatprep.subr.mxu0 0.0
  %6052 = vmatpush2.msra.mxu0 0.0
  %6053 = vmatprep.subr.mxu0 0.0
  %6054 = vmatpush2.msra.mxu0 0.0
  %6055 = vmatprep.subr.mxu0 0.0
  %6056 = vmatpush2.msra.mxu0 0.0
  %6057 = vmatprep.subr.mxu0 0.0
  %6058 = vmatpush2.msra.mxu0 0.0
  %6059 = vmatprep.subr.mxu0 0.0
  %6060 = vmatpush2.msra.mxu0 0.0
  %6061 = vmatprep.subr.mxu0 0.0
  %6062 = vmatpush2.msra.mxu0 0.0
  %6063 = vmatprep.subr.mxu0 0.0
  %6064 = vmatpush2.msra.mxu0 0.0
  %6065 = vmatprep.subr.mxu0 0.0
  %6066 = vmatpush2.msra.mxu0 0.0
  %6067 = vmatprep.subr.mxu0 0.0
  %6068 = vmatpush2.msra.mxu0 0.0
  %6069 = vmatprep.subr.mxu0 0.0
  %6070 = vmatpush2.msra.mxu0 0.0
  %6071 = vmatprep.subr.mxu0 0.0
  %6072 = vmatpush2.msra.mxu0 0.0
  %6073 = vmatprep.subr.mxu0 0.0
  %6074 = vmatpush2.msra.mxu0 0.0
  %6075 = vmatprep.subr.mxu0 0.0
  %6076 = vmatpush2.msra.mxu0 0.0
  %6077 = vmatprep.subr.mxu0 0.0
  %6078 = vmatpush2.msra.mxu0 0.0
  %6079 = vmatprep.subr.mxu0 0.0
  %6080 = vmatpush2.msra.mxu0 0.0
  %6081 = vmatprep.subr.mxu0 0.0
  %6082 = vmatpush2.msra.mxu0 0.0
  %6083 = vmatprep.mubr.f32.mxu0 0.0
  %6084 = vmatmul.mubr.f32.gmra.mxu0 %v3169
  %v6085 = vpop.f32.mrf.mxu0
  %v6086 = vadd.f32 0.0, %v6085
  %v6087 = vpop.f32.mrf.mxu0
  %6088 = vmatprep.mubr.f32.mxu0 0.0
  %6089 = vmatmul.mubr.f32.gmra.mxu0 %v3172
  %v6090 = vpop.f32.mrf.mxu0
  %v6091 = vadd.f32 0.0, %v6090
  %v6092 = vpop.f32.mrf.mxu0
  %6093 = vmatprep.mubr.f32.mxu0 0.0
  %6094 = vmatmul.mubr.f32.gmra.mxu0 %v3175
  %v6095 = vpop.f32.mrf.mxu0
  %v6096 = vadd.f32 0.0, %v6095
  %v6097 = vpop.f32.mrf.mxu0
  %6098 = vmatprep.mubr.f32.mxu0 0.0
  %6099 = vmatmul.mubr.f32.gmra.mxu0 %v3178
  %v6100 = vpop.f32.mrf.mxu0
  %v6101 = vadd.f32 0.0, %v6100
  %v6102 = vpop.f32.mrf.mxu0
  %6103 = vmatprep.mubr.f32.mxu0 0.0
  %6104 = vmatmul.mubr.f32.gmra.mxu0 %v3181
  %v6105 = vpop.f32.mrf.mxu0
  %v6106 = vadd.f32 0.0, %v6105
  %v6107 = vpop.f32.mrf.mxu0
  %6108 = vmatprep.mubr.f32.mxu0 0.0
  %6109 = vmatmul.mubr.f32.gmra.mxu0 %v3184
  %v6110 = vpop.f32.mrf.mxu0
  %v6111 = vadd.f32 0.0, %v6110
  %v6112 = vpop.f32.mrf.mxu0
  %6113 = vdwg.mxu0
  %v6114 = vadd.f32 %v6013, %v6086
  %v6115 = vadd.f32 %v6014, %v6091
  %v6116 = vmul.f32 %v6114, 0.5
  %v6117 = vmul.f32 %v6115, 0.5
  %v6118 = vtanh.pop %v6116
  %v6119 = vtanh.pop %v6117
  %v6120 = vmul.f32 %v6118, 0.5
  %v6121 = vmul.f32 %v6119, 0.5
  %v6122 = vadd.f32 %v6120, 0.5
  %v6123 = vadd.f32 %v6121, 0.5
  %v6124 = vadd.f32 %v6015, %v6096
  %v6125 = vadd.f32 %v6016, %v6101
  %v6126 = vmul.f32 %v6124, 0.5
  %v6127 = vmul.f32 %v6125, 0.5
  %v6128 = vtanh.pop %v6126
  %v6129 = vtanh.pop %v6127
  %v6130 = vmul.f32 %v6128, 0.5
  %v6131 = vmul.f32 %v6129, 0.5
  %v6132 = vadd.f32 %v6130, 0.5
  %v6133 = vadd.f32 %v6131, 0.5
  %v6134 = vadd.f32 %v6106, %v3304
  %v6135 = vadd.f32 %v6111, %v3309
  %v6136 = vmul.f32 %v6122, %v6134
  %v6137 = vmul.f32 %v6123, %v6135
  %v6138 = vadd.f32 %v6017, %v6136
  %v6139 = vadd.f32 %v6018, %v6137
  %v6140 = vtanh.pop %v6138
  %v6141 = vtanh.pop %v6139
  %v6142 = vsub.f32 1.0, %v6132
  %v6143 = vsub.f32 1.0, %v6133
  %v6144 = vmul.f32 %v6142, %v6140
  %v6145 = vmul.f32 %v6143, %v6141
  %v6146 = vmul.f32 %v6132, %v5870
  %v6147 = vmul.f32 %v6133, %v5871
  %v6148 = vadd.f32 %v6144, %v6146
  %v6149 = vadd.f32 %v6145, %v6147
  %v6150 = vld [vmem:[%s1222 + $0x30] sm:$0xff]
  %v6151 = vld [vmem:[%s1222 + $0x38] sm:$0xff]
  %v6152 = vld [vmem:[%s1222 + $0x40] sm:$0xff]
  %v6153 = vld [vmem:[%s1222 + $0x48] sm:$0xff]
  %v6154 = vld [vmem:[%s1222 + $0x50] sm:$0xff]
  %v6155 = vld [vmem:[%s1222 + $0x58] sm:$0xff]
  %6156 = vmatprep.subr.mxu0 0.0
  %6157 = vmatpush1.msra.mxu0 0.0
  %6158 = vmatprep.subr.mxu0 0.0
  %6159 = vmatpush1.msra.mxu0 0.0
  %6160 = vmatprep.subr.mxu0 0.0
  %6161 = vmatpush1.msra.mxu0 0.0
  %6162 = vmatprep.subr.mxu0 0.0
  %6163 = vmatpush1.msra.mxu0 0.0
  %6164 = vmatprep.subr.mxu0 0.0
  %6165 = vmatpush1.msra.mxu0 0.0
  %6166 = vmatprep.subr.mxu0 0.0
  %6167 = vmatpush1.msra.mxu0 0.0
  %6168 = vmatprep.subr.mxu0 0.0
  %6169 = vmatpush1.msra.mxu0 0.0
  %6170 = vmatprep.subr.mxu0 0.0
  %6171 = vmatpush1.msra.mxu0 0.0
  %6172 = vmatprep.subr.mxu0 0.0
  %6173 = vmatpush1.msra.mxu0 0.0
  %6174 = vmatprep.subr.mxu0 0.0
  %6175 = vmatpush1.msra.mxu0 0.0
  %6176 = vmatprep.subr.mxu0 0.0
  %6177 = vmatpush1.msra.mxu0 0.0
  %6178 = vmatprep.subr.mxu0 0.0
  %6179 = vmatpush1.msra.mxu0 0.0
  %6180 = vmatprep.subr.mxu0 0.0
  %6181 = vmatpush1.msra.mxu0 0.0
  %6182 = vmatprep.subr.mxu0 0.0
  %6183 = vmatpush1.msra.mxu0 0.0
  %6184 = vmatprep.subr.mxu0 0.0
  %6185 = vmatpush1.msra.mxu0 %v6008
  %6186 = vmatprep.subr.mxu0 0.0
  %6187 = vmatpush1.msra.mxu0 %v6007
  %6188 = vmatprep.subr.mxu0 0.0
  %6189 = vmatpush2.msra.mxu0 0.0
  %6190 = vmatprep.subr.mxu0 0.0
  %6191 = vmatpush2.msra.mxu0 0.0
  %6192 = vmatprep.subr.mxu0 0.0
  %6193 = vmatpush2.msra.mxu0 0.0
  %6194 = vmatprep.subr.mxu0 0.0
  %6195 = vmatpush2.msra.mxu0 0.0
  %6196 = vmatprep.subr.mxu0 0.0
  %6197 = vmatpush2.msra.mxu0 0.0
  %6198 = vmatprep.subr.mxu0 0.0
  %6199 = vmatpush2.msra.mxu0 0.0
  %6200 = vmatprep.subr.mxu0 0.0
  %6201 = vmatpush2.msra.mxu0 0.0
  %6202 = vmatprep.subr.mxu0 0.0
  %6203 = vmatpush2.msra.mxu0 0.0
  %6204 = vmatprep.subr.mxu0 0.0
  %6205 = vmatpush2.msra.mxu0 0.0
  %6206 = vmatprep.subr.mxu0 0.0
  %6207 = vmatpush2.msra.mxu0 0.0
  %6208 = vmatprep.subr.mxu0 0.0
  %6209 = vmatpush2.msra.mxu0 0.0
  %6210 = vmatprep.subr.mxu0 0.0
  %6211 = vmatpush2.msra.mxu0 0.0
  %6212 = vmatprep.subr.mxu0 0.0
  %6213 = vmatpush2.msra.mxu0 0.0
  %6214 = vmatprep.subr.mxu0 0.0
  %6215 = vmatpush2.msra.mxu0 0.0
  %6216 = vmatprep.subr.mxu0 0.0
  %6217 = vmatpush2.msra.mxu0 0.0
  %6218 = vmatprep.subr.mxu0 0.0
  %6219 = vmatpush2.msra.mxu0 0.0
  %6220 = vmatprep.mubr.f32.mxu0 0.0
  %6221 = vmatmul.mubr.f32.gmra.mxu0 %v3334
  %v6222 = vpop.f32.mrf.mxu0
  %v6223 = vadd.f32 0.0, %v6222
  %v6224 = vpop.f32.mrf.mxu0
  %6225 = vmatprep.mubr.f32.mxu0 0.0
  %6226 = vmatmul.mubr.f32.gmra.mxu0 %v3337
  %v6227 = vpop.f32.mrf.mxu0
  %v6228 = vadd.f32 0.0, %v6227
  %v6229 = vpop.f32.mrf.mxu0
  %6230 = vmatprep.mubr.f32.mxu0 0.0
  %6231 = vmatmul.mubr.f32.gmra.mxu0 %v3340
  %v6232 = vpop.f32.mrf.mxu0
  %v6233 = vadd.f32 0.0, %v6232
  %v6234 = vpop.f32.mrf.mxu0
  %6235 = vmatprep.mubr.f32.mxu0 0.0
  %6236 = vmatmul.mubr.f32.gmra.mxu0 %v3343
  %v6237 = vpop.f32.mrf.mxu0
  %v6238 = vadd.f32 0.0, %v6237
  %v6239 = vpop.f32.mrf.mxu0
  %6240 = vmatprep.mubr.f32.mxu0 0.0
  %6241 = vmatmul.mubr.f32.gmra.mxu0 %v3346
  %v6242 = vpop.f32.mrf.mxu0
  %v6243 = vadd.f32 0.0, %v6242
  %v6244 = vpop.f32.mrf.mxu0
  %6245 = vmatprep.mubr.f32.mxu0 0.0
  %6246 = vmatmul.mubr.f32.gmra.mxu0 %v3349
  %v6247 = vpop.f32.mrf.mxu0
  %v6248 = vadd.f32 0.0, %v6247
  %v6249 = vpop.f32.mrf.mxu0
  %6250 = vdwg.mxu0
  %v6251 = vadd.f32 %v6150, %v6223
  %v6252 = vadd.f32 %v6151, %v6228
  %v6253 = vmul.f32 %v6251, 0.5
  %v6254 = vmul.f32 %v6252, 0.5
  %v6255 = vtanh.pop %v6253
  %v6256 = vtanh.pop %v6254
  %v6257 = vmul.f32 %v6255, 0.5
  %v6258 = vmul.f32 %v6256, 0.5
  %v6259 = vadd.f32 %v6257, 0.5
  %v6260 = vadd.f32 %v6258, 0.5
  %v6261 = vadd.f32 %v6152, %v6233
  %v6262 = vadd.f32 %v6153, %v6238
  %v6263 = vmul.f32 %v6261, 0.5
  %v6264 = vmul.f32 %v6262, 0.5
  %v6265 = vtanh.pop %v6263
  %v6266 = vtanh.pop %v6264
  %v6267 = vmul.f32 %v6265, 0.5
  %v6268 = vmul.f32 %v6266, 0.5
  %v6269 = vadd.f32 %v6267, 0.5
  %v6270 = vadd.f32 %v6268, 0.5
  %v6271 = vadd.f32 %v6243, %v3469
  %v6272 = vadd.f32 %v6248, %v3474
  %v6273 = vmul.f32 %v6259, %v6271
  %v6274 = vmul.f32 %v6260, %v6272
  %v6275 = vadd.f32 %v6154, %v6273
  %v6276 = vadd.f32 %v6155, %v6274
  %v6277 = vtanh.pop %v6275
  %v6278 = vtanh.pop %v6276
  %v6279 = vsub.f32 1.0, %v6269
  %v6280 = vsub.f32 1.0, %v6270
  %v6281 = vmul.f32 %v6279, %v6277
  %v6282 = vmul.f32 %v6280, %v6278
  %v6283 = vmul.f32 %v6269, %v6007
  %v6284 = vmul.f32 %v6270, %v6008
  %v6285 = vadd.f32 %v6281, %v6283
  %v6286 = vadd.f32 %v6282, %v6284
  %6287 = vst [vmem:[%s4894] sm:$0xff] %v6148
  %6288 = vst [vmem:[%s4894 + $0x8] sm:$0xff] %v6149
  %6289 = vst [vmem:[%s4891 + $0x10] sm:$0xff] %v6285
  %6290 = vst [vmem:[%s4891 + $0x18] sm:$0xff] %v6286
  %v6291 = vld [vmem:[%s2368] sm:$0xff]
  %v6292 = vld [vmem:[%s2368 + $0x8] sm:$0xff]
  %v6293 = vld [vmem:[%s2368 + $0x10] sm:$0xff]
  %v6294 = vld [vmem:[%s2368 + $0x18] sm:$0xff]
  %v6295 = vld [vmem:[%s2368 + $0x20] sm:$0xff]
  %v6296 = vld [vmem:[%s2368 + $0x28] sm:$0xff]
  %6297 = vmatprep.subr.mxu0 0.0
  %6298 = vmatpush1.msra.mxu0 0.0
  %6299 = vmatprep.subr.mxu0 0.0
  %6300 = vmatpush1.msra.mxu0 0.0
  %6301 = vmatprep.subr.mxu0 0.0
  %6302 = vmatpush1.msra.mxu0 0.0
  %6303 = vmatprep.subr.mxu0 0.0
  %6304 = vmatpush1.msra.mxu0 0.0
  %6305 = vmatprep.subr.mxu0 0.0
  %6306 = vmatpush1.msra.mxu0 0.0
  %6307 = vmatprep.subr.mxu0 0.0
  %6308 = vmatpush1.msra.mxu0 0.0
  %6309 = vmatprep.subr.mxu0 0.0
  %6310 = vmatpush1.msra.mxu0 0.0
  %6311 = vmatprep.subr.mxu0 0.0
  %6312 = vmatpush1.msra.mxu0 0.0
  %6313 = vmatprep.subr.mxu0 0.0
  %6314 = vmatpush1.msra.mxu0 0.0
  %6315 = vmatprep.subr.mxu0 0.0
  %6316 = vmatpush1.msra.mxu0 0.0
  %6317 = vmatprep.subr.mxu0 0.0
  %6318 = vmatpush1.msra.mxu0 0.0
  %6319 = vmatprep.subr.mxu0 0.0
  %6320 = vmatpush1.msra.mxu0 0.0
  %6321 = vmatprep.subr.mxu0 0.0
  %6322 = vmatpush1.msra.mxu0 0.0
  %6323 = vmatprep.subr.mxu0 0.0
  %6324 = vmatpush1.msra.mxu0 0.0
  %6325 = vmatprep.subr.mxu0 0.0
  %6326 = vmatpush1.msra.mxu0 %v6149
  %6327 = vmatprep.subr.mxu0 0.0
  %6328 = vmatpush1.msra.mxu0 %v6148
  %6329 = vmatprep.subr.mxu0 0.0
  %6330 = vmatpush2.msra.mxu0 0.0
  %6331 = vmatprep.subr.mxu0 0.0
  %6332 = vmatpush2.msra.mxu0 0.0
  %6333 = vmatprep.subr.mxu0 0.0
  %6334 = vmatpush2.msra.mxu0 0.0
  %6335 = vmatprep.subr.mxu0 0.0
  %6336 = vmatpush2.msra.mxu0 0.0
  %6337 = vmatprep.subr.mxu0 0.0
  %6338 = vmatpush2.msra.mxu0 0.0
  %6339 = vmatprep.subr.mxu0 0.0
  %6340 = vmatpush2.msra.mxu0 0.0
  %6341 = vmatprep.subr.mxu0 0.0
  %6342 = vmatpush2.msra.mxu0 0.0
  %6343 = vmatprep.subr.mxu0 0.0
  %6344 = vmatpush2.msra.mxu0 0.0
  %6345 = vmatprep.subr.mxu0 0.0
  %6346 = vmatpush2.msra.mxu0 0.0
  %6347 = vmatprep.subr.mxu0 0.0
  %6348 = vmatpush2.msra.mxu0 0.0
  %6349 = vmatprep.subr.mxu0 0.0
  %6350 = vmatpush2.msra.mxu0 0.0
  %6351 = vmatprep.subr.mxu0 0.0
  %6352 = vmatpush2.msra.mxu0 0.0
  %6353 = vmatprep.subr.mxu0 0.0
  %6354 = vmatpush2.msra.mxu0 0.0
  %6355 = vmatprep.subr.mxu0 0.0
  %6356 = vmatpush2.msra.mxu0 0.0
  %6357 = vmatprep.subr.mxu0 0.0
  %6358 = vmatpush2.msra.mxu0 0.0
  %6359 = vmatprep.subr.mxu0 0.0
  %6360 = vmatpush2.msra.mxu0 0.0
  %6361 = vmatprep.mubr.f32.mxu0 0.0
  %6362 = vmatmul.mubr.f32.gmra.mxu0 %v3169
  %v6363 = vpop.f32.mrf.mxu0
  %v6364 = vadd.f32 0.0, %v6363
  %v6365 = vpop.f32.mrf.mxu0
  %6366 = vmatprep.mubr.f32.mxu0 0.0
  %6367 = vmatmul.mubr.f32.gmra.mxu0 %v3172
  %v6368 = vpop.f32.mrf.mxu0
  %v6369 = vadd.f32 0.0, %v6368
  %v6370 = vpop.f32.mrf.mxu0
  %6371 = vmatprep.mubr.f32.mxu0 0.0
  %6372 = vmatmul.mubr.f32.gmra.mxu0 %v3175
  %v6373 = vpop.f32.mrf.mxu0
  %v6374 = vadd.f32 0.0, %v6373
  %v6375 = vpop.f32.mrf.mxu0
  %6376 = vmatprep.mubr.f32.mxu0 0.0
  %6377 = vmatmul.mubr.f32.gmra.mxu0 %v3178
  %v6378 = vpop.f32.mrf.mxu0
  %v6379 = vadd.f32 0.0, %v6378
  %v6380 = vpop.f32.mrf.mxu0
  %6381 = vmatprep.mubr.f32.mxu0 0.0
  %6382 = vmatmul.mubr.f32.gmra.mxu0 %v3181
  %v6383 = vpop.f32.mrf.mxu0
  %v6384 = vadd.f32 0.0, %v6383
  %v6385 = vpop.f32.mrf.mxu0
  %6386 = vmatprep.mubr.f32.mxu0 0.0
  %6387 = vmatmul.mubr.f32.gmra.mxu0 %v3184
  %v6388 = vpop.f32.mrf.mxu0
  %v6389 = vadd.f32 0.0, %v6388
  %v6390 = vpop.f32.mrf.mxu0
  %6391 = vdwg.mxu0
  %v6392 = vadd.f32 %v6291, %v6364
  %v6393 = vadd.f32 %v6292, %v6369
  %v6394 = vmul.f32 %v6392, 0.5
  %v6395 = vmul.f32 %v6393, 0.5
  %v6396 = vtanh.pop %v6394
  %v6397 = vtanh.pop %v6395
  %v6398 = vmul.f32 %v6396, 0.5
  %v6399 = vmul.f32 %v6397, 0.5
  %v6400 = vadd.f32 %v6398, 0.5
  %v6401 = vadd.f32 %v6399, 0.5
  %v6402 = vadd.f32 %v6293, %v6374
  %v6403 = vadd.f32 %v6294, %v6379
  %v6404 = vmul.f32 %v6402, 0.5
  %v6405 = vmul.f32 %v6403, 0.5
  %v6406 = vtanh.pop %v6404
  %v6407 = vtanh.pop %v6405
  %v6408 = vmul.f32 %v6406, 0.5
  %v6409 = vmul.f32 %v6407, 0.5
  %v6410 = vadd.f32 %v6408, 0.5
  %v6411 = vadd.f32 %v6409, 0.5
  %v6412 = vadd.f32 %v6384, %v3304
  %v6413 = vadd.f32 %v6389, %v3309
  %v6414 = vmul.f32 %v6400, %v6412
  %v6415 = vmul.f32 %v6401, %v6413
  %v6416 = vadd.f32 %v6295, %v6414
  %v6417 = vadd.f32 %v6296, %v6415
  %v6418 = vtanh.pop %v6416
  %v6419 = vtanh.pop %v6417
  %v6420 = vsub.f32 1.0, %v6410
  %v6421 = vsub.f32 1.0, %v6411
  %v6422 = vmul.f32 %v6420, %v6418
  %v6423 = vmul.f32 %v6421, %v6419
  %v6424 = vmul.f32 %v6410, %v6148
  %v6425 = vmul.f32 %v6411, %v6149
  %v6426 = vadd.f32 %v6422, %v6424
  %v6427 = vadd.f32 %v6423, %v6425
  %v6428 = vld [vmem:[%s1031 + $0x30] sm:$0xff]
  %v6429 = vld [vmem:[%s1031 + $0x38] sm:$0xff]
  %v6430 = vld [vmem:[%s1031 + $0x40] sm:$0xff]
  %v6431 = vld [vmem:[%s1031 + $0x48] sm:$0xff]
  %v6432 = vld [vmem:[%s1031 + $0x50] sm:$0xff]
  %v6433 = vld [vmem:[%s1031 + $0x58] sm:$0xff]
  %6434 = vmatprep.subr.mxu0 0.0
  %6435 = vmatpush1.msra.mxu0 0.0
  %6436 = vmatprep.subr.mxu0 0.0
  %6437 = vmatpush1.msra.mxu0 0.0
  %6438 = vmatprep.subr.mxu0 0.0
  %6439 = vmatpush1.msra.mxu0 0.0
  %6440 = vmatprep.subr.mxu0 0.0
  %6441 = vmatpush1.msra.mxu0 0.0
  %6442 = vmatprep.subr.mxu0 0.0
  %6443 = vmatpush1.msra.mxu0 0.0
  %6444 = vmatprep.subr.mxu0 0.0
  %6445 = vmatpush1.msra.mxu0 0.0
  %6446 = vmatprep.subr.mxu0 0.0
  %6447 = vmatpush1.msra.mxu0 0.0
  %6448 = vmatprep.subr.mxu0 0.0
  %6449 = vmatpush1.msra.mxu0 0.0
  %6450 = vmatprep.subr.mxu0 0.0
  %6451 = vmatpush1.msra.mxu0 0.0
  %6452 = vmatprep.subr.mxu0 0.0
  %6453 = vmatpush1.msra.mxu0 0.0
  %6454 = vmatprep.subr.mxu0 0.0
  %6455 = vmatpush1.msra.mxu0 0.0
  %6456 = vmatprep.subr.mxu0 0.0
  %6457 = vmatpush1.msra.mxu0 0.0
  %6458 = vmatprep.subr.mxu0 0.0
  %6459 = vmatpush1.msra.mxu0 0.0
  %6460 = vmatprep.subr.mxu0 0.0
  %6461 = vmatpush1.msra.mxu0 0.0
  %6462 = vmatprep.subr.mxu0 0.0
  %6463 = vmatpush1.msra.mxu0 %v6286
  %6464 = vmatprep.subr.mxu0 0.0
  %6465 = vmatpush1.msra.mxu0 %v6285
  %6466 = vmatprep.subr.mxu0 0.0
  %6467 = vmatpush2.msra.mxu0 0.0
  %6468 = vmatprep.subr.mxu0 0.0
  %6469 = vmatpush2.msra.mxu0 0.0
  %6470 = vmatprep.subr.mxu0 0.0
  %6471 = vmatpush2.msra.mxu0 0.0
  %6472 = vmatprep.subr.mxu0 0.0
  %6473 = vmatpush2.msra.mxu0 0.0
  %6474 = vmatprep.subr.mxu0 0.0
  %6475 = vmatpush2.msra.mxu0 0.0
  %6476 = vmatprep.subr.mxu0 0.0
  %6477 = vmatpush2.msra.mxu0 0.0
  %6478 = vmatprep.subr.mxu0 0.0
  %6479 = vmatpush2.msra.mxu0 0.0
  %6480 = vmatprep.subr.mxu0 0.0
  %6481 = vmatpush2.msra.mxu0 0.0
  %6482 = vmatprep.subr.mxu0 0.0
  %6483 = vmatpush2.msra.mxu0 0.0
  %6484 = vmatprep.subr.mxu0 0.0
  %6485 = vmatpush2.msra.mxu0 0.0
  %6486 = vmatprep.subr.mxu0 0.0
  %6487 = vmatpush2.msra.mxu0 0.0
  %6488 = vmatprep.subr.mxu0 0.0
  %6489 = vmatpush2.msra.mxu0 0.0
  %6490 = vmatprep.subr.mxu0 0.0
  %6491 = vmatpush2.msra.mxu0 0.0
  %6492 = vmatprep.subr.mxu0 0.0
  %6493 = vmatpush2.msra.mxu0 0.0
  %6494 = vmatprep.subr.mxu0 0.0
  %6495 = vmatpush2.msra.mxu0 0.0
  %6496 = vmatprep.subr.mxu0 0.0
  %6497 = vmatpush2.msra.mxu0 0.0
  %6498 = vmatprep.mubr.f32.mxu0 0.0
  %6499 = vmatmul.mubr.f32.gmra.mxu0 %v3334
  %v6500 = vpop.f32.mrf.mxu0
  %v6501 = vadd.f32 0.0, %v6500
  %v6502 = vpop.f32.mrf.mxu0
  %6503 = vmatprep.mubr.f32.mxu0 0.0
  %6504 = vmatmul.mubr.f32.gmra.mxu0 %v3337
  %v6505 = vpop.f32.mrf.mxu0
  %v6506 = vadd.f32 0.0, %v6505
  %v6507 = vpop.f32.mrf.mxu0
  %6508 = vmatprep.mubr.f32.mxu0 0.0
  %6509 = vmatmul.mubr.f32.gmra.mxu0 %v3340
  %v6510 = vpop.f32.mrf.mxu0
  %v6511 = vadd.f32 0.0, %v6510
  %v6512 = vpop.f32.mrf.mxu0
  %6513 = vmatprep.mubr.f32.mxu0 0.0
  %6514 = vmatmul.mubr.f32.gmra.mxu0 %v3343
  %v6515 = vpop.f32.mrf.mxu0
  %v6516 = vadd.f32 0.0, %v6515
  %v6517 = vpop.f32.mrf.mxu0
  %6518 = vmatprep.mubr.f32.mxu0 0.0
  %6519 = vmatmul.mubr.f32.gmra.mxu0 %v3346
  %v6520 = vpop.f32.mrf.mxu0
  %v6521 = vadd.f32 0.0, %v6520
  %v6522 = vpop.f32.mrf.mxu0
  %6523 = vmatprep.mubr.f32.mxu0 0.0
  %6524 = vmatmul.mubr.f32.gmra.mxu0 %v3349
  %v6525 = vpop.f32.mrf.mxu0
  %v6526 = vadd.f32 0.0, %v6525
  %v6527 = vpop.f32.mrf.mxu0
  %6528 = vdwg.mxu0
  %v6529 = vadd.f32 %v6428, %v6501
  %v6530 = vadd.f32 %v6429, %v6506
  %v6531 = vmul.f32 %v6529, 0.5
  %v6532 = vmul.f32 %v6530, 0.5
  %v6533 = vtanh.pop %v6531
  %v6534 = vtanh.pop %v6532
  %v6535 = vmul.f32 %v6533, 0.5
  %v6536 = vmul.f32 %v6534, 0.5
  %v6537 = vadd.f32 %v6535, 0.5
  %v6538 = vadd.f32 %v6536, 0.5
  %v6539 = vadd.f32 %v6430, %v6511
  %v6540 = vadd.f32 %v6431, %v6516
  %v6541 = vmul.f32 %v6539, 0.5
  %v6542 = vmul.f32 %v6540, 0.5
  %v6543 = vtanh.pop %v6541
  %v6544 = vtanh.pop %v6542
  %v6545 = vmul.f32 %v6543, 0.5
  %v6546 = vmul.f32 %v6544, 0.5
  %v6547 = vadd.f32 %v6545, 0.5
  %v6548 = vadd.f32 %v6546, 0.5
  %v6549 = vadd.f32 %v6521, %v3469
  %v6550 = vadd.f32 %v6526, %v3474
  %v6551 = vmul.f32 %v6537, %v6549
  %v6552 = vmul.f32 %v6538, %v6550
  %v6553 = vadd.f32 %v6432, %v6551
  %v6554 = vadd.f32 %v6433, %v6552
  %v6555 = vtanh.pop %v6553
  %v6556 = vtanh.pop %v6554
  %v6557 = vsub.f32 1.0, %v6547
  %v6558 = vsub.f32 1.0, %v6548
  %v6559 = vmul.f32 %v6557, %v6555
  %v6560 = vmul.f32 %v6558, %v6556
  %v6561 = vmul.f32 %v6547, %v6285
  %v6562 = vmul.f32 %v6548, %v6286
  %v6563 = vadd.f32 %v6559, %v6561
  %v6564 = vadd.f32 %v6560, %v6562
  %6565 = vst [vmem:[%s4614] sm:$0xff] %v6426
  %6566 = vst [vmem:[%s4614 + $0x8] sm:$0xff] %v6427
  %6567 = vst [vmem:[%s4611 + $0x10] sm:$0xff] %v6563
  %6568 = vst [vmem:[%s4611 + $0x18] sm:$0xff] %v6564
  %v6569 = vld [vmem:[%s2559] sm:$0xff]
  %v6570 = vld [vmem:[%s2559 + $0x8] sm:$0xff]
  %v6571 = vld [vmem:[%s2559 + $0x10] sm:$0xff]
  %v6572 = vld [vmem:[%s2559 + $0x18] sm:$0xff]
  %v6573 = vld [vmem:[%s2559 + $0x20] sm:$0xff]
  %v6574 = vld [vmem:[%s2559 + $0x28] sm:$0xff]
  %6575 = vmatprep.subr.mxu0 0.0
  %6576 = vmatpush1.msra.mxu0 0.0
  %6577 = vmatprep.subr.mxu0 0.0
  %6578 = vmatpush1.msra.mxu0 0.0
  %6579 = vmatprep.subr.mxu0 0.0
  %6580 = vmatpush1.msra.mxu0 0.0
  %6581 = vmatprep.subr.mxu0 0.0
  %6582 = vmatpush1.msra.mxu0 0.0
  %6583 = vmatprep.subr.mxu0 0.0
  %6584 = vmatpush1.msra.mxu0 0.0
  %6585 = vmatprep.subr.mxu0 0.0
  %6586 = vmatpush1.msra.mxu0 0.0
  %6587 = vmatprep.subr.mxu0 0.0
  %6588 = vmatpush1.msra.mxu0 0.0
  %6589 = vmatprep.subr.mxu0 0.0
  %6590 = vmatpush1.msra.mxu0 0.0
  %6591 = vmatprep.subr.mxu0 0.0
  %6592 = vmatpush1.msra.mxu0 0.0
  %6593 = vmatprep.subr.mxu0 0.0
  %6594 = vmatpush1.msra.mxu0 0.0
  %6595 = vmatprep.subr.mxu0 0.0
  %6596 = vmatpush1.msra.mxu0 0.0
  %6597 = vmatprep.subr.mxu0 0.0
  %6598 = vmatpush1.msra.mxu0 0.0
  %6599 = vmatprep.subr.mxu0 0.0
  %6600 = vmatpush1.msra.mxu0 0.0
  %6601 = vmatprep.subr.mxu0 0.0
  %6602 = vmatpush1.msra.mxu0 0.0
  %6603 = vmatprep.subr.mxu0 0.0
  %6604 = vmatpush1.msra.mxu0 %v6427
  %6605 = vmatprep.subr.mxu0 0.0
  %6606 = vmatpush1.msra.mxu0 %v6426
  %6607 = vmatprep.subr.mxu0 0.0
  %6608 = vmatpush2.msra.mxu0 0.0
  %6609 = vmatprep.subr.mxu0 0.0
  %6610 = vmatpush2.msra.mxu0 0.0
  %6611 = vmatprep.subr.mxu0 0.0
  %6612 = vmatpush2.msra.mxu0 0.0
  %6613 = vmatprep.subr.mxu0 0.0
  %6614 = vmatpush2.msra.mxu0 0.0
  %6615 = vmatprep.subr.mxu0 0.0
  %6616 = vmatpush2.msra.mxu0 0.0
  %6617 = vmatprep.subr.mxu0 0.0
  %6618 = vmatpush2.msra.mxu0 0.0
  %6619 = vmatprep.subr.mxu0 0.0
  %6620 = vmatpush2.msra.mxu0 0.0
  %6621 = vmatprep.subr.mxu0 0.0
  %6622 = vmatpush2.msra.mxu0 0.0
  %6623 = vmatprep.subr.mxu0 0.0
  %6624 = vmatpush2.msra.mxu0 0.0
  %6625 = vmatprep.subr.mxu0 0.0
  %6626 = vmatpush2.msra.mxu0 0.0
  %6627 = vmatprep.subr.mxu0 0.0
  %6628 = vmatpush2.msra.mxu0 0.0
  %6629 = vmatprep.subr.mxu0 0.0
  %6630 = vmatpush2.msra.mxu0 0.0
  %6631 = vmatprep.subr.mxu0 0.0
  %6632 = vmatpush2.msra.mxu0 0.0
  %6633 = vmatprep.subr.mxu0 0.0
  %6634 = vmatpush2.msra.mxu0 0.0
  %6635 = vmatprep.subr.mxu0 0.0
  %6636 = vmatpush2.msra.mxu0 0.0
  %6637 = vmatprep.subr.mxu0 0.0
  %6638 = vmatpush2.msra.mxu0 0.0
  %6639 = vmatprep.mubr.f32.mxu0 0.0
  %6640 = vmatmul.mubr.f32.gmra.mxu0 %v3169
  %v6641 = vpop.f32.mrf.mxu0
  %v6642 = vadd.f32 0.0, %v6641
  %v6643 = vpop.f32.mrf.mxu0
  %6644 = vmatprep.mubr.f32.mxu0 0.0
  %6645 = vmatmul.mubr.f32.gmra.mxu0 %v3172
  %v6646 = vpop.f32.mrf.mxu0
  %v6647 = vadd.f32 0.0, %v6646
  %v6648 = vpop.f32.mrf.mxu0
  %6649 = vmatprep.mubr.f32.mxu0 0.0
  %6650 = vmatmul.mubr.f32.gmra.mxu0 %v3175
  %v6651 = vpop.f32.mrf.mxu0
  %v6652 = vadd.f32 0.0, %v6651
  %v6653 = vpop.f32.mrf.mxu0
  %6654 = vmatprep.mubr.f32.mxu0 0.0
  %6655 = vmatmul.mubr.f32.gmra.mxu0 %v3178
  %v6656 = vpop.f32.mrf.mxu0
  %v6657 = vadd.f32 0.0, %v6656
  %v6658 = vpop.f32.mrf.mxu0
  %6659 = vmatprep.mubr.f32.mxu0 0.0
  %6660 = vmatmul.mubr.f32.gmra.mxu0 %v3181
  %v6661 = vpop.f32.mrf.mxu0
  %v6662 = vadd.f32 0.0, %v6661
  %v6663 = vpop.f32.mrf.mxu0
  %6664 = vmatprep.mubr.f32.mxu0 0.0
  %6665 = vmatmul.mubr.f32.gmra.mxu0 %v3184
  %v6666 = vpop.f32.mrf.mxu0
  %v6667 = vadd.f32 0.0, %v6666
  %v6668 = vpop.f32.mrf.mxu0
  %6669 = vdwg.mxu0
  %v6670 = vadd.f32 %v6569, %v6642
  %v6671 = vadd.f32 %v6570, %v6647
  %v6672 = vmul.f32 %v6670, 0.5
  %v6673 = vmul.f32 %v6671, 0.5
  %v6674 = vtanh.pop %v6672
  %v6675 = vtanh.pop %v6673
  %v6676 = vmul.f32 %v6674, 0.5
  %v6677 = vmul.f32 %v6675, 0.5
  %v6678 = vadd.f32 %v6676, 0.5
  %v6679 = vadd.f32 %v6677, 0.5
  %v6680 = vadd.f32 %v6571, %v6652
  %v6681 = vadd.f32 %v6572, %v6657
  %v6682 = vmul.f32 %v6680, 0.5
  %v6683 = vmul.f32 %v6681, 0.5
  %v6684 = vtanh.pop %v6682
  %v6685 = vtanh.pop %v6683
  %v6686 = vmul.f32 %v6684, 0.5
  %v6687 = vmul.f32 %v6685, 0.5
  %v6688 = vadd.f32 %v6686, 0.5
  %v6689 = vadd.f32 %v6687, 0.5
  %v6690 = vadd.f32 %v6662, %v3304
  %v6691 = vadd.f32 %v6667, %v3309
  %v6692 = vmul.f32 %v6678, %v6690
  %v6693 = vmul.f32 %v6679, %v6691
  %v6694 = vadd.f32 %v6573, %v6692
  %v6695 = vadd.f32 %v6574, %v6693
  %v6696 = vtanh.pop %v6694
  %v6697 = vtanh.pop %v6695
  %v6698 = vsub.f32 1.0, %v6688
  %v6699 = vsub.f32 1.0, %v6689
  %v6700 = vmul.f32 %v6698, %v6696
  %v6701 = vmul.f32 %v6699, %v6697
  %v6702 = vmul.f32 %v6688, %v6426
  %v6703 = vmul.f32 %v6689, %v6427
  %v6704 = vadd.f32 %v6700, %v6702
  %v6705 = vadd.f32 %v6701, %v6703
  %v6706 = vld [vmem:[%s840 + $0x30] sm:$0xff]
  %v6707 = vld [vmem:[%s840 + $0x38] sm:$0xff]
  %v6708 = vld [vmem:[%s840 + $0x40] sm:$0xff]
  %v6709 = vld [vmem:[%s840 + $0x48] sm:$0xff]
  %v6710 = vld [vmem:[%s840 + $0x50] sm:$0xff]
  %v6711 = vld [vmem:[%s840 + $0x58] sm:$0xff]
  %6712 = vmatprep.subr.mxu0 0.0
  %6713 = vmatpush1.msra.mxu0 0.0
  %6714 = vmatprep.subr.mxu0 0.0
  %6715 = vmatpush1.msra.mxu0 0.0
  %6716 = vmatprep.subr.mxu0 0.0
  %6717 = vmatpush1.msra.mxu0 0.0
  %6718 = vmatprep.subr.mxu0 0.0
  %6719 = vmatpush1.msra.mxu0 0.0
  %6720 = vmatprep.subr.mxu0 0.0
  %6721 = vmatpush1.msra.mxu0 0.0
  %6722 = vmatprep.subr.mxu0 0.0
  %6723 = vmatpush1.msra.mxu0 0.0
  %6724 = vmatprep.subr.mxu0 0.0
  %6725 = vmatpush1.msra.mxu0 0.0
  %6726 = vmatprep.subr.mxu0 0.0
  %6727 = vmatpush1.msra.mxu0 0.0
  %6728 = vmatprep.subr.mxu0 0.0
  %6729 = vmatpush1.msra.mxu0 0.0
  %6730 = vmatprep.subr.mxu0 0.0
  %6731 = vmatpush1.msra.mxu0 0.0
  %6732 = vmatprep.subr.mxu0 0.0
  %6733 = vmatpush1.msra.mxu0 0.0
  %6734 = vmatprep.subr.mxu0 0.0
  %6735 = vmatpush1.msra.mxu0 0.0
  %6736 = vmatprep.subr.mxu0 0.0
  %6737 = vmatpush1.msra.mxu0 0.0
  %6738 = vmatprep.subr.mxu0 0.0
  %6739 = vmatpush1.msra.mxu0 0.0
  %6740 = vmatprep.subr.mxu0 0.0
  %6741 = vmatpush1.msra.mxu0 %v6564
  %6742 = vmatprep.subr.mxu0 0.0
  %6743 = vmatpush1.msra.mxu0 %v6563
  %6744 = vmatprep.subr.mxu0 0.0
  %6745 = vmatpush2.msra.mxu0 0.0
  %6746 = vmatprep.subr.mxu0 0.0
  %6747 = vmatpush2.msra.mxu0 0.0
  %6748 = vmatprep.subr.mxu0 0.0
  %6749 = vmatpush2.msra.mxu0 0.0
  %6750 = vmatprep.subr.mxu0 0.0
  %6751 = vmatpush2.msra.mxu0 0.0
  %6752 = vmatprep.subr.mxu0 0.0
  %6753 = vmatpush2.msra.mxu0 0.0
  %6754 = vmatprep.subr.mxu0 0.0
  %6755 = vmatpush2.msra.mxu0 0.0
  %6756 = vmatprep.subr.mxu0 0.0
  %6757 = vmatpush2.msra.mxu0 0.0
  %6758 = vmatprep.subr.mxu0 0.0
  %6759 = vmatpush2.msra.mxu0 0.0
  %6760 = vmatprep.subr.mxu0 0.0
  %6761 = vmatpush2.msra.mxu0 0.0
  %6762 = vmatprep.subr.mxu0 0.0
  %6763 = vmatpush2.msra.mxu0 0.0
  %6764 = vmatprep.subr.mxu0 0.0
  %6765 = vmatpush2.msra.mxu0 0.0
  %6766 = vmatprep.subr.mxu0 0.0
  %6767 = vmatpush2.msra.mxu0 0.0
  %6768 = vmatprep.subr.mxu0 0.0
  %6769 = vmatpush2.msra.mxu0 0.0
  %6770 = vmatprep.subr.mxu0 0.0
  %6771 = vmatpush2.msra.mxu0 0.0
  %6772 = vmatprep.subr.mxu0 0.0
  %6773 = vmatpush2.msra.mxu0 0.0
  %6774 = vmatprep.subr.mxu0 0.0
  %6775 = vmatpush2.msra.mxu0 0.0
  %6776 = vmatprep.mubr.f32.mxu0 0.0
  %6777 = vmatmul.mubr.f32.gmra.mxu0 %v3334
  %v6778 = vpop.f32.mrf.mxu0
  %v6779 = vadd.f32 0.0, %v6778
  %v6780 = vpop.f32.mrf.mxu0
  %6781 = vmatprep.mubr.f32.mxu0 0.0
  %6782 = vmatmul.mubr.f32.gmra.mxu0 %v3337
  %v6783 = vpop.f32.mrf.mxu0
  %v6784 = vadd.f32 0.0, %v6783
  %v6785 = vpop.f32.mrf.mxu0
  %6786 = vmatprep.mubr.f32.mxu0 0.0
  %6787 = vmatmul.mubr.f32.gmra.mxu0 %v3340
  %v6788 = vpop.f32.mrf.mxu0
  %v6789 = vadd.f32 0.0, %v6788
  %v6790 = vpop.f32.mrf.mxu0
  %6791 = vmatprep.mubr.f32.mxu0 0.0
  %6792 = vmatmul.mubr.f32.gmra.mxu0 %v3343
  %v6793 = vpop.f32.mrf.mxu0
  %v6794 = vadd.f32 0.0, %v6793
  %v6795 = vpop.f32.mrf.mxu0
  %6796 = vmatprep.mubr.f32.mxu0 0.0
  %6797 = vmatmul.mubr.f32.gmra.mxu0 %v3346
  %v6798 = vpop.f32.mrf.mxu0
  %v6799 = vadd.f32 0.0, %v6798
  %v6800 = vpop.f32.mrf.mxu0
  %6801 = vmatprep.mubr.f32.mxu0 0.0
  %6802 = vmatmul.mubr.f32.gmra.mxu0 %v3349
  %v6803 = vpop.f32.mrf.mxu0
  %v6804 = vadd.f32 0.0, %v6803
  %v6805 = vpop.f32.mrf.mxu0
  %6806 = vdwg.mxu0
  %v6807 = vadd.f32 %v6706, %v6779
  %v6808 = vadd.f32 %v6707, %v6784
  %v6809 = vmul.f32 %v6807, 0.5
  %v6810 = vmul.f32 %v6808, 0.5
  %v6811 = vtanh.pop %v6809
  %v6812 = vtanh.pop %v6810
  %v6813 = vmul.f32 %v6811, 0.5
  %v6814 = vmul.f32 %v6812, 0.5
  %v6815 = vadd.f32 %v6813, 0.5
  %v6816 = vadd.f32 %v6814, 0.5
  %v6817 = vadd.f32 %v6708, %v6789
  %v6818 = vadd.f32 %v6709, %v6794
  %v6819 = vmul.f32 %v6817, 0.5
  %v6820 = vmul.f32 %v6818, 0.5
  %v6821 = vtanh.pop %v6819
  %v6822 = vtanh.pop %v6820
  %v6823 = vmul.f32 %v6821, 0.5
  %v6824 = vmul.f32 %v6822, 0.5
  %v6825 = vadd.f32 %v6823, 0.5
  %v6826 = vadd.f32 %v6824, 0.5
  %v6827 = vadd.f32 %v6799, %v3469
  %v6828 = vadd.f32 %v6804, %v3474
  %v6829 = vmul.f32 %v6815, %v6827
  %v6830 = vmul.f32 %v6816, %v6828
  %v6831 = vadd.f32 %v6710, %v6829
  %v6832 = vadd.f32 %v6711, %v6830
  %v6833 = vtanh.pop %v6831
  %v6834 = vtanh.pop %v6832
  %v6835 = vsub.f32 1.0, %v6825
  %v6836 = vsub.f32 1.0, %v6826
  %v6837 = vmul.f32 %v6835, %v6833
  %v6838 = vmul.f32 %v6836, %v6834
  %v6839 = vmul.f32 %v6825, %v6563
  %v6840 = vmul.f32 %v6826, %v6564
  %v6841 = vadd.f32 %v6837, %v6839
  %v6842 = vadd.f32 %v6838, %v6840
  %6843 = vst [vmem:[%s4334] sm:$0xff] %v6704
  %6844 = vst [vmem:[%s4334 + $0x8] sm:$0xff] %v6705
  %6845 = vst [vmem:[%s4331 + $0x10] sm:$0xff] %v6841
  %6846 = vst [vmem:[%s4331 + $0x18] sm:$0xff] %v6842
  %v6847 = vld [vmem:[%s2750] sm:$0xff]
  %v6848 = vld [vmem:[%s2750 + $0x8] sm:$0xff]
  %v6849 = vld [vmem:[%s2750 + $0x10] sm:$0xff]
  %v6850 = vld [vmem:[%s2750 + $0x18] sm:$0xff]
  %v6851 = vld [vmem:[%s2750 + $0x20] sm:$0xff]
  %v6852 = vld [vmem:[%s2750 + $0x28] sm:$0xff]
  %6853 = vmatprep.subr.mxu0 0.0
  %6854 = vmatpush1.msra.mxu0 0.0
  %6855 = vmatprep.subr.mxu0 0.0
  %6856 = vmatpush1.msra.mxu0 0.0
  %6857 = vmatprep.subr.mxu0 0.0
  %6858 = vmatpush1.msra.mxu0 0.0
  %6859 = vmatprep.subr.mxu0 0.0
  %6860 = vmatpush1.msra.mxu0 0.0
  %6861 = vmatprep.subr.mxu0 0.0
  %6862 = vmatpush1.msra.mxu0 0.0
  %6863 = vmatprep.subr.mxu0 0.0
  %6864 = vmatpush1.msra.mxu0 0.0
  %6865 = vmatprep.subr.mxu0 0.0
  %6866 = vmatpush1.msra.mxu0 0.0
  %6867 = vmatprep.subr.mxu0 0.0
  %6868 = vmatpush1.msra.mxu0 0.0
  %6869 = vmatprep.subr.mxu0 0.0
  %6870 = vmatpush1.msra.mxu0 0.0
  %6871 = vmatprep.subr.mxu0 0.0
  %6872 = vmatpush1.msra.mxu0 0.0
  %6873 = vmatprep.subr.mxu0 0.0
  %6874 = vmatpush1.msra.mxu0 0.0
  %6875 = vmatprep.subr.mxu0 0.0
  %6876 = vmatpush1.msra.mxu0 0.0
  %6877 = vmatprep.subr.mxu0 0.0
  %6878 = vmatpush1.msra.mxu0 0.0
  %6879 = vmatprep.subr.mxu0 0.0
  %6880 = vmatpush1.msra.mxu0 0.0
  %6881 = vmatprep.subr.mxu0 0.0
  %6882 = vmatpush1.msra.mxu0 %v6705
  %6883 = vmatprep.subr.mxu0 0.0
  %6884 = vmatpush1.msra.mxu0 %v6704
  %6885 = vmatprep.subr.mxu0 0.0
  %6886 = vmatpush2.msra.mxu0 0.0
  %6887 = vmatprep.subr.mxu0 0.0
  %6888 = vmatpush2.msra.mxu0 0.0
  %6889 = vmatprep.subr.mxu0 0.0
  %6890 = vmatpush2.msra.mxu0 0.0
  %6891 = vmatprep.subr.mxu0 0.0
  %6892 = vmatpush2.msra.mxu0 0.0
  %6893 = vmatprep.subr.mxu0 0.0
  %6894 = vmatpush2.msra.mxu0 0.0
  %6895 = vmatprep.subr.mxu0 0.0
  %6896 = vmatpush2.msra.mxu0 0.0
  %6897 = vmatprep.subr.mxu0 0.0
  %6898 = vmatpush2.msra.mxu0 0.0
  %6899 = vmatprep.subr.mxu0 0.0
  %6900 = vmatpush2.msra.mxu0 0.0
  %6901 = vmatprep.subr.mxu0 0.0
  %6902 = vmatpush2.msra.mxu0 0.0
  %6903 = vmatprep.subr.mxu0 0.0
  %6904 = vmatpush2.msra.mxu0 0.0
  %6905 = vmatprep.subr.mxu0 0.0
  %6906 = vmatpush2.msra.mxu0 0.0
  %6907 = vmatprep.subr.mxu0 0.0
  %6908 = vmatpush2.msra.mxu0 0.0
  %6909 = vmatprep.subr.mxu0 0.0
  %6910 = vmatpush2.msra.mxu0 0.0
  %6911 = vmatprep.subr.mxu0 0.0
  %6912 = vmatpush2.msra.mxu0 0.0
  %6913 = vmatprep.subr.mxu0 0.0
  %6914 = vmatpush2.msra.mxu0 0.0
  %6915 = vmatprep.subr.mxu0 0.0
  %6916 = vmatpush2.msra.mxu0 0.0
  %6917 = vmatprep.mubr.f32.mxu0 0.0
  %6918 = vmatmul.mubr.f32.gmra.mxu0 %v3169
  %v6919 = vpop.f32.mrf.mxu0
  %v6920 = vadd.f32 0.0, %v6919
  %v6921 = vpop.f32.mrf.mxu0
  %6922 = vmatprep.mubr.f32.mxu0 0.0
  %6923 = vmatmul.mubr.f32.gmra.mxu0 %v3172
  %v6924 = vpop.f32.mrf.mxu0
  %v6925 = vadd.f32 0.0, %v6924
  %v6926 = vpop.f32.mrf.mxu0
  %6927 = vmatprep.mubr.f32.mxu0 0.0
  %6928 = vmatmul.mubr.f32.gmra.mxu0 %v3175
  %v6929 = vpop.f32.mrf.mxu0
  %v6930 = vadd.f32 0.0, %v6929
  %v6931 = vpop.f32.mrf.mxu0
  %6932 = vmatprep.mubr.f32.mxu0 0.0
  %6933 = vmatmul.mubr.f32.gmra.mxu0 %v3178
  %v6934 = vpop.f32.mrf.mxu0
  %v6935 = vadd.f32 0.0, %v6934
  %v6936 = vpop.f32.mrf.mxu0
  %6937 = vmatprep.mubr.f32.mxu0 0.0
  %6938 = vmatmul.mubr.f32.gmra.mxu0 %v3181
  %v6939 = vpop.f32.mrf.mxu0
  %v6940 = vadd.f32 0.0, %v6939
  %v6941 = vpop.f32.mrf.mxu0
  %6942 = vmatprep.mubr.f32.mxu0 0.0
  %6943 = vmatmul.mubr.f32.gmra.mxu0 %v3184
  %v6944 = vpop.f32.mrf.mxu0
  %v6945 = vadd.f32 0.0, %v6944
  %v6946 = vpop.f32.mrf.mxu0
  %6947 = vdwg.mxu0
  %v6948 = vadd.f32 %v6847, %v6920
  %v6949 = vadd.f32 %v6848, %v6925
  %v6950 = vmul.f32 %v6948, 0.5
  %v6951 = vmul.f32 %v6949, 0.5
  %v6952 = vtanh.pop %v6950
  %v6953 = vtanh.pop %v6951
  %v6954 = vmul.f32 %v6952, 0.5
  %v6955 = vmul.f32 %v6953, 0.5
  %v6956 = vadd.f32 %v6954, 0.5
  %v6957 = vadd.f32 %v6955, 0.5
  %v6958 = vadd.f32 %v6849, %v6930
  %v6959 = vadd.f32 %v6850, %v6935
  %v6960 = vmul.f32 %v6958, 0.5
  %v6961 = vmul.f32 %v6959, 0.5
  %v6962 = vtanh.pop %v6960
  %v6963 = vtanh.pop %v6961
  %v6964 = vmul.f32 %v6962, 0.5
  %v6965 = vmul.f32 %v6963, 0.5
  %v6966 = vadd.f32 %v6964, 0.5
  %v6967 = vadd.f32 %v6965, 0.5
  %v6968 = vadd.f32 %v6940, %v3304
  %v6969 = vadd.f32 %v6945, %v3309
  %v6970 = vmul.f32 %v6956, %v6968
  %v6971 = vmul.f32 %v6957, %v6969
  %v6972 = vadd.f32 %v6851, %v6970
  %v6973 = vadd.f32 %v6852, %v6971
  %v6974 = vtanh.pop %v6972
  %v6975 = vtanh.pop %v6973
  %v6976 = vsub.f32 1.0, %v6966
  %v6977 = vsub.f32 1.0, %v6967
  %v6978 = vmul.f32 %v6976, %v6974
  %v6979 = vmul.f32 %v6977, %v6975
  %v6980 = vmul.f32 %v6966, %v6704
  %v6981 = vmul.f32 %v6967, %v6705
  %v6982 = vadd.f32 %v6978, %v6980
  %v6983 = vadd.f32 %v6979, %v6981
  %v6984 = vld [vmem:[%s649 + $0x30] sm:$0xff]
  %v6985 = vld [vmem:[%s649 + $0x38] sm:$0xff]
  %v6986 = vld [vmem:[%s649 + $0x40] sm:$0xff]
  %v6987 = vld [vmem:[%s649 + $0x48] sm:$0xff]
  %v6988 = vld [vmem:[%s649 + $0x50] sm:$0xff]
  %v6989 = vld [vmem:[%s649 + $0x58] sm:$0xff]
  %6990 = vmatprep.subr.mxu0 0.0
  %6991 = vmatpush1.msra.mxu0 0.0
  %6992 = vmatprep.subr.mxu0 0.0
  %6993 = vmatpush1.msra.mxu0 0.0
  %6994 = vmatprep.subr.mxu0 0.0
  %6995 = vmatpush1.msra.mxu0 0.0
  %6996 = vmatprep.subr.mxu0 0.0
  %6997 = vmatpush1.msra.mxu0 0.0
  %6998 = vmatprep.subr.mxu0 0.0
  %6999 = vmatpush1.msra.mxu0 0.0
  %7000 = vmatprep.subr.mxu0 0.0
  %7001 = vmatpush1.msra.mxu0 0.0
  %7002 = vmatprep.subr.mxu0 0.0
  %7003 = vmatpush1.msra.mxu0 0.0
  %7004 = vmatprep.subr.mxu0 0.0
  %7005 = vmatpush1.msra.mxu0 0.0
  %7006 = vmatprep.subr.mxu0 0.0
  %7007 = vmatpush1.msra.mxu0 0.0
  %7008 = vmatprep.subr.mxu0 0.0
  %7009 = vmatpush1.msra.mxu0 0.0
  %7010 = vmatprep.subr.mxu0 0.0
  %7011 = vmatpush1.msra.mxu0 0.0
  %7012 = vmatprep.subr.mxu0 0.0
  %7013 = vmatpush1.msra.mxu0 0.0
  %7014 = vmatprep.subr.mxu0 0.0
  %7015 = vmatpush1.msra.mxu0 0.0
  %7016 = vmatprep.subr.mxu0 0.0
  %7017 = vmatpush1.msra.mxu0 0.0
  %7018 = vmatprep.subr.mxu0 0.0
  %7019 = vmatpush1.msra.mxu0 %v6842
  %7020 = vmatprep.subr.mxu0 0.0
  %7021 = vmatpush1.msra.mxu0 %v6841
  %7022 = vmatprep.subr.mxu0 0.0
  %7023 = vmatpush2.msra.mxu0 0.0
  %7024 = vmatprep.subr.mxu0 0.0
  %7025 = vmatpush2.msra.mxu0 0.0
  %7026 = vmatprep.subr.mxu0 0.0
  %7027 = vmatpush2.msra.mxu0 0.0
  %7028 = vmatprep.subr.mxu0 0.0
  %7029 = vmatpush2.msra.mxu0 0.0
  %7030 = vmatprep.subr.mxu0 0.0
  %7031 = vmatpush2.msra.mxu0 0.0
  %7032 = vmatprep.subr.mxu0 0.0
  %7033 = vmatpush2.msra.mxu0 0.0
  %7034 = vmatprep.subr.mxu0 0.0
  %7035 = vmatpush2.msra.mxu0 0.0
  %7036 = vmatprep.subr.mxu0 0.0
  %7037 = vmatpush2.msra.mxu0 0.0
  %7038 = vmatprep.subr.mxu0 0.0
  %7039 = vmatpush2.msra.mxu0 0.0
  %7040 = vmatprep.subr.mxu0 0.0
  %7041 = vmatpush2.msra.mxu0 0.0
  %7042 = vmatprep.subr.mxu0 0.0
  %7043 = vmatpush2.msra.mxu0 0.0
  %7044 = vmatprep.subr.mxu0 0.0
  %7045 = vmatpush2.msra.mxu0 0.0
  %7046 = vmatprep.subr.mxu0 0.0
  %7047 = vmatpush2.msra.mxu0 0.0
  %7048 = vmatprep.subr.mxu0 0.0
  %7049 = vmatpush2.msra.mxu0 0.0
  %7050 = vmatprep.subr.mxu0 0.0
  %7051 = vmatpush2.msra.mxu0 0.0
  %7052 = vmatprep.subr.mxu0 0.0
  %7053 = vmatpush2.msra.mxu0 0.0
  %7054 = vmatprep.mubr.f32.mxu0 0.0
  %7055 = vmatmul.mubr.f32.gmra.mxu0 %v3334
  %v7056 = vpop.f32.mrf.mxu0
  %v7057 = vadd.f32 0.0, %v7056
  %v7058 = vpop.f32.mrf.mxu0
  %7059 = vmatprep.mubr.f32.mxu0 0.0
  %7060 = vmatmul.mubr.f32.gmra.mxu0 %v3337
  %v7061 = vpop.f32.mrf.mxu0
  %v7062 = vadd.f32 0.0, %v7061
  %v7063 = vpop.f32.mrf.mxu0
  %7064 = vmatprep.mubr.f32.mxu0 0.0
  %7065 = vmatmul.mubr.f32.gmra.mxu0 %v3340
  %v7066 = vpop.f32.mrf.mxu0
  %v7067 = vadd.f32 0.0, %v7066
  %v7068 = vpop.f32.mrf.mxu0
  %7069 = vmatprep.mubr.f32.mxu0 0.0
  %7070 = vmatmul.mubr.f32.gmra.mxu0 %v3343
  %v7071 = vpop.f32.mrf.mxu0
  %v7072 = vadd.f32 0.0, %v7071
  %v7073 = vpop.f32.mrf.mxu0
  %7074 = vmatprep.mubr.f32.mxu0 0.0
  %7075 = vmatmul.mubr.f32.gmra.mxu0 %v3346
  %v7076 = vpop.f32.mrf.mxu0
  %v7077 = vadd.f32 0.0, %v7076
  %v7078 = vpop.f32.mrf.mxu0
  %7079 = vmatprep.mubr.f32.mxu0 0.0
  %7080 = vmatmul.mubr.f32.gmra.mxu0 %v3349
  %v7081 = vpop.f32.mrf.mxu0
  %v7082 = vadd.f32 0.0, %v7081
  %v7083 = vpop.f32.mrf.mxu0
  %7084 = vdwg.mxu0
  %v7085 = vadd.f32 %v6984, %v7057
  %v7086 = vadd.f32 %v6985, %v7062
  %v7087 = vmul.f32 %v7085, 0.5
  %v7088 = vmul.f32 %v7086, 0.5
  %v7089 = vtanh.pop %v7087
  %v7090 = vtanh.pop %v7088
  %v7091 = vmul.f32 %v7089, 0.5
  %v7092 = vmul.f32 %v7090, 0.5
  %v7093 = vadd.f32 %v7091, 0.5
  %v7094 = vadd.f32 %v7092, 0.5
  %v7095 = vadd.f32 %v6986, %v7067
  %v7096 = vadd.f32 %v6987, %v7072
  %v7097 = vmul.f32 %v7095, 0.5
  %v7098 = vmul.f32 %v7096, 0.5
  %v7099 = vtanh.pop %v7097
  %v7100 = vtanh.pop %v7098
  %v7101 = vmul.f32 %v7099, 0.5
  %v7102 = vmul.f32 %v7100, 0.5
  %v7103 = vadd.f32 %v7101, 0.5
  %v7104 = vadd.f32 %v7102, 0.5
  %v7105 = vadd.f32 %v7077, %v3469
  %v7106 = vadd.f32 %v7082, %v3474
  %v7107 = vmul.f32 %v7093, %v7105
  %v7108 = vmul.f32 %v7094, %v7106
  %v7109 = vadd.f32 %v6988, %v7107
  %v7110 = vadd.f32 %v6989, %v7108
  %v7111 = vtanh.pop %v7109
  %v7112 = vtanh.pop %v7110
  %v7113 = vsub.f32 1.0, %v7103
  %v7114 = vsub.f32 1.0, %v7104
  %v7115 = vmul.f32 %v7113, %v7111
  %v7116 = vmul.f32 %v7114, %v7112
  %v7117 = vmul.f32 %v7103, %v6841
  %v7118 = vmul.f32 %v7104, %v6842
  %v7119 = vadd.f32 %v7115, %v7117
  %v7120 = vadd.f32 %v7116, %v7118
  %7121 = vst [vmem:[%s4054] sm:$0xff] %v6982
  %7122 = vst [vmem:[%s4054 + $0x8] sm:$0xff] %v6983
  %7123 = vst [vmem:[%s4051 + $0x10] sm:$0xff] %v7119
  %7124 = vst [vmem:[%s4051 + $0x18] sm:$0xff] %v7120
  %v7125 = vld [vmem:[%s2941] sm:$0xff]
  %v7126 = vld [vmem:[%s2941 + $0x8] sm:$0xff]
  %v7127 = vld [vmem:[%s2941 + $0x10] sm:$0xff]
  %v7128 = vld [vmem:[%s2941 + $0x18] sm:$0xff]
  %v7129 = vld [vmem:[%s2941 + $0x20] sm:$0xff]
  %v7130 = vld [vmem:[%s2941 + $0x28] sm:$0xff]
  %7131 = vmatprep.subr.mxu0 0.0
  %7132 = vmatpush1.msra.mxu0 0.0
  %7133 = vmatprep.subr.mxu0 0.0
  %7134 = vmatpush1.msra.mxu0 0.0
  %7135 = vmatprep.subr.mxu0 0.0
  %7136 = vmatpush1.msra.mxu0 0.0
  %7137 = vmatprep.subr.mxu0 0.0
  %7138 = vmatpush1.msra.mxu0 0.0
  %7139 = vmatprep.subr.mxu0 0.0
  %7140 = vmatpush1.msra.mxu0 0.0
  %7141 = vmatprep.subr.mxu0 0.0
  %7142 = vmatpush1.msra.mxu0 0.0
  %7143 = vmatprep.subr.mxu0 0.0
  %7144 = vmatpush1.msra.mxu0 0.0
  %7145 = vmatprep.subr.mxu0 0.0
  %7146 = vmatpush1.msra.mxu0 0.0
  %7147 = vmatprep.subr.mxu0 0.0
  %7148 = vmatpush1.msra.mxu0 0.0
  %7149 = vmatprep.subr.mxu0 0.0
  %7150 = vmatpush1.msra.mxu0 0.0
  %7151 = vmatprep.subr.mxu0 0.0
  %7152 = vmatpush1.msra.mxu0 0.0
  %7153 = vmatprep.subr.mxu0 0.0
  %7154 = vmatpush1.msra.mxu0 0.0
  %7155 = vmatprep.subr.mxu0 0.0
  %7156 = vmatpush1.msra.mxu0 0.0
  %7157 = vmatprep.subr.mxu0 0.0
  %7158 = vmatpush1.msra.mxu0 0.0
  %7159 = vmatprep.subr.mxu0 0.0
  %7160 = vmatpush1.msra.mxu0 %v6983
  %7161 = vmatprep.subr.mxu0 0.0
  %7162 = vmatpush1.msra.mxu0 %v6982
  %7163 = vmatprep.subr.mxu0 0.0
  %7164 = vmatpush2.msra.mxu0 0.0
  %7165 = vmatprep.subr.mxu0 0.0
  %7166 = vmatpush2.msra.mxu0 0.0
  %7167 = vmatprep.subr.mxu0 0.0
  %7168 = vmatpush2.msra.mxu0 0.0
  %7169 = vmatprep.subr.mxu0 0.0
  %7170 = vmatpush2.msra.mxu0 0.0
  %7171 = vmatprep.subr.mxu0 0.0
  %7172 = vmatpush2.msra.mxu0 0.0
  %7173 = vmatprep.subr.mxu0 0.0
  %7174 = vmatpush2.msra.mxu0 0.0
  %7175 = vmatprep.subr.mxu0 0.0
  %7176 = vmatpush2.msra.mxu0 0.0
  %7177 = vmatprep.subr.mxu0 0.0
  %7178 = vmatpush2.msra.mxu0 0.0
  %7179 = vmatprep.subr.mxu0 0.0
  %7180 = vmatpush2.msra.mxu0 0.0
  %7181 = vmatprep.subr.mxu0 0.0
  %7182 = vmatpush2.msra.mxu0 0.0
  %7183 = vmatprep.subr.mxu0 0.0
  %7184 = vmatpush2.msra.mxu0 0.0
  %7185 = vmatprep.subr.mxu0 0.0
  %7186 = vmatpush2.msra.mxu0 0.0
  %7187 = vmatprep.subr.mxu0 0.0
  %7188 = vmatpush2.msra.mxu0 0.0
  %7189 = vmatprep.subr.mxu0 0.0
  %7190 = vmatpush2.msra.mxu0 0.0
  %7191 = vmatprep.subr.mxu0 0.0
  %7192 = vmatpush2.msra.mxu0 0.0
  %7193 = vmatprep.subr.mxu0 0.0
  %7194 = vmatpush2.msra.mxu0 0.0
  %7195 = vmatprep.mubr.f32.mxu0 0.0
  %7196 = vmatmul.mubr.f32.gmra.mxu0 %v3169
  %v7197 = vpop.f32.mrf.mxu0
  %v7198 = vadd.f32 0.0, %v7197
  %v7199 = vpop.f32.mrf.mxu0
  %7200 = vmatprep.mubr.f32.mxu0 0.0
  %7201 = vmatmul.mubr.f32.gmra.mxu0 %v3172
  %v7202 = vpop.f32.mrf.mxu0
  %v7203 = vadd.f32 0.0, %v7202
  %v7204 = vpop.f32.mrf.mxu0
  %7205 = vmatprep.mubr.f32.mxu0 0.0
  %7206 = vmatmul.mubr.f32.gmra.mxu0 %v3175
  %v7207 = vpop.f32.mrf.mxu0
  %v7208 = vadd.f32 0.0, %v7207
  %v7209 = vpop.f32.mrf.mxu0
  %7210 = vmatprep.mubr.f32.mxu0 0.0
  %7211 = vmatmul.mubr.f32.gmra.mxu0 %v3178
  %v7212 = vpop.f32.mrf.mxu0
  %v7213 = vadd.f32 0.0, %v7212
  %v7214 = vpop.f32.mrf.mxu0
  %7215 = vmatprep.mubr.f32.mxu0 0.0
  %7216 = vmatmul.mubr.f32.gmra.mxu0 %v3181
  %v7217 = vpop.f32.mrf.mxu0
  %v7218 = vadd.f32 0.0, %v7217
  %v7219 = vpop.f32.mrf.mxu0
  %7220 = vmatprep.mubr.f32.mxu0 0.0
  %7221 = vmatmul.mubr.f32.gmra.mxu0 %v3184
  %v7222 = vpop.f32.mrf.mxu0
  %v7223 = vadd.f32 0.0, %v7222
  %v7224 = vpop.f32.mrf.mxu0
  %7225 = vdwg.mxu0
  %v7226 = vadd.f32 %v7125, %v7198
  %v7227 = vadd.f32 %v7126, %v7203
  %v7228 = vmul.f32 %v7226, 0.5
  %v7229 = vmul.f32 %v7227, 0.5
  %v7230 = vtanh.pop %v7228
  %v7231 = vtanh.pop %v7229
  %v7232 = vmul.f32 %v7230, 0.5
  %v7233 = vmul.f32 %v7231, 0.5
  %v7234 = vadd.f32 %v7232, 0.5
  %v7235 = vadd.f32 %v7233, 0.5
  %v7236 = vadd.f32 %v7127, %v7208
  %v7237 = vadd.f32 %v7128, %v7213
  %v7238 = vmul.f32 %v7236, 0.5
  %v7239 = vmul.f32 %v7237, 0.5
  %v7240 = vtanh.pop %v7238
  %v7241 = vtanh.pop %v7239
  %v7242 = vmul.f32 %v7240, 0.5
  %v7243 = vmul.f32 %v7241, 0.5
  %v7244 = vadd.f32 %v7242, 0.5
  %v7245 = vadd.f32 %v7243, 0.5
  %v7246 = vadd.f32 %v7218, %v3304
  %v7247 = vadd.f32 %v7223, %v3309
  %v7248 = vmul.f32 %v7234, %v7246
  %v7249 = vmul.f32 %v7235, %v7247
  %v7250 = vadd.f32 %v7129, %v7248
  %v7251 = vadd.f32 %v7130, %v7249
  %v7252 = vtanh.pop %v7250
  %v7253 = vtanh.pop %v7251
  %v7254 = vsub.f32 1.0, %v7244
  %v7255 = vsub.f32 1.0, %v7245
  %v7256 = vmul.f32 %v7254, %v7252
  %v7257 = vmul.f32 %v7255, %v7253
  %v7258 = vmul.f32 %v7244, %v6982
  %v7259 = vmul.f32 %v7245, %v6983
  %v7260 = vadd.f32 %v7256, %v7258
  %v7261 = vadd.f32 %v7257, %v7259
  %v7262 = vld [vmem:[%s458 + $0x30] sm:$0xff]
  %v7263 = vld [vmem:[%s458 + $0x38] sm:$0xff]
  %v7264 = vld [vmem:[%s458 + $0x40] sm:$0xff]
  %v7265 = vld [vmem:[%s458 + $0x48] sm:$0xff]
  %v7266 = vld [vmem:[%s458 + $0x50] sm:$0xff]
  %v7267 = vld [vmem:[%s458 + $0x58] sm:$0xff]
  %7268 = vmatprep.subr.mxu0 0.0
  %7269 = vmatpush1.msra.mxu0 0.0
  %7270 = vmatprep.subr.mxu0 0.0
  %7271 = vmatpush1.msra.mxu0 0.0
  %7272 = vmatprep.subr.mxu0 0.0
  %7273 = vmatpush1.msra.mxu0 0.0
  %7274 = vmatprep.subr.mxu0 0.0
  %7275 = vmatpush1.msra.mxu0 0.0
  %7276 = vmatprep.subr.mxu0 0.0
  %7277 = vmatpush1.msra.mxu0 0.0
  %7278 = vmatprep.subr.mxu0 0.0
  %7279 = vmatpush1.msra.mxu0 0.0
  %7280 = vmatprep.subr.mxu0 0.0
  %7281 = vmatpush1.msra.mxu0 0.0
  %7282 = vmatprep.subr.mxu0 0.0
  %7283 = vmatpush1.msra.mxu0 0.0
  %7284 = vmatprep.subr.mxu0 0.0
  %7285 = vmatpush1.msra.mxu0 0.0
  %7286 = vmatprep.subr.mxu0 0.0
  %7287 = vmatpush1.msra.mxu0 0.0
  %7288 = vmatprep.subr.mxu0 0.0
  %7289 = vmatpush1.msra.mxu0 0.0
  %7290 = vmatprep.subr.mxu0 0.0
  %7291 = vmatpush1.msra.mxu0 0.0
  %7292 = vmatprep.subr.mxu0 0.0
  %7293 = vmatpush1.msra.mxu0 0.0
  %7294 = vmatprep.subr.mxu0 0.0
  %7295 = vmatpush1.msra.mxu0 0.0
  %7296 = vmatprep.subr.mxu0 0.0
  %7297 = vmatpush1.msra.mxu0 %v7120
  %7298 = vmatprep.subr.mxu0 0.0
  %7299 = vmatpush1.msra.mxu0 %v7119
  %7300 = vmatprep.subr.mxu0 0.0
  %7301 = vmatpush2.msra.mxu0 0.0
  %7302 = vmatprep.subr.mxu0 0.0
  %7303 = vmatpush2.msra.mxu0 0.0
  %7304 = vmatprep.subr.mxu0 0.0
  %7305 = vmatpush2.msra.mxu0 0.0
  %7306 = vmatprep.subr.mxu0 0.0
  %7307 = vmatpush2.msra.mxu0 0.0
  %7308 = vmatprep.subr.mxu0 0.0
  %7309 = vmatpush2.msra.mxu0 0.0
  %7310 = vmatprep.subr.mxu0 0.0
  %7311 = vmatpush2.msra.mxu0 0.0
  %7312 = vmatprep.subr.mxu0 0.0
  %7313 = vmatpush2.msra.mxu0 0.0
  %7314 = vmatprep.subr.mxu0 0.0
  %7315 = vmatpush2.msra.mxu0 0.0
  %7316 = vmatprep.subr.mxu0 0.0
  %7317 = vmatpush2.msra.mxu0 0.0
  %7318 = vmatprep.subr.mxu0 0.0
  %7319 = vmatpush2.msra.mxu0 0.0
  %7320 = vmatprep.subr.mxu0 0.0
  %7321 = vmatpush2.msra.mxu0 0.0
  %7322 = vmatprep.subr.mxu0 0.0
  %7323 = vmatpush2.msra.mxu0 0.0
  %7324 = vmatprep.subr.mxu0 0.0
  %7325 = vmatpush2.msra.mxu0 0.0
  %7326 = vmatprep.subr.mxu0 0.0
  %7327 = vmatpush2.msra.mxu0 0.0
  %7328 = vmatprep.subr.mxu0 0.0
  %7329 = vmatpush2.msra.mxu0 0.0
  %7330 = vmatprep.subr.mxu0 0.0
  %7331 = vmatpush2.msra.mxu0 0.0
  %7332 = vmatprep.mubr.f32.mxu0 0.0
  %7333 = vmatmul.mubr.f32.gmra.mxu0 %v3334
  %v7334 = vpop.f32.mrf.mxu0
  %v7335 = vadd.f32 0.0, %v7334
  %v7336 = vpop.f32.mrf.mxu0
  %7337 = vmatprep.mubr.f32.mxu0 0.0
  %7338 = vmatmul.mubr.f32.gmra.mxu0 %v3337
  %v7339 = vpop.f32.mrf.mxu0
  %v7340 = vadd.f32 0.0, %v7339
  %v7341 = vpop.f32.mrf.mxu0
  %7342 = vmatprep.mubr.f32.mxu0 0.0
  %7343 = vmatmul.mubr.f32.gmra.mxu0 %v3340
  %v7344 = vpop.f32.mrf.mxu0
  %v7345 = vadd.f32 0.0, %v7344
  %v7346 = vpop.f32.mrf.mxu0
  %7347 = vmatprep.mubr.f32.mxu0 0.0
  %7348 = vmatmul.mubr.f32.gmra.mxu0 %v3343
  %v7349 = vpop.f32.mrf.mxu0
  %v7350 = vadd.f32 0.0, %v7349
  %v7351 = vpop.f32.mrf.mxu0
  %7352 = vmatprep.mubr.f32.mxu0 0.0
  %7353 = vmatmul.mubr.f32.gmra.mxu0 %v3346
  %v7354 = vpop.f32.mrf.mxu0
  %v7355 = vadd.f32 0.0, %v7354
  %v7356 = vpop.f32.mrf.mxu0
  %7357 = vmatprep.mubr.f32.mxu0 0.0
  %7358 = vmatmul.mubr.f32.gmra.mxu0 %v3349
  %v7359 = vpop.f32.mrf.mxu0
  %v7360 = vadd.f32 0.0, %v7359
  %v7361 = vpop.f32.mrf.mxu0
  %7362 = vdwg.mxu0
  %v7363 = vadd.f32 %v7262, %v7335
  %v7364 = vadd.f32 %v7263, %v7340
  %v7365 = vmul.f32 %v7363, 0.5
  %v7366 = vmul.f32 %v7364, 0.5
  %v7367 = vtanh.pop %v7365
  %v7368 = vtanh.pop %v7366
  %v7369 = vmul.f32 %v7367, 0.5
  %v7370 = vmul.f32 %v7368, 0.5
  %v7371 = vadd.f32 %v7369, 0.5
  %v7372 = vadd.f32 %v7370, 0.5
  %v7373 = vadd.f32 %v7264, %v7345
  %v7374 = vadd.f32 %v7265, %v7350
  %v7375 = vmul.f32 %v7373, 0.5
  %v7376 = vmul.f32 %v7374, 0.5
  %v7377 = vtanh.pop %v7375
  %v7378 = vtanh.pop %v7376
  %v7379 = vmul.f32 %v7377, 0.5
  %v7380 = vmul.f32 %v7378, 0.5
  %v7381 = vadd.f32 %v7379, 0.5
  %v7382 = vadd.f32 %v7380, 0.5
  %v7383 = vadd.f32 %v7355, %v3469
  %v7384 = vadd.f32 %v7360, %v3474
  %v7385 = vmul.f32 %v7371, %v7383
  %v7386 = vmul.f32 %v7372, %v7384
  %v7387 = vadd.f32 %v7266, %v7385
  %v7388 = vadd.f32 %v7267, %v7386
  %v7389 = vtanh.pop %v7387
  %v7390 = vtanh.pop %v7388
  %v7391 = vsub.f32 1.0, %v7381
  %v7392 = vsub.f32 1.0, %v7382
  %v7393 = vmul.f32 %v7391, %v7389
  %v7394 = vmul.f32 %v7392, %v7390
  %v7395 = vmul.f32 %v7381, %v7119
  %v7396 = vmul.f32 %v7382, %v7120
  %v7397 = vadd.f32 %v7393, %v7395
  %v7398 = vadd.f32 %v7394, %v7396
  %7399 = vst [vmem:[%s3774] sm:$0xff] %v7260
  %7400 = vst [vmem:[%s3774 + $0x8] sm:$0xff] %v7261
  %7401 = vst [vmem:[%s3771 + $0x10] sm:$0xff] %v7397
  %7402 = vst [vmem:[%s3771 + $0x18] sm:$0xff] %v7398
  %v7403 = vld [vmem:[%s3132] sm:$0xff]
  %v7404 = vld [vmem:[%s3132 + $0x8] sm:$0xff]
  %v7405 = vld [vmem:[%s3132 + $0x10] sm:$0xff]
  %v7406 = vld [vmem:[%s3132 + $0x18] sm:$0xff]
  %v7407 = vld [vmem:[%s3132 + $0x20] sm:$0xff]
  %v7408 = vld [vmem:[%s3132 + $0x28] sm:$0xff]
  %7409 = vmatprep.subr.mxu0 0.0
  %7410 = vmatpush1.msra.mxu0 0.0
  %7411 = vmatprep.subr.mxu0 0.0
  %7412 = vmatpush1.msra.mxu0 0.0
  %7413 = vmatprep.subr.mxu0 0.0
  %7414 = vmatpush1.msra.mxu0 0.0
  %7415 = vmatprep.subr.mxu0 0.0
  %7416 = vmatpush1.msra.mxu0 0.0
  %7417 = vmatprep.subr.mxu0 0.0
  %7418 = vmatpush1.msra.mxu0 0.0
  %7419 = vmatprep.subr.mxu0 0.0
  %7420 = vmatpush1.msra.mxu0 0.0
  %7421 = vmatprep.subr.mxu0 0.0
  %7422 = vmatpush1.msra.mxu0 0.0
  %7423 = vmatprep.subr.mxu0 0.0
  %7424 = vmatpush1.msra.mxu0 0.0
  %7425 = vmatprep.subr.mxu0 0.0
  %7426 = vmatpush1.msra.mxu0 0.0
  %7427 = vmatprep.subr.mxu0 0.0
  %7428 = vmatpush1.msra.mxu0 0.0
  %7429 = vmatprep.subr.mxu0 0.0
  %7430 = vmatpush1.msra.mxu0 0.0
  %7431 = vmatprep.subr.mxu0 0.0
  %7432 = vmatpush1.msra.mxu0 0.0
  %7433 = vmatprep.subr.mxu0 0.0
  %7434 = vmatpush1.msra.mxu0 0.0
  %7435 = vmatprep.subr.mxu0 0.0
  %7436 = vmatpush1.msra.mxu0 0.0
  %7437 = vmatprep.subr.mxu0 0.0
  %7438 = vmatpush1.msra.mxu0 %v7261
  %7439 = vmatprep.subr.mxu0 0.0
  %7440 = vmatpush1.msra.mxu0 %v7260
  %7441 = vmatprep.subr.mxu0 0.0
  %7442 = vmatpush2.msra.mxu0 0.0
  %7443 = vmatprep.subr.mxu0 0.0
  %7444 = vmatpush2.msra.mxu0 0.0
  %7445 = vmatprep.subr.mxu0 0.0
  %7446 = vmatpush2.msra.mxu0 0.0
  %7447 = vmatprep.subr.mxu0 0.0
  %7448 = vmatpush2.msra.mxu0 0.0
  %7449 = vmatprep.subr.mxu0 0.0
  %7450 = vmatpush2.msra.mxu0 0.0
  %7451 = vmatprep.subr.mxu0 0.0
  %7452 = vmatpush2.msra.mxu0 0.0
  %7453 = vmatprep.subr.mxu0 0.0
  %7454 = vmatpush2.msra.mxu0 0.0
  %7455 = vmatprep.subr.mxu0 0.0
  %7456 = vmatpush2.msra.mxu0 0.0
  %7457 = vmatprep.subr.mxu0 0.0
  %7458 = vmatpush2.msra.mxu0 0.0
  %7459 = vmatprep.subr.mxu0 0.0
  %7460 = vmatpush2.msra.mxu0 0.0
  %7461 = vmatprep.subr.mxu0 0.0
  %7462 = vmatpush2.msra.mxu0 0.0
  %7463 = vmatprep.subr.mxu0 0.0
  %7464 = vmatpush2.msra.mxu0 0.0
  %7465 = vmatprep.subr.mxu0 0.0
  %7466 = vmatpush2.msra.mxu0 0.0
  %7467 = vmatprep.subr.mxu0 0.0
  %7468 = vmatpush2.msra.mxu0 0.0
  %7469 = vmatprep.subr.mxu0 0.0
  %7470 = vmatpush2.msra.mxu0 0.0
  %7471 = vmatprep.subr.mxu0 0.0
  %7472 = vmatpush2.msra.mxu0 0.0
  %7473 = vmatprep.mubr.f32.mxu0 0.0
  %7474 = vmatmul.mubr.f32.gmra.mxu0 %v3169
  %v7475 = vpop.f32.mrf.mxu0
  %v7476 = vadd.f32 0.0, %v7475
  %v7477 = vpop.f32.mrf.mxu0
  %7478 = vmatprep.mubr.f32.mxu0 0.0
  %7479 = vmatmul.mubr.f32.gmra.mxu0 %v3172
  %v7480 = vpop.f32.mrf.mxu0
  %v7481 = vadd.f32 0.0, %v7480
  %v7482 = vpop.f32.mrf.mxu0
  %7483 = vmatprep.mubr.f32.mxu0 0.0
  %7484 = vmatmul.mubr.f32.gmra.mxu0 %v3175
  %v7485 = vpop.f32.mrf.mxu0
  %v7486 = vadd.f32 0.0, %v7485
  %v7487 = vpop.f32.mrf.mxu0
  %7488 = vmatprep.mubr.f32.mxu0 0.0
  %7489 = vmatmul.mubr.f32.gmra.mxu0 %v3178
  %v7490 = vpop.f32.mrf.mxu0
  %v7491 = vadd.f32 0.0, %v7490
  %v7492 = vpop.f32.mrf.mxu0
  %7493 = vmatprep.mubr.f32.mxu0 0.0
  %7494 = vmatmul.mubr.f32.gmra.mxu0 %v3181
  %v7495 = vpop.f32.mrf.mxu0
  %v7496 = vadd.f32 0.0, %v7495
  %v7497 = vpop.f32.mrf.mxu0
  %7498 = vmatprep.mubr.f32.mxu0 0.0
  %7499 = vmatmul.mubr.f32.gmra.mxu0 %v3184
  %v7500 = vpop.f32.mrf.mxu0
  %v7501 = vadd.f32 0.0, %v7500
  %v7502 = vpop.f32.mrf.mxu0
  %7503 = vdwg.mxu0
  %v7504 = vadd.f32 %v7403, %v7476
  %v7505 = vadd.f32 %v7404, %v7481
  %v7506 = vmul.f32 %v7504, 0.5
  %v7507 = vmul.f32 %v7505, 0.5
  %v7508 = vtanh.pop %v7506
  %v7509 = vtanh.pop %v7507
  %v7510 = vmul.f32 %v7508, 0.5
  %v7511 = vmul.f32 %v7509, 0.5
  %v7512 = vadd.f32 %v7510, 0.5
  %v7513 = vadd.f32 %v7511, 0.5
  %v7514 = vadd.f32 %v7405, %v7486
  %v7515 = vadd.f32 %v7406, %v7491
  %v7516 = vmul.f32 %v7514, 0.5
  %v7517 = vmul.f32 %v7515, 0.5
  %v7518 = vtanh.pop %v7516
  %v7519 = vtanh.pop %v7517
  %v7520 = vmul.f32 %v7518, 0.5
  %v7521 = vmul.f32 %v7519, 0.5
  %v7522 = vadd.f32 %v7520, 0.5
  %v7523 = vadd.f32 %v7521, 0.5
  %v7524 = vadd.f32 %v7496, %v3304
  %v7525 = vadd.f32 %v7501, %v3309
  %v7526 = vmul.f32 %v7512, %v7524
  %v7527 = vmul.f32 %v7513, %v7525
  %v7528 = vadd.f32 %v7407, %v7526
  %v7529 = vadd.f32 %v7408, %v7527
  %v7530 = vtanh.pop %v7528
  %v7531 = vtanh.pop %v7529
  %v7532 = vsub.f32 1.0, %v7522
  %v7533 = vsub.f32 1.0, %v7523
  %v7534 = vmul.f32 %v7532, %v7530
  %v7535 = vmul.f32 %v7533, %v7531
  %v7536 = vmul.f32 %v7522, %v7260
  %v7537 = vmul.f32 %v7523, %v7261
  %v7538 = vadd.f32 %v7534, %v7536
  %v7539 = vadd.f32 %v7535, %v7537
  %v7540 = vld [vmem:[#allocation2 + $0x30] sm:$0xff]
  %v7541 = vld [vmem:[#allocation2 + $0x38] sm:$0xff]
  %v7542 = vld [vmem:[#allocation2 + $0x40] sm:$0xff]
  %v7543 = vld [vmem:[#allocation2 + $0x48] sm:$0xff]
  %v7544 = vld [vmem:[#allocation2 + $0x50] sm:$0xff]
  %v7545 = vld [vmem:[#allocation2 + $0x58] sm:$0xff]
  %7546 = vmatprep.subr.mxu0 0.0
  %7547 = vmatpush1.msra.mxu0 0.0
  %7548 = vmatprep.subr.mxu0 0.0
  %7549 = vmatpush1.msra.mxu0 0.0
  %7550 = vmatprep.subr.mxu0 0.0
  %7551 = vmatpush1.msra.mxu0 0.0
  %7552 = vmatprep.subr.mxu0 0.0
  %7553 = vmatpush1.msra.mxu0 0.0
  %7554 = vmatprep.subr.mxu0 0.0
  %7555 = vmatpush1.msra.mxu0 0.0
  %7556 = vmatprep.subr.mxu0 0.0
  %7557 = vmatpush1.msra.mxu0 0.0
  %7558 = vmatprep.subr.mxu0 0.0
  %7559 = vmatpush1.msra.mxu0 0.0
  %7560 = vmatprep.subr.mxu0 0.0
  %7561 = vmatpush1.msra.mxu0 0.0
  %7562 = vmatprep.subr.mxu0 0.0
  %7563 = vmatpush1.msra.mxu0 0.0
  %7564 = vmatprep.subr.mxu0 0.0
  %7565 = vmatpush1.msra.mxu0 0.0
  %7566 = vmatprep.subr.mxu0 0.0
  %7567 = vmatpush1.msra.mxu0 0.0
  %7568 = vmatprep.subr.mxu0 0.0
  %7569 = vmatpush1.msra.mxu0 0.0
  %7570 = vmatprep.subr.mxu0 0.0
  %7571 = vmatpush1.msra.mxu0 0.0
  %7572 = vmatprep.subr.mxu0 0.0
  %7573 = vmatpush1.msra.mxu0 0.0
  %7574 = vmatprep.subr.mxu0 0.0
  %7575 = vmatpush1.msra.mxu0 %v7398
  %7576 = vmatprep.subr.mxu0 0.0
  %7577 = vmatpush1.msra.mxu0 %v7397
  %7578 = vmatprep.subr.mxu0 0.0
  %7579 = vmatpush2.msra.mxu0 0.0
  %7580 = vmatprep.subr.mxu0 0.0
  %7581 = vmatpush2.msra.mxu0 0.0
  %7582 = vmatprep.subr.mxu0 0.0
  %7583 = vmatpush2.msra.mxu0 0.0
  %7584 = vmatprep.subr.mxu0 0.0
  %7585 = vmatpush2.msra.mxu0 0.0
  %7586 = vmatprep.subr.mxu0 0.0
  %7587 = vmatpush2.msra.mxu0 0.0
  %7588 = vmatprep.subr.mxu0 0.0
  %7589 = vmatpush2.msra.mxu0 0.0
  %7590 = vmatprep.subr.mxu0 0.0
  %7591 = vmatpush2.msra.mxu0 0.0
  %7592 = vmatprep.subr.mxu0 0.0
  %7593 = vmatpush2.msra.mxu0 0.0
  %7594 = vmatprep.subr.mxu0 0.0
  %7595 = vmatpush2.msra.mxu0 0.0
  %7596 = vmatprep.subr.mxu0 0.0
  %7597 = vmatpush2.msra.mxu0 0.0
  %7598 = vmatprep.subr.mxu0 0.0
  %7599 = vmatpush2.msra.mxu0 0.0
  %7600 = vmatprep.subr.mxu0 0.0
  %7601 = vmatpush2.msra.mxu0 0.0
  %7602 = vmatprep.subr.mxu0 0.0
  %7603 = vmatpush2.msra.mxu0 0.0
  %7604 = vmatprep.subr.mxu0 0.0
  %7605 = vmatpush2.msra.mxu0 0.0
  %7606 = vmatprep.subr.mxu0 0.0
  %7607 = vmatpush2.msra.mxu0 0.0
  %7608 = vmatprep.subr.mxu0 0.0
  %7609 = vmatpush2.msra.mxu0 0.0
  %7610 = vmatprep.mubr.f32.mxu0 0.0
  %7611 = vmatmul.mubr.f32.gmra.mxu0 %v3334
  %v7612 = vpop.f32.mrf.mxu0
  %v7613 = vadd.f32 0.0, %v7612
  %v7614 = vpop.f32.mrf.mxu0
  %7615 = vmatprep.mubr.f32.mxu0 0.0
  %7616 = vmatmul.mubr.f32.gmra.mxu0 %v3337
  %v7617 = vpop.f32.mrf.mxu0
  %v7618 = vadd.f32 0.0, %v7617
  %v7619 = vpop.f32.mrf.mxu0
  %7620 = vmatprep.mubr.f32.mxu0 0.0
  %7621 = vmatmul.mubr.f32.gmra.mxu0 %v3340
  %v7622 = vpop.f32.mrf.mxu0
  %v7623 = vadd.f32 0.0, %v7622
  %v7624 = vpop.f32.mrf.mxu0
  %7625 = vmatprep.mubr.f32.mxu0 0.0
  %7626 = vmatmul.mubr.f32.gmra.mxu0 %v3343
  %v7627 = vpop.f32.mrf.mxu0
  %v7628 = vadd.f32 0.0, %v7627
  %v7629 = vpop.f32.mrf.mxu0
  %7630 = vmatprep.mubr.f32.mxu0 0.0
  %7631 = vmatmul.mubr.f32.gmra.mxu0 %v3346
  %v7632 = vpop.f32.mrf.mxu0
  %v7633 = vadd.f32 0.0, %v7632
  %v7634 = vpop.f32.mrf.mxu0
  %7635 = vmatprep.mubr.f32.mxu0 0.0
  %7636 = vmatmul.mubr.f32.gmra.mxu0 %v3349
  %v7637 = vpop.f32.mrf.mxu0
  %v7638 = vadd.f32 0.0, %v7637
  %v7639 = vpop.f32.mrf.mxu0
  %7640 = vdwg.mxu0
  %v7641 = vadd.f32 %v7540, %v7613
  %v7642 = vadd.f32 %v7541, %v7618
  %v7643 = vmul.f32 %v7641, 0.5
  %v7644 = vmul.f32 %v7642, 0.5
  %v7645 = vtanh.pop %v7643
  %v7646 = vtanh.pop %v7644
  %v7647 = vmul.f32 %v7645, 0.5
  %v7648 = vmul.f32 %v7646, 0.5
  %v7649 = vadd.f32 %v7647, 0.5
  %v7650 = vadd.f32 %v7648, 0.5
  %v7651 = vadd.f32 %v7542, %v7623
  %v7652 = vadd.f32 %v7543, %v7628
  %v7653 = vmul.f32 %v7651, 0.5
  %v7654 = vmul.f32 %v7652, 0.5
  %v7655 = vtanh.pop %v7653
  %v7656 = vtanh.pop %v7654
  %v7657 = vmul.f32 %v7655, 0.5
  %v7658 = vmul.f32 %v7656, 0.5
  %v7659 = vadd.f32 %v7657, 0.5
  %v7660 = vadd.f32 %v7658, 0.5
  %v7661 = vadd.f32 %v7633, %v3469
  %v7662 = vadd.f32 %v7638, %v3474
  %v7663 = vmul.f32 %v7649, %v7661
  %v7664 = vmul.f32 %v7650, %v7662
  %v7665 = vadd.f32 %v7544, %v7663
  %v7666 = vadd.f32 %v7545, %v7664
  %v7667 = vtanh.pop %v7665
  %v7668 = vtanh.pop %v7666
  %v7669 = vsub.f32 1.0, %v7659
  %v7670 = vsub.f32 1.0, %v7660
  %v7671 = vmul.f32 %v7669, %v7667
  %v7672 = vmul.f32 %v7670, %v7668
  %v7673 = vmul.f32 %v7659, %v7397
  %v7674 = vmul.f32 %v7660, %v7398
  %v7675 = vadd.f32 %v7671, %v7673
  %v7676 = vadd.f32 %v7672, %v7674
  %7677 = vst [vmem:[%s3494] sm:$0xff] %v7538
  %7678 = vst [vmem:[%s3494 + $0x8] sm:$0xff] %v7539
  %7679 = vst [vmem:[%s4 + $0x10] sm:$0xff] %v7675
  %7680 = vst [vmem:[%s4 + $0x18] sm:$0xff] %v7676
  // Predicated region
  $region18: #{gru_block_forward.1} parent=0 // pred_check
    _
  $region19: #{gru_block_forward.1} parent=0 // pred_check_branch
    %7682 = sbr.rel (0) target = $region21
  $region20: #{gru_block_forward.1} parent=0 // pred_region
    _
  $region21: #{gru_block_forward.1} parent=0 // pred_fallthru
    _
  // Predicated region
  $region22: #{gru_block_forward.1} parent=0 // pred_check
    _
  $region23: #{gru_block_forward.1} parent=0 // pred_check_branch
    %7684 = sbr.rel (0) target = $region25
  $region24: #{gru_block_forward.1} parent=0 // pred_region
    _
  $region25: #{gru_block_forward.1} parent=0 // pred_fallthru
    _

</llo_original>
